<compile_context>
chip_gen: v7x
topology: tpu7x:2x2x1
jax: 0.10.0
libtpu: 0.0.40
codegen_flags: <defaults>
</compile_context>

<pallas_src>
import math

import jax
import jax.numpy as jnp
from jax import lax
from jax.experimental import pallas as pl
from jax.experimental.pallas import tpu as pltpu

# ---- scaled-down model config (DistilBERT-like) -----------------------------
B = 2            # batch
S = 8            # sequence length (== sublane count -> tile-aligned reshapes)
H = 32           # hidden size
NHEADS = 4       # attention heads
DH = H // NHEADS
FFN = 64         # feed-forward hidden dim
NLAYERS = 2      # encoder layers
VOCAB = 100      # logical vocab size
VOCAB_PAD = 128  # lane-dense padded vocab
OUT = 64         # fc output dim (nn.Linear(hidden, 64))
OUT_PAD = 128    # lane-dense padded fc output
LN_EPS = 1e-12   # DistilBERT layer-norm eps
M = B * S        # flattened row count

EMB_LN_ROW = VOCAB_PAD + S  # rows [0:128) word emb, [128:136) pos emb, 136/137 emb-LN


# ---------------------------- in-kernel helpers ------------------------------
def _layer_norm(x, gamma, beta):
    mu = jnp.mean(x, axis=-1, keepdims=True)
    var = jnp.mean((x - mu) ** 2, axis=-1, keepdims=True)
    return (x - mu) * lax.rsqrt(var + LN_EPS) * gamma + beta


_GELU_C = 0.7978845608028654  # sqrt(2/pi)


def _gelu(x):
    # tanh-approx GELU (EUP tanh slot). HF DistilBERT uses exact erf-GELU; the
    # difference is ~1e-3 and irrelevant for the randomly initialized weights here.
    return 0.5 * x * (1.0 + jnp.tanh(_GELU_C * (x + 0.044715 * x * x * x)))


# ------------------------------ fused kernel ---------------------------------
def fused_forward_kernel(ids_ref, emb_ref, wqkv_ref, wo_ref, w1_ref, w2_ref,
                         vecs_ref, fcwb_ref, o_ref):
    # ---- embedding lookup as a lane-dense one-hot matmul (gather-free) ------
    tok = ids_ref[...]                                                   # (M, 1) i32
    onehot = (tok == lax.broadcasted_iota(jnp.int32, (M, VOCAB_PAD), 1)
              ).astype(jnp.float32)                                      # (M, 128)
    x = jnp.dot(onehot, emb_ref[0:VOCAB_PAD, :],
                preferred_element_type=jnp.float32)                      # (M, H)

    pos = emb_ref[VOCAB_PAD:VOCAB_PAD + S, :]                            # (S, H)
    x = (x.reshape(B, S, H) + pos[None, :, :]).reshape(M, H)

    x = _layer_norm(x,
                    emb_ref[EMB_LN_ROW:EMB_LN_ROW + 1, :],
                    emb_ref[EMB_LN_ROW + 1:EMB_LN_ROW + 2, :])

    ones_col = jnp.ones((M, 1), jnp.float32)

    # ---- encoder layers (static unroll; switch to lax.fori_loop if NLAYERS grows)
    for l in range(NLAYERS):
        # ---------------- multi-head self-attention ----------------
        # bias folded in via a ones column: qkv_h[n] = x @ W_n + b_n   (exact)
        xa = jnp.concatenate([x, ones_col], axis=-1)                    # (M, H+1)
        xa_b = jnp.broadcast_to(xa[None], (3 * NHEADS, M, H + 1))       # (12, M, H+1)
        qkv_h = jnp.einsum('nmd,ndk->nmk', xa_b, wqkv_ref[l],
                           preferred_element_type=jnp.float32)          # (12, M, DH)

        # 1/sqrt(DH) already folded into the Q weight AND Q bias blocks.
        q = qkv_h[0 * NHEADS:1 * NHEADS].reshape(NHEADS * B, S, DH)     # (8, S, DH)
        k = qkv_h[1 * NHEADS:2 * NHEADS].reshape(NHEADS * B, S, DH)
        v = qkv_h[2 * NHEADS:3 * NHEADS].reshape(NHEADS * B, S, DH)

        s = jnp.einsum('nqd,nkd->nqk', q, k,
                       preferred_element_type=jnp.float32)              # (8, S, S)
        s = s - jnp.max(s, axis=-1, keepdims=True)
        p = jnp.exp(s)
        p = p / jnp.sum(p, axis=-1, keepdims=True)                      # exact divide
        ctx = jnp.einsum('nqk,nkd->nqd', p, v,
                         preferred_element_type=jnp.float32)            # (8, S, DH)

        # head merge = per-head output projection (row blocks of Wo) + head sum
        ctx = ctx.reshape(NHEADS, M, DH)                                # (NH, M, DH)
        attn_h = jnp.einsum('nmd,ndo->nmo', ctx, wo_ref[l],
                            preferred_element_type=jnp.float32)         # (NH, M, H)
        attn = attn_h[0]
        for h in range(1, NHEADS):
            attn = attn + attn_h[h]                                     # (M, H)
        attn = attn + vecs_ref[l, 0:1, 0:H]                             # bo

        # sa_layer_norm (post-LN residual)
        x = _layer_norm(x + attn,
                        vecs_ref[l, 3:4, 0:H], vecs_ref[l, 4:5, 0:H])

        # ---------------- feed-forward ----------------
        hid = jnp.dot(x, w1_ref[l],
                      preferred_element_type=jnp.float32) + vecs_ref[l, 1:2, 0:FFN]
        hid = _gelu(hid)
        ffn = jnp.dot(hid, w2_ref[l],
                      preferred_element_type=jnp.float32) + vecs_ref[l, 2:3, 0:H]

        # output_layer_norm (post-LN residual)
        x = _layer_norm(x + ffn,
                        vecs_ref[l, 5:6, 0:H], vecs_ref[l, 6:7, 0:H])

    # ---- fc applied to the [CLS] (position 0) token of every sequence -------
    # relayout-free CLS extraction via a tiny selector matmul.
    cls_sel = (lax.broadcasted_iota(jnp.int32, (B, M), 1)
               == S * lax.broadcasted_iota(jnp.int32, (B, M), 0)
               ).astype(jnp.float32)                                    # (B, M)
    cls = jnp.dot(cls_sel, x, preferred_element_type=jnp.float32)       # (B, H)

    # lane-dense (B, 128) store; wrapper slices back to (B, 64)
    o_ref[...] = (jnp.dot(cls, fcwb_ref[0:H, :],
                          preferred_element_type=jnp.float32)
                  + fcwb_ref[H:H + 1, :])


# ------------------------------ JAX wrapper ----------------------------------
def transaction_transformer_forward(token_ids, params):
    ids2 = token_ids.reshape(M, 1).astype(jnp.int32)
    args = (ids2, params['emb'], params['wqkv'], params['wo'],
            params['w1'], params['w2'], params['vecs'], params['fcwb'])
    out_pad = pl.pallas_call(
        fused_forward_kernel,
        out_shape=jax.ShapeDtypeStruct((B, OUT_PAD), jnp.float32),
        in_specs=[pl.BlockSpec(memory_space=pltpu.MemorySpace.VMEM) for _ in args],
        out_specs=pl.BlockSpec(memory_space=pltpu.MemorySpace.VMEM),
    )(*args)
    return out_pad[:, :OUT]


# --------------------------- deterministic params ----------------------------
def init_params(key):
    keys = iter(jax.random.split(key, 64))

    def dense(shape):
        return (0.02 * jax.random.normal(next(keys), shape)).astype(jnp.float32)

    # -- embeddings + embedding LayerNorm packed into one (138, H) table --
    emb = jnp.zeros((VOCAB_PAD + S + 2, H), jnp.float32)
    emb = emb.at[:VOCAB].set(dense((VOCAB, H)))                 # word (rows >= VOCAB stay 0)
    emb = emb.at[VOCAB_PAD:VOCAB_PAD + S].set(dense((S, H)))    # position
    emb = emb.at[EMB_LN_ROW].set(jnp.ones((H,), jnp.float32))   # emb LN gamma (beta row = 0)

    att_scale = 1.0 / math.sqrt(DH)

    def per_head(W, b):
        # (H, H), (H,) -> (NHEADS, H+1, DH); bias stored as the extra input row.
        Wh = W.reshape(H, NHEADS, DH).transpose(1, 0, 2)
        bh = b.reshape(NHEADS, 1, DH)
        return jnp.concatenate([Wh, bh], axis=1)

    wqkv_l, wo_l, w1_l, w2_l, vecs_l = [], [], [], [], []
    for _ in range(NLAYERS):
        wq, bq = dense((H, H)), dense((H,))
        wk, bk = dense((H, H)), dense((H,))
        wv, bv = dense((H, H)), dense((H,))
        wo, bo = dense((H, H)), dense((H,))
        w1, b1 = dense((H, FFN)), dense((FFN,))
        w2, b2 = dense((FFN, H)), dense((H,))

        # fold 1/sqrt(DH) into BOTH the Q weights and the Q bias (exact).
        wq, bq = wq * att_scale, bq * att_scale

        wqkv_l.append(jnp.concatenate(
            [per_head(wq, bq), per_head(wk, bk), per_head(wv, bv)], axis=0))  # (12, H+1, DH)
        wo_l.append(wo.reshape(NHEADS, DH, H))                                # row blocks of Wo
        w1_l.append(w1)
        w2_l.append(w2)

        vec = jnp.zeros((8, 128), jnp.float32)
        vec = vec.at[0, :H].set(bo)                              # attn output bias
        vec = vec.at[1, :FFN].set(b1)                            # ffn bias 1
        vec = vec.at[2, :H].set(b2)                              # ffn bias 2
        vec = vec.at[3, :H].set(jnp.ones((H,), jnp.float32))     # sa_ln gamma
        # row 4: sa_ln beta = 0
        vec = vec.at[5, :H].set(jnp.ones((H,), jnp.float32))     # out_ln gamma
        # row 6: out_ln beta = 0
        vecs_l.append(vec)

    fcwb = jnp.zeros((H + 1, OUT_PAD), jnp.float32)
    fcwb = fcwb.at[:H, :OUT].set(dense((H, OUT)))
    fcwb = fcwb.at[H, :OUT].set(dense((OUT,)))

    return {
        'emb': emb,                          # (138, H)
        'wqkv': jnp.stack(wqkv_l),           # (L, 3*NHEADS, H+1, DH)
        'wo': jnp.stack(wo_l),               # (L, NHEADS, DH, H)
        'w1': jnp.stack(w1_l),               # (L, H, FFN)
        'w2': jnp.stack(w2_l),               # (L, FFN, H)
        'vecs': jnp.stack(vecs_l),           # (L, 8, 128)
        'fcwb': fcwb,                        # (H+1, OUT_PAD)
    }


if __name__ == "__main__":
    key = jax.random.PRNGKey(0)
    k_tok, k_par = jax.random.split(key)

    # deterministic stand-in for tokenizer output
    token_ids = jax.random.randint(k_tok, (B, S), 0, VOCAB, dtype=jnp.int32)
    params = init_params(k_par)

    out = transaction_transformer_forward(token_ids, params)
    out = jax.block_until_ready(out)
    assert out.shape == (B, OUT), out.shape
    assert out.dtype == jnp.float32
    assert bool(jnp.all(jnp.isfinite(out)))
    print("KERNEL_OK")
</pallas_src>

<mosaic_0001>
module attributes {stable_mosaic.version = 11 : i64} {
  func.func @fused_forward_kernel(%arg0: memref<16x1xi32, #tpu.memory_space<vmem>>, %arg1: memref<138x32xf32, #tpu.memory_space<vmem>>, %arg2: memref<2x12x33x8xf32, #tpu.memory_space<vmem>>, %arg3: memref<2x4x8x32xf32, #tpu.memory_space<vmem>>, %arg4: memref<2x32x64xf32, #tpu.memory_space<vmem>>, %arg5: memref<2x64x32xf32, #tpu.memory_space<vmem>>, %arg6: memref<2x8x128xf32, #tpu.memory_space<vmem>>, %arg7: memref<33x128xf32, #tpu.memory_space<vmem>>, %arg8: memref<2x128xf32, #tpu.memory_space<vmem>>) attributes {dimension_semantics = [], scalar_prefetch = 0 : i64, scratch_operands = 0 : i64, tpu.core_type = #tpu.core_type<tc>} {
    %c0 = arith.constant 0 : index
    %c0_0 = arith.constant 0 : index
    %0 = vector.load %arg0[%c0, %c0_0] : memref<16x1xi32, #tpu.memory_space<vmem>>, vector<16x1xi32>
    %1 = tpu.iota {dimensions = array<i32: 1>} : vector<16x128xi32>
    %2 = vector.broadcast %0 : vector<16x1xi32> to vector<16x128xi32>
    %3 = arith.cmpi eq, %2, %1 : vector<16x128xi32>
    %4 = arith.extui %3 : vector<16x128xi1> to vector<16x128xi32>
    %5 = arith.sitofp %4 : vector<16x128xi32> to vector<16x128xf32>
    %c0_1 = arith.constant 0 : index
    %c0_2 = arith.constant 0 : index
    %6 = vector.load %arg1[%c0_1, %c0_2] : memref<138x32xf32, #tpu.memory_space<vmem>>, vector<128x32xf32>
    %cst = arith.constant dense<0.000000e+00> : vector<16x32xf32>
    %7 = tpu.matmul %5, %6, %cst {dimension_numbers = #tpu.dot_dimension_numbers<[1], [0], [0], [1], [0, 0, 1, 1], [], []>} : vector<16x128xf32>, vector<128x32xf32>, vector<16x32xf32> -> vector<16x32xf32>
    %c128 = arith.constant 128 : index
    %c0_3 = arith.constant 0 : index
    %8 = vector.load %arg1[%c128, %c0_3] : memref<138x32xf32, #tpu.memory_space<vmem>>, vector<8x32xf32>
    %9 = vector.shape_cast %7 : vector<16x32xf32> to vector<2x8x32xf32>
    %10 = vector.shape_cast %8 : vector<8x32xf32> to vector<1x8x32xf32>
    %11 = vector.broadcast %10 : vector<1x8x32xf32> to vector<2x8x32xf32>
    %12 = arith.addf %9, %11 : vector<2x8x32xf32>
    %13 = vector.shape_cast %12 : vector<2x8x32xf32> to vector<16x32xf32>
    %c136 = arith.constant 136 : index
    %c0_4 = arith.constant 0 : index
    %14 = vector.load %arg1[%c136, %c0_4] : memref<138x32xf32, #tpu.memory_space<vmem>>, vector<1x32xf32>
    %c137 = arith.constant 137 : index
    %c0_5 = arith.constant 0 : index
    %15 = vector.load %arg1[%c137, %c0_5] : memref<138x32xf32, #tpu.memory_space<vmem>>, vector<1x32xf32>
    %cst_6 = arith.constant dense<0.000000e+00> : vector<16xf32>
    %16 = vector.multi_reduction <add>, %13, %cst_6 [1] : vector<16x32xf32> to vector<16xf32>
    %17 = vector.shape_cast %16 : vector<16xf32> to vector<16x1xf32>
    %cst_7 = arith.constant 3.200000e+01 : f32
    %18 = vector.broadcast %cst_7 : f32 to vector<16x1xf32>
    %19 = arith.divf %17, %18 : vector<16x1xf32>
    %20 = vector.broadcast %19 : vector<16x1xf32> to vector<16x32xf32>
    %21 = arith.subf %13, %20 : vector<16x32xf32>
    %22 = arith.mulf %21, %21 : vector<16x32xf32>
    %cst_8 = arith.constant dense<0.000000e+00> : vector<16xf32>
    %23 = vector.multi_reduction <add>, %22, %cst_8 [1] : vector<16x32xf32> to vector<16xf32>
    %24 = vector.shape_cast %23 : vector<16xf32> to vector<16x1xf32>
    %cst_9 = arith.constant 3.200000e+01 : f32
    %25 = vector.broadcast %cst_9 : f32 to vector<16x1xf32>
    %26 = arith.divf %24, %25 : vector<16x1xf32>
    %27 = vector.broadcast %19 : vector<16x1xf32> to vector<16x32xf32>
    %28 = arith.subf %13, %27 : vector<16x32xf32>
    %cst_10 = arith.constant 9.99999996E-13 : f32
    %29 = vector.broadcast %cst_10 : f32 to vector<16x1xf32>
    %30 = arith.addf %26, %29 : vector<16x1xf32>
    %31 = math.rsqrt %30 : vector<16x1xf32>
    %32 = vector.broadcast %31 : vector<16x1xf32> to vector<16x32xf32>
    %33 = arith.mulf %28, %32 : vector<16x32xf32>
    %34 = vector.broadcast %14 : vector<1x32xf32> to vector<16x32xf32>
    %35 = arith.mulf %33, %34 : vector<16x32xf32>
    %36 = vector.broadcast %15 : vector<1x32xf32> to vector<16x32xf32>
    %37 = arith.addf %35, %36 : vector<16x32xf32>
    %cst_11 = arith.constant 1.000000e+00 : f32
    %38 = vector.broadcast %cst_11 : f32 to vector<16x1xf32>
    %39 = tpu.concatenate %37, %38 in 1 : vector<16x32xf32>, vector<16x1xf32> -> vector<16x33xf32>
    %40 = vector.shape_cast %39 : vector<16x33xf32> to vector<1x16x33xf32>
    %41 = vector.shape_cast %40 : vector<1x16x33xf32> to vector<1x16x33xf32>
    %42 = vector.broadcast %41 : vector<1x16x33xf32> to vector<12x16x33xf32>
    %c0_12 = arith.constant 0 : index
    %c0_13 = arith.constant 0 : index
    %c0_14 = arith.constant 0 : index
    %c0_15 = arith.constant 0 : index
    %43 = vector.load %arg2[%c0_12, %c0_13, %c0_14, %c0_15] : memref<2x12x33x8xf32, #tpu.memory_space<vmem>>, vector<1x12x33x8xf32>
    %44 = vector.shape_cast %43 : vector<1x12x33x8xf32> to vector<12x33x8xf32>
    "tpu.trace_start"() <{level = 10 : i32, message = "nmd,ndk->nmk"}> : () -> ()
    %cst_16 = arith.constant dense<0.000000e+00> : vector<12x16x8xf32>
    %45 = tpu.matmul %42, %44, %cst_16 {dimension_numbers = #tpu.dot_dimension_numbers<[2], [1], [1], [2], [0, 0, 0, 1, 1, 2], [0], [0]>} : vector<12x16x33xf32>, vector<12x33x8xf32>, vector<12x16x8xf32> -> vector<12x16x8xf32>
    "tpu.trace_stop"() : () -> ()
    %46 = vector.extract_strided_slice %45 {offsets = [0, 0, 0], sizes = [4, 16, 8], strides = [1, 1, 1]} : vector<12x16x8xf32> to vector<4x16x8xf32>
    %47 = vector.shape_cast %46 : vector<4x16x8xf32> to vector<8x8x8xf32>
    %48 = vector.extract_strided_slice %45 {offsets = [4, 0, 0], sizes = [4, 16, 8], strides = [1, 1, 1]} : vector<12x16x8xf32> to vector<4x16x8xf32>
    %49 = vector.shape_cast %48 : vector<4x16x8xf32> to vector<8x8x8xf32>
    %50 = vector.extract_strided_slice %45 {offsets = [8, 0, 0], sizes = [4, 16, 8], strides = [1, 1, 1]} : vector<12x16x8xf32> to vector<4x16x8xf32>
    %51 = vector.shape_cast %50 : vector<4x16x8xf32> to vector<8x8x8xf32>
    "tpu.trace_start"() <{level = 10 : i32, message = "nqd,nkd->nqk"}> : () -> ()
    %cst_17 = arith.constant dense<0.000000e+00> : vector<8x8x8xf32>
    %52 = tpu.matmul %47, %49, %cst_17 {dimension_numbers = #tpu.dot_dimension_numbers<[2], [2], [1], [1], [0, 0, 0, 1, 1, 1], [0], [0]>} : vector<8x8x8xf32>, vector<8x8x8xf32>, vector<8x8x8xf32> -> vector<8x8x8xf32>
    "tpu.trace_stop"() : () -> ()
    %cst_18 = arith.constant dense<0xFF800000> : vector<8x8xf32>
    %53 = vector.multi_reduction <maximumf>, %52, %cst_18 [2] : vector<8x8x8xf32> to vector<8x8xf32>
    %54 = vector.shape_cast %53 : vector<8x8xf32> to vector<8x8x1xf32>
    %55 = vector.broadcast %54 : vector<8x8x1xf32> to vector<8x8x8xf32>
    %56 = arith.subf %52, %55 : vector<8x8x8xf32>
    %57 = math.exp %56 : vector<8x8x8xf32>
    %cst_19 = arith.constant dense<0.000000e+00> : vector<8x8xf32>
    %58 = vector.multi_reduction <add>, %57, %cst_19 [2] : vector<8x8x8xf32> to vector<8x8xf32>
    %59 = vector.shape_cast %58 : vector<8x8xf32> to vector<8x8x1xf32>
    %60 = vector.broadcast %59 : vector<8x8x1xf32> to vector<8x8x8xf32>
    %61 = arith.divf %57, %60 : vector<8x8x8xf32>
    "tpu.trace_start"() <{level = 10 : i32, message = "nqk,nkd->nqd"}> : () -> ()
    %cst_20 = arith.constant dense<0.000000e+00> : vector<8x8x8xf32>
    %62 = tpu.matmul %61, %51, %cst_20 {dimension_numbers = #tpu.dot_dimension_numbers<[2], [1], [1], [2], [0, 0, 0, 1, 1, 2], [0], [0]>} : vector<8x8x8xf32>, vector<8x8x8xf32>, vector<8x8x8xf32> -> vector<8x8x8xf32>
    "tpu.trace_stop"() : () -> ()
    %63 = vector.shape_cast %62 : vector<8x8x8xf32> to vector<4x16x8xf32>
    %c0_21 = arith.constant 0 : index
    %c0_22 = arith.constant 0 : index
    %c0_23 = arith.constant 0 : index
    %c0_24 = arith.constant 0 : index
    %64 = vector.load %arg3[%c0_21, %c0_22, %c0_23, %c0_24] : memref<2x4x8x32xf32, #tpu.memory_space<vmem>>, vector<1x4x8x32xf32>
    %65 = vector.shape_cast %64 : vector<1x4x8x32xf32> to vector<4x8x32xf32>
    "tpu.trace_start"() <{level = 10 : i32, message = "nmd,ndo->nmo"}> : () -> ()
    %cst_25 = arith.constant dense<0.000000e+00> : vector<4x16x32xf32>
    %66 = tpu.matmul %63, %65, %cst_25 {dimension_numbers = #tpu.dot_dimension_numbers<[2], [1], [1], [2], [0, 0, 0, 1, 1, 2], [0], [0]>} : vector<4x16x8xf32>, vector<4x8x32xf32>, vector<4x16x32xf32> -> vector<4x16x32xf32>
    "tpu.trace_stop"() : () -> ()
    %67 = vector.extract_strided_slice %66 {offsets = [0, 0, 0], sizes = [1, 16, 32], strides = [1, 1, 1]} : vector<4x16x32xf32> to vector<1x16x32xf32>
    %68 = vector.shape_cast %67 : vector<1x16x32xf32> to vector<16x32xf32>
    %69 = vector.extract_strided_slice %66 {offsets = [1, 0, 0], sizes = [1, 16, 32], strides = [1, 1, 1]} : vector<4x16x32xf32> to vector<1x16x32xf32>
    %70 = vector.shape_cast %69 : vector<1x16x32xf32> to vector<16x32xf32>
    %71 = arith.addf %68, %70 : vector<16x32xf32>
    %72 = vector.extract_strided_slice %66 {offsets = [2, 0, 0], sizes = [1, 16, 32], strides = [1, 1, 1]} : vector<4x16x32xf32> to vector<1x16x32xf32>
    %73 = vector.shape_cast %72 : vector<1x16x32xf32> to vector<16x32xf32>
    %74 = arith.addf %71, %73 : vector<16x32xf32>
    %75 = vector.extract_strided_slice %66 {offsets = [3, 0, 0], sizes = [1, 16, 32], strides = [1, 1, 1]} : vector<4x16x32xf32> to vector<1x16x32xf32>
    %76 = vector.shape_cast %75 : vector<1x16x32xf32> to vector<16x32xf32>
    %77 = arith.addf %74, %76 : vector<16x32xf32>
    %c0_26 = arith.constant 0 : index
    %c0_27 = arith.constant 0 : index
    %c0_28 = arith.constant 0 : index
    %78 = vector.load %arg6[%c0_26, %c0_27, %c0_28] : memref<2x8x128xf32, #tpu.memory_space<vmem>>, vector<1x1x32xf32>
    %79 = vector.shape_cast %78 : vector<1x1x32xf32> to vector<1x32xf32>
    %80 = vector.broadcast %79 : vector<1x32xf32> to vector<16x32xf32>
    %81 = arith.addf %77, %80 : vector<16x32xf32>
    %82 = arith.addf %37, %81 : vector<16x32xf32>
    %c0_29 = arith.constant 0 : index
    %c3 = arith.constant 3 : index
    %c0_30 = arith.constant 0 : index
    %83 = vector.load %arg6[%c0_29, %c3, %c0_30] : memref<2x8x128xf32, #tpu.memory_space<vmem>>, vector<1x1x32xf32>
    %84 = vector.shape_cast %83 : vector<1x1x32xf32> to vector<1x32xf32>
    %c0_31 = arith.constant 0 : index
    %c4 = arith.constant 4 : index
    %c0_32 = arith.constant 0 : index
    %85 = vector.load %arg6[%c0_31, %c4, %c0_32] : memref<2x8x128xf32, #tpu.memory_space<vmem>>, vector<1x1x32xf32>
    %86 = vector.shape_cast %85 : vector<1x1x32xf32> to vector<1x32xf32>
    %cst_33 = arith.constant dense<0.000000e+00> : vector<16xf32>
    %87 = vector.multi_reduction <add>, %82, %cst_33 [1] : vector<16x32xf32> to vector<16xf32>
    %88 = vector.shape_cast %87 : vector<16xf32> to vector<16x1xf32>
    %cst_34 = arith.constant 3.200000e+01 : f32
    %89 = vector.broadcast %cst_34 : f32 to vector<16x1xf32>
    %90 = arith.divf %88, %89 : vector<16x1xf32>
    %91 = vector.broadcast %90 : vector<16x1xf32> to vector<16x32xf32>
    %92 = arith.subf %82, %91 : vector<16x32xf32>
    %93 = arith.mulf %92, %92 : vector<16x32xf32>
    %cst_35 = arith.constant dense<0.000000e+00> : vector<16xf32>
    %94 = vector.multi_reduction <add>, %93, %cst_35 [1] : vector<16x32xf32> to vector<16xf32>
    %95 = vector.shape_cast %94 : vector<16xf32> to vector<16x1xf32>
    %cst_36 = arith.constant 3.200000e+01 : f32
    %96 = vector.broadcast %cst_36 : f32 to vector<16x1xf32>
    %97 = arith.divf %95, %96 : vector<16x1xf32>
    %98 = vector.broadcast %90 : vector<16x1xf32> to vector<16x32xf32>
    %99 = arith.subf %82, %98 : vector<16x32xf32>
    %cst_37 = arith.constant 9.99999996E-13 : f32
    %100 = vector.broadcast %cst_37 : f32 to vector<16x1xf32>
    %101 = arith.addf %97, %100 : vector<16x1xf32>
    %102 = math.rsqrt %101 : vector<16x1xf32>
    %103 = vector.broadcast %102 : vector<16x1xf32> to vector<16x32xf32>
    %104 = arith.mulf %99, %103 : vector<16x32xf32>
    %105 = vector.broadcast %84 : vector<1x32xf32> to vector<16x32xf32>
    %106 = arith.mulf %104, %105 : vector<16x32xf32>
    %107 = vector.broadcast %86 : vector<1x32xf32> to vector<16x32xf32>
    %108 = arith.addf %106, %107 : vector<16x32xf32>
    %c0_38 = arith.constant 0 : index
    %c0_39 = arith.constant 0 : index
    %c0_40 = arith.constant 0 : index
    %109 = vector.load %arg4[%c0_38, %c0_39, %c0_40] : memref<2x32x64xf32, #tpu.memory_space<vmem>>, vector<1x32x64xf32>
    %110 = vector.shape_cast %109 : vector<1x32x64xf32> to vector<32x64xf32>
    %cst_41 = arith.constant dense<0.000000e+00> : vector<16x64xf32>
    %111 = tpu.matmul %108, %110, %cst_41 {dimension_numbers = #tpu.dot_dimension_numbers<[1], [0], [0], [1], [0, 0, 1, 1], [], []>} : vector<16x32xf32>, vector<32x64xf32>, vector<16x64xf32> -> vector<16x64xf32>
    %c0_42 = arith.constant 0 : index
    %c1 = arith.constant 1 : index
    %c0_43 = arith.constant 0 : index
    %112 = vector.load %arg6[%c0_42, %c1, %c0_43] : memref<2x8x128xf32, #tpu.memory_space<vmem>>, vector<1x1x64xf32>
    %113 = vector.shape_cast %112 : vector<1x1x64xf32> to vector<1x64xf32>
    %114 = vector.broadcast %113 : vector<1x64xf32> to vector<16x64xf32>
    %115 = arith.addf %111, %114 : vector<16x64xf32>
    %cst_44 = arith.constant 5.000000e-01 : f32
    %116 = vector.broadcast %cst_44 : f32 to vector<16x64xf32>
    %117 = arith.mulf %116, %115 : vector<16x64xf32>
    %cst_45 = arith.constant 4.471500e-02 : f32
    %118 = vector.broadcast %cst_45 : f32 to vector<16x64xf32>
    %119 = arith.mulf %118, %115 : vector<16x64xf32>
    %120 = arith.mulf %119, %115 : vector<16x64xf32>
    %121 = arith.mulf %120, %115 : vector<16x64xf32>
    %122 = arith.addf %115, %121 : vector<16x64xf32>
    %cst_46 = arith.constant 0.797884583 : f32
    %123 = vector.broadcast %cst_46 : f32 to vector<16x64xf32>
    %124 = arith.mulf %123, %122 : vector<16x64xf32>
    %125 = math.tanh %124 : vector<16x64xf32>
    %cst_47 = arith.constant 1.000000e+00 : f32
    %126 = vector.broadcast %cst_47 : f32 to vector<16x64xf32>
    %127 = arith.addf %126, %125 : vector<16x64xf32>
    %128 = arith.mulf %117, %127 : vector<16x64xf32>
    %c0_48 = arith.constant 0 : index
    %c0_49 = arith.constant 0 : index
    %c0_50 = arith.constant 0 : index
    %129 = vector.load %arg5[%c0_48, %c0_49, %c0_50] : memref<2x64x32xf32, #tpu.memory_space<vmem>>, vector<1x64x32xf32>
    %130 = vector.shape_cast %129 : vector<1x64x32xf32> to vector<64x32xf32>
    %cst_51 = arith.constant dense<0.000000e+00> : vector<16x32xf32>
    %131 = tpu.matmul %128, %130, %cst_51 {dimension_numbers = #tpu.dot_dimension_numbers<[1], [0], [0], [1], [0, 0, 1, 1], [], []>} : vector<16x64xf32>, vector<64x32xf32>, vector<16x32xf32> -> vector<16x32xf32>
    %c0_52 = arith.constant 0 : index
    %c2 = arith.constant 2 : index
    %c0_53 = arith.constant 0 : index
    %132 = vector.load %arg6[%c0_52, %c2, %c0_53] : memref<2x8x128xf32, #tpu.memory_space<vmem>>, vector<1x1x32xf32>
    %133 = vector.shape_cast %132 : vector<1x1x32xf32> to vector<1x32xf32>
    %134 = vector.broadcast %133 : vector<1x32xf32> to vector<16x32xf32>
    %135 = arith.addf %131, %134 : vector<16x32xf32>
    %136 = arith.addf %108, %135 : vector<16x32xf32>
    %c0_54 = arith.constant 0 : index
    %c5 = arith.constant 5 : index
    %c0_55 = arith.constant 0 : index
    %137 = vector.load %arg6[%c0_54, %c5, %c0_55] : memref<2x8x128xf32, #tpu.memory_space<vmem>>, vector<1x1x32xf32>
    %138 = vector.shape_cast %137 : vector<1x1x32xf32> to vector<1x32xf32>
    %c0_56 = arith.constant 0 : index
    %c6 = arith.constant 6 : index
    %c0_57 = arith.constant 0 : index
    %139 = vector.load %arg6[%c0_56, %c6, %c0_57] : memref<2x8x128xf32, #tpu.memory_space<vmem>>, vector<1x1x32xf32>
    %140 = vector.shape_cast %139 : vector<1x1x32xf32> to vector<1x32xf32>
    %cst_58 = arith.constant dense<0.000000e+00> : vector<16xf32>
    %141 = vector.multi_reduction <add>, %136, %cst_58 [1] : vector<16x32xf32> to vector<16xf32>
    %142 = vector.shape_cast %141 : vector<16xf32> to vector<16x1xf32>
    %cst_59 = arith.constant 3.200000e+01 : f32
    %143 = vector.broadcast %cst_59 : f32 to vector<16x1xf32>
    %144 = arith.divf %142, %143 : vector<16x1xf32>
    %145 = vector.broadcast %144 : vector<16x1xf32> to vector<16x32xf32>
    %146 = arith.subf %136, %145 : vector<16x32xf32>
    %147 = arith.mulf %146, %146 : vector<16x32xf32>
    %cst_60 = arith.constant dense<0.000000e+00> : vector<16xf32>
    %148 = vector.multi_reduction <add>, %147, %cst_60 [1] : vector<16x32xf32> to vector<16xf32>
    %149 = vector.shape_cast %148 : vector<16xf32> to vector<16x1xf32>
    %cst_61 = arith.constant 3.200000e+01 : f32
    %150 = vector.broadcast %cst_61 : f32 to vector<16x1xf32>
    %151 = arith.divf %149, %150 : vector<16x1xf32>
    %152 = vector.broadcast %144 : vector<16x1xf32> to vector<16x32xf32>
    %153 = arith.subf %136, %152 : vector<16x32xf32>
    %cst_62 = arith.constant 9.99999996E-13 : f32
    %154 = vector.broadcast %cst_62 : f32 to vector<16x1xf32>
    %155 = arith.addf %151, %154 : vector<16x1xf32>
    %156 = math.rsqrt %155 : vector<16x1xf32>
    %157 = vector.broadcast %156 : vector<16x1xf32> to vector<16x32xf32>
    %158 = arith.mulf %153, %157 : vector<16x32xf32>
    %159 = vector.broadcast %138 : vector<1x32xf32> to vector<16x32xf32>
    %160 = arith.mulf %158, %159 : vector<16x32xf32>
    %161 = vector.broadcast %140 : vector<1x32xf32> to vector<16x32xf32>
    %162 = arith.addf %160, %161 : vector<16x32xf32>
    %163 = tpu.concatenate %162, %38 in 1 : vector<16x32xf32>, vector<16x1xf32> -> vector<16x33xf32>
    %164 = vector.shape_cast %163 : vector<16x33xf32> to vector<1x16x33xf32>
    %165 = vector.shape_cast %164 : vector<1x16x33xf32> to vector<1x16x33xf32>
    %166 = vector.broadcast %165 : vector<1x16x33xf32> to vector<12x16x33xf32>
    %c1_63 = arith.constant 1 : index
    %c0_64 = arith.constant 0 : index
    %c0_65 = arith.constant 0 : index
    %c0_66 = arith.constant 0 : index
    %167 = vector.load %arg2[%c1_63, %c0_64, %c0_65, %c0_66] : memref<2x12x33x8xf32, #tpu.memory_space<vmem>>, vector<1x12x33x8xf32>
    %168 = vector.shape_cast %167 : vector<1x12x33x8xf32> to vector<12x33x8xf32>
    "tpu.trace_start"() <{level = 10 : i32, message = "nmd,ndk->nmk"}> : () -> ()
    %cst_67 = arith.constant dense<0.000000e+00> : vector<12x16x8xf32>
    %169 = tpu.matmul %166, %168, %cst_67 {dimension_numbers = #tpu.dot_dimension_numbers<[2], [1], [1], [2], [0, 0, 0, 1, 1, 2], [0], [0]>} : vector<12x16x33xf32>, vector<12x33x8xf32>, vector<12x16x8xf32> -> vector<12x16x8xf32>
    "tpu.trace_stop"() : () -> ()
    %170 = vector.extract_strided_slice %169 {offsets = [0, 0, 0], sizes = [4, 16, 8], strides = [1, 1, 1]} : vector<12x16x8xf32> to vector<4x16x8xf32>
    %171 = vector.shape_cast %170 : vector<4x16x8xf32> to vector<8x8x8xf32>
    %172 = vector.extract_strided_slice %169 {offsets = [4, 0, 0], sizes = [4, 16, 8], strides = [1, 1, 1]} : vector<12x16x8xf32> to vector<4x16x8xf32>
    %173 = vector.shape_cast %172 : vector<4x16x8xf32> to vector<8x8x8xf32>
    %174 = vector.extract_strided_slice %169 {offsets = [8, 0, 0], sizes = [4, 16, 8], strides = [1, 1, 1]} : vector<12x16x8xf32> to vector<4x16x8xf32>
    %175 = vector.shape_cast %174 : vector<4x16x8xf32> to vector<8x8x8xf32>
    "tpu.trace_start"() <{level = 10 : i32, message = "nqd,nkd->nqk"}> : () -> ()
    %cst_68 = arith.constant dense<0.000000e+00> : vector<8x8x8xf32>
    %176 = tpu.matmul %171, %173, %cst_68 {dimension_numbers = #tpu.dot_dimension_numbers<[2], [2], [1], [1], [0, 0, 0, 1, 1, 1], [0], [0]>} : vector<8x8x8xf32>, vector<8x8x8xf32>, vector<8x8x8xf32> -> vector<8x8x8xf32>
    "tpu.trace_stop"() : () -> ()
    %cst_69 = arith.constant dense<0xFF800000> : vector<8x8xf32>
    %177 = vector.multi_reduction <maximumf>, %176, %cst_69 [2] : vector<8x8x8xf32> to vector<8x8xf32>
    %178 = vector.shape_cast %177 : vector<8x8xf32> to vector<8x8x1xf32>
    %179 = vector.broadcast %178 : vector<8x8x1xf32> to vector<8x8x8xf32>
    %180 = arith.subf %176, %179 : vector<8x8x8xf32>
    %181 = math.exp %180 : vector<8x8x8xf32>
    %cst_70 = arith.constant dense<0.000000e+00> : vector<8x8xf32>
    %182 = vector.multi_reduction <add>, %181, %cst_70 [2] : vector<8x8x8xf32> to vector<8x8xf32>
    %183 = vector.shape_cast %182 : vector<8x8xf32> to vector<8x8x1xf32>
    %184 = vector.broadcast %183 : vector<8x8x1xf32> to vector<8x8x8xf32>
    %185 = arith.divf %181, %184 : vector<8x8x8xf32>
    "tpu.trace_start"() <{level = 10 : i32, message = "nqk,nkd->nqd"}> : () -> ()
    %cst_71 = arith.constant dense<0.000000e+00> : vector<8x8x8xf32>
    %186 = tpu.matmul %185, %175, %cst_71 {dimension_numbers = #tpu.dot_dimension_numbers<[2], [1], [1], [2], [0, 0, 0, 1, 1, 2], [0], [0]>} : vector<8x8x8xf32>, vector<8x8x8xf32>, vector<8x8x8xf32> -> vector<8x8x8xf32>
    "tpu.trace_stop"() : () -> ()
    %187 = vector.shape_cast %186 : vector<8x8x8xf32> to vector<4x16x8xf32>
    %c1_72 = arith.constant 1 : index
    %c0_73 = arith.constant 0 : index
    %c0_74 = arith.constant 0 : index
    %c0_75 = arith.constant 0 : index
    %188 = vector.load %arg3[%c1_72, %c0_73, %c0_74, %c0_75] : memref<2x4x8x32xf32, #tpu.memory_space<vmem>>, vector<1x4x8x32xf32>
    %189 = vector.shape_cast %188 : vector<1x4x8x32xf32> to vector<4x8x32xf32>
    "tpu.trace_start"() <{level = 10 : i32, message = "nmd,ndo->nmo"}> : () -> ()
    %cst_76 = arith.constant dense<0.000000e+00> : vector<4x16x32xf32>
    %190 = tpu.matmul %187, %189, %cst_76 {dimension_numbers = #tpu.dot_dimension_numbers<[2], [1], [1], [2], [0, 0, 0, 1, 1, 2], [0], [0]>} : vector<4x16x8xf32>, vector<4x8x32xf32>, vector<4x16x32xf32> -> vector<4x16x32xf32>
    "tpu.trace_stop"() : () -> ()
    %191 = vector.extract_strided_slice %190 {offsets = [0, 0, 0], sizes = [1, 16, 32], strides = [1, 1, 1]} : vector<4x16x32xf32> to vector<1x16x32xf32>
    %192 = vector.shape_cast %191 : vector<1x16x32xf32> to vector<16x32xf32>
    %193 = vector.extract_strided_slice %190 {offsets = [1, 0, 0], sizes = [1, 16, 32], strides = [1, 1, 1]} : vector<4x16x32xf32> to vector<1x16x32xf32>
    %194 = vector.shape_cast %193 : vector<1x16x32xf32> to vector<16x32xf32>
    %195 = arith.addf %192, %194 : vector<16x32xf32>
    %196 = vector.extract_strided_slice %190 {offsets = [2, 0, 0], sizes = [1, 16, 32], strides = [1, 1, 1]} : vector<4x16x32xf32> to vector<1x16x32xf32>
    %197 = vector.shape_cast %196 : vector<1x16x32xf32> to vector<16x32xf32>
    %198 = arith.addf %195, %197 : vector<16x32xf32>
    %199 = vector.extract_strided_slice %190 {offsets = [3, 0, 0], sizes = [1, 16, 32], strides = [1, 1, 1]} : vector<4x16x32xf32> to vector<1x16x32xf32>
    %200 = vector.shape_cast %199 : vector<1x16x32xf32> to vector<16x32xf32>
    %201 = arith.addf %198, %200 : vector<16x32xf32>
    %c1_77 = arith.constant 1 : index
    %c0_78 = arith.constant 0 : index
    %c0_79 = arith.constant 0 : index
    %202 = vector.load %arg6[%c1_77, %c0_78, %c0_79] : memref<2x8x128xf32, #tpu.memory_space<vmem>>, vector<1x1x32xf32>
    %203 = vector.shape_cast %202 : vector<1x1x32xf32> to vector<1x32xf32>
    %204 = vector.broadcast %203 : vector<1x32xf32> to vector<16x32xf32>
    %205 = arith.addf %201, %204 : vector<16x32xf32>
    %206 = arith.addf %162, %205 : vector<16x32xf32>
    %c1_80 = arith.constant 1 : index
    %c3_81 = arith.constant 3 : index
    %c0_82 = arith.constant 0 : index
    %207 = vector.load %arg6[%c1_80, %c3_81, %c0_82] : memref<2x8x128xf32, #tpu.memory_space<vmem>>, vector<1x1x32xf32>
    %208 = vector.shape_cast %207 : vector<1x1x32xf32> to vector<1x32xf32>
    %c1_83 = arith.constant 1 : index
    %c4_84 = arith.constant 4 : index
    %c0_85 = arith.constant 0 : index
    %209 = vector.load %arg6[%c1_83, %c4_84, %c0_85] : memref<2x8x128xf32, #tpu.memory_space<vmem>>, vector<1x1x32xf32>
    %210 = vector.shape_cast %209 : vector<1x1x32xf32> to vector<1x32xf32>
    %cst_86 = arith.constant dense<0.000000e+00> : vector<16xf32>
    %211 = vector.multi_reduction <add>, %206, %cst_86 [1] : vector<16x32xf32> to vector<16xf32>
    %212 = vector.shape_cast %211 : vector<16xf32> to vector<16x1xf32>
    %cst_87 = arith.constant 3.200000e+01 : f32
    %213 = vector.broadcast %cst_87 : f32 to vector<16x1xf32>
    %214 = arith.divf %212, %213 : vector<16x1xf32>
    %215 = vector.broadcast %214 : vector<16x1xf32> to vector<16x32xf32>
    %216 = arith.subf %206, %215 : vector<16x32xf32>
    %217 = arith.mulf %216, %216 : vector<16x32xf32>
    %cst_88 = arith.constant dense<0.000000e+00> : vector<16xf32>
    %218 = vector.multi_reduction <add>, %217, %cst_88 [1] : vector<16x32xf32> to vector<16xf32>
    %219 = vector.shape_cast %218 : vector<16xf32> to vector<16x1xf32>
    %cst_89 = arith.constant 3.200000e+01 : f32
    %220 = vector.broadcast %cst_89 : f32 to vector<16x1xf32>
    %221 = arith.divf %219, %220 : vector<16x1xf32>
    %222 = vector.broadcast %214 : vector<16x1xf32> to vector<16x32xf32>
    %223 = arith.subf %206, %222 : vector<16x32xf32>
    %cst_90 = arith.constant 9.99999996E-13 : f32
    %224 = vector.broadcast %cst_90 : f32 to vector<16x1xf32>
    %225 = arith.addf %221, %224 : vector<16x1xf32>
    %226 = math.rsqrt %225 : vector<16x1xf32>
    %227 = vector.broadcast %226 : vector<16x1xf32> to vector<16x32xf32>
    %228 = arith.mulf %223, %227 : vector<16x32xf32>
    %229 = vector.broadcast %208 : vector<1x32xf32> to vector<16x32xf32>
    %230 = arith.mulf %228, %229 : vector<16x32xf32>
    %231 = vector.broadcast %210 : vector<1x32xf32> to vector<16x32xf32>
    %232 = arith.addf %230, %231 : vector<16x32xf32>
    %c1_91 = arith.constant 1 : index
    %c0_92 = arith.constant 0 : index
    %c0_93 = arith.constant 0 : index
    %233 = vector.load %arg4[%c1_91, %c0_92, %c0_93] : memref<2x32x64xf32, #tpu.memory_space<vmem>>, vector<1x32x64xf32>
    %234 = vector.shape_cast %233 : vector<1x32x64xf32> to vector<32x64xf32>
    %cst_94 = arith.constant dense<0.000000e+00> : vector<16x64xf32>
    %235 = tpu.matmul %232, %234, %cst_94 {dimension_numbers = #tpu.dot_dimension_numbers<[1], [0], [0], [1], [0, 0, 1, 1], [], []>} : vector<16x32xf32>, vector<32x64xf32>, vector<16x64xf32> -> vector<16x64xf32>
    %c1_95 = arith.constant 1 : index
    %c1_96 = arith.constant 1 : index
    %c0_97 = arith.constant 0 : index
    %236 = vector.load %arg6[%c1_95, %c1_96, %c0_97] : memref<2x8x128xf32, #tpu.memory_space<vmem>>, vector<1x1x64xf32>
    %237 = vector.shape_cast %236 : vector<1x1x64xf32> to vector<1x64xf32>
    %238 = vector.broadcast %237 : vector<1x64xf32> to vector<16x64xf32>
    %239 = arith.addf %235, %238 : vector<16x64xf32>
    %cst_98 = arith.constant 5.000000e-01 : f32
    %240 = vector.broadcast %cst_98 : f32 to vector<16x64xf32>
    %241 = arith.mulf %240, %239 : vector<16x64xf32>
    %cst_99 = arith.constant 4.471500e-02 : f32
    %242 = vector.broadcast %cst_99 : f32 to vector<16x64xf32>
    %243 = arith.mulf %242, %239 : vector<16x64xf32>
    %244 = arith.mulf %243, %239 : vector<16x64xf32>
    %245 = arith.mulf %244, %239 : vector<16x64xf32>
    %246 = arith.addf %239, %245 : vector<16x64xf32>
    %cst_100 = arith.constant 0.797884583 : f32
    %247 = vector.broadcast %cst_100 : f32 to vector<16x64xf32>
    %248 = arith.mulf %247, %246 : vector<16x64xf32>
    %249 = math.tanh %248 : vector<16x64xf32>
    %cst_101 = arith.constant 1.000000e+00 : f32
    %250 = vector.broadcast %cst_101 : f32 to vector<16x64xf32>
    %251 = arith.addf %250, %249 : vector<16x64xf32>
    %252 = arith.mulf %241, %251 : vector<16x64xf32>
    %c1_102 = arith.constant 1 : index
    %c0_103 = arith.constant 0 : index
    %c0_104 = arith.constant 0 : index
    %253 = vector.load %arg5[%c1_102, %c0_103, %c0_104] : memref<2x64x32xf32, #tpu.memory_space<vmem>>, vector<1x64x32xf32>
    %254 = vector.shape_cast %253 : vector<1x64x32xf32> to vector<64x32xf32>
    %cst_105 = arith.constant dense<0.000000e+00> : vector<16x32xf32>
    %255 = tpu.matmul %252, %254, %cst_105 {dimension_numbers = #tpu.dot_dimension_numbers<[1], [0], [0], [1], [0, 0, 1, 1], [], []>} : vector<16x64xf32>, vector<64x32xf32>, vector<16x32xf32> -> vector<16x32xf32>
    %c1_106 = arith.constant 1 : index
    %c2_107 = arith.constant 2 : index
    %c0_108 = arith.constant 0 : index
    %256 = vector.load %arg6[%c1_106, %c2_107, %c0_108] : memref<2x8x128xf32, #tpu.memory_space<vmem>>, vector<1x1x32xf32>
    %257 = vector.shape_cast %256 : vector<1x1x32xf32> to vector<1x32xf32>
    %258 = vector.broadcast %257 : vector<1x32xf32> to vector<16x32xf32>
    %259 = arith.addf %255, %258 : vector<16x32xf32>
    %260 = arith.addf %232, %259 : vector<16x32xf32>
    %c1_109 = arith.constant 1 : index
    %c5_110 = arith.constant 5 : index
    %c0_111 = arith.constant 0 : index
    %261 = vector.load %arg6[%c1_109, %c5_110, %c0_111] : memref<2x8x128xf32, #tpu.memory_space<vmem>>, vector<1x1x32xf32>
    %262 = vector.shape_cast %261 : vector<1x1x32xf32> to vector<1x32xf32>
    %c1_112 = arith.constant 1 : index
    %c6_113 = arith.constant 6 : index
    %c0_114 = arith.constant 0 : index
    %263 = vector.load %arg6[%c1_112, %c6_113, %c0_114] : memref<2x8x128xf32, #tpu.memory_space<vmem>>, vector<1x1x32xf32>
    %264 = vector.shape_cast %263 : vector<1x1x32xf32> to vector<1x32xf32>
    %cst_115 = arith.constant dense<0.000000e+00> : vector<16xf32>
    %265 = vector.multi_reduction <add>, %260, %cst_115 [1] : vector<16x32xf32> to vector<16xf32>
    %266 = vector.shape_cast %265 : vector<16xf32> to vector<16x1xf32>
    %cst_116 = arith.constant 3.200000e+01 : f32
    %267 = vector.broadcast %cst_116 : f32 to vector<16x1xf32>
    %268 = arith.divf %266, %267 : vector<16x1xf32>
    %269 = vector.broadcast %268 : vector<16x1xf32> to vector<16x32xf32>
    %270 = arith.subf %260, %269 : vector<16x32xf32>
    %271 = arith.mulf %270, %270 : vector<16x32xf32>
    %cst_117 = arith.constant dense<0.000000e+00> : vector<16xf32>
    %272 = vector.multi_reduction <add>, %271, %cst_117 [1] : vector<16x32xf32> to vector<16xf32>
    %273 = vector.shape_cast %272 : vector<16xf32> to vector<16x1xf32>
    %cst_118 = arith.constant 3.200000e+01 : f32
    %274 = vector.broadcast %cst_118 : f32 to vector<16x1xf32>
    %275 = arith.divf %273, %274 : vector<16x1xf32>
    %276 = vector.broadcast %268 : vector<16x1xf32> to vector<16x32xf32>
    %277 = arith.subf %260, %276 : vector<16x32xf32>
    %cst_119 = arith.constant 9.99999996E-13 : f32
    %278 = vector.broadcast %cst_119 : f32 to vector<16x1xf32>
    %279 = arith.addf %275, %278 : vector<16x1xf32>
    %280 = math.rsqrt %279 : vector<16x1xf32>
    %281 = vector.broadcast %280 : vector<16x1xf32> to vector<16x32xf32>
    %282 = arith.mulf %277, %281 : vector<16x32xf32>
    %283 = vector.broadcast %262 : vector<1x32xf32> to vector<16x32xf32>
    %284 = arith.mulf %282, %283 : vector<16x32xf32>
    %285 = vector.broadcast %264 : vector<1x32xf32> to vector<16x32xf32>
    %286 = arith.addf %284, %285 : vector<16x32xf32>
    %287 = tpu.iota {dimensions = array<i32: 1>} : vector<2x16xi32>
    %288 = tpu.iota {dimensions = array<i32: 0>} : vector<2x16xi32>
    %c8_i32 = arith.constant 8 : i32
    %289 = vector.broadcast %c8_i32 : i32 to vector<2x16xi32>
    %290 = arith.muli %289, %288 : vector<2x16xi32>
    %291 = arith.cmpi eq, %287, %290 : vector<2x16xi32>
    %292 = arith.extui %291 : vector<2x16xi1> to vector<2x16xi32>
    %293 = arith.sitofp %292 : vector<2x16xi32> to vector<2x16xf32>
    %cst_120 = arith.constant dense<0.000000e+00> : vector<2x32xf32>
    %294 = tpu.matmul %293, %286, %cst_120 {dimension_numbers = #tpu.dot_dimension_numbers<[1], [0], [0], [1], [0, 0, 1, 1], [], []>} : vector<2x16xf32>, vector<16x32xf32>, vector<2x32xf32> -> vector<2x32xf32>
    %c0_121 = arith.constant 0 : index
    %c0_122 = arith.constant 0 : index
    %295 = vector.load %arg7[%c0_121, %c0_122] : memref<33x128xf32, #tpu.memory_space<vmem>>, vector<32x128xf32>
    %cst_123 = arith.constant dense<0.000000e+00> : vector<2x128xf32>
    %296 = tpu.matmul %294, %295, %cst_123 {dimension_numbers = #tpu.dot_dimension_numbers<[1], [0], [0], [1], [0, 0, 1, 1], [], []>} : vector<2x32xf32>, vector<32x128xf32>, vector<2x128xf32> -> vector<2x128xf32>
    %c32 = arith.constant 32 : index
    %c0_124 = arith.constant 0 : index
    %297 = vector.load %arg7[%c32, %c0_124] : memref<33x128xf32, #tpu.memory_space<vmem>>, vector<1x128xf32>
    %298 = vector.broadcast %297 : vector<1x128xf32> to vector<2x128xf32>
    %299 = arith.addf %296, %298 : vector<2x128xf32>
    %c0_125 = arith.constant 0 : index
    %c0_126 = arith.constant 0 : index
    %300 = vector.load %arg8[%c0_125, %c0_126] : memref<2x128xf32, #tpu.memory_space<vmem>>, vector<2x128xf32>
    tpu.vector_store %arg8[%c0_125, %c0_126], %299 {strides = array<i32>} : memref<2x128xf32, #tpu.memory_space<vmem>>, vector<2x128xf32>,
    return
  }
}

</mosaic_0001>

<llo_original>
// kernel: tpu_custom_call.1
$region0: #{tpu_custom_call.1}
  #allocation0 [shape = 'u32[]', space=smem, size = 0x4, offset = 0x4, fixed_abs, tag = 'smem constant byte address 0x4 - core index']
  #allocation1 [shape = 'u32[144,128]{1,0:T(1,128)}', space=vmem, size = 0x12000, scoped, tag = 'internal scratch']
  %s0 = inlined_call_operand.vmem [shape: s32[16,1], index: 0, kind: input, shape index: {}]
  %s1 = inlined_call_operand.vmem [shape: f32[138,32], index: 1, kind: input, shape index: {}]
  %s2 = inlined_call_operand.vmem [shape: f32[2,12,33,8], index: 2, kind: input, shape index: {}]
  %s3 = inlined_call_operand.vmem [shape: f32[2,4,8,32], index: 3, kind: input, shape index: {}]
  %s4 = inlined_call_operand.vmem [shape: f32[2,32,64], index: 4, kind: input, shape index: {}]
  %s5 = inlined_call_operand.vmem [shape: f32[2,64,32], index: 5, kind: input, shape index: {}]
  %s6 = inlined_call_operand.vmem [shape: f32[2,8,128], index: 6, kind: input, shape index: {}]
  %s7 = inlined_call_operand.vmem [shape: f32[33,128], index: 7, kind: input, shape index: {}]
  %s8 = inlined_call_operand.hbm [shape: f32[2,128], index: 8, kind: output, shape index: {}]
  %s9 = sld [smem:[#allocation0]]
  $region42: #{tpu_custom_call.1} parent=0
    _
  %s11 = ssub.s32 1, %s9
  %s12 = scalar_select 0, %s11, %s9
  $region1: #{tpu_custom_call.1} parent=0
    #allocation2 [shape = 'u8[1024]{0}', space=vmem, size = 0x400, scoped, tag = 'output window, operand 0, single buffered']
    #allocation3 [shape = 's32[1]{0}', space=sflag, size = 0x4, scoped, tag = 'scoped memory for tpu_custom_call.1']
    %13 = vsyncpa [#allocation3], 0
    // Predicated region
    $region2: #{tpu_custom_call.1} parent=1 // pred_check
      _
    $region3: #{tpu_custom_call.1} parent=1 // pred_check_branch
      %15 = sbr.rel (0) target = $region5
    $region4: #{tpu_custom_call.1} parent=1 // pred_region
      _
    $region5: #{tpu_custom_call.1} parent=1 // pred_fallthru
      _
    // Predicated region
    $region6: #{tpu_custom_call.1} parent=1 // pred_check
      _
    $region7: #{tpu_custom_call.1} parent=1 // pred_check_branch
      %17 = sbr.rel (0) target = $region9
    $region8: #{tpu_custom_call.1} parent=1 // pred_region
      _
    $region9: #{tpu_custom_call.1} parent=1 // pred_fallthru
      _
    // Predicated region
    $region10: #{tpu_custom_call.1} parent=1 // pred_check
      _
    $region11: #{tpu_custom_call.1} parent=1 // pred_check_branch
      %19 = sbr.rel (0) target = $region13
    $region12: #{tpu_custom_call.1} parent=1 // pred_region
      _
    $region13: #{tpu_custom_call.1} parent=1 // pred_fallthru
      _
    // Predicated region
    $region14: #{tpu_custom_call.1} parent=1 // pred_check
      _
    $region15: #{tpu_custom_call.1} parent=1 // pred_check_branch
      %21 = sbr.rel (0) target = $region17
    $region16: #{tpu_custom_call.1} parent=1 // pred_region
      _
    $region17: #{tpu_custom_call.1} parent=1 // pred_fallthru
      _
    // Predicated region
    $region18: #{tpu_custom_call.1} parent=1 // pred_check
      _
    $region19: #{tpu_custom_call.1} parent=1 // pred_check_branch
      %23 = sbr.rel (0) target = $region21
    $region20: #{tpu_custom_call.1} parent=1 // pred_region
      _
    $region21: #{tpu_custom_call.1} parent=1 // pred_fallthru
      _
    // Predicated region
    $region22: #{tpu_custom_call.1} parent=1 // pred_check
      _
    $region23: #{tpu_custom_call.1} parent=1 // pred_check_branch
      %25 = sbr.rel (0) target = $region25
    $region24: #{tpu_custom_call.1} parent=1 // pred_region
      _
    $region25: #{tpu_custom_call.1} parent=1 // pred_fallthru
      _
    // Predicated region
    $region26: #{tpu_custom_call.1} parent=1 // pred_check
      _
    $region27: #{tpu_custom_call.1} parent=1 // pred_check_branch
      %27 = sbr.rel (0) target = $region29
    $region28: #{tpu_custom_call.1} parent=1 // pred_region
      _
    $region29: #{tpu_custom_call.1} parent=1 // pred_fallthru
      _
    // Predicated region
    $region30: #{tpu_custom_call.1} parent=1 // pred_check
      _
    $region31: #{tpu_custom_call.1} parent=1 // pred_check_branch
      %29 = sbr.rel (0) target = $region33
    $region32: #{tpu_custom_call.1} parent=1 // pred_region
      _
    $region33: #{tpu_custom_call.1} parent=1 // pred_fallthru
      _
    %v30 = vld [vmem:[%s0] sm:$0xff]
    %v31 = vld [vmem:[%s0 + $0x8] sm:$0xff]
    %v32 = vlaneseq
    %v33 = vand.u32 %v32, 127
    %34 = vset.pattern.permute.xlu0 0
    %35 = vperm.xlu0 %34, %v30
    %v36 = vpop.permute.xlu0 %35
    %37 = vset.pattern.permute.xlu0 0
    %38 = vperm.xlu0 %37, %v31
    %v39 = vpop.permute.xlu0 %38
    %vm40 = vcmp.eq.s32.totalorder %v36, %v33
    %vm41 = vcmp.eq.s32.totalorder %v39, %v33
    %v42 = vsel %vm40, 1, 0
    %v43 = vsel %vm41, 1, 0
    %v44 = vcvt.s32.f32 %v42
    %v45 = vcvt.s32.f32 %v43
    %v46 = vld [vmem:[%s1] sm:$0xff]
    %v47 = vld [vmem:[%s1 + $0x8] sm:$0xff]
    %v48 = vld [vmem:[%s1 + $0x10] sm:$0xff]
    %v49 = vld [vmem:[%s1 + $0x18] sm:$0xff]
    %v50 = vld [vmem:[%s1 + $0x20] sm:$0xff]
    %v51 = vld [vmem:[%s1 + $0x28] sm:$0xff]
    %v52 = vld [vmem:[%s1 + $0x30] sm:$0xff]
    %v53 = vld [vmem:[%s1 + $0x38] sm:$0xff]
    %v54 = vld [vmem:[%s1 + $0x40] sm:$0xff]
    %v55 = vld [vmem:[%s1 + $0x48] sm:$0xff]
    %v56 = vld [vmem:[%s1 + $0x50] sm:$0xff]
    %v57 = vld [vmem:[%s1 + $0x58] sm:$0xff]
    %v58 = vld [vmem:[%s1 + $0x60] sm:$0xff]
    %v59 = vld [vmem:[%s1 + $0x68] sm:$0xff]
    %v60 = vld [vmem:[%s1 + $0x70] sm:$0xff]
    %v61 = vld [vmem:[%s1 + $0x78] sm:$0xff]
    %62 = vmatprep.subr.mxu0 0.0
    %63 = vmatpush1.msra.mxu0 %v46
    %64 = vmatprep.subr.mxu0 0.0
    %65 = vmatpush1.msra.mxu0 %v47
    %66 = vmatprep.subr.mxu0 0.0
    %67 = vmatpush1.msra.mxu0 %v48
    %68 = vmatprep.subr.mxu0 0.0
    %69 = vmatpush1.msra.mxu0 %v49
    %70 = vmatprep.subr.mxu0 0.0
    %71 = vmatpush1.msra.mxu0 %v50
    %72 = vmatprep.subr.mxu0 0.0
    %73 = vmatpush1.msra.mxu0 %v51
    %74 = vmatprep.subr.mxu0 0.0
    %75 = vmatpush1.msra.mxu0 %v52
    %76 = vmatprep.subr.mxu0 0.0
    %77 = vmatpush1.msra.mxu0 %v53
    %78 = vmatprep.subr.mxu0 0.0
    %79 = vmatpush1.msra.mxu0 %v54
    %80 = vmatprep.subr.mxu0 0.0
    %81 = vmatpush1.msra.mxu0 %v55
    %82 = vmatprep.subr.mxu0 0.0
    %83 = vmatpush1.msra.mxu0 %v56
    %84 = vmatprep.subr.mxu0 0.0
    %85 = vmatpush1.msra.mxu0 %v57
    %86 = vmatprep.subr.mxu0 0.0
    %87 = vmatpush1.msra.mxu0 %v58
    %88 = vmatprep.subr.mxu0 0.0
    %89 = vmatpush1.msra.mxu0 %v59
    %90 = vmatprep.subr.mxu0 0.0
    %91 = vmatpush1.msra.mxu0 %v60
    %92 = vmatprep.subr.mxu0 0.0
    %93 = vmatpush1.msra.mxu0 %v61
    %94 = vmatprep.subr.mxu0 0.0
    %95 = vmatpush1.msra.mxu0 0.0
    %96 = vmatprep.subr.mxu0 0.0
    %97 = vmatpush1.msra.mxu0 0.0
    %98 = vmatprep.subr.mxu0 0.0
    %99 = vmatpush1.msra.mxu0 0.0
    %100 = vmatprep.subr.mxu0 0.0
    %101 = vmatpush1.msra.mxu0 0.0
    %102 = vmatprep.subr.mxu0 0.0
    %103 = vmatpush1.msra.mxu0 0.0
    %104 = vmatprep.subr.mxu0 0.0
    %105 = vmatpush1.msra.mxu0 0.0
    %106 = vmatprep.subr.mxu0 0.0
    %107 = vmatpush1.msra.mxu0 0.0
    %108 = vmatprep.subr.mxu0 0.0
    %109 = vmatpush1.msra.mxu0 0.0
    %110 = vmatprep.subr.mxu0 0.0
    %111 = vmatpush1.msra.mxu0 0.0
    %112 = vmatprep.subr.mxu0 0.0
    %113 = vmatpush1.msra.mxu0 0.0
    %114 = vmatprep.subr.mxu0 0.0
    %115 = vmatpush1.msra.mxu0 0.0
    %116 = vmatprep.subr.mxu0 0.0
    %117 = vmatpush1.msra.mxu0 0.0
    %118 = vmatprep.subr.mxu0 0.0
    %119 = vmatpush1.msra.mxu0 0.0
    %120 = vmatprep.subr.mxu0 0.0
    %121 = vmatpush1.msra.mxu0 0.0
    %122 = vmatprep.subr.mxu0 0.0
    %123 = vmatpush1.msra.mxu0 0.0
    %124 = vmatprep.subr.mxu0 0.0
    %125 = vmatpush1.msra.mxu0 0.0
    %126 = vmatprep.mubr.f32.mxu0 0.0
    %127 = vmatmul.mubr.f32.gmra.mrb[0].mxu0 %v44
    %v128 = vpop.f32.mrb[0].mxu0
    %v129 = vadd.f32 0.0, %v128
    %v130 = vpop.f32.mrb[0].mxu0
    %131 = vmatprep.mubr.f32.mxu0 0.0
    %132 = vmatmul.mubr.f32.gmra.mrb[0].mxu0 %v45
    %v133 = vpop.f32.mrb[0].mxu0
    %v134 = vadd.f32 0.0, %v133
    %v135 = vpop.f32.mrb[0].mxu0
    %136 = vdwg.mxu0
    %v137 = vld [vmem:[%s1 + $0x80] sm:$0xff]
    %v138 = vadd.f32 %v129, %v137
    %v139 = vadd.f32 %v134, %v137
    %v140 = vld [vmem:[%s1 + $0x88] sm:$0x1]
    %v141 = vld [vmem:[%s1 + $0x89] sm:$0x1]
    %vm142 = vcmask 261120
    %v143 = vsel %vm142, %v138, 0.0
    %144 = vadd.xlane.f32.xlu0 %v143
    %v145 = vpop.xlane.xlu0 %144
    %v146 = vsel %vm142, %v139, 0.0
    %147 = vadd.xlane.f32.xlu0 %v146
    %v148 = vpop.xlane.xlu0 %147
    %v149 = vrcp.pop 32.0
    %v150 = vmul.f32 %v145, %v149
    %v151 = vmul.f32 %v148, %v149
    %v152 = vsub.f32 %v138, %v150
    %v153 = vsub.f32 %v139, %v151
    %v154 = vmul.f32 %v152, %v152
    %v155 = vmul.f32 %v153, %v153
    %v156 = vsel %vm142, %v154, 0.0
    %157 = vadd.xlane.f32.xlu0 %v156
    %v158 = vpop.xlane.xlu0 %157
    %v159 = vsel %vm142, %v155, 0.0
    %160 = vadd.xlane.f32.xlu0 %v159
    %v161 = vpop.xlane.xlu0 %160
    %v162 = vmul.f32 %v158, %v149
    %v163 = vmul.f32 %v161, %v149
    %v164 = vadd.f32 %v162, 1e-12
    %v165 = vadd.f32 %v163, 1e-12
    %v166 = vrsqrt.pop %v164
    %v167 = vrsqrt.pop %v165
    %v168 = vmul.f32 %v152, %v166
    %v169 = vmul.f32 %v153, %v167
    %v170 = vlaneseq
    %v171 = vshrl.u32 %v170, 7
    %v172 = vsub.s32 0, %v171
    %v173 = vrot.slane %v140, %v172
    %v174 = vmul.f32 %v168, %v173
    %v175 = vmul.f32 %v169, %v173
    %v176 = vlaneseq
    %v177 = vshrl.u32 %v176, 7
    %v178 = vsub.s32 0, %v177
    %v179 = vrot.slane %v141, %v178
    %v180 = vadd.f32 %v174, %v179
    %v181 = vadd.f32 %v175, %v179
    %v182 = vsel %vm142, %v180, 1.0
    %v183 = vsel %vm142, %v181, 1.0
    %v184 = vld [vmem:[%s2] sm:$0xff]
    %v185 = vld [vmem:[%s2 + $0x8] sm:$0xff]
    %v186 = vld [vmem:[%s2 + $0x10] sm:$0xff]
    %v187 = vld [vmem:[%s2 + $0x18] sm:$0xff]
    %v188 = vld [vmem:[%s2 + $0x20] sm:$0x1]
    %v189 = vld [vmem:[%s2 + $0x28] sm:$0xff]
    %v190 = vld [vmem:[%s2 + $0x30] sm:$0xff]
    %v191 = vld [vmem:[%s2 + $0x38] sm:$0xff]
    %v192 = vld [vmem:[%s2 + $0x40] sm:$0xff]
    %v193 = vld [vmem:[%s2 + $0x48] sm:$0x1]
    %v194 = vld [vmem:[%s2 + $0x50] sm:$0xff]
    %v195 = vld [vmem:[%s2 + $0x58] sm:$0xff]
    %v196 = vld [vmem:[%s2 + $0x60] sm:$0xff]
    %v197 = vld [vmem:[%s2 + $0x68] sm:$0xff]
    %v198 = vld [vmem:[%s2 + $0x70] sm:$0x1]
    %v199 = vld [vmem:[%s2 + $0x78] sm:$0xff]
    %v200 = vld [vmem:[%s2 + $0x80] sm:$0xff]
    %v201 = vld [vmem:[%s2 + $0x88] sm:$0xff]
    %v202 = vld [vmem:[%s2 + $0x90] sm:$0xff]
    %v203 = vld [vmem:[%s2 + $0x98] sm:$0x1]
    %v204 = vld [vmem:[%s2 + $0xa0] sm:$0xff]
    %v205 = vld [vmem:[%s2 + $0xa8] sm:$0xff]
    %v206 = vld [vmem:[%s2 + $0xb0] sm:$0xff]
    %v207 = vld [vmem:[%s2 + $0xb8] sm:$0xff]
    %v208 = vld [vmem:[%s2 + $0xc0] sm:$0x1]
    %v209 = vld [vmem:[%s2 + $0xc8] sm:$0xff]
    %v210 = vld [vmem:[%s2 + $0xd0] sm:$0xff]
    %v211 = vld [vmem:[%s2 + $0xd8] sm:$0xff]
    %v212 = vld [vmem:[%s2 + $0xe0] sm:$0xff]
    %v213 = vld [vmem:[%s2 + $0xe8] sm:$0x1]
    %v214 = vld [vmem:[%s2 + $0xf0] sm:$0xff]
    %v215 = vld [vmem:[%s2 + $0xf8] sm:$0xff]
    %v216 = vld [vmem:[%s2 + $0x100] sm:$0xff]
    %v217 = vld [vmem:[%s2 + $0x108] sm:$0xff]
    %v218 = vld [vmem:[%s2 + $0x110] sm:$0x1]
    %v219 = vld [vmem:[%s2 + $0x118] sm:$0xff]
    %v220 = vld [vmem:[%s2 + $0x120] sm:$0xff]
    %v221 = vld [vmem:[%s2 + $0x128] sm:$0xff]
    %v222 = vld [vmem:[%s2 + $0x130] sm:$0xff]
    %v223 = vld [vmem:[%s2 + $0x138] sm:$0x1]
    %v224 = vld [vmem:[%s2 + $0x140] sm:$0xff]
    %v225 = vld [vmem:[%s2 + $0x148] sm:$0xff]
    %v226 = vld [vmem:[%s2 + $0x150] sm:$0xff]
    %v227 = vld [vmem:[%s2 + $0x158] sm:$0xff]
    %v228 = vld [vmem:[%s2 + $0x160] sm:$0x1]
    %v229 = vld [vmem:[%s2 + $0x168] sm:$0xff]
    %v230 = vld [vmem:[%s2 + $0x170] sm:$0xff]
    %v231 = vld [vmem:[%s2 + $0x178] sm:$0xff]
    %v232 = vld [vmem:[%s2 + $0x180] sm:$0xff]
    %v233 = vld [vmem:[%s2 + $0x188] sm:$0x1]
    %v234 = vld [vmem:[%s2 + $0x190] sm:$0xff]
    %v235 = vld [vmem:[%s2 + $0x198] sm:$0xff]
    %v236 = vld [vmem:[%s2 + $0x1a0] sm:$0xff]
    %v237 = vld [vmem:[%s2 + $0x1a8] sm:$0xff]
    %v238 = vld [vmem:[%s2 + $0x1b0] sm:$0x1]
    %v239 = vld [vmem:[%s2 + $0x1b8] sm:$0xff]
    %v240 = vld [vmem:[%s2 + $0x1c0] sm:$0xff]
    %v241 = vld [vmem:[%s2 + $0x1c8] sm:$0xff]
    %v242 = vld [vmem:[%s2 + $0x1d0] sm:$0xff]
    %v243 = vld [vmem:[%s2 + $0x1d8] sm:$0x1]
    %vm244 = vcmask 269312
    %v246 = vsel %vm244, %v182, 0
    %v249 = vsel %vm244, %v183, 0
    %vm251 = vcmask 1040384
    %v253 = vsel %vm251, %v188, 0
    %255 = vmatprep.subr.mxu0 0.0
    %256 = vmatpush1.msra.mxu0 %v184
    %257 = vmatprep.subr.mxu0 0.0
    %258 = vmatpush1.msra.mxu0 %v185
    %259 = vmatprep.subr.mxu0 0.0
    %260 = vmatpush1.msra.mxu0 %v186
    %261 = vmatprep.subr.mxu0 0.0
    %262 = vmatpush1.msra.mxu0 %v187
    %263 = vmatprep.subr.mxu0 0.0
    %264 = vmatpush1.msra.mxu0 %v253
    %265 = vmatprep.subr.mxu0 0.0
    %266 = vmatpush1.msra.mxu0 0.0
    %267 = vmatprep.subr.mxu0 0.0
    %268 = vmatpush1.msra.mxu0 0.0
    %269 = vmatprep.subr.mxu0 0.0
    %270 = vmatpush1.msra.mxu0 0.0
    %271 = vmatprep.subr.mxu0 0.0
    %272 = vmatpush1.msra.mxu0 0.0
    %273 = vmatprep.subr.mxu0 0.0
    %274 = vmatpush1.msra.mxu0 0.0
    %275 = vmatprep.subr.mxu0 0.0
    %276 = vmatpush1.msra.mxu0 0.0
    %277 = vmatprep.subr.mxu0 0.0
    %278 = vmatpush1.msra.mxu0 0.0
    %279 = vmatprep.subr.mxu0 0.0
    %280 = vmatpush1.msra.mxu0 0.0
    %281 = vmatprep.subr.mxu0 0.0
    %282 = vmatpush1.msra.mxu0 0.0
    %283 = vmatprep.subr.mxu0 0.0
    %284 = vmatpush1.msra.mxu0 0.0
    %285 = vmatprep.subr.mxu0 0.0
    %286 = vmatpush1.msra.mxu0 0.0
    %287 = vmatprep.subr.mxu0 0.0
    %288 = vmatpush1.msra.mxu0 0.0
    %289 = vmatprep.subr.mxu0 0.0
    %290 = vmatpush1.msra.mxu0 0.0
    %291 = vmatprep.subr.mxu0 0.0
    %292 = vmatpush1.msra.mxu0 0.0
    %293 = vmatprep.subr.mxu0 0.0
    %294 = vmatpush1.msra.mxu0 0.0
    %295 = vmatprep.subr.mxu0 0.0
    %296 = vmatpush1.msra.mxu0 0.0
    %297 = vmatprep.subr.mxu0 0.0
    %298 = vmatpush1.msra.mxu0 0.0
    %299 = vmatprep.subr.mxu0 0.0
    %300 = vmatpush1.msra.mxu0 0.0
    %301 = vmatprep.subr.mxu0 0.0
    %302 = vmatpush1.msra.mxu0 0.0
    %303 = vmatprep.subr.mxu0 0.0
    %304 = vmatpush1.msra.mxu0 0.0
    %305 = vmatprep.subr.mxu0 0.0
    %306 = vmatpush1.msra.mxu0 0.0
    %307 = vmatprep.subr.mxu0 0.0
    %308 = vmatpush1.msra.mxu0 0.0
    %309 = vmatprep.subr.mxu0 0.0
    %310 = vmatpush1.msra.mxu0 0.0
    %311 = vmatprep.subr.mxu0 0.0
    %312 = vmatpush1.msra.mxu0 0.0
    %313 = vmatprep.subr.mxu0 0.0
    %314 = vmatpush1.msra.mxu0 0.0
    %315 = vmatprep.subr.mxu0 0.0
    %316 = vmatpush1.msra.mxu0 0.0
    %317 = vmatprep.subr.mxu0 0.0
    %318 = vmatpush1.msra.mxu0 0.0
    %319 = vmatprep.mubr.f32.mxu0 0.0
    %320 = vmatmul.mubr.f32.gmra.mrb[0].mxu0 %v246
    %v321 = vpop.f32.mrb[0].mxu0
    %v322 = vadd.f32 0.0, %v321
    %v323 = vpop.f32.mrb[0].mxu0
    %324 = vmatprep.mubr.f32.mxu0 0.0
    %325 = vmatmul.mubr.f32.gmra.mrb[0].mxu0 %v249
    %v326 = vpop.f32.mrb[0].mxu0
    %v327 = vadd.f32 0.0, %v326
    %v328 = vpop.f32.mrb[0].mxu0
    %329 = vdwg.mxu0
    %v331 = vsel %vm251, %v193, 0
    %333 = vmatprep.subr.mxu0 0.0
    %334 = vmatpush1.msra.mxu0 %v189
    %335 = vmatprep.subr.mxu0 0.0
    %336 = vmatpush1.msra.mxu0 %v190
    %337 = vmatprep.subr.mxu0 0.0
    %338 = vmatpush1.msra.mxu0 %v191
    %339 = vmatprep.subr.mxu0 0.0
    %340 = vmatpush1.msra.mxu0 %v192
    %341 = vmatprep.subr.mxu0 0.0
    %342 = vmatpush1.msra.mxu0 %v331
    %343 = vmatprep.subr.mxu0 0.0
    %344 = vmatpush1.msra.mxu0 0.0
    %345 = vmatprep.subr.mxu0 0.0
    %346 = vmatpush1.msra.mxu0 0.0
    %347 = vmatprep.subr.mxu0 0.0
    %348 = vmatpush1.msra.mxu0 0.0
    %349 = vmatprep.subr.mxu0 0.0
    %350 = vmatpush1.msra.mxu0 0.0
    %351 = vmatprep.subr.mxu0 0.0
    %352 = vmatpush1.msra.mxu0 0.0
    %353 = vmatprep.subr.mxu0 0.0
    %354 = vmatpush1.msra.mxu0 0.0
    %355 = vmatprep.subr.mxu0 0.0
    %356 = vmatpush1.msra.mxu0 0.0
    %357 = vmatprep.subr.mxu0 0.0
    %358 = vmatpush1.msra.mxu0 0.0
    %359 = vmatprep.subr.mxu0 0.0
    %360 = vmatpush1.msra.mxu0 0.0
    %361 = vmatprep.subr.mxu0 0.0
    %362 = vmatpush1.msra.mxu0 0.0
    %363 = vmatprep.subr.mxu0 0.0
    %364 = vmatpush1.msra.mxu0 0.0
    %365 = vmatprep.subr.mxu0 0.0
    %366 = vmatpush1.msra.mxu0 0.0
    %367 = vmatprep.subr.mxu0 0.0
    %368 = vmatpush1.msra.mxu0 0.0
    %369 = vmatprep.subr.mxu0 0.0
    %370 = vmatpush1.msra.mxu0 0.0
    %371 = vmatprep.subr.mxu0 0.0
    %372 = vmatpush1.msra.mxu0 0.0
    %373 = vmatprep.subr.mxu0 0.0
    %374 = vmatpush1.msra.mxu0 0.0
    %375 = vmatprep.subr.mxu0 0.0
    %376 = vmatpush1.msra.mxu0 0.0
    %377 = vmatprep.subr.mxu0 0.0
    %378 = vmatpush1.msra.mxu0 0.0
    %379 = vmatprep.subr.mxu0 0.0
    %380 = vmatpush1.msra.mxu0 0.0
    %381 = vmatprep.subr.mxu0 0.0
    %382 = vmatpush1.msra.mxu0 0.0
    %383 = vmatprep.subr.mxu0 0.0
    %384 = vmatpush1.msra.mxu0 0.0
    %385 = vmatprep.subr.mxu0 0.0
    %386 = vmatpush1.msra.mxu0 0.0
    %387 = vmatprep.subr.mxu0 0.0
    %388 = vmatpush1.msra.mxu0 0.0
    %389 = vmatprep.subr.mxu0 0.0
    %390 = vmatpush1.msra.mxu0 0.0
    %391 = vmatprep.subr.mxu0 0.0
    %392 = vmatpush1.msra.mxu0 0.0
    %393 = vmatprep.subr.mxu0 0.0
    %394 = vmatpush1.msra.mxu0 0.0
    %395 = vmatprep.subr.mxu0 0.0
    %396 = vmatpush1.msra.mxu0 0.0
    %397 = vmatprep.mubr.f32.mxu0 0.0
    %398 = vmatmul.mubr.f32.gmra.mrb[0].mxu0 %v246
    %v399 = vpop.f32.mrb[0].mxu0
    %v400 = vadd.f32 0.0, %v399
    %v401 = vpop.f32.mrb[0].mxu0
    %402 = vmatprep.mubr.f32.mxu0 0.0
    %403 = vmatmul.mubr.f32.gmra.mrb[0].mxu0 %v249
    %v404 = vpop.f32.mrb[0].mxu0
    %v405 = vadd.f32 0.0, %v404
    %v406 = vpop.f32.mrb[0].mxu0
    %407 = vdwg.mxu0
    %v409 = vsel %vm251, %v198, 0
    %411 = vmatprep.subr.mxu0 0.0
    %412 = vmatpush1.msra.mxu0 %v194
    %413 = vmatprep.subr.mxu0 0.0
    %414 = vmatpush1.msra.mxu0 %v195
    %415 = vmatprep.subr.mxu0 0.0
    %416 = vmatpush1.msra.mxu0 %v196
    %417 = vmatprep.subr.mxu0 0.0
    %418 = vmatpush1.msra.mxu0 %v197
    %419 = vmatprep.subr.mxu0 0.0
    %420 = vmatpush1.msra.mxu0 %v409
    %421 = vmatprep.subr.mxu0 0.0
    %422 = vmatpush1.msra.mxu0 0.0
    %423 = vmatprep.subr.mxu0 0.0
    %424 = vmatpush1.msra.mxu0 0.0
    %425 = vmatprep.subr.mxu0 0.0
    %426 = vmatpush1.msra.mxu0 0.0
    %427 = vmatprep.subr.mxu0 0.0
    %428 = vmatpush1.msra.mxu0 0.0
    %429 = vmatprep.subr.mxu0 0.0
    %430 = vmatpush1.msra.mxu0 0.0
    %431 = vmatprep.subr.mxu0 0.0
    %432 = vmatpush1.msra.mxu0 0.0
    %433 = vmatprep.subr.mxu0 0.0
    %434 = vmatpush1.msra.mxu0 0.0
    %435 = vmatprep.subr.mxu0 0.0
    %436 = vmatpush1.msra.mxu0 0.0
    %437 = vmatprep.subr.mxu0 0.0
    %438 = vmatpush1.msra.mxu0 0.0
    %439 = vmatprep.subr.mxu0 0.0
    %440 = vmatpush1.msra.mxu0 0.0
    %441 = vmatprep.subr.mxu0 0.0
    %442 = vmatpush1.msra.mxu0 0.0
    %443 = vmatprep.subr.mxu0 0.0
    %444 = vmatpush1.msra.mxu0 0.0
    %445 = vmatprep.subr.mxu0 0.0
    %446 = vmatpush1.msra.mxu0 0.0
    %447 = vmatprep.subr.mxu0 0.0
    %448 = vmatpush1.msra.mxu0 0.0
    %449 = vmatprep.subr.mxu0 0.0
    %450 = vmatpush1.msra.mxu0 0.0
    %451 = vmatprep.subr.mxu0 0.0
    %452 = vmatpush1.msra.mxu0 0.0
    %453 = vmatprep.subr.mxu0 0.0
    %454 = vmatpush1.msra.mxu0 0.0
    %455 = vmatprep.subr.mxu0 0.0
    %456 = vmatpush1.msra.mxu0 0.0
    %457 = vmatprep.subr.mxu0 0.0
    %458 = vmatpush1.msra.mxu0 0.0
    %459 = vmatprep.subr.mxu0 0.0
    %460 = vmatpush1.msra.mxu0 0.0
    %461 = vmatprep.subr.mxu0 0.0
    %462 = vmatpush1.msra.mxu0 0.0
    %463 = vmatprep.subr.mxu0 0.0
    %464 = vmatpush1.msra.mxu0 0.0
    %465 = vmatprep.subr.mxu0 0.0
    %466 = vmatpush1.msra.mxu0 0.0
    %467 = vmatprep.subr.mxu0 0.0
    %468 = vmatpush1.msra.mxu0 0.0
    %469 = vmatprep.subr.mxu0 0.0
    %470 = vmatpush1.msra.mxu0 0.0
    %471 = vmatprep.subr.mxu0 0.0
    %472 = vmatpush1.msra.mxu0 0.0
    %473 = vmatprep.subr.mxu0 0.0
    %474 = vmatpush1.msra.mxu0 0.0
    %475 = vmatprep.mubr.f32.mxu0 0.0
    %476 = vmatmul.mubr.f32.gmra.mrb[0].mxu0 %v246
    %v477 = vpop.f32.mrb[0].mxu0
    %v478 = vadd.f32 0.0, %v477
    %v479 = vpop.f32.mrb[0].mxu0
    %480 = vmatprep.mubr.f32.mxu0 0.0
    %481 = vmatmul.mubr.f32.gmra.mrb[0].mxu0 %v249
    %v482 = vpop.f32.mrb[0].mxu0
    %v483 = vadd.f32 0.0, %v482
    %v484 = vpop.f32.mrb[0].mxu0
    %485 = vdwg.mxu0
    %v487 = vsel %vm251, %v203, 0
    %489 = vmatprep.subr.mxu0 0.0
    %490 = vmatpush1.msra.mxu0 %v199
    %491 = vmatprep.subr.mxu0 0.0
    %492 = vmatpush1.msra.mxu0 %v200
    %493 = vmatprep.subr.mxu0 0.0
    %494 = vmatpush1.msra.mxu0 %v201
    %495 = vmatprep.subr.mxu0 0.0
    %496 = vmatpush1.msra.mxu0 %v202
    %497 = vmatprep.subr.mxu0 0.0
    %498 = vmatpush1.msra.mxu0 %v487
    %499 = vmatprep.subr.mxu0 0.0
    %500 = vmatpush1.msra.mxu0 0.0
    %501 = vmatprep.subr.mxu0 0.0
    %502 = vmatpush1.msra.mxu0 0.0
    %503 = vmatprep.subr.mxu0 0.0
    %504 = vmatpush1.msra.mxu0 0.0
    %505 = vmatprep.subr.mxu0 0.0
    %506 = vmatpush1.msra.mxu0 0.0
    %507 = vmatprep.subr.mxu0 0.0
    %508 = vmatpush1.msra.mxu0 0.0
    %509 = vmatprep.subr.mxu0 0.0
    %510 = vmatpush1.msra.mxu0 0.0
    %511 = vmatprep.subr.mxu0 0.0
    %512 = vmatpush1.msra.mxu0 0.0
    %513 = vmatprep.subr.mxu0 0.0
    %514 = vmatpush1.msra.mxu0 0.0
    %515 = vmatprep.subr.mxu0 0.0
    %516 = vmatpush1.msra.mxu0 0.0
    %517 = vmatprep.subr.mxu0 0.0
    %518 = vmatpush1.msra.mxu0 0.0
    %519 = vmatprep.subr.mxu0 0.0
    %520 = vmatpush1.msra.mxu0 0.0
    %521 = vmatprep.subr.mxu0 0.0
    %522 = vmatpush1.msra.mxu0 0.0
    %523 = vmatprep.subr.mxu0 0.0
    %524 = vmatpush1.msra.mxu0 0.0
    %525 = vmatprep.subr.mxu0 0.0
    %526 = vmatpush1.msra.mxu0 0.0
    %527 = vmatprep.subr.mxu0 0.0
    %528 = vmatpush1.msra.mxu0 0.0
    %529 = vmatprep.subr.mxu0 0.0
    %530 = vmatpush1.msra.mxu0 0.0
    %531 = vmatprep.subr.mxu0 0.0
    %532 = vmatpush1.msra.mxu0 0.0
    %533 = vmatprep.subr.mxu0 0.0
    %534 = vmatpush1.msra.mxu0 0.0
    %535 = vmatprep.subr.mxu0 0.0
    %536 = vmatpush1.msra.mxu0 0.0
    %537 = vmatprep.subr.mxu0 0.0
    %538 = vmatpush1.msra.mxu0 0.0
    %539 = vmatprep.subr.mxu0 0.0
    %540 = vmatpush1.msra.mxu0 0.0
    %541 = vmatprep.subr.mxu0 0.0
    %542 = vmatpush1.msra.mxu0 0.0
    %543 = vmatprep.subr.mxu0 0.0
    %544 = vmatpush1.msra.mxu0 0.0
    %545 = vmatprep.subr.mxu0 0.0
    %546 = vmatpush1.msra.mxu0 0.0
    %547 = vmatprep.subr.mxu0 0.0
    %548 = vmatpush1.msra.mxu0 0.0
    %549 = vmatprep.subr.mxu0 0.0
    %550 = vmatpush1.msra.mxu0 0.0
    %551 = vmatprep.subr.mxu0 0.0
    %552 = vmatpush1.msra.mxu0 0.0
    %553 = vmatprep.mubr.f32.mxu0 0.0
    %554 = vmatmul.mubr.f32.gmra.mrb[0].mxu0 %v246
    %v555 = vpop.f32.mrb[0].mxu0
    %v556 = vadd.f32 0.0, %v555
    %v557 = vpop.f32.mrb[0].mxu0
    %558 = vmatprep.mubr.f32.mxu0 0.0
    %559 = vmatmul.mubr.f32.gmra.mrb[0].mxu0 %v249
    %v560 = vpop.f32.mrb[0].mxu0
    %v561 = vadd.f32 0.0, %v560
    %v562 = vpop.f32.mrb[0].mxu0
    %563 = vdwg.mxu0
    %v565 = vsel %vm251, %v208, 0
    %567 = vmatprep.subr.mxu0 0.0
    %568 = vmatpush1.msra.mxu0 %v204
    %569 = vmatprep.subr.mxu0 0.0
    %570 = vmatpush1.msra.mxu0 %v205
    %571 = vmatprep.subr.mxu0 0.0
    %572 = vmatpush1.msra.mxu0 %v206
    %573 = vmatprep.subr.mxu0 0.0
    %574 = vmatpush1.msra.mxu0 %v207
    %575 = vmatprep.subr.mxu0 0.0
    %576 = vmatpush1.msra.mxu0 %v565
    %577 = vmatprep.subr.mxu0 0.0
    %578 = vmatpush1.msra.mxu0 0.0
    %579 = vmatprep.subr.mxu0 0.0
    %580 = vmatpush1.msra.mxu0 0.0
    %581 = vmatprep.subr.mxu0 0.0
    %582 = vmatpush1.msra.mxu0 0.0
    %583 = vmatprep.subr.mxu0 0.0
    %584 = vmatpush1.msra.mxu0 0.0
    %585 = vmatprep.subr.mxu0 0.0
    %586 = vmatpush1.msra.mxu0 0.0
    %587 = vmatprep.subr.mxu0 0.0
    %588 = vmatpush1.msra.mxu0 0.0
    %589 = vmatprep.subr.mxu0 0.0
    %590 = vmatpush1.msra.mxu0 0.0
    %591 = vmatprep.subr.mxu0 0.0
    %592 = vmatpush1.msra.mxu0 0.0
    %593 = vmatprep.subr.mxu0 0.0
    %594 = vmatpush1.msra.mxu0 0.0
    %595 = vmatprep.subr.mxu0 0.0
    %596 = vmatpush1.msra.mxu0 0.0
    %597 = vmatprep.subr.mxu0 0.0
    %598 = vmatpush1.msra.mxu0 0.0
    %599 = vmatprep.subr.mxu0 0.0
    %600 = vmatpush1.msra.mxu0 0.0
    %601 = vmatprep.subr.mxu0 0.0
    %602 = vmatpush1.msra.mxu0 0.0
    %603 = vmatprep.subr.mxu0 0.0
    %604 = vmatpush1.msra.mxu0 0.0
    %605 = vmatprep.subr.mxu0 0.0
    %606 = vmatpush1.msra.mxu0 0.0
    %607 = vmatprep.subr.mxu0 0.0
    %608 = vmatpush1.msra.mxu0 0.0
    %609 = vmatprep.subr.mxu0 0.0
    %610 = vmatpush1.msra.mxu0 0.0
    %611 = vmatprep.subr.mxu0 0.0
    %612 = vmatpush1.msra.mxu0 0.0
    %613 = vmatprep.subr.mxu0 0.0
    %614 = vmatpush1.msra.mxu0 0.0
    %615 = vmatprep.subr.mxu0 0.0
    %616 = vmatpush1.msra.mxu0 0.0
    %617 = vmatprep.subr.mxu0 0.0
    %618 = vmatpush1.msra.mxu0 0.0
    %619 = vmatprep.subr.mxu0 0.0
    %620 = vmatpush1.msra.mxu0 0.0
    %621 = vmatprep.subr.mxu0 0.0
    %622 = vmatpush1.msra.mxu0 0.0
    %623 = vmatprep.subr.mxu0 0.0
    %624 = vmatpush1.msra.mxu0 0.0
    %625 = vmatprep.subr.mxu0 0.0
    %626 = vmatpush1.msra.mxu0 0.0
    %627 = vmatprep.subr.mxu0 0.0
    %628 = vmatpush1.msra.mxu0 0.0
    %629 = vmatprep.subr.mxu0 0.0
    %630 = vmatpush1.msra.mxu0 0.0
    %631 = vmatprep.mubr.f32.mxu0 0.0
    %632 = vmatmul.mubr.f32.gmra.mrb[0].mxu0 %v246
    %v633 = vpop.f32.mrb[0].mxu0
    %v634 = vadd.f32 0.0, %v633
    %v635 = vpop.f32.mrb[0].mxu0
    %636 = vmatprep.mubr.f32.mxu0 0.0
    %637 = vmatmul.mubr.f32.gmra.mrb[0].mxu0 %v249
    %v638 = vpop.f32.mrb[0].mxu0
    %v639 = vadd.f32 0.0, %v638
    %v640 = vpop.f32.mrb[0].mxu0
    %641 = vdwg.mxu0
    %v643 = vsel %vm251, %v213, 0
    %645 = vmatprep.subr.mxu0 0.0
    %646 = vmatpush1.msra.mxu0 %v209
    %647 = vmatprep.subr.mxu0 0.0
    %648 = vmatpush1.msra.mxu0 %v210
    %649 = vmatprep.subr.mxu0 0.0
    %650 = vmatpush1.msra.mxu0 %v211
    %651 = vmatprep.subr.mxu0 0.0
    %652 = vmatpush1.msra.mxu0 %v212
    %653 = vmatprep.subr.mxu0 0.0
    %654 = vmatpush1.msra.mxu0 %v643
    %655 = vmatprep.subr.mxu0 0.0
    %656 = vmatpush1.msra.mxu0 0.0
    %657 = vmatprep.subr.mxu0 0.0
    %658 = vmatpush1.msra.mxu0 0.0
    %659 = vmatprep.subr.mxu0 0.0
    %660 = vmatpush1.msra.mxu0 0.0
    %661 = vmatprep.subr.mxu0 0.0
    %662 = vmatpush1.msra.mxu0 0.0
    %663 = vmatprep.subr.mxu0 0.0
    %664 = vmatpush1.msra.mxu0 0.0
    %665 = vmatprep.subr.mxu0 0.0
    %666 = vmatpush1.msra.mxu0 0.0
    %667 = vmatprep.subr.mxu0 0.0
    %668 = vmatpush1.msra.mxu0 0.0
    %669 = vmatprep.subr.mxu0 0.0
    %670 = vmatpush1.msra.mxu0 0.0
    %671 = vmatprep.subr.mxu0 0.0
    %672 = vmatpush1.msra.mxu0 0.0
    %673 = vmatprep.subr.mxu0 0.0
    %674 = vmatpush1.msra.mxu0 0.0
    %675 = vmatprep.subr.mxu0 0.0
    %676 = vmatpush1.msra.mxu0 0.0
    %677 = vmatprep.subr.mxu0 0.0
    %678 = vmatpush1.msra.mxu0 0.0
    %679 = vmatprep.subr.mxu0 0.0
    %680 = vmatpush1.msra.mxu0 0.0
    %681 = vmatprep.subr.mxu0 0.0
    %682 = vmatpush1.msra.mxu0 0.0
    %683 = vmatprep.subr.mxu0 0.0
    %684 = vmatpush1.msra.mxu0 0.0
    %685 = vmatprep.subr.mxu0 0.0
    %686 = vmatpush1.msra.mxu0 0.0
    %687 = vmatprep.subr.mxu0 0.0
    %688 = vmatpush1.msra.mxu0 0.0
    %689 = vmatprep.subr.mxu0 0.0
    %690 = vmatpush1.msra.mxu0 0.0
    %691 = vmatprep.subr.mxu0 0.0
    %692 = vmatpush1.msra.mxu0 0.0
    %693 = vmatprep.subr.mxu0 0.0
    %694 = vmatpush1.msra.mxu0 0.0
    %695 = vmatprep.subr.mxu0 0.0
    %696 = vmatpush1.msra.mxu0 0.0
    %697 = vmatprep.subr.mxu0 0.0
    %698 = vmatpush1.msra.mxu0 0.0
    %699 = vmatprep.subr.mxu0 0.0
    %700 = vmatpush1.msra.mxu0 0.0
    %701 = vmatprep.subr.mxu0 0.0
    %702 = vmatpush1.msra.mxu0 0.0
    %703 = vmatprep.subr.mxu0 0.0
    %704 = vmatpush1.msra.mxu0 0.0
    %705 = vmatprep.subr.mxu0 0.0
    %706 = vmatpush1.msra.mxu0 0.0
    %707 = vmatprep.subr.mxu0 0.0
    %708 = vmatpush1.msra.mxu0 0.0
    %709 = vmatprep.mubr.f32.mxu0 0.0
    %710 = vmatmul.mubr.f32.gmra.mrb[0].mxu0 %v246
    %v711 = vpop.f32.mrb[0].mxu0
    %v712 = vadd.f32 0.0, %v711
    %v713 = vpop.f32.mrb[0].mxu0
    %714 = vmatprep.mubr.f32.mxu0 0.0
    %715 = vmatmul.mubr.f32.gmra.mrb[0].mxu0 %v249
    %v716 = vpop.f32.mrb[0].mxu0
    %v717 = vadd.f32 0.0, %v716
    %v718 = vpop.f32.mrb[0].mxu0
    %719 = vdwg.mxu0
    %v721 = vsel %vm251, %v218, 0
    %723 = vmatprep.subr.mxu0 0.0
    %724 = vmatpush1.msra.mxu0 %v214
    %725 = vmatprep.subr.mxu0 0.0
    %726 = vmatpush1.msra.mxu0 %v215
    %727 = vmatprep.subr.mxu0 0.0
    %728 = vmatpush1.msra.mxu0 %v216
    %729 = vmatprep.subr.mxu0 0.0
    %730 = vmatpush1.msra.mxu0 %v217
    %731 = vmatprep.subr.mxu0 0.0
    %732 = vmatpush1.msra.mxu0 %v721
    %733 = vmatprep.subr.mxu0 0.0
    %734 = vmatpush1.msra.mxu0 0.0
    %735 = vmatprep.subr.mxu0 0.0
    %736 = vmatpush1.msra.mxu0 0.0
    %737 = vmatprep.subr.mxu0 0.0
    %738 = vmatpush1.msra.mxu0 0.0
    %739 = vmatprep.subr.mxu0 0.0
    %740 = vmatpush1.msra.mxu0 0.0
    %741 = vmatprep.subr.mxu0 0.0
    %742 = vmatpush1.msra.mxu0 0.0
    %743 = vmatprep.subr.mxu0 0.0
    %744 = vmatpush1.msra.mxu0 0.0
    %745 = vmatprep.subr.mxu0 0.0
    %746 = vmatpush1.msra.mxu0 0.0
    %747 = vmatprep.subr.mxu0 0.0
    %748 = vmatpush1.msra.mxu0 0.0
    %749 = vmatprep.subr.mxu0 0.0
    %750 = vmatpush1.msra.mxu0 0.0
    %751 = vmatprep.subr.mxu0 0.0
    %752 = vmatpush1.msra.mxu0 0.0
    %753 = vmatprep.subr.mxu0 0.0
    %754 = vmatpush1.msra.mxu0 0.0
    %755 = vmatprep.subr.mxu0 0.0
    %756 = vmatpush1.msra.mxu0 0.0
    %757 = vmatprep.subr.mxu0 0.0
    %758 = vmatpush1.msra.mxu0 0.0
    %759 = vmatprep.subr.mxu0 0.0
    %760 = vmatpush1.msra.mxu0 0.0
    %761 = vmatprep.subr.mxu0 0.0
    %762 = vmatpush1.msra.mxu0 0.0
    %763 = vmatprep.subr.mxu0 0.0
    %764 = vmatpush1.msra.mxu0 0.0
    %765 = vmatprep.subr.mxu0 0.0
    %766 = vmatpush1.msra.mxu0 0.0
    %767 = vmatprep.subr.mxu0 0.0
    %768 = vmatpush1.msra.mxu0 0.0
    %769 = vmatprep.subr.mxu0 0.0
    %770 = vmatpush1.msra.mxu0 0.0
    %771 = vmatprep.subr.mxu0 0.0
    %772 = vmatpush1.msra.mxu0 0.0
    %773 = vmatprep.subr.mxu0 0.0
    %774 = vmatpush1.msra.mxu0 0.0
    %775 = vmatprep.subr.mxu0 0.0
    %776 = vmatpush1.msra.mxu0 0.0
    %777 = vmatprep.subr.mxu0 0.0
    %778 = vmatpush1.msra.mxu0 0.0
    %779 = vmatprep.subr.mxu0 0.0
    %780 = vmatpush1.msra.mxu0 0.0
    %781 = vmatprep.subr.mxu0 0.0
    %782 = vmatpush1.msra.mxu0 0.0
    %783 = vmatprep.subr.mxu0 0.0
    %784 = vmatpush1.msra.mxu0 0.0
    %785 = vmatprep.subr.mxu0 0.0
    %786 = vmatpush1.msra.mxu0 0.0
    %787 = vmatprep.mubr.f32.mxu0 0.0
    %788 = vmatmul.mubr.f32.gmra.mrb[0].mxu0 %v246
    %v789 = vpop.f32.mrb[0].mxu0
    %v790 = vadd.f32 0.0, %v789
    %v791 = vpop.f32.mrb[0].mxu0
    %792 = vmatprep.mubr.f32.mxu0 0.0
    %793 = vmatmul.mubr.f32.gmra.mrb[0].mxu0 %v249
    %v794 = vpop.f32.mrb[0].mxu0
    %v795 = vadd.f32 0.0, %v794
    %v796 = vpop.f32.mrb[0].mxu0
    %797 = vdwg.mxu0
    %v799 = vsel %vm251, %v223, 0
    %801 = vmatprep.subr.mxu0 0.0
    %802 = vmatpush1.msra.mxu0 %v219
    %803 = vmatprep.subr.mxu0 0.0
    %804 = vmatpush1.msra.mxu0 %v220
    %805 = vmatprep.subr.mxu0 0.0
    %806 = vmatpush1.msra.mxu0 %v221
    %807 = vmatprep.subr.mxu0 0.0
    %808 = vmatpush1.msra.mxu0 %v222
    %809 = vmatprep.subr.mxu0 0.0
    %810 = vmatpush1.msra.mxu0 %v799
    %811 = vmatprep.subr.mxu0 0.0
    %812 = vmatpush1.msra.mxu0 0.0
    %813 = vmatprep.subr.mxu0 0.0
    %814 = vmatpush1.msra.mxu0 0.0
    %815 = vmatprep.subr.mxu0 0.0
    %816 = vmatpush1.msra.mxu0 0.0
    %817 = vmatprep.subr.mxu0 0.0
    %818 = vmatpush1.msra.mxu0 0.0
    %819 = vmatprep.subr.mxu0 0.0
    %820 = vmatpush1.msra.mxu0 0.0
    %821 = vmatprep.subr.mxu0 0.0
    %822 = vmatpush1.msra.mxu0 0.0
    %823 = vmatprep.subr.mxu0 0.0
    %824 = vmatpush1.msra.mxu0 0.0
    %825 = vmatprep.subr.mxu0 0.0
    %826 = vmatpush1.msra.mxu0 0.0
    %827 = vmatprep.subr.mxu0 0.0
    %828 = vmatpush1.msra.mxu0 0.0
    %829 = vmatprep.subr.mxu0 0.0
    %830 = vmatpush1.msra.mxu0 0.0
    %831 = vmatprep.subr.mxu0 0.0
    %832 = vmatpush1.msra.mxu0 0.0
    %833 = vmatprep.subr.mxu0 0.0
    %834 = vmatpush1.msra.mxu0 0.0
    %835 = vmatprep.subr.mxu0 0.0
    %836 = vmatpush1.msra.mxu0 0.0
    %837 = vmatprep.subr.mxu0 0.0
    %838 = vmatpush1.msra.mxu0 0.0
    %839 = vmatprep.subr.mxu0 0.0
    %840 = vmatpush1.msra.mxu0 0.0
    %841 = vmatprep.subr.mxu0 0.0
    %842 = vmatpush1.msra.mxu0 0.0
    %843 = vmatprep.subr.mxu0 0.0
    %844 = vmatpush1.msra.mxu0 0.0
    %845 = vmatprep.subr.mxu0 0.0
    %846 = vmatpush1.msra.mxu0 0.0
    %847 = vmatprep.subr.mxu0 0.0
    %848 = vmatpush1.msra.mxu0 0.0
    %849 = vmatprep.subr.mxu0 0.0
    %850 = vmatpush1.msra.mxu0 0.0
    %851 = vmatprep.subr.mxu0 0.0
    %852 = vmatpush1.msra.mxu0 0.0
    %853 = vmatprep.subr.mxu0 0.0
    %854 = vmatpush1.msra.mxu0 0.0
    %855 = vmatprep.subr.mxu0 0.0
    %856 = vmatpush1.msra.mxu0 0.0
    %857 = vmatprep.subr.mxu0 0.0
    %858 = vmatpush1.msra.mxu0 0.0
    %859 = vmatprep.subr.mxu0 0.0
    %860 = vmatpush1.msra.mxu0 0.0
    %861 = vmatprep.subr.mxu0 0.0
    %862 = vmatpush1.msra.mxu0 0.0
    %863 = vmatprep.subr.mxu0 0.0
    %864 = vmatpush1.msra.mxu0 0.0
    %865 = vmatprep.mubr.f32.mxu0 0.0
    %866 = vmatmul.mubr.f32.gmra.mrb[0].mxu0 %v246
    %v867 = vpop.f32.mrb[0].mxu0
    %v868 = vadd.f32 0.0, %v867
    %v869 = vpop.f32.mrb[0].mxu0
    %870 = vmatprep.mubr.f32.mxu0 0.0
    %871 = vmatmul.mubr.f32.gmra.mrb[0].mxu0 %v249
    %v872 = vpop.f32.mrb[0].mxu0
    %v873 = vadd.f32 0.0, %v872
    %v874 = vpop.f32.mrb[0].mxu0
    %875 = vdwg.mxu0
    %v877 = vsel %vm251, %v228, 0
    %879 = vmatprep.subr.mxu0 0.0
    %880 = vmatpush1.msra.mxu0 %v224
    %881 = vmatprep.subr.mxu0 0.0
    %882 = vmatpush1.msra.mxu0 %v225
    %883 = vmatprep.subr.mxu0 0.0
    %884 = vmatpush1.msra.mxu0 %v226
    %885 = vmatprep.subr.mxu0 0.0
    %886 = vmatpush1.msra.mxu0 %v227
    %887 = vmatprep.subr.mxu0 0.0
    %888 = vmatpush1.msra.mxu0 %v877
    %889 = vmatprep.subr.mxu0 0.0
    %890 = vmatpush1.msra.mxu0 0.0
    %891 = vmatprep.subr.mxu0 0.0
    %892 = vmatpush1.msra.mxu0 0.0
    %893 = vmatprep.subr.mxu0 0.0
    %894 = vmatpush1.msra.mxu0 0.0
    %895 = vmatprep.subr.mxu0 0.0
    %896 = vmatpush1.msra.mxu0 0.0
    %897 = vmatprep.subr.mxu0 0.0
    %898 = vmatpush1.msra.mxu0 0.0
    %899 = vmatprep.subr.mxu0 0.0
    %900 = vmatpush1.msra.mxu0 0.0
    %901 = vmatprep.subr.mxu0 0.0
    %902 = vmatpush1.msra.mxu0 0.0
    %903 = vmatprep.subr.mxu0 0.0
    %904 = vmatpush1.msra.mxu0 0.0
    %905 = vmatprep.subr.mxu0 0.0
    %906 = vmatpush1.msra.mxu0 0.0
    %907 = vmatprep.subr.mxu0 0.0
    %908 = vmatpush1.msra.mxu0 0.0
    %909 = vmatprep.subr.mxu0 0.0
    %910 = vmatpush1.msra.mxu0 0.0
    %911 = vmatprep.subr.mxu0 0.0
    %912 = vmatpush1.msra.mxu0 0.0
    %913 = vmatprep.subr.mxu0 0.0
    %914 = vmatpush1.msra.mxu0 0.0
    %915 = vmatprep.subr.mxu0 0.0
    %916 = vmatpush1.msra.mxu0 0.0
    %917 = vmatprep.subr.mxu0 0.0
    %918 = vmatpush1.msra.mxu0 0.0
    %919 = vmatprep.subr.mxu0 0.0
    %920 = vmatpush1.msra.mxu0 0.0
    %921 = vmatprep.subr.mxu0 0.0
    %922 = vmatpush1.msra.mxu0 0.0
    %923 = vmatprep.subr.mxu0 0.0
    %924 = vmatpush1.msra.mxu0 0.0
    %925 = vmatprep.subr.mxu0 0.0
    %926 = vmatpush1.msra.mxu0 0.0
    %927 = vmatprep.subr.mxu0 0.0
    %928 = vmatpush1.msra.mxu0 0.0
    %929 = vmatprep.subr.mxu0 0.0
    %930 = vmatpush1.msra.mxu0 0.0
    %931 = vmatprep.subr.mxu0 0.0
    %932 = vmatpush1.msra.mxu0 0.0
    %933 = vmatprep.subr.mxu0 0.0
    %934 = vmatpush1.msra.mxu0 0.0
    %935 = vmatprep.subr.mxu0 0.0
    %936 = vmatpush1.msra.mxu0 0.0
    %937 = vmatprep.subr.mxu0 0.0
    %938 = vmatpush1.msra.mxu0 0.0
    %939 = vmatprep.subr.mxu0 0.0
    %940 = vmatpush1.msra.mxu0 0.0
    %941 = vmatprep.subr.mxu0 0.0
    %942 = vmatpush1.msra.mxu0 0.0
    %943 = vmatprep.mubr.f32.mxu0 0.0
    %944 = vmatmul.mubr.f32.gmra.mrb[0].mxu0 %v246
    %v945 = vpop.f32.mrb[0].mxu0
    %v946 = vadd.f32 0.0, %v945
    %v947 = vpop.f32.mrb[0].mxu0
    %948 = vmatprep.mubr.f32.mxu0 0.0
    %949 = vmatmul.mubr.f32.gmra.mrb[0].mxu0 %v249
    %v950 = vpop.f32.mrb[0].mxu0
    %v951 = vadd.f32 0.0, %v950
    %v952 = vpop.f32.mrb[0].mxu0
    %953 = vdwg.mxu0
    %v955 = vsel %vm251, %v233, 0
    %957 = vmatprep.subr.mxu0 0.0
    %958 = vmatpush1.msra.mxu0 %v229
    %959 = vmatprep.subr.mxu0 0.0
    %960 = vmatpush1.msra.mxu0 %v230
    %961 = vmatprep.subr.mxu0 0.0
    %962 = vmatpush1.msra.mxu0 %v231
    %963 = vmatprep.subr.mxu0 0.0
    %964 = vmatpush1.msra.mxu0 %v232
    %965 = vmatprep.subr.mxu0 0.0
    %966 = vmatpush1.msra.mxu0 %v955
    %967 = vmatprep.subr.mxu0 0.0
    %968 = vmatpush1.msra.mxu0 0.0
    %969 = vmatprep.subr.mxu0 0.0
    %970 = vmatpush1.msra.mxu0 0.0
    %971 = vmatprep.subr.mxu0 0.0
    %972 = vmatpush1.msra.mxu0 0.0
    %973 = vmatprep.subr.mxu0 0.0
    %974 = vmatpush1.msra.mxu0 0.0
    %975 = vmatprep.subr.mxu0 0.0
    %976 = vmatpush1.msra.mxu0 0.0
    %977 = vmatprep.subr.mxu0 0.0
    %978 = vmatpush1.msra.mxu0 0.0
    %979 = vmatprep.subr.mxu0 0.0
    %980 = vmatpush1.msra.mxu0 0.0
    %981 = vmatprep.subr.mxu0 0.0
    %982 = vmatpush1.msra.mxu0 0.0
    %983 = vmatprep.subr.mxu0 0.0
    %984 = vmatpush1.msra.mxu0 0.0
    %985 = vmatprep.subr.mxu0 0.0
    %986 = vmatpush1.msra.mxu0 0.0
    %987 = vmatprep.subr.mxu0 0.0
    %988 = vmatpush1.msra.mxu0 0.0
    %989 = vmatprep.subr.mxu0 0.0
    %990 = vmatpush1.msra.mxu0 0.0
    %991 = vmatprep.subr.mxu0 0.0
    %992 = vmatpush1.msra.mxu0 0.0
    %993 = vmatprep.subr.mxu0 0.0
    %994 = vmatpush1.msra.mxu0 0.0
    %995 = vmatprep.subr.mxu0 0.0
    %996 = vmatpush1.msra.mxu0 0.0
    %997 = vmatprep.subr.mxu0 0.0
    %998 = vmatpush1.msra.mxu0 0.0
    %999 = vmatprep.subr.mxu0 0.0
    %1000 = vmatpush1.msra.mxu0 0.0
    %1001 = vmatprep.subr.mxu0 0.0
    %1002 = vmatpush1.msra.mxu0 0.0
    %1003 = vmatprep.subr.mxu0 0.0
    %1004 = vmatpush1.msra.mxu0 0.0
    %1005 = vmatprep.subr.mxu0 0.0
    %1006 = vmatpush1.msra.mxu0 0.0
    %1007 = vmatprep.subr.mxu0 0.0
    %1008 = vmatpush1.msra.mxu0 0.0
    %1009 = vmatprep.subr.mxu0 0.0
    %1010 = vmatpush1.msra.mxu0 0.0
    %1011 = vmatprep.subr.mxu0 0.0
    %1012 = vmatpush1.msra.mxu0 0.0
    %1013 = vmatprep.subr.mxu0 0.0
    %1014 = vmatpush1.msra.mxu0 0.0
    %1015 = vmatprep.subr.mxu0 0.0
    %1016 = vmatpush1.msra.mxu0 0.0
    %1017 = vmatprep.subr.mxu0 0.0
    %1018 = vmatpush1.msra.mxu0 0.0
    %1019 = vmatprep.subr.mxu0 0.0
    %1020 = vmatpush1.msra.mxu0 0.0
    %1021 = vmatprep.mubr.f32.mxu0 0.0
    %1022 = vmatmul.mubr.f32.gmra.mrb[0].mxu0 %v246
    %v1023 = vpop.f32.mrb[0].mxu0
    %v1024 = vadd.f32 0.0, %v1023
    %v1025 = vpop.f32.mrb[0].mxu0
    %1026 = vmatprep.mubr.f32.mxu0 0.0
    %1027 = vmatmul.mubr.f32.gmra.mrb[0].mxu0 %v249
    %v1028 = vpop.f32.mrb[0].mxu0
    %v1029 = vadd.f32 0.0, %v1028
    %v1030 = vpop.f32.mrb[0].mxu0
    %1031 = vdwg.mxu0
    %v1033 = vsel %vm251, %v238, 0
    %1035 = vmatprep.subr.mxu0 0.0
    %1036 = vmatpush1.msra.mxu0 %v234
    %1037 = vmatprep.subr.mxu0 0.0
    %1038 = vmatpush1.msra.mxu0 %v235
    %1039 = vmatprep.subr.mxu0 0.0
    %1040 = vmatpush1.msra.mxu0 %v236
    %1041 = vmatprep.subr.mxu0 0.0
    %1042 = vmatpush1.msra.mxu0 %v237
    %1043 = vmatprep.subr.mxu0 0.0
    %1044 = vmatpush1.msra.mxu0 %v1033
    %1045 = vmatprep.subr.mxu0 0.0
    %1046 = vmatpush1.msra.mxu0 0.0
    %1047 = vmatprep.subr.mxu0 0.0
    %1048 = vmatpush1.msra.mxu0 0.0
    %1049 = vmatprep.subr.mxu0 0.0
    %1050 = vmatpush1.msra.mxu0 0.0
    %1051 = vmatprep.subr.mxu0 0.0
    %1052 = vmatpush1.msra.mxu0 0.0
    %1053 = vmatprep.subr.mxu0 0.0
    %1054 = vmatpush1.msra.mxu0 0.0
    %1055 = vmatprep.subr.mxu0 0.0
    %1056 = vmatpush1.msra.mxu0 0.0
    %1057 = vmatprep.subr.mxu0 0.0
    %1058 = vmatpush1.msra.mxu0 0.0
    %1059 = vmatprep.subr.mxu0 0.0
    %1060 = vmatpush1.msra.mxu0 0.0
    %1061 = vmatprep.subr.mxu0 0.0
    %1062 = vmatpush1.msra.mxu0 0.0
    %1063 = vmatprep.subr.mxu0 0.0
    %1064 = vmatpush1.msra.mxu0 0.0
    %1065 = vmatprep.subr.mxu0 0.0
    %1066 = vmatpush1.msra.mxu0 0.0
    %1067 = vmatprep.subr.mxu0 0.0
    %1068 = vmatpush1.msra.mxu0 0.0
    %1069 = vmatprep.subr.mxu0 0.0
    %1070 = vmatpush1.msra.mxu0 0.0
    %1071 = vmatprep.subr.mxu0 0.0
    %1072 = vmatpush1.msra.mxu0 0.0
    %1073 = vmatprep.subr.mxu0 0.0
    %1074 = vmatpush1.msra.mxu0 0.0
    %1075 = vmatprep.subr.mxu0 0.0
    %1076 = vmatpush1.msra.mxu0 0.0
    %1077 = vmatprep.subr.mxu0 0.0
    %1078 = vmatpush1.msra.mxu0 0.0
    %1079 = vmatprep.subr.mxu0 0.0
    %1080 = vmatpush1.msra.mxu0 0.0
    %1081 = vmatprep.subr.mxu0 0.0
    %1082 = vmatpush1.msra.mxu0 0.0
    %1083 = vmatprep.subr.mxu0 0.0
    %1084 = vmatpush1.msra.mxu0 0.0
    %1085 = vmatprep.subr.mxu0 0.0
    %1086 = vmatpush1.msra.mxu0 0.0
    %1087 = vmatprep.subr.mxu0 0.0
    %1088 = vmatpush1.msra.mxu0 0.0
    %1089 = vmatprep.subr.mxu0 0.0
    %1090 = vmatpush1.msra.mxu0 0.0
    %1091 = vmatprep.subr.mxu0 0.0
    %1092 = vmatpush1.msra.mxu0 0.0
    %1093 = vmatprep.subr.mxu0 0.0
    %1094 = vmatpush1.msra.mxu0 0.0
    %1095 = vmatprep.subr.mxu0 0.0
    %1096 = vmatpush1.msra.mxu0 0.0
    %1097 = vmatprep.subr.mxu0 0.0
    %1098 = vmatpush1.msra.mxu0 0.0
    %1099 = vmatprep.mubr.f32.mxu0 0.0
    %1100 = vmatmul.mubr.f32.gmra.mrb[0].mxu0 %v246
    %v1101 = vpop.f32.mrb[0].mxu0
    %v1102 = vadd.f32 0.0, %v1101
    %v1103 = vpop.f32.mrb[0].mxu0
    %1104 = vmatprep.mubr.f32.mxu0 0.0
    %1105 = vmatmul.mubr.f32.gmra.mrb[0].mxu0 %v249
    %v1106 = vpop.f32.mrb[0].mxu0
    %v1107 = vadd.f32 0.0, %v1106
    %v1108 = vpop.f32.mrb[0].mxu0
    %1109 = vdwg.mxu0
    %v1111 = vsel %vm251, %v243, 0
    %1113 = vmatprep.subr.mxu0 0.0
    %1114 = vmatpush1.msra.mxu0 %v239
    %1115 = vmatprep.subr.mxu0 0.0
    %1116 = vmatpush1.msra.mxu0 %v240
    %1117 = vmatprep.subr.mxu0 0.0
    %1118 = vmatpush1.msra.mxu0 %v241
    %1119 = vmatprep.subr.mxu0 0.0
    %1120 = vmatpush1.msra.mxu0 %v242
    %1121 = vmatprep.subr.mxu0 0.0
    %1122 = vmatpush1.msra.mxu0 %v1111
    %1123 = vmatprep.subr.mxu0 0.0
    %1124 = vmatpush1.msra.mxu0 0.0
    %1125 = vmatprep.subr.mxu0 0.0
    %1126 = vmatpush1.msra.mxu0 0.0
    %1127 = vmatprep.subr.mxu0 0.0
    %1128 = vmatpush1.msra.mxu0 0.0
    %1129 = vmatprep.subr.mxu0 0.0
    %1130 = vmatpush1.msra.mxu0 0.0
    %1131 = vmatprep.subr.mxu0 0.0
    %1132 = vmatpush1.msra.mxu0 0.0
    %1133 = vmatprep.subr.mxu0 0.0
    %1134 = vmatpush1.msra.mxu0 0.0
    %1135 = vmatprep.subr.mxu0 0.0
    %1136 = vmatpush1.msra.mxu0 0.0
    %1137 = vmatprep.subr.mxu0 0.0
    %1138 = vmatpush1.msra.mxu0 0.0
    %1139 = vmatprep.subr.mxu0 0.0
    %1140 = vmatpush1.msra.mxu0 0.0
    %1141 = vmatprep.subr.mxu0 0.0
    %1142 = vmatpush1.msra.mxu0 0.0
    %1143 = vmatprep.subr.mxu0 0.0
    %1144 = vmatpush1.msra.mxu0 0.0
    %1145 = vmatprep.subr.mxu0 0.0
    %1146 = vmatpush1.msra.mxu0 0.0
    %1147 = vmatprep.subr.mxu0 0.0
    %1148 = vmatpush1.msra.mxu0 0.0
    %1149 = vmatprep.subr.mxu0 0.0
    %1150 = vmatpush1.msra.mxu0 0.0
    %1151 = vmatprep.subr.mxu0 0.0
    %1152 = vmatpush1.msra.mxu0 0.0
    %1153 = vmatprep.subr.mxu0 0.0
    %1154 = vmatpush1.msra.mxu0 0.0
    %1155 = vmatprep.subr.mxu0 0.0
    %1156 = vmatpush1.msra.mxu0 0.0
    %1157 = vmatprep.subr.mxu0 0.0
    %1158 = vmatpush1.msra.mxu0 0.0
    %1159 = vmatprep.subr.mxu0 0.0
    %1160 = vmatpush1.msra.mxu0 0.0
    %1161 = vmatprep.subr.mxu0 0.0
    %1162 = vmatpush1.msra.mxu0 0.0
    %1163 = vmatprep.subr.mxu0 0.0
    %1164 = vmatpush1.msra.mxu0 0.0
    %1165 = vmatprep.subr.mxu0 0.0
    %1166 = vmatpush1.msra.mxu0 0.0
    %1167 = vmatprep.subr.mxu0 0.0
    %1168 = vmatpush1.msra.mxu0 0.0
    %1169 = vmatprep.subr.mxu0 0.0
    %1170 = vmatpush1.msra.mxu0 0.0
    %1171 = vmatprep.subr.mxu0 0.0
    %1172 = vmatpush1.msra.mxu0 0.0
    %1173 = vmatprep.subr.mxu0 0.0
    %1174 = vmatpush1.msra.mxu0 0.0
    %1175 = vmatprep.subr.mxu0 0.0
    %1176 = vmatpush1.msra.mxu0 0.0
    %1177 = vmatprep.mubr.f32.mxu0 0.0
    %1178 = vmatmul.mubr.f32.gmra.mrb[0].mxu0 %v246
    %v1179 = vpop.f32.mrb[0].mxu0
    %v1180 = vadd.f32 0.0, %v1179
    %v1181 = vpop.f32.mrb[0].mxu0
    %1182 = vmatprep.mubr.f32.mxu0 0.0
    %1183 = vmatmul.mubr.f32.gmra.mrb[0].mxu0 %v249
    %v1184 = vpop.f32.mrb[0].mxu0
    %v1185 = vadd.f32 0.0, %v1184
    %v1186 = vpop.f32.mrb[0].mxu0
    %1187 = vdwg.mxu0
    %vm1188 = vcmask 64512
    %v1190 = vsel %vm1188, %v322, 0
    %v1193 = vsel %vm1188, %v634, 0
    %1195 = vmatprep.subr.mxu0 0.0
    %1196 = vmatpush1.xpose.msra.mxu0 %v1193
    %1197 = vmatprep.subr.mxu0 0.0
    %1198 = vmatpush1.xpose.msra.mxu0 0.0
    %1199 = vmatprep.subr.mxu0 0.0
    %1200 = vmatpush1.xpose.msra.mxu0 0.0
    %1201 = vmatprep.subr.mxu0 0.0
    %1202 = vmatpush1.xpose.msra.mxu0 0.0
    %1203 = vmatprep.subr.mxu0 0.0
    %1204 = vmatpush1.xpose.msra.mxu0 0.0
    %1205 = vmatprep.subr.mxu0 0.0
    %1206 = vmatpush1.xpose.msra.mxu0 0.0
    %1207 = vmatprep.subr.mxu0 0.0
    %1208 = vmatpush1.xpose.msra.mxu0 0.0
    %1209 = vmatprep.subr.mxu0 0.0
    %1210 = vmatpush1.xpose.msra.mxu0 0.0
    %1211 = vmatprep.subr.mxu0 0.0
    %1212 = vmatpush1.xpose.msra.mxu0 0.0
    %1213 = vmatprep.subr.mxu0 0.0
    %1214 = vmatpush1.xpose.msra.mxu0 0.0
    %1215 = vmatprep.subr.mxu0 0.0
    %1216 = vmatpush1.xpose.msra.mxu0 0.0
    %1217 = vmatprep.subr.mxu0 0.0
    %1218 = vmatpush1.xpose.msra.mxu0 0.0
    %1219 = vmatprep.subr.mxu0 0.0
    %1220 = vmatpush1.xpose.msra.mxu0 0.0
    %1221 = vmatprep.subr.mxu0 0.0
    %1222 = vmatpush1.xpose.msra.mxu0 0.0
    %1223 = vmatprep.subr.mxu0 0.0
    %1224 = vmatpush1.xpose.msra.mxu0 0.0
    %1225 = vmatprep.subr.mxu0 0.0
    %1226 = vmatpush1.xpose.msra.mxu0 0.0
    %1227 = vmatprep.subr.mxu0 0.0
    %1228 = vmatpush1.xpose.msra.mxu0 0.0
    %1229 = vmatprep.subr.mxu0 0.0
    %1230 = vmatpush1.xpose.msra.mxu0 0.0
    %1231 = vmatprep.subr.mxu0 0.0
    %1232 = vmatpush1.xpose.msra.mxu0 0.0
    %1233 = vmatprep.subr.mxu0 0.0
    %1234 = vmatpush1.xpose.msra.mxu0 0.0
    %1235 = vmatprep.subr.mxu0 0.0
    %1236 = vmatpush1.xpose.msra.mxu0 0.0
    %1237 = vmatprep.subr.mxu0 0.0
    %1238 = vmatpush1.xpose.msra.mxu0 0.0
    %1239 = vmatprep.subr.mxu0 0.0
    %1240 = vmatpush1.xpose.msra.mxu0 0.0
    %1241 = vmatprep.subr.mxu0 0.0
    %1242 = vmatpush1.xpose.msra.mxu0 0.0
    %1243 = vmatprep.subr.mxu0 0.0
    %1244 = vmatpush1.xpose.msra.mxu0 0.0
    %1245 = vmatprep.subr.mxu0 0.0
    %1246 = vmatpush1.xpose.msra.mxu0 0.0
    %1247 = vmatprep.subr.mxu0 0.0
    %1248 = vmatpush1.xpose.msra.mxu0 0.0
    %1249 = vmatprep.subr.mxu0 0.0
    %1250 = vmatpush1.xpose.msra.mxu0 0.0
    %1251 = vmatprep.subr.mxu0 0.0
    %1252 = vmatpush1.xpose.msra.mxu0 0.0
    %1253 = vmatprep.subr.mxu0 0.0
    %1254 = vmatpush1.xpose.msra.mxu0 0.0
    %1255 = vmatprep.subr.mxu0 0.0
    %1256 = vmatpush1.xpose.msra.mxu0 0.0
    %1257 = vmatprep.subr.mxu0 0.0
    %1258 = vmatpush1.xpose.msra.mxu0 0.0
    %1259 = vmatprep.mubr.f32.mxu0 0.0
    %1260 = vmatmul.mubr.f32.gmra.mrb[0].mxu0 %v1190
    %v1261 = vpop.f32.mrb[0].mxu0
    %v1262 = vadd.f32 0.0, %v1261
    %v1263 = vpop.f32.mrb[0].mxu0
    %1264 = vdwg.mxu0
    %v1266 = vsel %vm1188, %v327, 0
    %v1269 = vsel %vm1188, %v639, 0
    %1271 = vmatprep.subr.mxu0 0.0
    %1272 = vmatpush1.xpose.msra.mxu0 %v1269
    %1273 = vmatprep.subr.mxu0 0.0
    %1274 = vmatpush1.xpose.msra.mxu0 0.0
    %1275 = vmatprep.subr.mxu0 0.0
    %1276 = vmatpush1.xpose.msra.mxu0 0.0
    %1277 = vmatprep.subr.mxu0 0.0
    %1278 = vmatpush1.xpose.msra.mxu0 0.0
    %1279 = vmatprep.subr.mxu0 0.0
    %1280 = vmatpush1.xpose.msra.mxu0 0.0
    %1281 = vmatprep.subr.mxu0 0.0
    %1282 = vmatpush1.xpose.msra.mxu0 0.0
    %1283 = vmatprep.subr.mxu0 0.0
    %1284 = vmatpush1.xpose.msra.mxu0 0.0
    %1285 = vmatprep.subr.mxu0 0.0
    %1286 = vmatpush1.xpose.msra.mxu0 0.0
    %1287 = vmatprep.subr.mxu0 0.0
    %1288 = vmatpush1.xpose.msra.mxu0 0.0
    %1289 = vmatprep.subr.mxu0 0.0
    %1290 = vmatpush1.xpose.msra.mxu0 0.0
    %1291 = vmatprep.subr.mxu0 0.0
    %1292 = vmatpush1.xpose.msra.mxu0 0.0
    %1293 = vmatprep.subr.mxu0 0.0
    %1294 = vmatpush1.xpose.msra.mxu0 0.0
    %1295 = vmatprep.subr.mxu0 0.0
    %1296 = vmatpush1.xpose.msra.mxu0 0.0
    %1297 = vmatprep.subr.mxu0 0.0
    %1298 = vmatpush1.xpose.msra.mxu0 0.0
    %1299 = vmatprep.subr.mxu0 0.0
    %1300 = vmatpush1.xpose.msra.mxu0 0.0
    %1301 = vmatprep.subr.mxu0 0.0
    %1302 = vmatpush1.xpose.msra.mxu0 0.0
    %1303 = vmatprep.subr.mxu0 0.0
    %1304 = vmatpush1.xpose.msra.mxu0 0.0
    %1305 = vmatprep.subr.mxu0 0.0
    %1306 = vmatpush1.xpose.msra.mxu0 0.0
    %1307 = vmatprep.subr.mxu0 0.0
    %1308 = vmatpush1.xpose.msra.mxu0 0.0
    %1309 = vmatprep.subr.mxu0 0.0
    %1310 = vmatpush1.xpose.msra.mxu0 0.0
    %1311 = vmatprep.subr.mxu0 0.0
    %1312 = vmatpush1.xpose.msra.mxu0 0.0
    %1313 = vmatprep.subr.mxu0 0.0
    %1314 = vmatpush1.xpose.msra.mxu0 0.0
    %1315 = vmatprep.subr.mxu0 0.0
    %1316 = vmatpush1.xpose.msra.mxu0 0.0
    %1317 = vmatprep.subr.mxu0 0.0
    %1318 = vmatpush1.xpose.msra.mxu0 0.0
    %1319 = vmatprep.subr.mxu0 0.0
    %1320 = vmatpush1.xpose.msra.mxu0 0.0
    %1321 = vmatprep.subr.mxu0 0.0
    %1322 = vmatpush1.xpose.msra.mxu0 0.0
    %1323 = vmatprep.subr.mxu0 0.0
    %1324 = vmatpush1.xpose.msra.mxu0 0.0
    %1325 = vmatprep.subr.mxu0 0.0
    %1326 = vmatpush1.xpose.msra.mxu0 0.0
    %1327 = vmatprep.subr.mxu0 0.0
    %1328 = vmatpush1.xpose.msra.mxu0 0.0
    %1329 = vmatprep.subr.mxu0 0.0
    %1330 = vmatpush1.xpose.msra.mxu0 0.0
    %1331 = vmatprep.subr.mxu0 0.0
    %1332 = vmatpush1.xpose.msra.mxu0 0.0
    %1333 = vmatprep.subr.mxu0 0.0
    %1334 = vmatpush1.xpose.msra.mxu0 0.0
    %1335 = vmatprep.mubr.f32.mxu0 0.0
    %1336 = vmatmul.mubr.f32.gmra.mrb[0].mxu0 %v1266
    %v1337 = vpop.f32.mrb[0].mxu0
    %v1338 = vadd.f32 0.0, %v1337
    %v1339 = vpop.f32.mrb[0].mxu0
    %1340 = vdwg.mxu0
    %v1342 = vsel %vm1188, %v400, 0
    %v1345 = vsel %vm1188, %v712, 0
    %1347 = vmatprep.subr.mxu0 0.0
    %1348 = vmatpush1.xpose.msra.mxu0 %v1345
    %1349 = vmatprep.subr.mxu0 0.0
    %1350 = vmatpush1.xpose.msra.mxu0 0.0
    %1351 = vmatprep.subr.mxu0 0.0
    %1352 = vmatpush1.xpose.msra.mxu0 0.0
    %1353 = vmatprep.subr.mxu0 0.0
    %1354 = vmatpush1.xpose.msra.mxu0 0.0
    %1355 = vmatprep.subr.mxu0 0.0
    %1356 = vmatpush1.xpose.msra.mxu0 0.0
    %1357 = vmatprep.subr.mxu0 0.0
    %1358 = vmatpush1.xpose.msra.mxu0 0.0
    %1359 = vmatprep.subr.mxu0 0.0
    %1360 = vmatpush1.xpose.msra.mxu0 0.0
    %1361 = vmatprep.subr.mxu0 0.0
    %1362 = vmatpush1.xpose.msra.mxu0 0.0
    %1363 = vmatprep.subr.mxu0 0.0
    %1364 = vmatpush1.xpose.msra.mxu0 0.0
    %1365 = vmatprep.subr.mxu0 0.0
    %1366 = vmatpush1.xpose.msra.mxu0 0.0
    %1367 = vmatprep.subr.mxu0 0.0
    %1368 = vmatpush1.xpose.msra.mxu0 0.0
    %1369 = vmatprep.subr.mxu0 0.0
    %1370 = vmatpush1.xpose.msra.mxu0 0.0
    %1371 = vmatprep.subr.mxu0 0.0
    %1372 = vmatpush1.xpose.msra.mxu0 0.0
    %1373 = vmatprep.subr.mxu0 0.0
    %1374 = vmatpush1.xpose.msra.mxu0 0.0
    %1375 = vmatprep.subr.mxu0 0.0
    %1376 = vmatpush1.xpose.msra.mxu0 0.0
    %1377 = vmatprep.subr.mxu0 0.0
    %1378 = vmatpush1.xpose.msra.mxu0 0.0
    %1379 = vmatprep.subr.mxu0 0.0
    %1380 = vmatpush1.xpose.msra.mxu0 0.0
    %1381 = vmatprep.subr.mxu0 0.0
    %1382 = vmatpush1.xpose.msra.mxu0 0.0
    %1383 = vmatprep.subr.mxu0 0.0
    %1384 = vmatpush1.xpose.msra.mxu0 0.0
    %1385 = vmatprep.subr.mxu0 0.0
    %1386 = vmatpush1.xpose.msra.mxu0 0.0
    %1387 = vmatprep.subr.mxu0 0.0
    %1388 = vmatpush1.xpose.msra.mxu0 0.0
    %1389 = vmatprep.subr.mxu0 0.0
    %1390 = vmatpush1.xpose.msra.mxu0 0.0
    %1391 = vmatprep.subr.mxu0 0.0
    %1392 = vmatpush1.xpose.msra.mxu0 0.0
    %1393 = vmatprep.subr.mxu0 0.0
    %1394 = vmatpush1.xpose.msra.mxu0 0.0
    %1395 = vmatprep.subr.mxu0 0.0
    %1396 = vmatpush1.xpose.msra.mxu0 0.0
    %1397 = vmatprep.subr.mxu0 0.0
    %1398 = vmatpush1.xpose.msra.mxu0 0.0
    %1399 = vmatprep.subr.mxu0 0.0
    %1400 = vmatpush1.xpose.msra.mxu0 0.0
    %1401 = vmatprep.subr.mxu0 0.0
    %1402 = vmatpush1.xpose.msra.mxu0 0.0
    %1403 = vmatprep.subr.mxu0 0.0
    %1404 = vmatpush1.xpose.msra.mxu0 0.0
    %1405 = vmatprep.subr.mxu0 0.0
    %1406 = vmatpush1.xpose.msra.mxu0 0.0
    %1407 = vmatprep.subr.mxu0 0.0
    %1408 = vmatpush1.xpose.msra.mxu0 0.0
    %1409 = vmatprep.subr.mxu0 0.0
    %1410 = vmatpush1.xpose.msra.mxu0 0.0
    %1411 = vmatprep.mubr.f32.mxu0 0.0
    %1412 = vmatmul.mubr.f32.gmra.mrb[0].mxu0 %v1342
    %v1413 = vpop.f32.mrb[0].mxu0
    %v1414 = vadd.f32 0.0, %v1413
    %v1415 = vpop.f32.mrb[0].mxu0
    %1416 = vdwg.mxu0
    %v1418 = vsel %vm1188, %v405, 0
    %v1421 = vsel %vm1188, %v717, 0
    %1423 = vmatprep.subr.mxu0 0.0
    %1424 = vmatpush1.xpose.msra.mxu0 %v1421
    %1425 = vmatprep.subr.mxu0 0.0
    %1426 = vmatpush1.xpose.msra.mxu0 0.0
    %1427 = vmatprep.subr.mxu0 0.0
    %1428 = vmatpush1.xpose.msra.mxu0 0.0
    %1429 = vmatprep.subr.mxu0 0.0
    %1430 = vmatpush1.xpose.msra.mxu0 0.0
    %1431 = vmatprep.subr.mxu0 0.0
    %1432 = vmatpush1.xpose.msra.mxu0 0.0
    %1433 = vmatprep.subr.mxu0 0.0
    %1434 = vmatpush1.xpose.msra.mxu0 0.0
    %1435 = vmatprep.subr.mxu0 0.0
    %1436 = vmatpush1.xpose.msra.mxu0 0.0
    %1437 = vmatprep.subr.mxu0 0.0
    %1438 = vmatpush1.xpose.msra.mxu0 0.0
    %1439 = vmatprep.subr.mxu0 0.0
    %1440 = vmatpush1.xpose.msra.mxu0 0.0
    %1441 = vmatprep.subr.mxu0 0.0
    %1442 = vmatpush1.xpose.msra.mxu0 0.0
    %1443 = vmatprep.subr.mxu0 0.0
    %1444 = vmatpush1.xpose.msra.mxu0 0.0
    %1445 = vmatprep.subr.mxu0 0.0
    %1446 = vmatpush1.xpose.msra.mxu0 0.0
    %1447 = vmatprep.subr.mxu0 0.0
    %1448 = vmatpush1.xpose.msra.mxu0 0.0
    %1449 = vmatprep.subr.mxu0 0.0
    %1450 = vmatpush1.xpose.msra.mxu0 0.0
    %1451 = vmatprep.subr.mxu0 0.0
    %1452 = vmatpush1.xpose.msra.mxu0 0.0
    %1453 = vmatprep.subr.mxu0 0.0
    %1454 = vmatpush1.xpose.msra.mxu0 0.0
    %1455 = vmatprep.subr.mxu0 0.0
    %1456 = vmatpush1.xpose.msra.mxu0 0.0
    %1457 = vmatprep.subr.mxu0 0.0
    %1458 = vmatpush1.xpose.msra.mxu0 0.0
    %1459 = vmatprep.subr.mxu0 0.0
    %1460 = vmatpush1.xpose.msra.mxu0 0.0
    %1461 = vmatprep.subr.mxu0 0.0
    %1462 = vmatpush1.xpose.msra.mxu0 0.0
    %1463 = vmatprep.subr.mxu0 0.0
    %1464 = vmatpush1.xpose.msra.mxu0 0.0
    %1465 = vmatprep.subr.mxu0 0.0
    %1466 = vmatpush1.xpose.msra.mxu0 0.0
    %1467 = vmatprep.subr.mxu0 0.0
    %1468 = vmatpush1.xpose.msra.mxu0 0.0
    %1469 = vmatprep.subr.mxu0 0.0
    %1470 = vmatpush1.xpose.msra.mxu0 0.0
    %1471 = vmatprep.subr.mxu0 0.0
    %1472 = vmatpush1.xpose.msra.mxu0 0.0
    %1473 = vmatprep.subr.mxu0 0.0
    %1474 = vmatpush1.xpose.msra.mxu0 0.0
    %1475 = vmatprep.subr.mxu0 0.0
    %1476 = vmatpush1.xpose.msra.mxu0 0.0
    %1477 = vmatprep.subr.mxu0 0.0
    %1478 = vmatpush1.xpose.msra.mxu0 0.0
    %1479 = vmatprep.subr.mxu0 0.0
    %1480 = vmatpush1.xpose.msra.mxu0 0.0
    %1481 = vmatprep.subr.mxu0 0.0
    %1482 = vmatpush1.xpose.msra.mxu0 0.0
    %1483 = vmatprep.subr.mxu0 0.0
    %1484 = vmatpush1.xpose.msra.mxu0 0.0
    %1485 = vmatprep.subr.mxu0 0.0
    %1486 = vmatpush1.xpose.msra.mxu0 0.0
    %1487 = vmatprep.mubr.f32.mxu0 0.0
    %1488 = vmatmul.mubr.f32.gmra.mrb[0].mxu0 %v1418
    %v1489 = vpop.f32.mrb[0].mxu0
    %v1490 = vadd.f32 0.0, %v1489
    %v1491 = vpop.f32.mrb[0].mxu0
    %1492 = vdwg.mxu0
    %v1494 = vsel %vm1188, %v478, 0
    %v1497 = vsel %vm1188, %v790, 0
    %1499 = vmatprep.subr.mxu0 0.0
    %1500 = vmatpush1.xpose.msra.mxu0 %v1497
    %1501 = vmatprep.subr.mxu0 0.0
    %1502 = vmatpush1.xpose.msra.mxu0 0.0
    %1503 = vmatprep.subr.mxu0 0.0
    %1504 = vmatpush1.xpose.msra.mxu0 0.0
    %1505 = vmatprep.subr.mxu0 0.0
    %1506 = vmatpush1.xpose.msra.mxu0 0.0
    %1507 = vmatprep.subr.mxu0 0.0
    %1508 = vmatpush1.xpose.msra.mxu0 0.0
    %1509 = vmatprep.subr.mxu0 0.0
    %1510 = vmatpush1.xpose.msra.mxu0 0.0
    %1511 = vmatprep.subr.mxu0 0.0
    %1512 = vmatpush1.xpose.msra.mxu0 0.0
    %1513 = vmatprep.subr.mxu0 0.0
    %1514 = vmatpush1.xpose.msra.mxu0 0.0
    %1515 = vmatprep.subr.mxu0 0.0
    %1516 = vmatpush1.xpose.msra.mxu0 0.0
    %1517 = vmatprep.subr.mxu0 0.0
    %1518 = vmatpush1.xpose.msra.mxu0 0.0
    %1519 = vmatprep.subr.mxu0 0.0
    %1520 = vmatpush1.xpose.msra.mxu0 0.0
    %1521 = vmatprep.subr.mxu0 0.0
    %1522 = vmatpush1.xpose.msra.mxu0 0.0
    %1523 = vmatprep.subr.mxu0 0.0
    %1524 = vmatpush1.xpose.msra.mxu0 0.0
    %1525 = vmatprep.subr.mxu0 0.0
    %1526 = vmatpush1.xpose.msra.mxu0 0.0
    %1527 = vmatprep.subr.mxu0 0.0
    %1528 = vmatpush1.xpose.msra.mxu0 0.0
    %1529 = vmatprep.subr.mxu0 0.0
    %1530 = vmatpush1.xpose.msra.mxu0 0.0
    %1531 = vmatprep.subr.mxu0 0.0
    %1532 = vmatpush1.xpose.msra.mxu0 0.0
    %1533 = vmatprep.subr.mxu0 0.0
    %1534 = vmatpush1.xpose.msra.mxu0 0.0
    %1535 = vmatprep.subr.mxu0 0.0
    %1536 = vmatpush1.xpose.msra.mxu0 0.0
    %1537 = vmatprep.subr.mxu0 0.0
    %1538 = vmatpush1.xpose.msra.mxu0 0.0
    %1539 = vmatprep.subr.mxu0 0.0
    %1540 = vmatpush1.xpose.msra.mxu0 0.0
    %1541 = vmatprep.subr.mxu0 0.0
    %1542 = vmatpush1.xpose.msra.mxu0 0.0
    %1543 = vmatprep.subr.mxu0 0.0
    %1544 = vmatpush1.xpose.msra.mxu0 0.0
    %1545 = vmatprep.subr.mxu0 0.0
    %1546 = vmatpush1.xpose.msra.mxu0 0.0
    %1547 = vmatprep.subr.mxu0 0.0
    %1548 = vmatpush1.xpose.msra.mxu0 0.0
    %1549 = vmatprep.subr.mxu0 0.0
    %1550 = vmatpush1.xpose.msra.mxu0 0.0
    %1551 = vmatprep.subr.mxu0 0.0
    %1552 = vmatpush1.xpose.msra.mxu0 0.0
    %1553 = vmatprep.subr.mxu0 0.0
    %1554 = vmatpush1.xpose.msra.mxu0 0.0
    %1555 = vmatprep.subr.mxu0 0.0
    %1556 = vmatpush1.xpose.msra.mxu0 0.0
    %1557 = vmatprep.subr.mxu0 0.0
    %1558 = vmatpush1.xpose.msra.mxu0 0.0
    %1559 = vmatprep.subr.mxu0 0.0
    %1560 = vmatpush1.xpose.msra.mxu0 0.0
    %1561 = vmatprep.subr.mxu0 0.0
    %1562 = vmatpush1.xpose.msra.mxu0 0.0
    %1563 = vmatprep.mubr.f32.mxu0 0.0
    %1564 = vmatmul.mubr.f32.gmra.mrb[0].mxu0 %v1494
    %v1565 = vpop.f32.mrb[0].mxu0
    %v1566 = vadd.f32 0.0, %v1565
    %v1567 = vpop.f32.mrb[0].mxu0
    %1568 = vdwg.mxu0
    %v1570 = vsel %vm1188, %v483, 0
    %v1573 = vsel %vm1188, %v795, 0
    %1575 = vmatprep.subr.mxu0 0.0
    %1576 = vmatpush1.xpose.msra.mxu0 %v1573
    %1577 = vmatprep.subr.mxu0 0.0
    %1578 = vmatpush1.xpose.msra.mxu0 0.0
    %1579 = vmatprep.subr.mxu0 0.0
    %1580 = vmatpush1.xpose.msra.mxu0 0.0
    %1581 = vmatprep.subr.mxu0 0.0
    %1582 = vmatpush1.xpose.msra.mxu0 0.0
    %1583 = vmatprep.subr.mxu0 0.0
    %1584 = vmatpush1.xpose.msra.mxu0 0.0
    %1585 = vmatprep.subr.mxu0 0.0
    %1586 = vmatpush1.xpose.msra.mxu0 0.0
    %1587 = vmatprep.subr.mxu0 0.0
    %1588 = vmatpush1.xpose.msra.mxu0 0.0
    %1589 = vmatprep.subr.mxu0 0.0
    %1590 = vmatpush1.xpose.msra.mxu0 0.0
    %1591 = vmatprep.subr.mxu0 0.0
    %1592 = vmatpush1.xpose.msra.mxu0 0.0
    %1593 = vmatprep.subr.mxu0 0.0
    %1594 = vmatpush1.xpose.msra.mxu0 0.0
    %1595 = vmatprep.subr.mxu0 0.0
    %1596 = vmatpush1.xpose.msra.mxu0 0.0
    %1597 = vmatprep.subr.mxu0 0.0
    %1598 = vmatpush1.xpose.msra.mxu0 0.0
    %1599 = vmatprep.subr.mxu0 0.0
    %1600 = vmatpush1.xpose.msra.mxu0 0.0
    %1601 = vmatprep.subr.mxu0 0.0
    %1602 = vmatpush1.xpose.msra.mxu0 0.0
    %1603 = vmatprep.subr.mxu0 0.0
    %1604 = vmatpush1.xpose.msra.mxu0 0.0
    %1605 = vmatprep.subr.mxu0 0.0
    %1606 = vmatpush1.xpose.msra.mxu0 0.0
    %1607 = vmatprep.subr.mxu0 0.0
    %1608 = vmatpush1.xpose.msra.mxu0 0.0
    %1609 = vmatprep.subr.mxu0 0.0
    %1610 = vmatpush1.xpose.msra.mxu0 0.0
    %1611 = vmatprep.subr.mxu0 0.0
    %1612 = vmatpush1.xpose.msra.mxu0 0.0
    %1613 = vmatprep.subr.mxu0 0.0
    %1614 = vmatpush1.xpose.msra.mxu0 0.0
    %1615 = vmatprep.subr.mxu0 0.0
    %1616 = vmatpush1.xpose.msra.mxu0 0.0
    %1617 = vmatprep.subr.mxu0 0.0
    %1618 = vmatpush1.xpose.msra.mxu0 0.0
    %1619 = vmatprep.subr.mxu0 0.0
    %1620 = vmatpush1.xpose.msra.mxu0 0.0
    %1621 = vmatprep.subr.mxu0 0.0
    %1622 = vmatpush1.xpose.msra.mxu0 0.0
    %1623 = vmatprep.subr.mxu0 0.0
    %1624 = vmatpush1.xpose.msra.mxu0 0.0
    %1625 = vmatprep.subr.mxu0 0.0
    %1626 = vmatpush1.xpose.msra.mxu0 0.0
    %1627 = vmatprep.subr.mxu0 0.0
    %1628 = vmatpush1.xpose.msra.mxu0 0.0
    %1629 = vmatprep.subr.mxu0 0.0
    %1630 = vmatpush1.xpose.msra.mxu0 0.0
    %1631 = vmatprep.subr.mxu0 0.0
    %1632 = vmatpush1.xpose.msra.mxu0 0.0
    %1633 = vmatprep.subr.mxu0 0.0
    %1634 = vmatpush1.xpose.msra.mxu0 0.0
    %1635 = vmatprep.subr.mxu0 0.0
    %1636 = vmatpush1.xpose.msra.mxu0 0.0
    %1637 = vmatprep.subr.mxu0 0.0
    %1638 = vmatpush1.xpose.msra.mxu0 0.0
    %1639 = vmatprep.mubr.f32.mxu0 0.0
    %1640 = vmatmul.mubr.f32.gmra.mrb[0].mxu0 %v1570
    %v1641 = vpop.f32.mrb[0].mxu0
    %v1642 = vadd.f32 0.0, %v1641
    %v1643 = vpop.f32.mrb[0].mxu0
    %1644 = vdwg.mxu0
    %v1646 = vsel %vm1188, %v556, 0
    %v1649 = vsel %vm1188, %v868, 0
    %1651 = vmatprep.subr.mxu0 0.0
    %1652 = vmatpush1.xpose.msra.mxu0 %v1649
    %1653 = vmatprep.subr.mxu0 0.0
    %1654 = vmatpush1.xpose.msra.mxu0 0.0
    %1655 = vmatprep.subr.mxu0 0.0
    %1656 = vmatpush1.xpose.msra.mxu0 0.0
    %1657 = vmatprep.subr.mxu0 0.0
    %1658 = vmatpush1.xpose.msra.mxu0 0.0
    %1659 = vmatprep.subr.mxu0 0.0
    %1660 = vmatpush1.xpose.msra.mxu0 0.0
    %1661 = vmatprep.subr.mxu0 0.0
    %1662 = vmatpush1.xpose.msra.mxu0 0.0
    %1663 = vmatprep.subr.mxu0 0.0
    %1664 = vmatpush1.xpose.msra.mxu0 0.0
    %1665 = vmatprep.subr.mxu0 0.0
    %1666 = vmatpush1.xpose.msra.mxu0 0.0
    %1667 = vmatprep.subr.mxu0 0.0
    %1668 = vmatpush1.xpose.msra.mxu0 0.0
    %1669 = vmatprep.subr.mxu0 0.0
    %1670 = vmatpush1.xpose.msra.mxu0 0.0
    %1671 = vmatprep.subr.mxu0 0.0
    %1672 = vmatpush1.xpose.msra.mxu0 0.0
    %1673 = vmatprep.subr.mxu0 0.0
    %1674 = vmatpush1.xpose.msra.mxu0 0.0
    %1675 = vmatprep.subr.mxu0 0.0
    %1676 = vmatpush1.xpose.msra.mxu0 0.0
    %1677 = vmatprep.subr.mxu0 0.0
    %1678 = vmatpush1.xpose.msra.mxu0 0.0
    %1679 = vmatprep.subr.mxu0 0.0
    %1680 = vmatpush1.xpose.msra.mxu0 0.0
    %1681 = vmatprep.subr.mxu0 0.0
    %1682 = vmatpush1.xpose.msra.mxu0 0.0
    %1683 = vmatprep.subr.mxu0 0.0
    %1684 = vmatpush1.xpose.msra.mxu0 0.0
    %1685 = vmatprep.subr.mxu0 0.0
    %1686 = vmatpush1.xpose.msra.mxu0 0.0
    %1687 = vmatprep.subr.mxu0 0.0
    %1688 = vmatpush1.xpose.msra.mxu0 0.0
    %1689 = vmatprep.subr.mxu0 0.0
    %1690 = vmatpush1.xpose.msra.mxu0 0.0
    %1691 = vmatprep.subr.mxu0 0.0
    %1692 = vmatpush1.xpose.msra.mxu0 0.0
    %1693 = vmatprep.subr.mxu0 0.0
    %1694 = vmatpush1.xpose.msra.mxu0 0.0
    %1695 = vmatprep.subr.mxu0 0.0
    %1696 = vmatpush1.xpose.msra.mxu0 0.0
    %1697 = vmatprep.subr.mxu0 0.0
    %1698 = vmatpush1.xpose.msra.mxu0 0.0
    %1699 = vmatprep.subr.mxu0 0.0
    %1700 = vmatpush1.xpose.msra.mxu0 0.0
    %1701 = vmatprep.subr.mxu0 0.0
    %1702 = vmatpush1.xpose.msra.mxu0 0.0
    %1703 = vmatprep.subr.mxu0 0.0
    %1704 = vmatpush1.xpose.msra.mxu0 0.0
    %1705 = vmatprep.subr.mxu0 0.0
    %1706 = vmatpush1.xpose.msra.mxu0 0.0
    %1707 = vmatprep.subr.mxu0 0.0
    %1708 = vmatpush1.xpose.msra.mxu0 0.0
    %1709 = vmatprep.subr.mxu0 0.0
    %1710 = vmatpush1.xpose.msra.mxu0 0.0
    %1711 = vmatprep.subr.mxu0 0.0
    %1712 = vmatpush1.xpose.msra.mxu0 0.0
    %1713 = vmatprep.subr.mxu0 0.0
    %1714 = vmatpush1.xpose.msra.mxu0 0.0
    %1715 = vmatprep.mubr.f32.mxu0 0.0
    %1716 = vmatmul.mubr.f32.gmra.mrb[0].mxu0 %v1646
    %v1717 = vpop.f32.mrb[0].mxu0
    %v1718 = vadd.f32 0.0, %v1717
    %v1719 = vpop.f32.mrb[0].mxu0
    %1720 = vdwg.mxu0
    %v1722 = vsel %vm1188, %v561, 0
    %v1725 = vsel %vm1188, %v873, 0
    %1727 = vmatprep.subr.mxu0 0.0
    %1728 = vmatpush1.xpose.msra.mxu0 %v1725
    %1729 = vmatprep.subr.mxu0 0.0
    %1730 = vmatpush1.xpose.msra.mxu0 0.0
    %1731 = vmatprep.subr.mxu0 0.0
    %1732 = vmatpush1.xpose.msra.mxu0 0.0
    %1733 = vmatprep.subr.mxu0 0.0
    %1734 = vmatpush1.xpose.msra.mxu0 0.0
    %1735 = vmatprep.subr.mxu0 0.0
    %1736 = vmatpush1.xpose.msra.mxu0 0.0
    %1737 = vmatprep.subr.mxu0 0.0
    %1738 = vmatpush1.xpose.msra.mxu0 0.0
    %1739 = vmatprep.subr.mxu0 0.0
    %1740 = vmatpush1.xpose.msra.mxu0 0.0
    %1741 = vmatprep.subr.mxu0 0.0
    %1742 = vmatpush1.xpose.msra.mxu0 0.0
    %1743 = vmatprep.subr.mxu0 0.0
    %1744 = vmatpush1.xpose.msra.mxu0 0.0
    %1745 = vmatprep.subr.mxu0 0.0
    %1746 = vmatpush1.xpose.msra.mxu0 0.0
    %1747 = vmatprep.subr.mxu0 0.0
    %1748 = vmatpush1.xpose.msra.mxu0 0.0
    %1749 = vmatprep.subr.mxu0 0.0
    %1750 = vmatpush1.xpose.msra.mxu0 0.0
    %1751 = vmatprep.subr.mxu0 0.0
    %1752 = vmatpush1.xpose.msra.mxu0 0.0
    %1753 = vmatprep.subr.mxu0 0.0
    %1754 = vmatpush1.xpose.msra.mxu0 0.0
    %1755 = vmatprep.subr.mxu0 0.0
    %1756 = vmatpush1.xpose.msra.mxu0 0.0
    %1757 = vmatprep.subr.mxu0 0.0
    %1758 = vmatpush1.xpose.msra.mxu0 0.0
    %1759 = vmatprep.subr.mxu0 0.0
    %1760 = vmatpush1.xpose.msra.mxu0 0.0
    %1761 = vmatprep.subr.mxu0 0.0
    %1762 = vmatpush1.xpose.msra.mxu0 0.0
    %1763 = vmatprep.subr.mxu0 0.0
    %1764 = vmatpush1.xpose.msra.mxu0 0.0
    %1765 = vmatprep.subr.mxu0 0.0
    %1766 = vmatpush1.xpose.msra.mxu0 0.0
    %1767 = vmatprep.subr.mxu0 0.0
    %1768 = vmatpush1.xpose.msra.mxu0 0.0
    %1769 = vmatprep.subr.mxu0 0.0
    %1770 = vmatpush1.xpose.msra.mxu0 0.0
    %1771 = vmatprep.subr.mxu0 0.0
    %1772 = vmatpush1.xpose.msra.mxu0 0.0
    %1773 = vmatprep.subr.mxu0 0.0
    %1774 = vmatpush1.xpose.msra.mxu0 0.0
    %1775 = vmatprep.subr.mxu0 0.0
    %1776 = vmatpush1.xpose.msra.mxu0 0.0
    %1777 = vmatprep.subr.mxu0 0.0
    %1778 = vmatpush1.xpose.msra.mxu0 0.0
    %1779 = vmatprep.subr.mxu0 0.0
    %1780 = vmatpush1.xpose.msra.mxu0 0.0
    %1781 = vmatprep.subr.mxu0 0.0
    %1782 = vmatpush1.xpose.msra.mxu0 0.0
    %1783 = vmatprep.subr.mxu0 0.0
    %1784 = vmatpush1.xpose.msra.mxu0 0.0
    %1785 = vmatprep.subr.mxu0 0.0
    %1786 = vmatpush1.xpose.msra.mxu0 0.0
    %1787 = vmatprep.subr.mxu0 0.0
    %1788 = vmatpush1.xpose.msra.mxu0 0.0
    %1789 = vmatprep.subr.mxu0 0.0
    %1790 = vmatpush1.xpose.msra.mxu0 0.0
    %1791 = vmatprep.mubr.f32.mxu0 0.0
    %1792 = vmatmul.mubr.f32.gmra.mrb[0].mxu0 %v1722
    %v1793 = vpop.f32.mrb[0].mxu0
    %v1794 = vadd.f32 0.0, %v1793
    %v1795 = vpop.f32.mrb[0].mxu0
    %1796 = vdwg.mxu0
    %v1797 = vsel %vm1188, %v1262, -inf
    %1798 = vmax.xlane.f32.xlu0 %v1797
    %v1799 = vpop.xlane.xlu0 %1798
    %v1800 = vsel %vm1188, %v1338, -inf
    %1801 = vmax.xlane.f32.xlu0 %v1800
    %v1802 = vpop.xlane.xlu0 %1801
    %v1803 = vsel %vm1188, %v1414, -inf
    %1804 = vmax.xlane.f32.xlu0 %v1803
    %v1805 = vpop.xlane.xlu0 %1804
    %v1806 = vsel %vm1188, %v1490, -inf
    %1807 = vmax.xlane.f32.xlu0 %v1806
    %v1808 = vpop.xlane.xlu0 %1807
    %v1809 = vsel %vm1188, %v1566, -inf
    %1810 = vmax.xlane.f32.xlu0 %v1809
    %v1811 = vpop.xlane.xlu0 %1810
    %v1812 = vsel %vm1188, %v1642, -inf
    %1813 = vmax.xlane.f32.xlu0 %v1812
    %v1814 = vpop.xlane.xlu0 %1813
    %v1815 = vsel %vm1188, %v1718, -inf
    %1816 = vmax.xlane.f32.xlu0 %v1815
    %v1817 = vpop.xlane.xlu0 %1816
    %v1818 = vsel %vm1188, %v1794, -inf
    %1819 = vmax.xlane.f32.xlu0 %v1818
    %v1820 = vpop.xlane.xlu0 %1819
    %v1821 = vsub.f32 %v1262, %v1799
    %v1822 = vsub.f32 %v1338, %v1802
    %v1823 = vsub.f32 %v1414, %v1805
    %v1824 = vsub.f32 %v1490, %v1808
    %v1825 = vsub.f32 %v1566, %v1811
    %v1826 = vsub.f32 %v1642, %v1814
    %v1827 = vsub.f32 %v1718, %v1817
    %v1828 = vsub.f32 %v1794, %v1820
    %v1829 = vmul.f32 %v1821, 1.442695
    %v1830 = vpow.pop %v1829
    %v1831 = vmul.f32 %v1822, 1.442695
    %v1832 = vpow.pop %v1831
    %v1833 = vmul.f32 %v1823, 1.442695
    %v1834 = vpow.pop %v1833
    %v1835 = vmul.f32 %v1824, 1.442695
    %v1836 = vpow.pop %v1835
    %v1837 = vmul.f32 %v1825, 1.442695
    %v1838 = vpow.pop %v1837
    %v1839 = vmul.f32 %v1826, 1.442695
    %v1840 = vpow.pop %v1839
    %v1841 = vmul.f32 %v1827, 1.442695
    %v1842 = vpow.pop %v1841
    %v1843 = vmul.f32 %v1828, 1.442695
    %v1844 = vpow.pop %v1843
    %v1845 = vsel %vm1188, %v1830, 0.0
    %1846 = vadd.xlane.f32.xlu0 %v1845
    %v1847 = vpop.xlane.xlu0 %1846
    %v1848 = vsel %vm1188, %v1832, 0.0
    %1849 = vadd.xlane.f32.xlu0 %v1848
    %v1850 = vpop.xlane.xlu0 %1849
    %v1851 = vsel %vm1188, %v1834, 0.0
    %1852 = vadd.xlane.f32.xlu0 %v1851
    %v1853 = vpop.xlane.xlu0 %1852
    %v1854 = vsel %vm1188, %v1836, 0.0
    %1855 = vadd.xlane.f32.xlu0 %v1854
    %v1856 = vpop.xlane.xlu0 %1855
    %v1857 = vsel %vm1188, %v1838, 0.0
    %1858 = vadd.xlane.f32.xlu0 %v1857
    %v1859 = vpop.xlane.xlu0 %1858
    %v1860 = vsel %vm1188, %v1840, 0.0
    %1861 = vadd.xlane.f32.xlu0 %v1860
    %v1862 = vpop.xlane.xlu0 %1861
    %v1863 = vsel %vm1188, %v1842, 0.0
    %1864 = vadd.xlane.f32.xlu0 %v1863
    %v1865 = vpop.xlane.xlu0 %1864
    %v1866 = vsel %vm1188, %v1844, 0.0
    %1867 = vadd.xlane.f32.xlu0 %v1866
    %v1868 = vpop.xlane.xlu0 %1867
    %v1869 = vrcp.pop %v1847
    %v1870 = vmul.f32 %v1830, %v1869
    %v1871 = vrcp.pop %v1850
    %v1872 = vmul.f32 %v1832, %v1871
    %v1873 = vrcp.pop %v1853
    %v1874 = vmul.f32 %v1834, %v1873
    %v1875 = vrcp.pop %v1856
    %v1876 = vmul.f32 %v1836, %v1875
    %v1877 = vrcp.pop %v1859
    %v1878 = vmul.f32 %v1838, %v1877
    %v1879 = vrcp.pop %v1862
    %v1880 = vmul.f32 %v1840, %v1879
    %v1881 = vrcp.pop %v1865
    %v1882 = vmul.f32 %v1842, %v1881
    %v1883 = vrcp.pop %v1868
    %v1884 = vmul.f32 %v1844, %v1883
    %v1886 = vsel %vm1188, %v1870, 0
    %1888 = vmatprep.subr.mxu0 0.0
    %1889 = vmatpush1.msra.mxu0 %v946
    %1890 = vmatprep.subr.mxu0 0.0
    %1891 = vmatpush1.msra.mxu0 0.0
    %1892 = vmatprep.subr.mxu0 0.0
    %1893 = vmatpush1.msra.mxu0 0.0
    %1894 = vmatprep.subr.mxu0 0.0
    %1895 = vmatpush1.msra.mxu0 0.0
    %1896 = vmatprep.subr.mxu0 0.0
    %1897 = vmatpush1.msra.mxu0 0.0
    %1898 = vmatprep.subr.mxu0 0.0
    %1899 = vmatpush1.msra.mxu0 0.0
    %1900 = vmatprep.subr.mxu0 0.0
    %1901 = vmatpush1.msra.mxu0 0.0
    %1902 = vmatprep.subr.mxu0 0.0
    %1903 = vmatpush1.msra.mxu0 0.0
    %1904 = vmatprep.subr.mxu0 0.0
    %1905 = vmatpush1.msra.mxu0 0.0
    %1906 = vmatprep.subr.mxu0 0.0
    %1907 = vmatpush1.msra.mxu0 0.0
    %1908 = vmatprep.subr.mxu0 0.0
    %1909 = vmatpush1.msra.mxu0 0.0
    %1910 = vmatprep.subr.mxu0 0.0
    %1911 = vmatpush1.msra.mxu0 0.0
    %1912 = vmatprep.subr.mxu0 0.0
    %1913 = vmatpush1.msra.mxu0 0.0
    %1914 = vmatprep.subr.mxu0 0.0
    %1915 = vmatpush1.msra.mxu0 0.0
    %1916 = vmatprep.subr.mxu0 0.0
    %1917 = vmatpush1.msra.mxu0 0.0
    %1918 = vmatprep.subr.mxu0 0.0
    %1919 = vmatpush1.msra.mxu0 0.0
    %1920 = vmatprep.subr.mxu0 0.0
    %1921 = vmatpush1.msra.mxu0 0.0
    %1922 = vmatprep.subr.mxu0 0.0
    %1923 = vmatpush1.msra.mxu0 0.0
    %1924 = vmatprep.subr.mxu0 0.0
    %1925 = vmatpush1.msra.mxu0 0.0
    %1926 = vmatprep.subr.mxu0 0.0
    %1927 = vmatpush1.msra.mxu0 0.0
    %1928 = vmatprep.subr.mxu0 0.0
    %1929 = vmatpush1.msra.mxu0 0.0
    %1930 = vmatprep.subr.mxu0 0.0
    %1931 = vmatpush1.msra.mxu0 0.0
    %1932 = vmatprep.subr.mxu0 0.0
    %1933 = vmatpush1.msra.mxu0 0.0
    %1934 = vmatprep.subr.mxu0 0.0
    %1935 = vmatpush1.msra.mxu0 0.0
    %1936 = vmatprep.subr.mxu0 0.0
    %1937 = vmatpush1.msra.mxu0 0.0
    %1938 = vmatprep.subr.mxu0 0.0
    %1939 = vmatpush1.msra.mxu0 0.0
    %1940 = vmatprep.subr.mxu0 0.0
    %1941 = vmatpush1.msra.mxu0 0.0
    %1942 = vmatprep.subr.mxu0 0.0
    %1943 = vmatpush1.msra.mxu0 0.0
    %1944 = vmatprep.subr.mxu0 0.0
    %1945 = vmatpush1.msra.mxu0 0.0
    %1946 = vmatprep.subr.mxu0 0.0
    %1947 = vmatpush1.msra.mxu0 0.0
    %1948 = vmatprep.subr.mxu0 0.0
    %1949 = vmatpush1.msra.mxu0 0.0
    %1950 = vmatprep.subr.mxu0 0.0
    %1951 = vmatpush1.msra.mxu0 0.0
    %1952 = vmatprep.mubr.f32.mxu0 0.0
    %1953 = vmatmul.mubr.f32.gmra.mrb[0].mxu0 %v1886
    %v1954 = vpop.f32.mrb[0].mxu0
    %v1955 = vadd.f32 0.0, %v1954
    %v1956 = vpop.f32.mrb[0].mxu0
    %1957 = vdwg.mxu0
    %v1959 = vsel %vm1188, %v1872, 0
    %1961 = vmatprep.subr.mxu0 0.0
    %1962 = vmatpush1.msra.mxu0 %v951
    %1963 = vmatprep.subr.mxu0 0.0
    %1964 = vmatpush1.msra.mxu0 0.0
    %1965 = vmatprep.subr.mxu0 0.0
    %1966 = vmatpush1.msra.mxu0 0.0
    %1967 = vmatprep.subr.mxu0 0.0
    %1968 = vmatpush1.msra.mxu0 0.0
    %1969 = vmatprep.subr.mxu0 0.0
    %1970 = vmatpush1.msra.mxu0 0.0
    %1971 = vmatprep.subr.mxu0 0.0
    %1972 = vmatpush1.msra.mxu0 0.0
    %1973 = vmatprep.subr.mxu0 0.0
    %1974 = vmatpush1.msra.mxu0 0.0
    %1975 = vmatprep.subr.mxu0 0.0
    %1976 = vmatpush1.msra.mxu0 0.0
    %1977 = vmatprep.subr.mxu0 0.0
    %1978 = vmatpush1.msra.mxu0 0.0
    %1979 = vmatprep.subr.mxu0 0.0
    %1980 = vmatpush1.msra.mxu0 0.0
    %1981 = vmatprep.subr.mxu0 0.0
    %1982 = vmatpush1.msra.mxu0 0.0
    %1983 = vmatprep.subr.mxu0 0.0
    %1984 = vmatpush1.msra.mxu0 0.0
    %1985 = vmatprep.subr.mxu0 0.0
    %1986 = vmatpush1.msra.mxu0 0.0
    %1987 = vmatprep.subr.mxu0 0.0
    %1988 = vmatpush1.msra.mxu0 0.0
    %1989 = vmatprep.subr.mxu0 0.0
    %1990 = vmatpush1.msra.mxu0 0.0
    %1991 = vmatprep.subr.mxu0 0.0
    %1992 = vmatpush1.msra.mxu0 0.0
    %1993 = vmatprep.subr.mxu0 0.0
    %1994 = vmatpush1.msra.mxu0 0.0
    %1995 = vmatprep.subr.mxu0 0.0
    %1996 = vmatpush1.msra.mxu0 0.0
    %1997 = vmatprep.subr.mxu0 0.0
    %1998 = vmatpush1.msra.mxu0 0.0
    %1999 = vmatprep.subr.mxu0 0.0
    %2000 = vmatpush1.msra.mxu0 0.0
    %2001 = vmatprep.subr.mxu0 0.0
    %2002 = vmatpush1.msra.mxu0 0.0
    %2003 = vmatprep.subr.mxu0 0.0
    %2004 = vmatpush1.msra.mxu0 0.0
    %2005 = vmatprep.subr.mxu0 0.0
    %2006 = vmatpush1.msra.mxu0 0.0
    %2007 = vmatprep.subr.mxu0 0.0
    %2008 = vmatpush1.msra.mxu0 0.0
    %2009 = vmatprep.subr.mxu0 0.0
    %2010 = vmatpush1.msra.mxu0 0.0
    %2011 = vmatprep.subr.mxu0 0.0
    %2012 = vmatpush1.msra.mxu0 0.0
    %2013 = vmatprep.subr.mxu0 0.0
    %2014 = vmatpush1.msra.mxu0 0.0
    %2015 = vmatprep.subr.mxu0 0.0
    %2016 = vmatpush1.msra.mxu0 0.0
    %2017 = vmatprep.subr.mxu0 0.0
    %2018 = vmatpush1.msra.mxu0 0.0
    %2019 = vmatprep.subr.mxu0 0.0
    %2020 = vmatpush1.msra.mxu0 0.0
    %2021 = vmatprep.subr.mxu0 0.0
    %2022 = vmatpush1.msra.mxu0 0.0
    %2023 = vmatprep.subr.mxu0 0.0
    %2024 = vmatpush1.msra.mxu0 0.0
    %2025 = vmatprep.mubr.f32.mxu0 0.0
    %2026 = vmatmul.mubr.f32.gmra.mrb[0].mxu0 %v1959
    %v2027 = vpop.f32.mrb[0].mxu0
    %v2028 = vadd.f32 0.0, %v2027
    %v2029 = vpop.f32.mrb[0].mxu0
    %2030 = vdwg.mxu0
    %v2032 = vsel %vm1188, %v1874, 0
    %2034 = vmatprep.subr.mxu0 0.0
    %2035 = vmatpush1.msra.mxu0 %v1024
    %2036 = vmatprep.subr.mxu0 0.0
    %2037 = vmatpush1.msra.mxu0 0.0
    %2038 = vmatprep.subr.mxu0 0.0
    %2039 = vmatpush1.msra.mxu0 0.0
    %2040 = vmatprep.subr.mxu0 0.0
    %2041 = vmatpush1.msra.mxu0 0.0
    %2042 = vmatprep.subr.mxu0 0.0
    %2043 = vmatpush1.msra.mxu0 0.0
    %2044 = vmatprep.subr.mxu0 0.0
    %2045 = vmatpush1.msra.mxu0 0.0
    %2046 = vmatprep.subr.mxu0 0.0
    %2047 = vmatpush1.msra.mxu0 0.0
    %2048 = vmatprep.subr.mxu0 0.0
    %2049 = vmatpush1.msra.mxu0 0.0
    %2050 = vmatprep.subr.mxu0 0.0
    %2051 = vmatpush1.msra.mxu0 0.0
    %2052 = vmatprep.subr.mxu0 0.0
    %2053 = vmatpush1.msra.mxu0 0.0
    %2054 = vmatprep.subr.mxu0 0.0
    %2055 = vmatpush1.msra.mxu0 0.0
    %2056 = vmatprep.subr.mxu0 0.0
    %2057 = vmatpush1.msra.mxu0 0.0
    %2058 = vmatprep.subr.mxu0 0.0
    %2059 = vmatpush1.msra.mxu0 0.0
    %2060 = vmatprep.subr.mxu0 0.0
    %2061 = vmatpush1.msra.mxu0 0.0
    %2062 = vmatprep.subr.mxu0 0.0
    %2063 = vmatpush1.msra.mxu0 0.0
    %2064 = vmatprep.subr.mxu0 0.0
    %2065 = vmatpush1.msra.mxu0 0.0
    %2066 = vmatprep.subr.mxu0 0.0
    %2067 = vmatpush1.msra.mxu0 0.0
    %2068 = vmatprep.subr.mxu0 0.0
    %2069 = vmatpush1.msra.mxu0 0.0
    %2070 = vmatprep.subr.mxu0 0.0
    %2071 = vmatpush1.msra.mxu0 0.0
    %2072 = vmatprep.subr.mxu0 0.0
    %2073 = vmatpush1.msra.mxu0 0.0
    %2074 = vmatprep.subr.mxu0 0.0
    %2075 = vmatpush1.msra.mxu0 0.0
    %2076 = vmatprep.subr.mxu0 0.0
    %2077 = vmatpush1.msra.mxu0 0.0
    %2078 = vmatprep.subr.mxu0 0.0
    %2079 = vmatpush1.msra.mxu0 0.0
    %2080 = vmatprep.subr.mxu0 0.0
    %2081 = vmatpush1.msra.mxu0 0.0
    %2082 = vmatprep.subr.mxu0 0.0
    %2083 = vmatpush1.msra.mxu0 0.0
    %2084 = vmatprep.subr.mxu0 0.0
    %2085 = vmatpush1.msra.mxu0 0.0
    %2086 = vmatprep.subr.mxu0 0.0
    %2087 = vmatpush1.msra.mxu0 0.0
    %2088 = vmatprep.subr.mxu0 0.0
    %2089 = vmatpush1.msra.mxu0 0.0
    %2090 = vmatprep.subr.mxu0 0.0
    %2091 = vmatpush1.msra.mxu0 0.0
    %2092 = vmatprep.subr.mxu0 0.0
    %2093 = vmatpush1.msra.mxu0 0.0
    %2094 = vmatprep.subr.mxu0 0.0
    %2095 = vmatpush1.msra.mxu0 0.0
    %2096 = vmatprep.subr.mxu0 0.0
    %2097 = vmatpush1.msra.mxu0 0.0
    %2098 = vmatprep.mubr.f32.mxu0 0.0
    %2099 = vmatmul.mubr.f32.gmra.mrb[0].mxu0 %v2032
    %v2100 = vpop.f32.mrb[0].mxu0
    %v2101 = vadd.f32 0.0, %v2100
    %v2102 = vpop.f32.mrb[0].mxu0
    %2103 = vdwg.mxu0
    %v2105 = vsel %vm1188, %v1876, 0
    %2107 = vmatprep.subr.mxu0 0.0
    %2108 = vmatpush1.msra.mxu0 %v1029
    %2109 = vmatprep.subr.mxu0 0.0
    %2110 = vmatpush1.msra.mxu0 0.0
    %2111 = vmatprep.subr.mxu0 0.0
    %2112 = vmatpush1.msra.mxu0 0.0
    %2113 = vmatprep.subr.mxu0 0.0
    %2114 = vmatpush1.msra.mxu0 0.0
    %2115 = vmatprep.subr.mxu0 0.0
    %2116 = vmatpush1.msra.mxu0 0.0
    %2117 = vmatprep.subr.mxu0 0.0
    %2118 = vmatpush1.msra.mxu0 0.0
    %2119 = vmatprep.subr.mxu0 0.0
    %2120 = vmatpush1.msra.mxu0 0.0
    %2121 = vmatprep.subr.mxu0 0.0
    %2122 = vmatpush1.msra.mxu0 0.0
    %2123 = vmatprep.subr.mxu0 0.0
    %2124 = vmatpush1.msra.mxu0 0.0
    %2125 = vmatprep.subr.mxu0 0.0
    %2126 = vmatpush1.msra.mxu0 0.0
    %2127 = vmatprep.subr.mxu0 0.0
    %2128 = vmatpush1.msra.mxu0 0.0
    %2129 = vmatprep.subr.mxu0 0.0
    %2130 = vmatpush1.msra.mxu0 0.0
    %2131 = vmatprep.subr.mxu0 0.0
    %2132 = vmatpush1.msra.mxu0 0.0
    %2133 = vmatprep.subr.mxu0 0.0
    %2134 = vmatpush1.msra.mxu0 0.0
    %2135 = vmatprep.subr.mxu0 0.0
    %2136 = vmatpush1.msra.mxu0 0.0
    %2137 = vmatprep.subr.mxu0 0.0
    %2138 = vmatpush1.msra.mxu0 0.0
    %2139 = vmatprep.subr.mxu0 0.0
    %2140 = vmatpush1.msra.mxu0 0.0
    %2141 = vmatprep.subr.mxu0 0.0
    %2142 = vmatpush1.msra.mxu0 0.0
    %2143 = vmatprep.subr.mxu0 0.0
    %2144 = vmatpush1.msra.mxu0 0.0
    %2145 = vmatprep.subr.mxu0 0.0
    %2146 = vmatpush1.msra.mxu0 0.0
    %2147 = vmatprep.subr.mxu0 0.0
    %2148 = vmatpush1.msra.mxu0 0.0
    %2149 = vmatprep.subr.mxu0 0.0
    %2150 = vmatpush1.msra.mxu0 0.0
    %2151 = vmatprep.subr.mxu0 0.0
    %2152 = vmatpush1.msra.mxu0 0.0
    %2153 = vmatprep.subr.mxu0 0.0
    %2154 = vmatpush1.msra.mxu0 0.0
    %2155 = vmatprep.subr.mxu0 0.0
    %2156 = vmatpush1.msra.mxu0 0.0
    %2157 = vmatprep.subr.mxu0 0.0
    %2158 = vmatpush1.msra.mxu0 0.0
    %2159 = vmatprep.subr.mxu0 0.0
    %2160 = vmatpush1.msra.mxu0 0.0
    %2161 = vmatprep.subr.mxu0 0.0
    %2162 = vmatpush1.msra.mxu0 0.0
    %2163 = vmatprep.subr.mxu0 0.0
    %2164 = vmatpush1.msra.mxu0 0.0
    %2165 = vmatprep.subr.mxu0 0.0
    %2166 = vmatpush1.msra.mxu0 0.0
    %2167 = vmatprep.subr.mxu0 0.0
    %2168 = vmatpush1.msra.mxu0 0.0
    %2169 = vmatprep.subr.mxu0 0.0
    %2170 = vmatpush1.msra.mxu0 0.0
    %2171 = vmatprep.mubr.f32.mxu0 0.0
    %2172 = vmatmul.mubr.f32.gmra.mrb[0].mxu0 %v2105
    %v2173 = vpop.f32.mrb[0].mxu0
    %v2174 = vadd.f32 0.0, %v2173
    %v2175 = vpop.f32.mrb[0].mxu0
    %2176 = vdwg.mxu0
    %v2178 = vsel %vm1188, %v1878, 0
    %2180 = vmatprep.subr.mxu0 0.0
    %2181 = vmatpush1.msra.mxu0 %v1102
    %2182 = vmatprep.subr.mxu0 0.0
    %2183 = vmatpush1.msra.mxu0 0.0
    %2184 = vmatprep.subr.mxu0 0.0
    %2185 = vmatpush1.msra.mxu0 0.0
    %2186 = vmatprep.subr.mxu0 0.0
    %2187 = vmatpush1.msra.mxu0 0.0
    %2188 = vmatprep.subr.mxu0 0.0
    %2189 = vmatpush1.msra.mxu0 0.0
    %2190 = vmatprep.subr.mxu0 0.0
    %2191 = vmatpush1.msra.mxu0 0.0
    %2192 = vmatprep.subr.mxu0 0.0
    %2193 = vmatpush1.msra.mxu0 0.0
    %2194 = vmatprep.subr.mxu0 0.0
    %2195 = vmatpush1.msra.mxu0 0.0
    %2196 = vmatprep.subr.mxu0 0.0
    %2197 = vmatpush1.msra.mxu0 0.0
    %2198 = vmatprep.subr.mxu0 0.0
    %2199 = vmatpush1.msra.mxu0 0.0
    %2200 = vmatprep.subr.mxu0 0.0
    %2201 = vmatpush1.msra.mxu0 0.0
    %2202 = vmatprep.subr.mxu0 0.0
    %2203 = vmatpush1.msra.mxu0 0.0
    %2204 = vmatprep.subr.mxu0 0.0
    %2205 = vmatpush1.msra.mxu0 0.0
    %2206 = vmatprep.subr.mxu0 0.0
    %2207 = vmatpush1.msra.mxu0 0.0
    %2208 = vmatprep.subr.mxu0 0.0
    %2209 = vmatpush1.msra.mxu0 0.0
    %2210 = vmatprep.subr.mxu0 0.0
    %2211 = vmatpush1.msra.mxu0 0.0
    %2212 = vmatprep.subr.mxu0 0.0
    %2213 = vmatpush1.msra.mxu0 0.0
    %2214 = vmatprep.subr.mxu0 0.0
    %2215 = vmatpush1.msra.mxu0 0.0
    %2216 = vmatprep.subr.mxu0 0.0
    %2217 = vmatpush1.msra.mxu0 0.0
    %2218 = vmatprep.subr.mxu0 0.0
    %2219 = vmatpush1.msra.mxu0 0.0
    %2220 = vmatprep.subr.mxu0 0.0
    %2221 = vmatpush1.msra.mxu0 0.0
    %2222 = vmatprep.subr.mxu0 0.0
    %2223 = vmatpush1.msra.mxu0 0.0
    %2224 = vmatprep.subr.mxu0 0.0
    %2225 = vmatpush1.msra.mxu0 0.0
    %2226 = vmatprep.subr.mxu0 0.0
    %2227 = vmatpush1.msra.mxu0 0.0
    %2228 = vmatprep.subr.mxu0 0.0
    %2229 = vmatpush1.msra.mxu0 0.0
    %2230 = vmatprep.subr.mxu0 0.0
    %2231 = vmatpush1.msra.mxu0 0.0
    %2232 = vmatprep.subr.mxu0 0.0
    %2233 = vmatpush1.msra.mxu0 0.0
    %2234 = vmatprep.subr.mxu0 0.0
    %2235 = vmatpush1.msra.mxu0 0.0
    %2236 = vmatprep.subr.mxu0 0.0
    %2237 = vmatpush1.msra.mxu0 0.0
    %2238 = vmatprep.subr.mxu0 0.0
    %2239 = vmatpush1.msra.mxu0 0.0
    %2240 = vmatprep.subr.mxu0 0.0
    %2241 = vmatpush1.msra.mxu0 0.0
    %2242 = vmatprep.subr.mxu0 0.0
    %2243 = vmatpush1.msra.mxu0 0.0
    %2244 = vmatprep.mubr.f32.mxu0 0.0
    %2245 = vmatmul.mubr.f32.gmra.mrb[0].mxu0 %v2178
    %v2246 = vpop.f32.mrb[0].mxu0
    %v2247 = vadd.f32 0.0, %v2246
    %v2248 = vpop.f32.mrb[0].mxu0
    %2249 = vdwg.mxu0
    %v2251 = vsel %vm1188, %v1880, 0
    %2253 = vmatprep.subr.mxu0 0.0
    %2254 = vmatpush1.msra.mxu0 %v1107
    %2255 = vmatprep.subr.mxu0 0.0
    %2256 = vmatpush1.msra.mxu0 0.0
    %2257 = vmatprep.subr.mxu0 0.0
    %2258 = vmatpush1.msra.mxu0 0.0
    %2259 = vmatprep.subr.mxu0 0.0
    %2260 = vmatpush1.msra.mxu0 0.0
    %2261 = vmatprep.subr.mxu0 0.0
    %2262 = vmatpush1.msra.mxu0 0.0
    %2263 = vmatprep.subr.mxu0 0.0
    %2264 = vmatpush1.msra.mxu0 0.0
    %2265 = vmatprep.subr.mxu0 0.0
    %2266 = vmatpush1.msra.mxu0 0.0
    %2267 = vmatprep.subr.mxu0 0.0
    %2268 = vmatpush1.msra.mxu0 0.0
    %2269 = vmatprep.subr.mxu0 0.0
    %2270 = vmatpush1.msra.mxu0 0.0
    %2271 = vmatprep.subr.mxu0 0.0
    %2272 = vmatpush1.msra.mxu0 0.0
    %2273 = vmatprep.subr.mxu0 0.0
    %2274 = vmatpush1.msra.mxu0 0.0
    %2275 = vmatprep.subr.mxu0 0.0
    %2276 = vmatpush1.msra.mxu0 0.0
    %2277 = vmatprep.subr.mxu0 0.0
    %2278 = vmatpush1.msra.mxu0 0.0
    %2279 = vmatprep.subr.mxu0 0.0
    %2280 = vmatpush1.msra.mxu0 0.0
    %2281 = vmatprep.subr.mxu0 0.0
    %2282 = vmatpush1.msra.mxu0 0.0
    %2283 = vmatprep.subr.mxu0 0.0
    %2284 = vmatpush1.msra.mxu0 0.0
    %2285 = vmatprep.subr.mxu0 0.0
    %2286 = vmatpush1.msra.mxu0 0.0
    %2287 = vmatprep.subr.mxu0 0.0
    %2288 = vmatpush1.msra.mxu0 0.0
    %2289 = vmatprep.subr.mxu0 0.0
    %2290 = vmatpush1.msra.mxu0 0.0
    %2291 = vmatprep.subr.mxu0 0.0
    %2292 = vmatpush1.msra.mxu0 0.0
    %2293 = vmatprep.subr.mxu0 0.0
    %2294 = vmatpush1.msra.mxu0 0.0
    %2295 = vmatprep.subr.mxu0 0.0
    %2296 = vmatpush1.msra.mxu0 0.0
    %2297 = vmatprep.subr.mxu0 0.0
    %2298 = vmatpush1.msra.mxu0 0.0
    %2299 = vmatprep.subr.mxu0 0.0
    %2300 = vmatpush1.msra.mxu0 0.0
    %2301 = vmatprep.subr.mxu0 0.0
    %2302 = vmatpush1.msra.mxu0 0.0
    %2303 = vmatprep.subr.mxu0 0.0
    %2304 = vmatpush1.msra.mxu0 0.0
    %2305 = vmatprep.subr.mxu0 0.0
    %2306 = vmatpush1.msra.mxu0 0.0
    %2307 = vmatprep.subr.mxu0 0.0
    %2308 = vmatpush1.msra.mxu0 0.0
    %2309 = vmatprep.subr.mxu0 0.0
    %2310 = vmatpush1.msra.mxu0 0.0
    %2311 = vmatprep.subr.mxu0 0.0
    %2312 = vmatpush1.msra.mxu0 0.0
    %2313 = vmatprep.subr.mxu0 0.0
    %2314 = vmatpush1.msra.mxu0 0.0
    %2315 = vmatprep.subr.mxu0 0.0
    %2316 = vmatpush1.msra.mxu0 0.0
    %2317 = vmatprep.mubr.f32.mxu0 0.0
    %2318 = vmatmul.mubr.f32.gmra.mrb[0].mxu0 %v2251
    %v2319 = vpop.f32.mrb[0].mxu0
    %v2320 = vadd.f32 0.0, %v2319
    %v2321 = vpop.f32.mrb[0].mxu0
    %2322 = vdwg.mxu0
    %v2324 = vsel %vm1188, %v1882, 0
    %2326 = vmatprep.subr.mxu0 0.0
    %2327 = vmatpush1.msra.mxu0 %v1180
    %2328 = vmatprep.subr.mxu0 0.0
    %2329 = vmatpush1.msra.mxu0 0.0
    %2330 = vmatprep.subr.mxu0 0.0
    %2331 = vmatpush1.msra.mxu0 0.0
    %2332 = vmatprep.subr.mxu0 0.0
    %2333 = vmatpush1.msra.mxu0 0.0
    %2334 = vmatprep.subr.mxu0 0.0
    %2335 = vmatpush1.msra.mxu0 0.0
    %2336 = vmatprep.subr.mxu0 0.0
    %2337 = vmatpush1.msra.mxu0 0.0
    %2338 = vmatprep.subr.mxu0 0.0
    %2339 = vmatpush1.msra.mxu0 0.0
    %2340 = vmatprep.subr.mxu0 0.0
    %2341 = vmatpush1.msra.mxu0 0.0
    %2342 = vmatprep.subr.mxu0 0.0
    %2343 = vmatpush1.msra.mxu0 0.0
    %2344 = vmatprep.subr.mxu0 0.0
    %2345 = vmatpush1.msra.mxu0 0.0
    %2346 = vmatprep.subr.mxu0 0.0
    %2347 = vmatpush1.msra.mxu0 0.0
    %2348 = vmatprep.subr.mxu0 0.0
    %2349 = vmatpush1.msra.mxu0 0.0
    %2350 = vmatprep.subr.mxu0 0.0
    %2351 = vmatpush1.msra.mxu0 0.0
    %2352 = vmatprep.subr.mxu0 0.0
    %2353 = vmatpush1.msra.mxu0 0.0
    %2354 = vmatprep.subr.mxu0 0.0
    %2355 = vmatpush1.msra.mxu0 0.0
    %2356 = vmatprep.subr.mxu0 0.0
    %2357 = vmatpush1.msra.mxu0 0.0
    %2358 = vmatprep.subr.mxu0 0.0
    %2359 = vmatpush1.msra.mxu0 0.0
    %2360 = vmatprep.subr.mxu0 0.0
    %2361 = vmatpush1.msra.mxu0 0.0
    %2362 = vmatprep.subr.mxu0 0.0
    %2363 = vmatpush1.msra.mxu0 0.0
    %2364 = vmatprep.subr.mxu0 0.0
    %2365 = vmatpush1.msra.mxu0 0.0
    %2366 = vmatprep.subr.mxu0 0.0
    %2367 = vmatpush1.msra.mxu0 0.0
    %2368 = vmatprep.subr.mxu0 0.0
    %2369 = vmatpush1.msra.mxu0 0.0
    %2370 = vmatprep.subr.mxu0 0.0
    %2371 = vmatpush1.msra.mxu0 0.0
    %2372 = vmatprep.subr.mxu0 0.0
    %2373 = vmatpush1.msra.mxu0 0.0
    %2374 = vmatprep.subr.mxu0 0.0
    %2375 = vmatpush1.msra.mxu0 0.0
    %2376 = vmatprep.subr.mxu0 0.0
    %2377 = vmatpush1.msra.mxu0 0.0
    %2378 = vmatprep.subr.mxu0 0.0
    %2379 = vmatpush1.msra.mxu0 0.0
    %2380 = vmatprep.subr.mxu0 0.0
    %2381 = vmatpush1.msra.mxu0 0.0
    %2382 = vmatprep.subr.mxu0 0.0
    %2383 = vmatpush1.msra.mxu0 0.0
    %2384 = vmatprep.subr.mxu0 0.0
    %2385 = vmatpush1.msra.mxu0 0.0
    %2386 = vmatprep.subr.mxu0 0.0
    %2387 = vmatpush1.msra.mxu0 0.0
    %2388 = vmatprep.subr.mxu0 0.0
    %2389 = vmatpush1.msra.mxu0 0.0
    %2390 = vmatprep.mubr.f32.mxu0 0.0
    %2391 = vmatmul.mubr.f32.gmra.mrb[0].mxu0 %v2324
    %v2392 = vpop.f32.mrb[0].mxu0
    %v2393 = vadd.f32 0.0, %v2392
    %v2394 = vpop.f32.mrb[0].mxu0
    %2395 = vdwg.mxu0
    %v2397 = vsel %vm1188, %v1884, 0
    %2399 = vmatprep.subr.mxu0 0.0
    %2400 = vmatpush1.msra.mxu0 %v1185
    %2401 = vmatprep.subr.mxu0 0.0
    %2402 = vmatpush1.msra.mxu0 0.0
    %2403 = vmatprep.subr.mxu0 0.0
    %2404 = vmatpush1.msra.mxu0 0.0
    %2405 = vmatprep.subr.mxu0 0.0
    %2406 = vmatpush1.msra.mxu0 0.0
    %2407 = vmatprep.subr.mxu0 0.0
    %2408 = vmatpush1.msra.mxu0 0.0
    %2409 = vmatprep.subr.mxu0 0.0
    %2410 = vmatpush1.msra.mxu0 0.0
    %2411 = vmatprep.subr.mxu0 0.0
    %2412 = vmatpush1.msra.mxu0 0.0
    %2413 = vmatprep.subr.mxu0 0.0
    %2414 = vmatpush1.msra.mxu0 0.0
    %2415 = vmatprep.subr.mxu0 0.0
    %2416 = vmatpush1.msra.mxu0 0.0
    %2417 = vmatprep.subr.mxu0 0.0
    %2418 = vmatpush1.msra.mxu0 0.0
    %2419 = vmatprep.subr.mxu0 0.0
    %2420 = vmatpush1.msra.mxu0 0.0
    %2421 = vmatprep.subr.mxu0 0.0
    %2422 = vmatpush1.msra.mxu0 0.0
    %2423 = vmatprep.subr.mxu0 0.0
    %2424 = vmatpush1.msra.mxu0 0.0
    %2425 = vmatprep.subr.mxu0 0.0
    %2426 = vmatpush1.msra.mxu0 0.0
    %2427 = vmatprep.subr.mxu0 0.0
    %2428 = vmatpush1.msra.mxu0 0.0
    %2429 = vmatprep.subr.mxu0 0.0
    %2430 = vmatpush1.msra.mxu0 0.0
    %2431 = vmatprep.subr.mxu0 0.0
    %2432 = vmatpush1.msra.mxu0 0.0
    %2433 = vmatprep.subr.mxu0 0.0
    %2434 = vmatpush1.msra.mxu0 0.0
    %2435 = vmatprep.subr.mxu0 0.0
    %2436 = vmatpush1.msra.mxu0 0.0
    %2437 = vmatprep.subr.mxu0 0.0
    %2438 = vmatpush1.msra.mxu0 0.0
    %2439 = vmatprep.subr.mxu0 0.0
    %2440 = vmatpush1.msra.mxu0 0.0
    %2441 = vmatprep.subr.mxu0 0.0
    %2442 = vmatpush1.msra.mxu0 0.0
    %2443 = vmatprep.subr.mxu0 0.0
    %2444 = vmatpush1.msra.mxu0 0.0
    %2445 = vmatprep.subr.mxu0 0.0
    %2446 = vmatpush1.msra.mxu0 0.0
    %2447 = vmatprep.subr.mxu0 0.0
    %2448 = vmatpush1.msra.mxu0 0.0
    %2449 = vmatprep.subr.mxu0 0.0
    %2450 = vmatpush1.msra.mxu0 0.0
    %2451 = vmatprep.subr.mxu0 0.0
    %2452 = vmatpush1.msra.mxu0 0.0
    %2453 = vmatprep.subr.mxu0 0.0
    %2454 = vmatpush1.msra.mxu0 0.0
    %2455 = vmatprep.subr.mxu0 0.0
    %2456 = vmatpush1.msra.mxu0 0.0
    %2457 = vmatprep.subr.mxu0 0.0
    %2458 = vmatpush1.msra.mxu0 0.0
    %2459 = vmatprep.subr.mxu0 0.0
    %2460 = vmatpush1.msra.mxu0 0.0
    %2461 = vmatprep.subr.mxu0 0.0
    %2462 = vmatpush1.msra.mxu0 0.0
    %2463 = vmatprep.mubr.f32.mxu0 0.0
    %2464 = vmatmul.mubr.f32.gmra.mrb[0].mxu0 %v2397
    %v2465 = vpop.f32.mrb[0].mxu0
    %v2466 = vadd.f32 0.0, %v2465
    %v2467 = vpop.f32.mrb[0].mxu0
    %2468 = vdwg.mxu0
    %v2469 = vld [vmem:[%s3] sm:$0xff]
    %v2470 = vld [vmem:[%s3 + $0x8] sm:$0xff]
    %v2471 = vld [vmem:[%s3 + $0x10] sm:$0xff]
    %v2472 = vld [vmem:[%s3 + $0x18] sm:$0xff]
    %v2474 = vsel %vm1188, %v1955, 0
    %v2477 = vsel %vm1188, %v2028, 0
    %2479 = vmatprep.subr.mxu0 0.0
    %2480 = vmatpush1.msra.mxu0 %v2469
    %2481 = vmatprep.subr.mxu0 0.0
    %2482 = vmatpush1.msra.mxu0 0.0
    %2483 = vmatprep.subr.mxu0 0.0
    %2484 = vmatpush1.msra.mxu0 0.0
    %2485 = vmatprep.subr.mxu0 0.0
    %2486 = vmatpush1.msra.mxu0 0.0
    %2487 = vmatprep.subr.mxu0 0.0
    %2488 = vmatpush1.msra.mxu0 0.0
    %2489 = vmatprep.subr.mxu0 0.0
    %2490 = vmatpush1.msra.mxu0 0.0
    %2491 = vmatprep.subr.mxu0 0.0
    %2492 = vmatpush1.msra.mxu0 0.0
    %2493 = vmatprep.subr.mxu0 0.0
    %2494 = vmatpush1.msra.mxu0 0.0
    %2495 = vmatprep.subr.mxu0 0.0
    %2496 = vmatpush1.msra.mxu0 0.0
    %2497 = vmatprep.subr.mxu0 0.0
    %2498 = vmatpush1.msra.mxu0 0.0
    %2499 = vmatprep.subr.mxu0 0.0
    %2500 = vmatpush1.msra.mxu0 0.0
    %2501 = vmatprep.subr.mxu0 0.0
    %2502 = vmatpush1.msra.mxu0 0.0
    %2503 = vmatprep.subr.mxu0 0.0
    %2504 = vmatpush1.msra.mxu0 0.0
    %2505 = vmatprep.subr.mxu0 0.0
    %2506 = vmatpush1.msra.mxu0 0.0
    %2507 = vmatprep.subr.mxu0 0.0
    %2508 = vmatpush1.msra.mxu0 0.0
    %2509 = vmatprep.subr.mxu0 0.0
    %2510 = vmatpush1.msra.mxu0 0.0
    %2511 = vmatprep.subr.mxu0 0.0
    %2512 = vmatpush1.msra.mxu0 0.0
    %2513 = vmatprep.subr.mxu0 0.0
    %2514 = vmatpush1.msra.mxu0 0.0
    %2515 = vmatprep.subr.mxu0 0.0
    %2516 = vmatpush1.msra.mxu0 0.0
    %2517 = vmatprep.subr.mxu0 0.0
    %2518 = vmatpush1.msra.mxu0 0.0
    %2519 = vmatprep.subr.mxu0 0.0
    %2520 = vmatpush1.msra.mxu0 0.0
    %2521 = vmatprep.subr.mxu0 0.0
    %2522 = vmatpush1.msra.mxu0 0.0
    %2523 = vmatprep.subr.mxu0 0.0
    %2524 = vmatpush1.msra.mxu0 0.0
    %2525 = vmatprep.subr.mxu0 0.0
    %2526 = vmatpush1.msra.mxu0 0.0
    %2527 = vmatprep.subr.mxu0 0.0
    %2528 = vmatpush1.msra.mxu0 0.0
    %2529 = vmatprep.subr.mxu0 0.0
    %2530 = vmatpush1.msra.mxu0 0.0
    %2531 = vmatprep.subr.mxu0 0.0
    %2532 = vmatpush1.msra.mxu0 0.0
    %2533 = vmatprep.subr.mxu0 0.0
    %2534 = vmatpush1.msra.mxu0 0.0
    %2535 = vmatprep.subr.mxu0 0.0
    %2536 = vmatpush1.msra.mxu0 0.0
    %2537 = vmatprep.subr.mxu0 0.0
    %2538 = vmatpush1.msra.mxu0 0.0
    %2539 = vmatprep.subr.mxu0 0.0
    %2540 = vmatpush1.msra.mxu0 0.0
    %2541 = vmatprep.subr.mxu0 0.0
    %2542 = vmatpush1.msra.mxu0 0.0
    %2543 = vmatprep.mubr.f32.mxu0 0.0
    %2544 = vmatmul.mubr.f32.gmra.mrb[0].mxu0 %v2474
    %v2545 = vpop.f32.mrb[0].mxu0
    %v2546 = vadd.f32 0.0, %v2545
    %v2547 = vpop.f32.mrb[0].mxu0
    %2548 = vmatprep.mubr.f32.mxu0 0.0
    %2549 = vmatmul.mubr.f32.gmra.mrb[0].mxu0 %v2477
    %v2550 = vpop.f32.mrb[0].mxu0
    %v2551 = vadd.f32 0.0, %v2550
    %v2552 = vpop.f32.mrb[0].mxu0
    %2553 = vdwg.mxu0
    %v2555 = vsel %vm1188, %v2101, 0
    %v2558 = vsel %vm1188, %v2174, 0
    %2560 = vmatprep.subr.mxu0 0.0
    %2561 = vmatpush1.msra.mxu0 %v2470
    %2562 = vmatprep.subr.mxu0 0.0
    %2563 = vmatpush1.msra.mxu0 0.0
    %2564 = vmatprep.subr.mxu0 0.0
    %2565 = vmatpush1.msra.mxu0 0.0
    %2566 = vmatprep.subr.mxu0 0.0
    %2567 = vmatpush1.msra.mxu0 0.0
    %2568 = vmatprep.subr.mxu0 0.0
    %2569 = vmatpush1.msra.mxu0 0.0
    %2570 = vmatprep.subr.mxu0 0.0
    %2571 = vmatpush1.msra.mxu0 0.0
    %2572 = vmatprep.subr.mxu0 0.0
    %2573 = vmatpush1.msra.mxu0 0.0
    %2574 = vmatprep.subr.mxu0 0.0
    %2575 = vmatpush1.msra.mxu0 0.0
    %2576 = vmatprep.subr.mxu0 0.0
    %2577 = vmatpush1.msra.mxu0 0.0
    %2578 = vmatprep.subr.mxu0 0.0
    %2579 = vmatpush1.msra.mxu0 0.0
    %2580 = vmatprep.subr.mxu0 0.0
    %2581 = vmatpush1.msra.mxu0 0.0
    %2582 = vmatprep.subr.mxu0 0.0
    %2583 = vmatpush1.msra.mxu0 0.0
    %2584 = vmatprep.subr.mxu0 0.0
    %2585 = vmatpush1.msra.mxu0 0.0
    %2586 = vmatprep.subr.mxu0 0.0
    %2587 = vmatpush1.msra.mxu0 0.0
    %2588 = vmatprep.subr.mxu0 0.0
    %2589 = vmatpush1.msra.mxu0 0.0
    %2590 = vmatprep.subr.mxu0 0.0
    %2591 = vmatpush1.msra.mxu0 0.0
    %2592 = vmatprep.subr.mxu0 0.0
    %2593 = vmatpush1.msra.mxu0 0.0
    %2594 = vmatprep.subr.mxu0 0.0
    %2595 = vmatpush1.msra.mxu0 0.0
    %2596 = vmatprep.subr.mxu0 0.0
    %2597 = vmatpush1.msra.mxu0 0.0
    %2598 = vmatprep.subr.mxu0 0.0
    %2599 = vmatpush1.msra.mxu0 0.0
    %2600 = vmatprep.subr.mxu0 0.0
    %2601 = vmatpush1.msra.mxu0 0.0
    %2602 = vmatprep.subr.mxu0 0.0
    %2603 = vmatpush1.msra.mxu0 0.0
    %2604 = vmatprep.subr.mxu0 0.0
    %2605 = vmatpush1.msra.mxu0 0.0
    %2606 = vmatprep.subr.mxu0 0.0
    %2607 = vmatpush1.msra.mxu0 0.0
    %2608 = vmatprep.subr.mxu0 0.0
    %2609 = vmatpush1.msra.mxu0 0.0
    %2610 = vmatprep.subr.mxu0 0.0
    %2611 = vmatpush1.msra.mxu0 0.0
    %2612 = vmatprep.subr.mxu0 0.0
    %2613 = vmatpush1.msra.mxu0 0.0
    %2614 = vmatprep.subr.mxu0 0.0
    %2615 = vmatpush1.msra.mxu0 0.0
    %2616 = vmatprep.subr.mxu0 0.0
    %2617 = vmatpush1.msra.mxu0 0.0
    %2618 = vmatprep.subr.mxu0 0.0
    %2619 = vmatpush1.msra.mxu0 0.0
    %2620 = vmatprep.subr.mxu0 0.0
    %2621 = vmatpush1.msra.mxu0 0.0
    %2622 = vmatprep.subr.mxu0 0.0
    %2623 = vmatpush1.msra.mxu0 0.0
    %2624 = vmatprep.mubr.f32.mxu0 0.0
    %2625 = vmatmul.mubr.f32.gmra.mrb[0].mxu0 %v2555
    %v2626 = vpop.f32.mrb[0].mxu0
    %v2627 = vadd.f32 0.0, %v2626
    %v2628 = vpop.f32.mrb[0].mxu0
    %2629 = vmatprep.mubr.f32.mxu0 0.0
    %2630 = vmatmul.mubr.f32.gmra.mrb[0].mxu0 %v2558
    %v2631 = vpop.f32.mrb[0].mxu0
    %v2632 = vadd.f32 0.0, %v2631
    %v2633 = vpop.f32.mrb[0].mxu0
    %2634 = vdwg.mxu0
    %v2636 = vsel %vm1188, %v2247, 0
    %v2639 = vsel %vm1188, %v2320, 0
    %2641 = vmatprep.subr.mxu0 0.0
    %2642 = vmatpush1.msra.mxu0 %v2471
    %2643 = vmatprep.subr.mxu0 0.0
    %2644 = vmatpush1.msra.mxu0 0.0
    %2645 = vmatprep.subr.mxu0 0.0
    %2646 = vmatpush1.msra.mxu0 0.0
    %2647 = vmatprep.subr.mxu0 0.0
    %2648 = vmatpush1.msra.mxu0 0.0
    %2649 = vmatprep.subr.mxu0 0.0
    %2650 = vmatpush1.msra.mxu0 0.0
    %2651 = vmatprep.subr.mxu0 0.0
    %2652 = vmatpush1.msra.mxu0 0.0
    %2653 = vmatprep.subr.mxu0 0.0
    %2654 = vmatpush1.msra.mxu0 0.0
    %2655 = vmatprep.subr.mxu0 0.0
    %2656 = vmatpush1.msra.mxu0 0.0
    %2657 = vmatprep.subr.mxu0 0.0
    %2658 = vmatpush1.msra.mxu0 0.0
    %2659 = vmatprep.subr.mxu0 0.0
    %2660 = vmatpush1.msra.mxu0 0.0
    %2661 = vmatprep.subr.mxu0 0.0
    %2662 = vmatpush1.msra.mxu0 0.0
    %2663 = vmatprep.subr.mxu0 0.0
    %2664 = vmatpush1.msra.mxu0 0.0
    %2665 = vmatprep.subr.mxu0 0.0
    %2666 = vmatpush1.msra.mxu0 0.0
    %2667 = vmatprep.subr.mxu0 0.0
    %2668 = vmatpush1.msra.mxu0 0.0
    %2669 = vmatprep.subr.mxu0 0.0
    %2670 = vmatpush1.msra.mxu0 0.0
    %2671 = vmatprep.subr.mxu0 0.0
    %2672 = vmatpush1.msra.mxu0 0.0
    %2673 = vmatprep.subr.mxu0 0.0
    %2674 = vmatpush1.msra.mxu0 0.0
    %2675 = vmatprep.subr.mxu0 0.0
    %2676 = vmatpush1.msra.mxu0 0.0
    %2677 = vmatprep.subr.mxu0 0.0
    %2678 = vmatpush1.msra.mxu0 0.0
    %2679 = vmatprep.subr.mxu0 0.0
    %2680 = vmatpush1.msra.mxu0 0.0
    %2681 = vmatprep.subr.mxu0 0.0
    %2682 = vmatpush1.msra.mxu0 0.0
    %2683 = vmatprep.subr.mxu0 0.0
    %2684 = vmatpush1.msra.mxu0 0.0
    %2685 = vmatprep.subr.mxu0 0.0
    %2686 = vmatpush1.msra.mxu0 0.0
    %2687 = vmatprep.subr.mxu0 0.0
    %2688 = vmatpush1.msra.mxu0 0.0
    %2689 = vmatprep.subr.mxu0 0.0
    %2690 = vmatpush1.msra.mxu0 0.0
    %2691 = vmatprep.subr.mxu0 0.0
    %2692 = vmatpush1.msra.mxu0 0.0
    %2693 = vmatprep.subr.mxu0 0.0
    %2694 = vmatpush1.msra.mxu0 0.0
    %2695 = vmatprep.subr.mxu0 0.0
    %2696 = vmatpush1.msra.mxu0 0.0
    %2697 = vmatprep.subr.mxu0 0.0
    %2698 = vmatpush1.msra.mxu0 0.0
    %2699 = vmatprep.subr.mxu0 0.0
    %2700 = vmatpush1.msra.mxu0 0.0
    %2701 = vmatprep.subr.mxu0 0.0
    %2702 = vmatpush1.msra.mxu0 0.0
    %2703 = vmatprep.subr.mxu0 0.0
    %2704 = vmatpush1.msra.mxu0 0.0
    %2705 = vmatprep.mubr.f32.mxu0 0.0
    %2706 = vmatmul.mubr.f32.gmra.mrb[0].mxu0 %v2636
    %v2707 = vpop.f32.mrb[0].mxu0
    %v2708 = vadd.f32 0.0, %v2707
    %v2709 = vpop.f32.mrb[0].mxu0
    %2710 = vmatprep.mubr.f32.mxu0 0.0
    %2711 = vmatmul.mubr.f32.gmra.mrb[0].mxu0 %v2639
    %v2712 = vpop.f32.mrb[0].mxu0
    %v2713 = vadd.f32 0.0, %v2712
    %v2714 = vpop.f32.mrb[0].mxu0
    %2715 = vdwg.mxu0
    %v2717 = vsel %vm1188, %v2393, 0
    %v2720 = vsel %vm1188, %v2466, 0
    %2722 = vmatprep.subr.mxu0 0.0
    %2723 = vmatpush1.msra.mxu0 %v2472
    %2724 = vmatprep.subr.mxu0 0.0
    %2725 = vmatpush1.msra.mxu0 0.0
    %2726 = vmatprep.subr.mxu0 0.0
    %2727 = vmatpush1.msra.mxu0 0.0
    %2728 = vmatprep.subr.mxu0 0.0
    %2729 = vmatpush1.msra.mxu0 0.0
    %2730 = vmatprep.subr.mxu0 0.0
    %2731 = vmatpush1.msra.mxu0 0.0
    %2732 = vmatprep.subr.mxu0 0.0
    %2733 = vmatpush1.msra.mxu0 0.0
    %2734 = vmatprep.subr.mxu0 0.0
    %2735 = vmatpush1.msra.mxu0 0.0
    %2736 = vmatprep.subr.mxu0 0.0
    %2737 = vmatpush1.msra.mxu0 0.0
    %2738 = vmatprep.subr.mxu0 0.0
    %2739 = vmatpush1.msra.mxu0 0.0
    %2740 = vmatprep.subr.mxu0 0.0
    %2741 = vmatpush1.msra.mxu0 0.0
    %2742 = vmatprep.subr.mxu0 0.0
    %2743 = vmatpush1.msra.mxu0 0.0
    %2744 = vmatprep.subr.mxu0 0.0
    %2745 = vmatpush1.msra.mxu0 0.0
    %2746 = vmatprep.subr.mxu0 0.0
    %2747 = vmatpush1.msra.mxu0 0.0
    %2748 = vmatprep.subr.mxu0 0.0
    %2749 = vmatpush1.msra.mxu0 0.0
    %2750 = vmatprep.subr.mxu0 0.0
    %2751 = vmatpush1.msra.mxu0 0.0
    %2752 = vmatprep.subr.mxu0 0.0
    %2753 = vmatpush1.msra.mxu0 0.0
    %2754 = vmatprep.subr.mxu0 0.0
    %2755 = vmatpush1.msra.mxu0 0.0
    %2756 = vmatprep.subr.mxu0 0.0
    %2757 = vmatpush1.msra.mxu0 0.0
    %2758 = vmatprep.subr.mxu0 0.0
    %2759 = vmatpush1.msra.mxu0 0.0
    %2760 = vmatprep.subr.mxu0 0.0
    %2761 = vmatpush1.msra.mxu0 0.0
    %2762 = vmatprep.subr.mxu0 0.0
    %2763 = vmatpush1.msra.mxu0 0.0
    %2764 = vmatprep.subr.mxu0 0.0
    %2765 = vmatpush1.msra.mxu0 0.0
    %2766 = vmatprep.subr.mxu0 0.0
    %2767 = vmatpush1.msra.mxu0 0.0
    %2768 = vmatprep.subr.mxu0 0.0
    %2769 = vmatpush1.msra.mxu0 0.0
    %2770 = vmatprep.subr.mxu0 0.0
    %2771 = vmatpush1.msra.mxu0 0.0
    %2772 = vmatprep.subr.mxu0 0.0
    %2773 = vmatpush1.msra.mxu0 0.0
    %2774 = vmatprep.subr.mxu0 0.0
    %2775 = vmatpush1.msra.mxu0 0.0
    %2776 = vmatprep.subr.mxu0 0.0
    %2777 = vmatpush1.msra.mxu0 0.0
    %2778 = vmatprep.subr.mxu0 0.0
    %2779 = vmatpush1.msra.mxu0 0.0
    %2780 = vmatprep.subr.mxu0 0.0
    %2781 = vmatpush1.msra.mxu0 0.0
    %2782 = vmatprep.subr.mxu0 0.0
    %2783 = vmatpush1.msra.mxu0 0.0
    %2784 = vmatprep.subr.mxu0 0.0
    %2785 = vmatpush1.msra.mxu0 0.0
    %2786 = vmatprep.mubr.f32.mxu0 0.0
    %2787 = vmatmul.mubr.f32.gmra.mrb[0].mxu0 %v2717
    %v2788 = vpop.f32.mrb[0].mxu0
    %v2789 = vadd.f32 0.0, %v2788
    %v2790 = vpop.f32.mrb[0].mxu0
    %2791 = vmatprep.mubr.f32.mxu0 0.0
    %2792 = vmatmul.mubr.f32.gmra.mrb[0].mxu0 %v2720
    %v2793 = vpop.f32.mrb[0].mxu0
    %v2794 = vadd.f32 0.0, %v2793
    %v2795 = vpop.f32.mrb[0].mxu0
    %2796 = vdwg.mxu0
    %v2797 = vadd.f32 %v2546, %v2627
    %v2798 = vadd.f32 %v2551, %v2632
    %v2799 = vadd.f32 %v2797, %v2708
    %v2800 = vadd.f32 %v2798, %v2713
    %v2801 = vadd.f32 %v2799, %v2789
    %v2802 = vadd.f32 %v2800, %v2794
    %v2803 = vld [vmem:[%s6] sm:$0x1]
    %v2804 = vlaneseq
    %v2805 = vshrl.u32 %v2804, 7
    %v2806 = vsub.s32 0, %v2805
    %v2807 = vrot.slane %v2803, %v2806
    %v2808 = vadd.f32 %v2801, %v2807
    %v2809 = vadd.f32 %v2802, %v2807
    %v2810 = vadd.f32 %v180, %v2808
    %v2811 = vadd.f32 %v181, %v2809
    %v2812 = vld [vmem:[%s6 + $0x3] sm:$0x1]
    %v2813 = vld [vmem:[%s6 + $0x4] sm:$0x1]
    %v2814 = vsel %vm142, %v2810, 0.0
    %2815 = vadd.xlane.f32.xlu0 %v2814
    %v2816 = vpop.xlane.xlu0 %2815
    %v2817 = vsel %vm142, %v2811, 0.0
    %2818 = vadd.xlane.f32.xlu0 %v2817
    %v2819 = vpop.xlane.xlu0 %2818
    %v2820 = vmul.f32 %v2816, %v149
    %v2821 = vmul.f32 %v2819, %v149
    %v2822 = vsub.f32 %v2810, %v2820
    %v2823 = vsub.f32 %v2811, %v2821
    %v2824 = vmul.f32 %v2822, %v2822
    %v2825 = vmul.f32 %v2823, %v2823
    %v2826 = vsel %vm142, %v2824, 0.0
    %2827 = vadd.xlane.f32.xlu0 %v2826
    %v2828 = vpop.xlane.xlu0 %2827
    %v2829 = vsel %vm142, %v2825, 0.0
    %2830 = vadd.xlane.f32.xlu0 %v2829
    %v2831 = vpop.xlane.xlu0 %2830
    %v2832 = vmul.f32 %v2828, %v149
    %v2833 = vmul.f32 %v2831, %v149
    %v2834 = vadd.f32 %v2832, 1e-12
    %v2835 = vadd.f32 %v2833, 1e-12
    %v2836 = vrsqrt.pop %v2834
    %v2837 = vrsqrt.pop %v2835
    %v2838 = vmul.f32 %v2822, %v2836
    %v2839 = vmul.f32 %v2823, %v2837
    %v2840 = vlaneseq
    %v2841 = vshrl.u32 %v2840, 7
    %v2842 = vsub.s32 0, %v2841
    %v2843 = vrot.slane %v2812, %v2842
    %v2844 = vmul.f32 %v2838, %v2843
    %v2845 = vmul.f32 %v2839, %v2843
    %v2846 = vlaneseq
    %v2847 = vshrl.u32 %v2846, 7
    %v2848 = vsub.s32 0, %v2847
    %v2849 = vrot.slane %v2813, %v2848
    %v2850 = vadd.f32 %v2844, %v2849
    %v2851 = vadd.f32 %v2845, %v2849
    %v2852 = vld [vmem:[%s4] sm:$0xff]
    %v2853 = vld [vmem:[%s4 + $0x8] sm:$0xff]
    %v2854 = vld [vmem:[%s4 + $0x10] sm:$0xff]
    %v2855 = vld [vmem:[%s4 + $0x18] sm:$0xff]
    %v2856 = vld [vmem:[%s6 + $0x1] sm:$0x1]
    %v2857 = vlaneseq
    %v2858 = vshrl.u32 %v2857, 7
    %v2859 = vsub.s32 0, %v2858
    %v2860 = vrot.slane %v2856, %v2859
    %v2862 = vsel %vm142, %v2850, 0
    %v2865 = vsel %vm142, %v2851, 0
    %2867 = vmatprep.subr.mxu0 0.0
    %2868 = vmatpush1.msra.mxu0 %v2852
    %2869 = vmatprep.subr.mxu0 0.0
    %2870 = vmatpush1.msra.mxu0 %v2853
    %2871 = vmatprep.subr.mxu0 0.0
    %2872 = vmatpush1.msra.mxu0 %v2854
    %2873 = vmatprep.subr.mxu0 0.0
    %2874 = vmatpush1.msra.mxu0 %v2855
    %2875 = vmatprep.subr.mxu0 0.0
    %2876 = vmatpush1.msra.mxu0 0.0
    %2877 = vmatprep.subr.mxu0 0.0
    %2878 = vmatpush1.msra.mxu0 0.0
    %2879 = vmatprep.subr.mxu0 0.0
    %2880 = vmatpush1.msra.mxu0 0.0
    %2881 = vmatprep.subr.mxu0 0.0
    %2882 = vmatpush1.msra.mxu0 0.0
    %2883 = vmatprep.subr.mxu0 0.0
    %2884 = vmatpush1.msra.mxu0 0.0
    %2885 = vmatprep.subr.mxu0 0.0
    %2886 = vmatpush1.msra.mxu0 0.0
    %2887 = vmatprep.subr.mxu0 0.0
    %2888 = vmatpush1.msra.mxu0 0.0
    %2889 = vmatprep.subr.mxu0 0.0
    %2890 = vmatpush1.msra.mxu0 0.0
    %2891 = vmatprep.subr.mxu0 0.0
    %2892 = vmatpush1.msra.mxu0 0.0
    %2893 = vmatprep.subr.mxu0 0.0
    %2894 = vmatpush1.msra.mxu0 0.0
    %2895 = vmatprep.subr.mxu0 0.0
    %2896 = vmatpush1.msra.mxu0 0.0
    %2897 = vmatprep.subr.mxu0 0.0
    %2898 = vmatpush1.msra.mxu0 0.0
    %2899 = vmatprep.subr.mxu0 0.0
    %2900 = vmatpush1.msra.mxu0 0.0
    %2901 = vmatprep.subr.mxu0 0.0
    %2902 = vmatpush1.msra.mxu0 0.0
    %2903 = vmatprep.subr.mxu0 0.0
    %2904 = vmatpush1.msra.mxu0 0.0
    %2905 = vmatprep.subr.mxu0 0.0
    %2906 = vmatpush1.msra.mxu0 0.0
    %2907 = vmatprep.subr.mxu0 0.0
    %2908 = vmatpush1.msra.mxu0 0.0
    %2909 = vmatprep.subr.mxu0 0.0
    %2910 = vmatpush1.msra.mxu0 0.0
    %2911 = vmatprep.subr.mxu0 0.0
    %2912 = vmatpush1.msra.mxu0 0.0
    %2913 = vmatprep.subr.mxu0 0.0
    %2914 = vmatpush1.msra.mxu0 0.0
    %2915 = vmatprep.subr.mxu0 0.0
    %2916 = vmatpush1.msra.mxu0 0.0
    %2917 = vmatprep.subr.mxu0 0.0
    %2918 = vmatpush1.msra.mxu0 0.0
    %2919 = vmatprep.subr.mxu0 0.0
    %2920 = vmatpush1.msra.mxu0 0.0
    %2921 = vmatprep.subr.mxu0 0.0
    %2922 = vmatpush1.msra.mxu0 0.0
    %2923 = vmatprep.subr.mxu0 0.0
    %2924 = vmatpush1.msra.mxu0 0.0
    %2925 = vmatprep.subr.mxu0 0.0
    %2926 = vmatpush1.msra.mxu0 0.0
    %2927 = vmatprep.subr.mxu0 0.0
    %2928 = vmatpush1.msra.mxu0 0.0
    %2929 = vmatprep.subr.mxu0 0.0
    %2930 = vmatpush1.msra.mxu0 0.0
    %2931 = vmatprep.mubr.f32.mxu0 0.0
    %2932 = vmatmul.mubr.f32.gmra.mrb[0].mxu0 %v2862
    %v2933 = vpop.f32.mrb[0].mxu0
    %v2934 = vadd.f32 %v2860, %v2933
    %v2935 = vpop.f32.mrb[0].mxu0
    %2936 = vmatprep.mubr.f32.mxu0 0.0
    %2937 = vmatmul.mubr.f32.gmra.mrb[0].mxu0 %v2865
    %v2938 = vpop.f32.mrb[0].mxu0
    %v2939 = vadd.f32 %v2860, %v2938
    %v2940 = vpop.f32.mrb[0].mxu0
    %2941 = vdwg.mxu0
    %v2942 = vmul.f32 %v2934, 0.5
    %v2943 = vmul.f32 %v2939, 0.5
    %v2944 = vmul.f32 %v2934, 0.044715
    %v2945 = vmul.f32 %v2939, 0.044715
    %v2946 = vmul.f32 %v2944, %v2934
    %v2947 = vmul.f32 %v2945, %v2939
    %v2948 = vmul.f32 %v2946, %v2934
    %v2949 = vmul.f32 %v2947, %v2939
    %v2950 = vadd.f32 %v2934, %v2948
    %v2951 = vadd.f32 %v2939, %v2949
    %v2952 = vmul.f32 %v2950, 0.7978846
    %v2953 = vmul.f32 %v2951, 0.7978846
    %v2954 = vtanh.pop %v2952
    %v2955 = vtanh.pop %v2953
    %v2956 = vadd.f32 %v2954, 1.0
    %v2957 = vadd.f32 %v2955, 1.0
    %v2958 = vmul.f32 %v2942, %v2956
    %v2959 = vmul.f32 %v2943, %v2957
    %v2960 = vld [vmem:[%s5] sm:$0xff]
    %v2961 = vld [vmem:[%s5 + $0x8] sm:$0xff]
    %v2962 = vld [vmem:[%s5 + $0x10] sm:$0xff]
    %v2963 = vld [vmem:[%s5 + $0x18] sm:$0xff]
    %v2964 = vld [vmem:[%s5 + $0x20] sm:$0xff]
    %v2965 = vld [vmem:[%s5 + $0x28] sm:$0xff]
    %v2966 = vld [vmem:[%s5 + $0x30] sm:$0xff]
    %v2967 = vld [vmem:[%s5 + $0x38] sm:$0xff]
    %v2968 = vld [vmem:[%s6 + $0x2] sm:$0x1]
    %v2969 = vlaneseq
    %v2970 = vshrl.u32 %v2969, 7
    %v2971 = vsub.s32 0, %v2970
    %v2972 = vrot.slane %v2968, %v2971
    %vm2973 = vcmask 523264
    %v2975 = vsel %vm2973, %v2958, 0
    %v2978 = vsel %vm2973, %v2959, 0
    %2980 = vmatprep.subr.mxu0 0.0
    %2981 = vmatpush1.msra.mxu0 %v2960
    %2982 = vmatprep.subr.mxu0 0.0
    %2983 = vmatpush1.msra.mxu0 %v2961
    %2984 = vmatprep.subr.mxu0 0.0
    %2985 = vmatpush1.msra.mxu0 %v2962
    %2986 = vmatprep.subr.mxu0 0.0
    %2987 = vmatpush1.msra.mxu0 %v2963
    %2988 = vmatprep.subr.mxu0 0.0
    %2989 = vmatpush1.msra.mxu0 %v2964
    %2990 = vmatprep.subr.mxu0 0.0
    %2991 = vmatpush1.msra.mxu0 %v2965
    %2992 = vmatprep.subr.mxu0 0.0
    %2993 = vmatpush1.msra.mxu0 %v2966
    %2994 = vmatprep.subr.mxu0 0.0
    %2995 = vmatpush1.msra.mxu0 %v2967
    %2996 = vmatprep.subr.mxu0 0.0
    %2997 = vmatpush1.msra.mxu0 0.0
    %2998 = vmatprep.subr.mxu0 0.0
    %2999 = vmatpush1.msra.mxu0 0.0
    %3000 = vmatprep.subr.mxu0 0.0
    %3001 = vmatpush1.msra.mxu0 0.0
    %3002 = vmatprep.subr.mxu0 0.0
    %3003 = vmatpush1.msra.mxu0 0.0
    %3004 = vmatprep.subr.mxu0 0.0
    %3005 = vmatpush1.msra.mxu0 0.0
    %3006 = vmatprep.subr.mxu0 0.0
    %3007 = vmatpush1.msra.mxu0 0.0
    %3008 = vmatprep.subr.mxu0 0.0
    %3009 = vmatpush1.msra.mxu0 0.0
    %3010 = vmatprep.subr.mxu0 0.0
    %3011 = vmatpush1.msra.mxu0 0.0
    %3012 = vmatprep.subr.mxu0 0.0
    %3013 = vmatpush1.msra.mxu0 0.0
    %3014 = vmatprep.subr.mxu0 0.0
    %3015 = vmatpush1.msra.mxu0 0.0
    %3016 = vmatprep.subr.mxu0 0.0
    %3017 = vmatpush1.msra.mxu0 0.0
    %3018 = vmatprep.subr.mxu0 0.0
    %3019 = vmatpush1.msra.mxu0 0.0
    %3020 = vmatprep.subr.mxu0 0.0
    %3021 = vmatpush1.msra.mxu0 0.0
    %3022 = vmatprep.subr.mxu0 0.0
    %3023 = vmatpush1.msra.mxu0 0.0
    %3024 = vmatprep.subr.mxu0 0.0
    %3025 = vmatpush1.msra.mxu0 0.0
    %3026 = vmatprep.subr.mxu0 0.0
    %3027 = vmatpush1.msra.mxu0 0.0
    %3028 = vmatprep.subr.mxu0 0.0
    %3029 = vmatpush1.msra.mxu0 0.0
    %3030 = vmatprep.subr.mxu0 0.0
    %3031 = vmatpush1.msra.mxu0 0.0
    %3032 = vmatprep.subr.mxu0 0.0
    %3033 = vmatpush1.msra.mxu0 0.0
    %3034 = vmatprep.subr.mxu0 0.0
    %3035 = vmatpush1.msra.mxu0 0.0
    %3036 = vmatprep.subr.mxu0 0.0
    %3037 = vmatpush1.msra.mxu0 0.0
    %3038 = vmatprep.subr.mxu0 0.0
    %3039 = vmatpush1.msra.mxu0 0.0
    %3040 = vmatprep.subr.mxu0 0.0
    %3041 = vmatpush1.msra.mxu0 0.0
    %3042 = vmatprep.subr.mxu0 0.0
    %3043 = vmatpush1.msra.mxu0 0.0
    %3044 = vmatprep.mubr.f32.mxu0 0.0
    %3045 = vmatmul.mubr.f32.gmra.mrb[0].mxu0 %v2975
    %v3046 = vpop.f32.mrb[0].mxu0
    %v3047 = vadd.f32 %v2972, %v3046
    %v3048 = vpop.f32.mrb[0].mxu0
    %3049 = vmatprep.mubr.f32.mxu0 0.0
    %3050 = vmatmul.mubr.f32.gmra.mrb[0].mxu0 %v2978
    %v3051 = vpop.f32.mrb[0].mxu0
    %v3052 = vadd.f32 %v2972, %v3051
    %v3053 = vpop.f32.mrb[0].mxu0
    %3054 = vdwg.mxu0
    %v3055 = vadd.f32 %v2850, %v3047
    %v3056 = vadd.f32 %v2851, %v3052
    %v3057 = vld [vmem:[%s6 + $0x5] sm:$0x1]
    %v3058 = vld [vmem:[%s6 + $0x6] sm:$0x1]
    %v3059 = vsel %vm142, %v3055, 0.0
    %3060 = vadd.xlane.f32.xlu0 %v3059
    %v3061 = vpop.xlane.xlu0 %3060
    %v3062 = vsel %vm142, %v3056, 0.0
    %3063 = vadd.xlane.f32.xlu0 %v3062
    %v3064 = vpop.xlane.xlu0 %3063
    %v3065 = vmul.f32 %v3061, %v149
    %v3066 = vmul.f32 %v3064, %v149
    %v3067 = vsub.f32 %v3055, %v3065
    %v3068 = vsub.f32 %v3056, %v3066
    %v3069 = vmul.f32 %v3067, %v3067
    %v3070 = vmul.f32 %v3068, %v3068
    %v3071 = vsel %vm142, %v3069, 0.0
    %3072 = vadd.xlane.f32.xlu0 %v3071
    %v3073 = vpop.xlane.xlu0 %3072
    %v3074 = vsel %vm142, %v3070, 0.0
    %3075 = vadd.xlane.f32.xlu0 %v3074
    %v3076 = vpop.xlane.xlu0 %3075
    %v3077 = vmul.f32 %v3073, %v149
    %v3078 = vmul.f32 %v3076, %v149
    %v3079 = vadd.f32 %v3077, 1e-12
    %v3080 = vadd.f32 %v3078, 1e-12
    %v3081 = vrsqrt.pop %v3079
    %v3082 = vrsqrt.pop %v3080
    %v3083 = vmul.f32 %v3067, %v3081
    %v3084 = vmul.f32 %v3068, %v3082
    %v3085 = vlaneseq
    %v3086 = vshrl.u32 %v3085, 7
    %v3087 = vsub.s32 0, %v3086
    %v3088 = vrot.slane %v3057, %v3087
    %v3089 = vmul.f32 %v3083, %v3088
    %v3090 = vmul.f32 %v3084, %v3088
    %v3091 = vlaneseq
    %v3092 = vshrl.u32 %v3091, 7
    %v3093 = vsub.s32 0, %v3092
    %v3094 = vrot.slane %v3058, %v3093
    %v3095 = vadd.f32 %v3089, %v3094
    %v3096 = vadd.f32 %v3090, %v3094
    %v3097 = vsel %vm142, %v3095, 1.0
    %v3098 = vsel %vm142, %v3096, 1.0
    %s3099 = scalar_lea.vmem %s2, 480
    %v3100 = vld [vmem:[%s3099] sm:$0xff]
    %v3101 = vld [vmem:[%s3099 + $0x8] sm:$0xff]
    %v3102 = vld [vmem:[%s3099 + $0x10] sm:$0xff]
    %v3103 = vld [vmem:[%s3099 + $0x18] sm:$0xff]
    %v3104 = vld [vmem:[%s3099 + $0x20] sm:$0x1]
    %v3105 = vld [vmem:[%s3099 + $0x28] sm:$0xff]
    %v3106 = vld [vmem:[%s3099 + $0x30] sm:$0xff]
    %v3107 = vld [vmem:[%s3099 + $0x38] sm:$0xff]
    %v3108 = vld [vmem:[%s3099 + $0x40] sm:$0xff]
    %v3109 = vld [vmem:[%s3099 + $0x48] sm:$0x1]
    %v3110 = vld [vmem:[%s3099 + $0x50] sm:$0xff]
    %v3111 = vld [vmem:[%s3099 + $0x58] sm:$0xff]
    %v3112 = vld [vmem:[%s3099 + $0x60] sm:$0xff]
    %v3113 = vld [vmem:[%s3099 + $0x68] sm:$0xff]
    %v3114 = vld [vmem:[%s3099 + $0x70] sm:$0x1]
    %v3115 = vld [vmem:[%s3099 + $0x78] sm:$0xff]
    %v3116 = vld [vmem:[%s3099 + $0x80] sm:$0xff]
    %v3117 = vld [vmem:[%s3099 + $0x88] sm:$0xff]
    %v3118 = vld [vmem:[%s3099 + $0x90] sm:$0xff]
    %v3119 = vld [vmem:[%s3099 + $0x98] sm:$0x1]
    %v3120 = vld [vmem:[%s3099 + $0xa0] sm:$0xff]
    %v3121 = vld [vmem:[%s3099 + $0xa8] sm:$0xff]
    %v3122 = vld [vmem:[%s3099 + $0xb0] sm:$0xff]
    %v3123 = vld [vmem:[%s3099 + $0xb8] sm:$0xff]
    %v3124 = vld [vmem:[%s3099 + $0xc0] sm:$0x1]
    %v3125 = vld [vmem:[%s3099 + $0xc8] sm:$0xff]
    %v3126 = vld [vmem:[%s3099 + $0xd0] sm:$0xff]
    %v3127 = vld [vmem:[%s3099 + $0xd8] sm:$0xff]
    %v3128 = vld [vmem:[%s3099 + $0xe0] sm:$0xff]
    %v3129 = vld [vmem:[%s3099 + $0xe8] sm:$0x1]
    %v3130 = vld [vmem:[%s3099 + $0xf0] sm:$0xff]
    %v3131 = vld [vmem:[%s3099 + $0xf8] sm:$0xff]
    %v3132 = vld [vmem:[%s3099 + $0x100] sm:$0xff]
    %v3133 = vld [vmem:[%s3099 + $0x108] sm:$0xff]
    %v3134 = vld [vmem:[%s3099 + $0x110] sm:$0x1]
    %v3135 = vld [vmem:[%s3099 + $0x118] sm:$0xff]
    %v3136 = vld [vmem:[%s3099 + $0x120] sm:$0xff]
    %v3137 = vld [vmem:[%s3099 + $0x128] sm:$0xff]
    %v3138 = vld [vmem:[%s3099 + $0x130] sm:$0xff]
    %v3139 = vld [vmem:[%s3099 + $0x138] sm:$0x1]
    %v3140 = vld [vmem:[%s3099 + $0x140] sm:$0xff]
    %v3141 = vld [vmem:[%s3099 + $0x148] sm:$0xff]
    %v3142 = vld [vmem:[%s3099 + $0x150] sm:$0xff]
    %v3143 = vld [vmem:[%s3099 + $0x158] sm:$0xff]
    %v3144 = vld [vmem:[%s3099 + $0x160] sm:$0x1]
    %v3145 = vld [vmem:[%s3099 + $0x168] sm:$0xff]
    %v3146 = vld [vmem:[%s3099 + $0x170] sm:$0xff]
    %v3147 = vld [vmem:[%s3099 + $0x178] sm:$0xff]
    %v3148 = vld [vmem:[%s3099 + $0x180] sm:$0xff]
    %v3149 = vld [vmem:[%s3099 + $0x188] sm:$0x1]
    %v3150 = vld [vmem:[%s3099 + $0x190] sm:$0xff]
    %v3151 = vld [vmem:[%s3099 + $0x198] sm:$0xff]
    %v3152 = vld [vmem:[%s3099 + $0x1a0] sm:$0xff]
    %v3153 = vld [vmem:[%s3099 + $0x1a8] sm:$0xff]
    %v3154 = vld [vmem:[%s3099 + $0x1b0] sm:$0x1]
    %v3155 = vld [vmem:[%s3099 + $0x1b8] sm:$0xff]
    %v3156 = vld [vmem:[%s3099 + $0x1c0] sm:$0xff]
    %v3157 = vld [vmem:[%s3099 + $0x1c8] sm:$0xff]
    %v3158 = vld [vmem:[%s3099 + $0x1d0] sm:$0xff]
    %v3159 = vld [vmem:[%s3099 + $0x1d8] sm:$0x1]
    %v3161 = vsel %vm244, %v3097, 0
    %v3164 = vsel %vm244, %v3098, 0
    %v3167 = vsel %vm251, %v3104, 0
    %3169 = vmatprep.subr.mxu0 0.0
    %3170 = vmatpush1.msra.mxu0 %v3100
    %3171 = vmatprep.subr.mxu0 0.0
    %3172 = vmatpush1.msra.mxu0 %v3101
    %3173 = vmatprep.subr.mxu0 0.0
    %3174 = vmatpush1.msra.mxu0 %v3102
    %3175 = vmatprep.subr.mxu0 0.0
    %3176 = vmatpush1.msra.mxu0 %v3103
    %3177 = vmatprep.subr.mxu0 0.0
    %3178 = vmatpush1.msra.mxu0 %v3167
    %3179 = vmatprep.subr.mxu0 0.0
    %3180 = vmatpush1.msra.mxu0 0.0
    %3181 = vmatprep.subr.mxu0 0.0
    %3182 = vmatpush1.msra.mxu0 0.0
    %3183 = vmatprep.subr.mxu0 0.0
    %3184 = vmatpush1.msra.mxu0 0.0
    %3185 = vmatprep.subr.mxu0 0.0
    %3186 = vmatpush1.msra.mxu0 0.0
    %3187 = vmatprep.subr.mxu0 0.0
    %3188 = vmatpush1.msra.mxu0 0.0
    %3189 = vmatprep.subr.mxu0 0.0
    %3190 = vmatpush1.msra.mxu0 0.0
    %3191 = vmatprep.subr.mxu0 0.0
    %3192 = vmatpush1.msra.mxu0 0.0
    %3193 = vmatprep.subr.mxu0 0.0
    %3194 = vmatpush1.msra.mxu0 0.0
    %3195 = vmatprep.subr.mxu0 0.0
    %3196 = vmatpush1.msra.mxu0 0.0
    %3197 = vmatprep.subr.mxu0 0.0
    %3198 = vmatpush1.msra.mxu0 0.0
    %3199 = vmatprep.subr.mxu0 0.0
    %3200 = vmatpush1.msra.mxu0 0.0
    %3201 = vmatprep.subr.mxu0 0.0
    %3202 = vmatpush1.msra.mxu0 0.0
    %3203 = vmatprep.subr.mxu0 0.0
    %3204 = vmatpush1.msra.mxu0 0.0
    %3205 = vmatprep.subr.mxu0 0.0
    %3206 = vmatpush1.msra.mxu0 0.0
    %3207 = vmatprep.subr.mxu0 0.0
    %3208 = vmatpush1.msra.mxu0 0.0
    %3209 = vmatprep.subr.mxu0 0.0
    %3210 = vmatpush1.msra.mxu0 0.0
    %3211 = vmatprep.subr.mxu0 0.0
    %3212 = vmatpush1.msra.mxu0 0.0
    %3213 = vmatprep.subr.mxu0 0.0
    %3214 = vmatpush1.msra.mxu0 0.0
    %3215 = vmatprep.subr.mxu0 0.0
    %3216 = vmatpush1.msra.mxu0 0.0
    %3217 = vmatprep.subr.mxu0 0.0
    %3218 = vmatpush1.msra.mxu0 0.0
    %3219 = vmatprep.subr.mxu0 0.0
    %3220 = vmatpush1.msra.mxu0 0.0
    %3221 = vmatprep.subr.mxu0 0.0
    %3222 = vmatpush1.msra.mxu0 0.0
    %3223 = vmatprep.subr.mxu0 0.0
    %3224 = vmatpush1.msra.mxu0 0.0
    %3225 = vmatprep.subr.mxu0 0.0
    %3226 = vmatpush1.msra.mxu0 0.0
    %3227 = vmatprep.subr.mxu0 0.0
    %3228 = vmatpush1.msra.mxu0 0.0
    %3229 = vmatprep.subr.mxu0 0.0
    %3230 = vmatpush1.msra.mxu0 0.0
    %3231 = vmatprep.subr.mxu0 0.0
    %3232 = vmatpush1.msra.mxu0 0.0
    %3233 = vmatprep.mubr.f32.mxu0 0.0
    %3234 = vmatmul.mubr.f32.gmra.mrb[0].mxu0 %v3161
    %v3235 = vpop.f32.mrb[0].mxu0
    %v3236 = vadd.f32 0.0, %v3235
    %v3237 = vpop.f32.mrb[0].mxu0
    %3238 = vmatprep.mubr.f32.mxu0 0.0
    %3239 = vmatmul.mubr.f32.gmra.mrb[0].mxu0 %v3164
    %v3240 = vpop.f32.mrb[0].mxu0
    %v3241 = vadd.f32 0.0, %v3240
    %v3242 = vpop.f32.mrb[0].mxu0
    %3243 = vdwg.mxu0
    %v3245 = vsel %vm251, %v3109, 0
    %3247 = vmatprep.subr.mxu0 0.0
    %3248 = vmatpush1.msra.mxu0 %v3105
    %3249 = vmatprep.subr.mxu0 0.0
    %3250 = vmatpush1.msra.mxu0 %v3106
    %3251 = vmatprep.subr.mxu0 0.0
    %3252 = vmatpush1.msra.mxu0 %v3107
    %3253 = vmatprep.subr.mxu0 0.0
    %3254 = vmatpush1.msra.mxu0 %v3108
    %3255 = vmatprep.subr.mxu0 0.0
    %3256 = vmatpush1.msra.mxu0 %v3245
    %3257 = vmatprep.subr.mxu0 0.0
    %3258 = vmatpush1.msra.mxu0 0.0
    %3259 = vmatprep.subr.mxu0 0.0
    %3260 = vmatpush1.msra.mxu0 0.0
    %3261 = vmatprep.subr.mxu0 0.0
    %3262 = vmatpush1.msra.mxu0 0.0
    %3263 = vmatprep.subr.mxu0 0.0
    %3264 = vmatpush1.msra.mxu0 0.0
    %3265 = vmatprep.subr.mxu0 0.0
    %3266 = vmatpush1.msra.mxu0 0.0
    %3267 = vmatprep.subr.mxu0 0.0
    %3268 = vmatpush1.msra.mxu0 0.0
    %3269 = vmatprep.subr.mxu0 0.0
    %3270 = vmatpush1.msra.mxu0 0.0
    %3271 = vmatprep.subr.mxu0 0.0
    %3272 = vmatpush1.msra.mxu0 0.0
    %3273 = vmatprep.subr.mxu0 0.0
    %3274 = vmatpush1.msra.mxu0 0.0
    %3275 = vmatprep.subr.mxu0 0.0
    %3276 = vmatpush1.msra.mxu0 0.0
    %3277 = vmatprep.subr.mxu0 0.0
    %3278 = vmatpush1.msra.mxu0 0.0
    %3279 = vmatprep.subr.mxu0 0.0
    %3280 = vmatpush1.msra.mxu0 0.0
    %3281 = vmatprep.subr.mxu0 0.0
    %3282 = vmatpush1.msra.mxu0 0.0
    %3283 = vmatprep.subr.mxu0 0.0
    %3284 = vmatpush1.msra.mxu0 0.0
    %3285 = vmatprep.subr.mxu0 0.0
    %3286 = vmatpush1.msra.mxu0 0.0
    %3287 = vmatprep.subr.mxu0 0.0
    %3288 = vmatpush1.msra.mxu0 0.0
    %3289 = vmatprep.subr.mxu0 0.0
    %3290 = vmatpush1.msra.mxu0 0.0
    %3291 = vmatprep.subr.mxu0 0.0
    %3292 = vmatpush1.msra.mxu0 0.0
    %3293 = vmatprep.subr.mxu0 0.0
    %3294 = vmatpush1.msra.mxu0 0.0
    %3295 = vmatprep.subr.mxu0 0.0
    %3296 = vmatpush1.msra.mxu0 0.0
    %3297 = vmatprep.subr.mxu0 0.0
    %3298 = vmatpush1.msra.mxu0 0.0
    %3299 = vmatprep.subr.mxu0 0.0
    %3300 = vmatpush1.msra.mxu0 0.0
    %3301 = vmatprep.subr.mxu0 0.0
    %3302 = vmatpush1.msra.mxu0 0.0
    %3303 = vmatprep.subr.mxu0 0.0
    %3304 = vmatpush1.msra.mxu0 0.0
    %3305 = vmatprep.subr.mxu0 0.0
    %3306 = vmatpush1.msra.mxu0 0.0
    %3307 = vmatprep.subr.mxu0 0.0
    %3308 = vmatpush1.msra.mxu0 0.0
    %3309 = vmatprep.subr.mxu0 0.0
    %3310 = vmatpush1.msra.mxu0 0.0
    %3311 = vmatprep.mubr.f32.mxu0 0.0
    %3312 = vmatmul.mubr.f32.gmra.mrb[0].mxu0 %v3161
    %v3313 = vpop.f32.mrb[0].mxu0
    %v3314 = vadd.f32 0.0, %v3313
    %v3315 = vpop.f32.mrb[0].mxu0
    %3316 = vmatprep.mubr.f32.mxu0 0.0
    %3317 = vmatmul.mubr.f32.gmra.mrb[0].mxu0 %v3164
    %v3318 = vpop.f32.mrb[0].mxu0
    %v3319 = vadd.f32 0.0, %v3318
    %v3320 = vpop.f32.mrb[0].mxu0
    %3321 = vdwg.mxu0
    %v3323 = vsel %vm251, %v3114, 0
    %3325 = vmatprep.subr.mxu0 0.0
    %3326 = vmatpush1.msra.mxu0 %v3110
    %3327 = vmatprep.subr.mxu0 0.0
    %3328 = vmatpush1.msra.mxu0 %v3111
    %3329 = vmatprep.subr.mxu0 0.0
    %3330 = vmatpush1.msra.mxu0 %v3112
    %3331 = vmatprep.subr.mxu0 0.0
    %3332 = vmatpush1.msra.mxu0 %v3113
    %3333 = vmatprep.subr.mxu0 0.0
    %3334 = vmatpush1.msra.mxu0 %v3323
    %3335 = vmatprep.subr.mxu0 0.0
    %3336 = vmatpush1.msra.mxu0 0.0
    %3337 = vmatprep.subr.mxu0 0.0
    %3338 = vmatpush1.msra.mxu0 0.0
    %3339 = vmatprep.subr.mxu0 0.0
    %3340 = vmatpush1.msra.mxu0 0.0
    %3341 = vmatprep.subr.mxu0 0.0
    %3342 = vmatpush1.msra.mxu0 0.0
    %3343 = vmatprep.subr.mxu0 0.0
    %3344 = vmatpush1.msra.mxu0 0.0
    %3345 = vmatprep.subr.mxu0 0.0
    %3346 = vmatpush1.msra.mxu0 0.0
    %3347 = vmatprep.subr.mxu0 0.0
    %3348 = vmatpush1.msra.mxu0 0.0
    %3349 = vmatprep.subr.mxu0 0.0
    %3350 = vmatpush1.msra.mxu0 0.0
    %3351 = vmatprep.subr.mxu0 0.0
    %3352 = vmatpush1.msra.mxu0 0.0
    %3353 = vmatprep.subr.mxu0 0.0
    %3354 = vmatpush1.msra.mxu0 0.0
    %3355 = vmatprep.subr.mxu0 0.0
    %3356 = vmatpush1.msra.mxu0 0.0
    %3357 = vmatprep.subr.mxu0 0.0
    %3358 = vmatpush1.msra.mxu0 0.0
    %3359 = vmatprep.subr.mxu0 0.0
    %3360 = vmatpush1.msra.mxu0 0.0
    %3361 = vmatprep.subr.mxu0 0.0
    %3362 = vmatpush1.msra.mxu0 0.0
    %3363 = vmatprep.subr.mxu0 0.0
    %3364 = vmatpush1.msra.mxu0 0.0
    %3365 = vmatprep.subr.mxu0 0.0
    %3366 = vmatpush1.msra.mxu0 0.0
    %3367 = vmatprep.subr.mxu0 0.0
    %3368 = vmatpush1.msra.mxu0 0.0
    %3369 = vmatprep.subr.mxu0 0.0
    %3370 = vmatpush1.msra.mxu0 0.0
    %3371 = vmatprep.subr.mxu0 0.0
    %3372 = vmatpush1.msra.mxu0 0.0
    %3373 = vmatprep.subr.mxu0 0.0
    %3374 = vmatpush1.msra.mxu0 0.0
    %3375 = vmatprep.subr.mxu0 0.0
    %3376 = vmatpush1.msra.mxu0 0.0
    %3377 = vmatprep.subr.mxu0 0.0
    %3378 = vmatpush1.msra.mxu0 0.0
    %3379 = vmatprep.subr.mxu0 0.0
    %3380 = vmatpush1.msra.mxu0 0.0
    %3381 = vmatprep.subr.mxu0 0.0
    %3382 = vmatpush1.msra.mxu0 0.0
    %3383 = vmatprep.subr.mxu0 0.0
    %3384 = vmatpush1.msra.mxu0 0.0
    %3385 = vmatprep.subr.mxu0 0.0
    %3386 = vmatpush1.msra.mxu0 0.0
    %3387 = vmatprep.subr.mxu0 0.0
    %3388 = vmatpush1.msra.mxu0 0.0
    %3389 = vmatprep.mubr.f32.mxu0 0.0
    %3390 = vmatmul.mubr.f32.gmra.mrb[0].mxu0 %v3161
    %v3391 = vpop.f32.mrb[0].mxu0
    %v3392 = vadd.f32 0.0, %v3391
    %v3393 = vpop.f32.mrb[0].mxu0
    %3394 = vmatprep.mubr.f32.mxu0 0.0
    %3395 = vmatmul.mubr.f32.gmra.mrb[0].mxu0 %v3164
    %v3396 = vpop.f32.mrb[0].mxu0
    %v3397 = vadd.f32 0.0, %v3396
    %v3398 = vpop.f32.mrb[0].mxu0
    %3399 = vdwg.mxu0
    %v3401 = vsel %vm251, %v3119, 0
    %3403 = vmatprep.subr.mxu0 0.0
    %3404 = vmatpush1.msra.mxu0 %v3115
    %3405 = vmatprep.subr.mxu0 0.0
    %3406 = vmatpush1.msra.mxu0 %v3116
    %3407 = vmatprep.subr.mxu0 0.0
    %3408 = vmatpush1.msra.mxu0 %v3117
    %3409 = vmatprep.subr.mxu0 0.0
    %3410 = vmatpush1.msra.mxu0 %v3118
    %3411 = vmatprep.subr.mxu0 0.0
    %3412 = vmatpush1.msra.mxu0 %v3401
    %3413 = vmatprep.subr.mxu0 0.0
    %3414 = vmatpush1.msra.mxu0 0.0
    %3415 = vmatprep.subr.mxu0 0.0
    %3416 = vmatpush1.msra.mxu0 0.0
    %3417 = vmatprep.subr.mxu0 0.0
    %3418 = vmatpush1.msra.mxu0 0.0
    %3419 = vmatprep.subr.mxu0 0.0
    %3420 = vmatpush1.msra.mxu0 0.0
    %3421 = vmatprep.subr.mxu0 0.0
    %3422 = vmatpush1.msra.mxu0 0.0
    %3423 = vmatprep.subr.mxu0 0.0
    %3424 = vmatpush1.msra.mxu0 0.0
    %3425 = vmatprep.subr.mxu0 0.0
    %3426 = vmatpush1.msra.mxu0 0.0
    %3427 = vmatprep.subr.mxu0 0.0
    %3428 = vmatpush1.msra.mxu0 0.0
    %3429 = vmatprep.subr.mxu0 0.0
    %3430 = vmatpush1.msra.mxu0 0.0
    %3431 = vmatprep.subr.mxu0 0.0
    %3432 = vmatpush1.msra.mxu0 0.0
    %3433 = vmatprep.subr.mxu0 0.0
    %3434 = vmatpush1.msra.mxu0 0.0
    %3435 = vmatprep.subr.mxu0 0.0
    %3436 = vmatpush1.msra.mxu0 0.0
    %3437 = vmatprep.subr.mxu0 0.0
    %3438 = vmatpush1.msra.mxu0 0.0
    %3439 = vmatprep.subr.mxu0 0.0
    %3440 = vmatpush1.msra.mxu0 0.0
    %3441 = vmatprep.subr.mxu0 0.0
    %3442 = vmatpush1.msra.mxu0 0.0
    %3443 = vmatprep.subr.mxu0 0.0
    %3444 = vmatpush1.msra.mxu0 0.0
    %3445 = vmatprep.subr.mxu0 0.0
    %3446 = vmatpush1.msra.mxu0 0.0
    %3447 = vmatprep.subr.mxu0 0.0
    %3448 = vmatpush1.msra.mxu0 0.0
    %3449 = vmatprep.subr.mxu0 0.0
    %3450 = vmatpush1.msra.mxu0 0.0
    %3451 = vmatprep.subr.mxu0 0.0
    %3452 = vmatpush1.msra.mxu0 0.0
    %3453 = vmatprep.subr.mxu0 0.0
    %3454 = vmatpush1.msra.mxu0 0.0
    %3455 = vmatprep.subr.mxu0 0.0
    %3456 = vmatpush1.msra.mxu0 0.0
    %3457 = vmatprep.subr.mxu0 0.0
    %3458 = vmatpush1.msra.mxu0 0.0
    %3459 = vmatprep.subr.mxu0 0.0
    %3460 = vmatpush1.msra.mxu0 0.0
    %3461 = vmatprep.subr.mxu0 0.0
    %3462 = vmatpush1.msra.mxu0 0.0
    %3463 = vmatprep.subr.mxu0 0.0
    %3464 = vmatpush1.msra.mxu0 0.0
    %3465 = vmatprep.subr.mxu0 0.0
    %3466 = vmatpush1.msra.mxu0 0.0
    %3467 = vmatprep.mubr.f32.mxu0 0.0
    %3468 = vmatmul.mubr.f32.gmra.mrb[0].mxu0 %v3161
    %v3469 = vpop.f32.mrb[0].mxu0
    %v3470 = vadd.f32 0.0, %v3469
    %v3471 = vpop.f32.mrb[0].mxu0
    %3472 = vmatprep.mubr.f32.mxu0 0.0
    %3473 = vmatmul.mubr.f32.gmra.mrb[0].mxu0 %v3164
    %v3474 = vpop.f32.mrb[0].mxu0
    %v3475 = vadd.f32 0.0, %v3474
    %v3476 = vpop.f32.mrb[0].mxu0
    %3477 = vdwg.mxu0
    %v3479 = vsel %vm251, %v3124, 0
    %3481 = vmatprep.subr.mxu0 0.0
    %3482 = vmatpush1.msra.mxu0 %v3120
    %3483 = vmatprep.subr.mxu0 0.0
    %3484 = vmatpush1.msra.mxu0 %v3121
    %3485 = vmatprep.subr.mxu0 0.0
    %3486 = vmatpush1.msra.mxu0 %v3122
    %3487 = vmatprep.subr.mxu0 0.0
    %3488 = vmatpush1.msra.mxu0 %v3123
    %3489 = vmatprep.subr.mxu0 0.0
    %3490 = vmatpush1.msra.mxu0 %v3479
    %3491 = vmatprep.subr.mxu0 0.0
    %3492 = vmatpush1.msra.mxu0 0.0
    %3493 = vmatprep.subr.mxu0 0.0
    %3494 = vmatpush1.msra.mxu0 0.0
    %3495 = vmatprep.subr.mxu0 0.0
    %3496 = vmatpush1.msra.mxu0 0.0
    %3497 = vmatprep.subr.mxu0 0.0
    %3498 = vmatpush1.msra.mxu0 0.0
    %3499 = vmatprep.subr.mxu0 0.0
    %3500 = vmatpush1.msra.mxu0 0.0
    %3501 = vmatprep.subr.mxu0 0.0
    %3502 = vmatpush1.msra.mxu0 0.0
    %3503 = vmatprep.subr.mxu0 0.0
    %3504 = vmatpush1.msra.mxu0 0.0
    %3505 = vmatprep.subr.mxu0 0.0
    %3506 = vmatpush1.msra.mxu0 0.0
    %3507 = vmatprep.subr.mxu0 0.0
    %3508 = vmatpush1.msra.mxu0 0.0
    %3509 = vmatprep.subr.mxu0 0.0
    %3510 = vmatpush1.msra.mxu0 0.0
    %3511 = vmatprep.subr.mxu0 0.0
    %3512 = vmatpush1.msra.mxu0 0.0
    %3513 = vmatprep.subr.mxu0 0.0
    %3514 = vmatpush1.msra.mxu0 0.0
    %3515 = vmatprep.subr.mxu0 0.0
    %3516 = vmatpush1.msra.mxu0 0.0
    %3517 = vmatprep.subr.mxu0 0.0
    %3518 = vmatpush1.msra.mxu0 0.0
    %3519 = vmatprep.subr.mxu0 0.0
    %3520 = vmatpush1.msra.mxu0 0.0
    %3521 = vmatprep.subr.mxu0 0.0
    %3522 = vmatpush1.msra.mxu0 0.0
    %3523 = vmatprep.subr.mxu0 0.0
    %3524 = vmatpush1.msra.mxu0 0.0
    %3525 = vmatprep.subr.mxu0 0.0
    %3526 = vmatpush1.msra.mxu0 0.0
    %3527 = vmatprep.subr.mxu0 0.0
    %3528 = vmatpush1.msra.mxu0 0.0
    %3529 = vmatprep.subr.mxu0 0.0
    %3530 = vmatpush1.msra.mxu0 0.0
    %3531 = vmatprep.subr.mxu0 0.0
    %3532 = vmatpush1.msra.mxu0 0.0
    %3533 = vmatprep.subr.mxu0 0.0
    %3534 = vmatpush1.msra.mxu0 0.0
    %3535 = vmatprep.subr.mxu0 0.0
    %3536 = vmatpush1.msra.mxu0 0.0
    %3537 = vmatprep.subr.mxu0 0.0
    %3538 = vmatpush1.msra.mxu0 0.0
    %3539 = vmatprep.subr.mxu0 0.0
    %3540 = vmatpush1.msra.mxu0 0.0
    %3541 = vmatprep.subr.mxu0 0.0
    %3542 = vmatpush1.msra.mxu0 0.0
    %3543 = vmatprep.subr.mxu0 0.0
    %3544 = vmatpush1.msra.mxu0 0.0
    %3545 = vmatprep.mubr.f32.mxu0 0.0
    %3546 = vmatmul.mubr.f32.gmra.mrb[0].mxu0 %v3161
    %v3547 = vpop.f32.mrb[0].mxu0
    %v3548 = vadd.f32 0.0, %v3547
    %v3549 = vpop.f32.mrb[0].mxu0
    %3550 = vmatprep.mubr.f32.mxu0 0.0
    %3551 = vmatmul.mubr.f32.gmra.mrb[0].mxu0 %v3164
    %v3552 = vpop.f32.mrb[0].mxu0
    %v3553 = vadd.f32 0.0, %v3552
    %v3554 = vpop.f32.mrb[0].mxu0
    %3555 = vdwg.mxu0
    %v3557 = vsel %vm251, %v3129, 0
    %3559 = vmatprep.subr.mxu0 0.0
    %3560 = vmatpush1.msra.mxu0 %v3125
    %3561 = vmatprep.subr.mxu0 0.0
    %3562 = vmatpush1.msra.mxu0 %v3126
    %3563 = vmatprep.subr.mxu0 0.0
    %3564 = vmatpush1.msra.mxu0 %v3127
    %3565 = vmatprep.subr.mxu0 0.0
    %3566 = vmatpush1.msra.mxu0 %v3128
    %3567 = vmatprep.subr.mxu0 0.0
    %3568 = vmatpush1.msra.mxu0 %v3557
    %3569 = vmatprep.subr.mxu0 0.0
    %3570 = vmatpush1.msra.mxu0 0.0
    %3571 = vmatprep.subr.mxu0 0.0
    %3572 = vmatpush1.msra.mxu0 0.0
    %3573 = vmatprep.subr.mxu0 0.0
    %3574 = vmatpush1.msra.mxu0 0.0
    %3575 = vmatprep.subr.mxu0 0.0
    %3576 = vmatpush1.msra.mxu0 0.0
    %3577 = vmatprep.subr.mxu0 0.0
    %3578 = vmatpush1.msra.mxu0 0.0
    %3579 = vmatprep.subr.mxu0 0.0
    %3580 = vmatpush1.msra.mxu0 0.0
    %3581 = vmatprep.subr.mxu0 0.0
    %3582 = vmatpush1.msra.mxu0 0.0
    %3583 = vmatprep.subr.mxu0 0.0
    %3584 = vmatpush1.msra.mxu0 0.0
    %3585 = vmatprep.subr.mxu0 0.0
    %3586 = vmatpush1.msra.mxu0 0.0
    %3587 = vmatprep.subr.mxu0 0.0
    %3588 = vmatpush1.msra.mxu0 0.0
    %3589 = vmatprep.subr.mxu0 0.0
    %3590 = vmatpush1.msra.mxu0 0.0
    %3591 = vmatprep.subr.mxu0 0.0
    %3592 = vmatpush1.msra.mxu0 0.0
    %3593 = vmatprep.subr.mxu0 0.0
    %3594 = vmatpush1.msra.mxu0 0.0
    %3595 = vmatprep.subr.mxu0 0.0
    %3596 = vmatpush1.msra.mxu0 0.0
    %3597 = vmatprep.subr.mxu0 0.0
    %3598 = vmatpush1.msra.mxu0 0.0
    %3599 = vmatprep.subr.mxu0 0.0
    %3600 = vmatpush1.msra.mxu0 0.0
    %3601 = vmatprep.subr.mxu0 0.0
    %3602 = vmatpush1.msra.mxu0 0.0
    %3603 = vmatprep.subr.mxu0 0.0
    %3604 = vmatpush1.msra.mxu0 0.0
    %3605 = vmatprep.subr.mxu0 0.0
    %3606 = vmatpush1.msra.mxu0 0.0
    %3607 = vmatprep.subr.mxu0 0.0
    %3608 = vmatpush1.msra.mxu0 0.0
    %3609 = vmatprep.subr.mxu0 0.0
    %3610 = vmatpush1.msra.mxu0 0.0
    %3611 = vmatprep.subr.mxu0 0.0
    %3612 = vmatpush1.msra.mxu0 0.0
    %3613 = vmatprep.subr.mxu0 0.0
    %3614 = vmatpush1.msra.mxu0 0.0
    %3615 = vmatprep.subr.mxu0 0.0
    %3616 = vmatpush1.msra.mxu0 0.0
    %3617 = vmatprep.subr.mxu0 0.0
    %3618 = vmatpush1.msra.mxu0 0.0
    %3619 = vmatprep.subr.mxu0 0.0
    %3620 = vmatpush1.msra.mxu0 0.0
    %3621 = vmatprep.subr.mxu0 0.0
    %3622 = vmatpush1.msra.mxu0 0.0
    %3623 = vmatprep.mubr.f32.mxu0 0.0
    %3624 = vmatmul.mubr.f32.gmra.mrb[0].mxu0 %v3161
    %v3625 = vpop.f32.mrb[0].mxu0
    %v3626 = vadd.f32 0.0, %v3625
    %v3627 = vpop.f32.mrb[0].mxu0
    %3628 = vmatprep.mubr.f32.mxu0 0.0
    %3629 = vmatmul.mubr.f32.gmra.mrb[0].mxu0 %v3164
    %v3630 = vpop.f32.mrb[0].mxu0
    %v3631 = vadd.f32 0.0, %v3630
    %v3632 = vpop.f32.mrb[0].mxu0
    %3633 = vdwg.mxu0
    %v3635 = vsel %vm251, %v3134, 0
    %3637 = vmatprep.subr.mxu0 0.0
    %3638 = vmatpush1.msra.mxu0 %v3130
    %3639 = vmatprep.subr.mxu0 0.0
    %3640 = vmatpush1.msra.mxu0 %v3131
    %3641 = vmatprep.subr.mxu0 0.0
    %3642 = vmatpush1.msra.mxu0 %v3132
    %3643 = vmatprep.subr.mxu0 0.0
    %3644 = vmatpush1.msra.mxu0 %v3133
    %3645 = vmatprep.subr.mxu0 0.0
    %3646 = vmatpush1.msra.mxu0 %v3635
    %3647 = vmatprep.subr.mxu0 0.0
    %3648 = vmatpush1.msra.mxu0 0.0
    %3649 = vmatprep.subr.mxu0 0.0
    %3650 = vmatpush1.msra.mxu0 0.0
    %3651 = vmatprep.subr.mxu0 0.0
    %3652 = vmatpush1.msra.mxu0 0.0
    %3653 = vmatprep.subr.mxu0 0.0
    %3654 = vmatpush1.msra.mxu0 0.0
    %3655 = vmatprep.subr.mxu0 0.0
    %3656 = vmatpush1.msra.mxu0 0.0
    %3657 = vmatprep.subr.mxu0 0.0
    %3658 = vmatpush1.msra.mxu0 0.0
    %3659 = vmatprep.subr.mxu0 0.0
    %3660 = vmatpush1.msra.mxu0 0.0
    %3661 = vmatprep.subr.mxu0 0.0
    %3662 = vmatpush1.msra.mxu0 0.0
    %3663 = vmatprep.subr.mxu0 0.0
    %3664 = vmatpush1.msra.mxu0 0.0
    %3665 = vmatprep.subr.mxu0 0.0
    %3666 = vmatpush1.msra.mxu0 0.0
    %3667 = vmatprep.subr.mxu0 0.0
    %3668 = vmatpush1.msra.mxu0 0.0
    %3669 = vmatprep.subr.mxu0 0.0
    %3670 = vmatpush1.msra.mxu0 0.0
    %3671 = vmatprep.subr.mxu0 0.0
    %3672 = vmatpush1.msra.mxu0 0.0
    %3673 = vmatprep.subr.mxu0 0.0
    %3674 = vmatpush1.msra.mxu0 0.0
    %3675 = vmatprep.subr.mxu0 0.0
    %3676 = vmatpush1.msra.mxu0 0.0
    %3677 = vmatprep.subr.mxu0 0.0
    %3678 = vmatpush1.msra.mxu0 0.0
    %3679 = vmatprep.subr.mxu0 0.0
    %3680 = vmatpush1.msra.mxu0 0.0
    %3681 = vmatprep.subr.mxu0 0.0
    %3682 = vmatpush1.msra.mxu0 0.0
    %3683 = vmatprep.subr.mxu0 0.0
    %3684 = vmatpush1.msra.mxu0 0.0
    %3685 = vmatprep.subr.mxu0 0.0
    %3686 = vmatpush1.msra.mxu0 0.0
    %3687 = vmatprep.subr.mxu0 0.0
    %3688 = vmatpush1.msra.mxu0 0.0
    %3689 = vmatprep.subr.mxu0 0.0
    %3690 = vmatpush1.msra.mxu0 0.0
    %3691 = vmatprep.subr.mxu0 0.0
    %3692 = vmatpush1.msra.mxu0 0.0
    %3693 = vmatprep.subr.mxu0 0.0
    %3694 = vmatpush1.msra.mxu0 0.0
    %3695 = vmatprep.subr.mxu0 0.0
    %3696 = vmatpush1.msra.mxu0 0.0
    %3697 = vmatprep.subr.mxu0 0.0
    %3698 = vmatpush1.msra.mxu0 0.0
    %3699 = vmatprep.subr.mxu0 0.0
    %3700 = vmatpush1.msra.mxu0 0.0
    %3701 = vmatprep.mubr.f32.mxu0 0.0
    %3702 = vmatmul.mubr.f32.gmra.mrb[0].mxu0 %v3161
    %v3703 = vpop.f32.mrb[0].mxu0
    %v3704 = vadd.f32 0.0, %v3703
    %v3705 = vpop.f32.mrb[0].mxu0
    %3706 = vmatprep.mubr.f32.mxu0 0.0
    %3707 = vmatmul.mubr.f32.gmra.mrb[0].mxu0 %v3164
    %v3708 = vpop.f32.mrb[0].mxu0
    %v3709 = vadd.f32 0.0, %v3708
    %v3710 = vpop.f32.mrb[0].mxu0
    %3711 = vdwg.mxu0
    %v3713 = vsel %vm251, %v3139, 0
    %3715 = vmatprep.subr.mxu0 0.0
    %3716 = vmatpush1.msra.mxu0 %v3135
    %3717 = vmatprep.subr.mxu0 0.0
    %3718 = vmatpush1.msra.mxu0 %v3136
    %3719 = vmatprep.subr.mxu0 0.0
    %3720 = vmatpush1.msra.mxu0 %v3137
    %3721 = vmatprep.subr.mxu0 0.0
    %3722 = vmatpush1.msra.mxu0 %v3138
    %3723 = vmatprep.subr.mxu0 0.0
    %3724 = vmatpush1.msra.mxu0 %v3713
    %3725 = vmatprep.subr.mxu0 0.0
    %3726 = vmatpush1.msra.mxu0 0.0
    %3727 = vmatprep.subr.mxu0 0.0
    %3728 = vmatpush1.msra.mxu0 0.0
    %3729 = vmatprep.subr.mxu0 0.0
    %3730 = vmatpush1.msra.mxu0 0.0
    %3731 = vmatprep.subr.mxu0 0.0
    %3732 = vmatpush1.msra.mxu0 0.0
    %3733 = vmatprep.subr.mxu0 0.0
    %3734 = vmatpush1.msra.mxu0 0.0
    %3735 = vmatprep.subr.mxu0 0.0
    %3736 = vmatpush1.msra.mxu0 0.0
    %3737 = vmatprep.subr.mxu0 0.0
    %3738 = vmatpush1.msra.mxu0 0.0
    %3739 = vmatprep.subr.mxu0 0.0
    %3740 = vmatpush1.msra.mxu0 0.0
    %3741 = vmatprep.subr.mxu0 0.0
    %3742 = vmatpush1.msra.mxu0 0.0
    %3743 = vmatprep.subr.mxu0 0.0
    %3744 = vmatpush1.msra.mxu0 0.0
    %3745 = vmatprep.subr.mxu0 0.0
    %3746 = vmatpush1.msra.mxu0 0.0
    %3747 = vmatprep.subr.mxu0 0.0
    %3748 = vmatpush1.msra.mxu0 0.0
    %3749 = vmatprep.subr.mxu0 0.0
    %3750 = vmatpush1.msra.mxu0 0.0
    %3751 = vmatprep.subr.mxu0 0.0
    %3752 = vmatpush1.msra.mxu0 0.0
    %3753 = vmatprep.subr.mxu0 0.0
    %3754 = vmatpush1.msra.mxu0 0.0
    %3755 = vmatprep.subr.mxu0 0.0
    %3756 = vmatpush1.msra.mxu0 0.0
    %3757 = vmatprep.subr.mxu0 0.0
    %3758 = vmatpush1.msra.mxu0 0.0
    %3759 = vmatprep.subr.mxu0 0.0
    %3760 = vmatpush1.msra.mxu0 0.0
    %3761 = vmatprep.subr.mxu0 0.0
    %3762 = vmatpush1.msra.mxu0 0.0
    %3763 = vmatprep.subr.mxu0 0.0
    %3764 = vmatpush1.msra.mxu0 0.0
    %3765 = vmatprep.subr.mxu0 0.0
    %3766 = vmatpush1.msra.mxu0 0.0
    %3767 = vmatprep.subr.mxu0 0.0
    %3768 = vmatpush1.msra.mxu0 0.0
    %3769 = vmatprep.subr.mxu0 0.0
    %3770 = vmatpush1.msra.mxu0 0.0
    %3771 = vmatprep.subr.mxu0 0.0
    %3772 = vmatpush1.msra.mxu0 0.0
    %3773 = vmatprep.subr.mxu0 0.0
    %3774 = vmatpush1.msra.mxu0 0.0
    %3775 = vmatprep.subr.mxu0 0.0
    %3776 = vmatpush1.msra.mxu0 0.0
    %3777 = vmatprep.subr.mxu0 0.0
    %3778 = vmatpush1.msra.mxu0 0.0
    %3779 = vmatprep.mubr.f32.mxu0 0.0
    %3780 = vmatmul.mubr.f32.gmra.mrb[0].mxu0 %v3161
    %v3781 = vpop.f32.mrb[0].mxu0
    %v3782 = vadd.f32 0.0, %v3781
    %v3783 = vpop.f32.mrb[0].mxu0
    %3784 = vmatprep.mubr.f32.mxu0 0.0
    %3785 = vmatmul.mubr.f32.gmra.mrb[0].mxu0 %v3164
    %v3786 = vpop.f32.mrb[0].mxu0
    %v3787 = vadd.f32 0.0, %v3786
    %v3788 = vpop.f32.mrb[0].mxu0
    %3789 = vdwg.mxu0
    %v3791 = vsel %vm251, %v3144, 0
    %3793 = vmatprep.subr.mxu0 0.0
    %3794 = vmatpush1.msra.mxu0 %v3140
    %3795 = vmatprep.subr.mxu0 0.0
    %3796 = vmatpush1.msra.mxu0 %v3141
    %3797 = vmatprep.subr.mxu0 0.0
    %3798 = vmatpush1.msra.mxu0 %v3142
    %3799 = vmatprep.subr.mxu0 0.0
    %3800 = vmatpush1.msra.mxu0 %v3143
    %3801 = vmatprep.subr.mxu0 0.0
    %3802 = vmatpush1.msra.mxu0 %v3791
    %3803 = vmatprep.subr.mxu0 0.0
    %3804 = vmatpush1.msra.mxu0 0.0
    %3805 = vmatprep.subr.mxu0 0.0
    %3806 = vmatpush1.msra.mxu0 0.0
    %3807 = vmatprep.subr.mxu0 0.0
    %3808 = vmatpush1.msra.mxu0 0.0
    %3809 = vmatprep.subr.mxu0 0.0
    %3810 = vmatpush1.msra.mxu0 0.0
    %3811 = vmatprep.subr.mxu0 0.0
    %3812 = vmatpush1.msra.mxu0 0.0
    %3813 = vmatprep.subr.mxu0 0.0
    %3814 = vmatpush1.msra.mxu0 0.0
    %3815 = vmatprep.subr.mxu0 0.0
    %3816 = vmatpush1.msra.mxu0 0.0
    %3817 = vmatprep.subr.mxu0 0.0
    %3818 = vmatpush1.msra.mxu0 0.0
    %3819 = vmatprep.subr.mxu0 0.0
    %3820 = vmatpush1.msra.mxu0 0.0
    %3821 = vmatprep.subr.mxu0 0.0
    %3822 = vmatpush1.msra.mxu0 0.0
    %3823 = vmatprep.subr.mxu0 0.0
    %3824 = vmatpush1.msra.mxu0 0.0
    %3825 = vmatprep.subr.mxu0 0.0
    %3826 = vmatpush1.msra.mxu0 0.0
    %3827 = vmatprep.subr.mxu0 0.0
    %3828 = vmatpush1.msra.mxu0 0.0
    %3829 = vmatprep.subr.mxu0 0.0
    %3830 = vmatpush1.msra.mxu0 0.0
    %3831 = vmatprep.subr.mxu0 0.0
    %3832 = vmatpush1.msra.mxu0 0.0
    %3833 = vmatprep.subr.mxu0 0.0
    %3834 = vmatpush1.msra.mxu0 0.0
    %3835 = vmatprep.subr.mxu0 0.0
    %3836 = vmatpush1.msra.mxu0 0.0
    %3837 = vmatprep.subr.mxu0 0.0
    %3838 = vmatpush1.msra.mxu0 0.0
    %3839 = vmatprep.subr.mxu0 0.0
    %3840 = vmatpush1.msra.mxu0 0.0
    %3841 = vmatprep.subr.mxu0 0.0
    %3842 = vmatpush1.msra.mxu0 0.0
    %3843 = vmatprep.subr.mxu0 0.0
    %3844 = vmatpush1.msra.mxu0 0.0
    %3845 = vmatprep.subr.mxu0 0.0
    %3846 = vmatpush1.msra.mxu0 0.0
    %3847 = vmatprep.subr.mxu0 0.0
    %3848 = vmatpush1.msra.mxu0 0.0
    %3849 = vmatprep.subr.mxu0 0.0
    %3850 = vmatpush1.msra.mxu0 0.0
    %3851 = vmatprep.subr.mxu0 0.0
    %3852 = vmatpush1.msra.mxu0 0.0
    %3853 = vmatprep.subr.mxu0 0.0
    %3854 = vmatpush1.msra.mxu0 0.0
    %3855 = vmatprep.subr.mxu0 0.0
    %3856 = vmatpush1.msra.mxu0 0.0
    %3857 = vmatprep.mubr.f32.mxu0 0.0
    %3858 = vmatmul.mubr.f32.gmra.mrb[0].mxu0 %v3161
    %v3859 = vpop.f32.mrb[0].mxu0
    %v3860 = vadd.f32 0.0, %v3859
    %v3861 = vpop.f32.mrb[0].mxu0
    %3862 = vmatprep.mubr.f32.mxu0 0.0
    %3863 = vmatmul.mubr.f32.gmra.mrb[0].mxu0 %v3164
    %v3864 = vpop.f32.mrb[0].mxu0
    %v3865 = vadd.f32 0.0, %v3864
    %v3866 = vpop.f32.mrb[0].mxu0
    %3867 = vdwg.mxu0
    %v3869 = vsel %vm251, %v3149, 0
    %3871 = vmatprep.subr.mxu0 0.0
    %3872 = vmatpush1.msra.mxu0 %v3145
    %3873 = vmatprep.subr.mxu0 0.0
    %3874 = vmatpush1.msra.mxu0 %v3146
    %3875 = vmatprep.subr.mxu0 0.0
    %3876 = vmatpush1.msra.mxu0 %v3147
    %3877 = vmatprep.subr.mxu0 0.0
    %3878 = vmatpush1.msra.mxu0 %v3148
    %3879 = vmatprep.subr.mxu0 0.0
    %3880 = vmatpush1.msra.mxu0 %v3869
    %3881 = vmatprep.subr.mxu0 0.0
    %3882 = vmatpush1.msra.mxu0 0.0
    %3883 = vmatprep.subr.mxu0 0.0
    %3884 = vmatpush1.msra.mxu0 0.0
    %3885 = vmatprep.subr.mxu0 0.0
    %3886 = vmatpush1.msra.mxu0 0.0
    %3887 = vmatprep.subr.mxu0 0.0
    %3888 = vmatpush1.msra.mxu0 0.0
    %3889 = vmatprep.subr.mxu0 0.0
    %3890 = vmatpush1.msra.mxu0 0.0
    %3891 = vmatprep.subr.mxu0 0.0
    %3892 = vmatpush1.msra.mxu0 0.0
    %3893 = vmatprep.subr.mxu0 0.0
    %3894 = vmatpush1.msra.mxu0 0.0
    %3895 = vmatprep.subr.mxu0 0.0
    %3896 = vmatpush1.msra.mxu0 0.0
    %3897 = vmatprep.subr.mxu0 0.0
    %3898 = vmatpush1.msra.mxu0 0.0
    %3899 = vmatprep.subr.mxu0 0.0
    %3900 = vmatpush1.msra.mxu0 0.0
    %3901 = vmatprep.subr.mxu0 0.0
    %3902 = vmatpush1.msra.mxu0 0.0
    %3903 = vmatprep.subr.mxu0 0.0
    %3904 = vmatpush1.msra.mxu0 0.0
    %3905 = vmatprep.subr.mxu0 0.0
    %3906 = vmatpush1.msra.mxu0 0.0
    %3907 = vmatprep.subr.mxu0 0.0
    %3908 = vmatpush1.msra.mxu0 0.0
    %3909 = vmatprep.subr.mxu0 0.0
    %3910 = vmatpush1.msra.mxu0 0.0
    %3911 = vmatprep.subr.mxu0 0.0
    %3912 = vmatpush1.msra.mxu0 0.0
    %3913 = vmatprep.subr.mxu0 0.0
    %3914 = vmatpush1.msra.mxu0 0.0
    %3915 = vmatprep.subr.mxu0 0.0
    %3916 = vmatpush1.msra.mxu0 0.0
    %3917 = vmatprep.subr.mxu0 0.0
    %3918 = vmatpush1.msra.mxu0 0.0
    %3919 = vmatprep.subr.mxu0 0.0
    %3920 = vmatpush1.msra.mxu0 0.0
    %3921 = vmatprep.subr.mxu0 0.0
    %3922 = vmatpush1.msra.mxu0 0.0
    %3923 = vmatprep.subr.mxu0 0.0
    %3924 = vmatpush1.msra.mxu0 0.0
    %3925 = vmatprep.subr.mxu0 0.0
    %3926 = vmatpush1.msra.mxu0 0.0
    %3927 = vmatprep.subr.mxu0 0.0
    %3928 = vmatpush1.msra.mxu0 0.0
    %3929 = vmatprep.subr.mxu0 0.0
    %3930 = vmatpush1.msra.mxu0 0.0
    %3931 = vmatprep.subr.mxu0 0.0
    %3932 = vmatpush1.msra.mxu0 0.0
    %3933 = vmatprep.subr.mxu0 0.0
    %3934 = vmatpush1.msra.mxu0 0.0
    %3935 = vmatprep.mubr.f32.mxu0 0.0
    %3936 = vmatmul.mubr.f32.gmra.mrb[0].mxu0 %v3161
    %v3937 = vpop.f32.mrb[0].mxu0
    %v3938 = vadd.f32 0.0, %v3937
    %v3939 = vpop.f32.mrb[0].mxu0
    %3940 = vmatprep.mubr.f32.mxu0 0.0
    %3941 = vmatmul.mubr.f32.gmra.mrb[0].mxu0 %v3164
    %v3942 = vpop.f32.mrb[0].mxu0
    %v3943 = vadd.f32 0.0, %v3942
    %v3944 = vpop.f32.mrb[0].mxu0
    %3945 = vdwg.mxu0
    %v3947 = vsel %vm251, %v3154, 0
    %3949 = vmatprep.subr.mxu0 0.0
    %3950 = vmatpush1.msra.mxu0 %v3150
    %3951 = vmatprep.subr.mxu0 0.0
    %3952 = vmatpush1.msra.mxu0 %v3151
    %3953 = vmatprep.subr.mxu0 0.0
    %3954 = vmatpush1.msra.mxu0 %v3152
    %3955 = vmatprep.subr.mxu0 0.0
    %3956 = vmatpush1.msra.mxu0 %v3153
    %3957 = vmatprep.subr.mxu0 0.0
    %3958 = vmatpush1.msra.mxu0 %v3947
    %3959 = vmatprep.subr.mxu0 0.0
    %3960 = vmatpush1.msra.mxu0 0.0
    %3961 = vmatprep.subr.mxu0 0.0
    %3962 = vmatpush1.msra.mxu0 0.0
    %3963 = vmatprep.subr.mxu0 0.0
    %3964 = vmatpush1.msra.mxu0 0.0
    %3965 = vmatprep.subr.mxu0 0.0
    %3966 = vmatpush1.msra.mxu0 0.0
    %3967 = vmatprep.subr.mxu0 0.0
    %3968 = vmatpush1.msra.mxu0 0.0
    %3969 = vmatprep.subr.mxu0 0.0
    %3970 = vmatpush1.msra.mxu0 0.0
    %3971 = vmatprep.subr.mxu0 0.0
    %3972 = vmatpush1.msra.mxu0 0.0
    %3973 = vmatprep.subr.mxu0 0.0
    %3974 = vmatpush1.msra.mxu0 0.0
    %3975 = vmatprep.subr.mxu0 0.0
    %3976 = vmatpush1.msra.mxu0 0.0
    %3977 = vmatprep.subr.mxu0 0.0
    %3978 = vmatpush1.msra.mxu0 0.0
    %3979 = vmatprep.subr.mxu0 0.0
    %3980 = vmatpush1.msra.mxu0 0.0
    %3981 = vmatprep.subr.mxu0 0.0
    %3982 = vmatpush1.msra.mxu0 0.0
    %3983 = vmatprep.subr.mxu0 0.0
    %3984 = vmatpush1.msra.mxu0 0.0
    %3985 = vmatprep.subr.mxu0 0.0
    %3986 = vmatpush1.msra.mxu0 0.0
    %3987 = vmatprep.subr.mxu0 0.0
    %3988 = vmatpush1.msra.mxu0 0.0
    %3989 = vmatprep.subr.mxu0 0.0
    %3990 = vmatpush1.msra.mxu0 0.0
    %3991 = vmatprep.subr.mxu0 0.0
    %3992 = vmatpush1.msra.mxu0 0.0
    %3993 = vmatprep.subr.mxu0 0.0
    %3994 = vmatpush1.msra.mxu0 0.0
    %3995 = vmatprep.subr.mxu0 0.0
    %3996 = vmatpush1.msra.mxu0 0.0
    %3997 = vmatprep.subr.mxu0 0.0
    %3998 = vmatpush1.msra.mxu0 0.0
    %3999 = vmatprep.subr.mxu0 0.0
    %4000 = vmatpush1.msra.mxu0 0.0
    %4001 = vmatprep.subr.mxu0 0.0
    %4002 = vmatpush1.msra.mxu0 0.0
    %4003 = vmatprep.subr.mxu0 0.0
    %4004 = vmatpush1.msra.mxu0 0.0
    %4005 = vmatprep.subr.mxu0 0.0
    %4006 = vmatpush1.msra.mxu0 0.0
    %4007 = vmatprep.subr.mxu0 0.0
    %4008 = vmatpush1.msra.mxu0 0.0
    %4009 = vmatprep.subr.mxu0 0.0
    %4010 = vmatpush1.msra.mxu0 0.0
    %4011 = vmatprep.subr.mxu0 0.0
    %4012 = vmatpush1.msra.mxu0 0.0
    %4013 = vmatprep.mubr.f32.mxu0 0.0
    %4014 = vmatmul.mubr.f32.gmra.mrb[0].mxu0 %v3161
    %v4015 = vpop.f32.mrb[0].mxu0
    %v4016 = vadd.f32 0.0, %v4015
    %v4017 = vpop.f32.mrb[0].mxu0
    %4018 = vmatprep.mubr.f32.mxu0 0.0
    %4019 = vmatmul.mubr.f32.gmra.mrb[0].mxu0 %v3164
    %v4020 = vpop.f32.mrb[0].mxu0
    %v4021 = vadd.f32 0.0, %v4020
    %v4022 = vpop.f32.mrb[0].mxu0
    %4023 = vdwg.mxu0
    %v4025 = vsel %vm251, %v3159, 0
    %4027 = vmatprep.subr.mxu0 0.0
    %4028 = vmatpush1.msra.mxu0 %v3155
    %4029 = vmatprep.subr.mxu0 0.0
    %4030 = vmatpush1.msra.mxu0 %v3156
    %4031 = vmatprep.subr.mxu0 0.0
    %4032 = vmatpush1.msra.mxu0 %v3157
    %4033 = vmatprep.subr.mxu0 0.0
    %4034 = vmatpush1.msra.mxu0 %v3158
    %4035 = vmatprep.subr.mxu0 0.0
    %4036 = vmatpush1.msra.mxu0 %v4025
    %4037 = vmatprep.subr.mxu0 0.0
    %4038 = vmatpush1.msra.mxu0 0.0
    %4039 = vmatprep.subr.mxu0 0.0
    %4040 = vmatpush1.msra.mxu0 0.0
    %4041 = vmatprep.subr.mxu0 0.0
    %4042 = vmatpush1.msra.mxu0 0.0
    %4043 = vmatprep.subr.mxu0 0.0
    %4044 = vmatpush1.msra.mxu0 0.0
    %4045 = vmatprep.subr.mxu0 0.0
    %4046 = vmatpush1.msra.mxu0 0.0
    %4047 = vmatprep.subr.mxu0 0.0
    %4048 = vmatpush1.msra.mxu0 0.0
    %4049 = vmatprep.subr.mxu0 0.0
    %4050 = vmatpush1.msra.mxu0 0.0
    %4051 = vmatprep.subr.mxu0 0.0
    %4052 = vmatpush1.msra.mxu0 0.0
    %4053 = vmatprep.subr.mxu0 0.0
    %4054 = vmatpush1.msra.mxu0 0.0
    %4055 = vmatprep.subr.mxu0 0.0
    %4056 = vmatpush1.msra.mxu0 0.0
    %4057 = vmatprep.subr.mxu0 0.0
    %4058 = vmatpush1.msra.mxu0 0.0
    %4059 = vmatprep.subr.mxu0 0.0
    %4060 = vmatpush1.msra.mxu0 0.0
    %4061 = vmatprep.subr.mxu0 0.0
    %4062 = vmatpush1.msra.mxu0 0.0
    %4063 = vmatprep.subr.mxu0 0.0
    %4064 = vmatpush1.msra.mxu0 0.0
    %4065 = vmatprep.subr.mxu0 0.0
    %4066 = vmatpush1.msra.mxu0 0.0
    %4067 = vmatprep.subr.mxu0 0.0
    %4068 = vmatpush1.msra.mxu0 0.0
    %4069 = vmatprep.subr.mxu0 0.0
    %4070 = vmatpush1.msra.mxu0 0.0
    %4071 = vmatprep.subr.mxu0 0.0
    %4072 = vmatpush1.msra.mxu0 0.0
    %4073 = vmatprep.subr.mxu0 0.0
    %4074 = vmatpush1.msra.mxu0 0.0
    %4075 = vmatprep.subr.mxu0 0.0
    %4076 = vmatpush1.msra.mxu0 0.0
    %4077 = vmatprep.subr.mxu0 0.0
    %4078 = vmatpush1.msra.mxu0 0.0
    %4079 = vmatprep.subr.mxu0 0.0
    %4080 = vmatpush1.msra.mxu0 0.0
    %4081 = vmatprep.subr.mxu0 0.0
    %4082 = vmatpush1.msra.mxu0 0.0
    %4083 = vmatprep.subr.mxu0 0.0
    %4084 = vmatpush1.msra.mxu0 0.0
    %4085 = vmatprep.subr.mxu0 0.0
    %4086 = vmatpush1.msra.mxu0 0.0
    %4087 = vmatprep.subr.mxu0 0.0
    %4088 = vmatpush1.msra.mxu0 0.0
    %4089 = vmatprep.subr.mxu0 0.0
    %4090 = vmatpush1.msra.mxu0 0.0
    %4091 = vmatprep.mubr.f32.mxu0 0.0
    %4092 = vmatmul.mubr.f32.gmra.mrb[0].mxu0 %v3161
    %v4093 = vpop.f32.mrb[0].mxu0
    %v4094 = vadd.f32 0.0, %v4093
    %v4095 = vpop.f32.mrb[0].mxu0
    %4096 = vmatprep.mubr.f32.mxu0 0.0
    %4097 = vmatmul.mubr.f32.gmra.mrb[0].mxu0 %v3164
    %v4098 = vpop.f32.mrb[0].mxu0
    %v4099 = vadd.f32 0.0, %v4098
    %v4100 = vpop.f32.mrb[0].mxu0
    %4101 = vdwg.mxu0
    %v4103 = vsel %vm1188, %v3236, 0
    %v4106 = vsel %vm1188, %v3548, 0
    %4108 = vmatprep.subr.mxu0 0.0
    %4109 = vmatpush1.xpose.msra.mxu0 %v4106
    %4110 = vmatprep.subr.mxu0 0.0
    %4111 = vmatpush1.xpose.msra.mxu0 0.0
    %4112 = vmatprep.subr.mxu0 0.0
    %4113 = vmatpush1.xpose.msra.mxu0 0.0
    %4114 = vmatprep.subr.mxu0 0.0
    %4115 = vmatpush1.xpose.msra.mxu0 0.0
    %4116 = vmatprep.subr.mxu0 0.0
    %4117 = vmatpush1.xpose.msra.mxu0 0.0
    %4118 = vmatprep.subr.mxu0 0.0
    %4119 = vmatpush1.xpose.msra.mxu0 0.0
    %4120 = vmatprep.subr.mxu0 0.0
    %4121 = vmatpush1.xpose.msra.mxu0 0.0
    %4122 = vmatprep.subr.mxu0 0.0
    %4123 = vmatpush1.xpose.msra.mxu0 0.0
    %4124 = vmatprep.subr.mxu0 0.0
    %4125 = vmatpush1.xpose.msra.mxu0 0.0
    %4126 = vmatprep.subr.mxu0 0.0
    %4127 = vmatpush1.xpose.msra.mxu0 0.0
    %4128 = vmatprep.subr.mxu0 0.0
    %4129 = vmatpush1.xpose.msra.mxu0 0.0
    %4130 = vmatprep.subr.mxu0 0.0
    %4131 = vmatpush1.xpose.msra.mxu0 0.0
    %4132 = vmatprep.subr.mxu0 0.0
    %4133 = vmatpush1.xpose.msra.mxu0 0.0
    %4134 = vmatprep.subr.mxu0 0.0
    %4135 = vmatpush1.xpose.msra.mxu0 0.0
    %4136 = vmatprep.subr.mxu0 0.0
    %4137 = vmatpush1.xpose.msra.mxu0 0.0
    %4138 = vmatprep.subr.mxu0 0.0
    %4139 = vmatpush1.xpose.msra.mxu0 0.0
    %4140 = vmatprep.subr.mxu0 0.0
    %4141 = vmatpush1.xpose.msra.mxu0 0.0
    %4142 = vmatprep.subr.mxu0 0.0
    %4143 = vmatpush1.xpose.msra.mxu0 0.0
    %4144 = vmatprep.subr.mxu0 0.0
    %4145 = vmatpush1.xpose.msra.mxu0 0.0
    %4146 = vmatprep.subr.mxu0 0.0
    %4147 = vmatpush1.xpose.msra.mxu0 0.0
    %4148 = vmatprep.subr.mxu0 0.0
    %4149 = vmatpush1.xpose.msra.mxu0 0.0
    %4150 = vmatprep.subr.mxu0 0.0
    %4151 = vmatpush1.xpose.msra.mxu0 0.0
    %4152 = vmatprep.subr.mxu0 0.0
    %4153 = vmatpush1.xpose.msra.mxu0 0.0
    %4154 = vmatprep.subr.mxu0 0.0
    %4155 = vmatpush1.xpose.msra.mxu0 0.0
    %4156 = vmatprep.subr.mxu0 0.0
    %4157 = vmatpush1.xpose.msra.mxu0 0.0
    %4158 = vmatprep.subr.mxu0 0.0
    %4159 = vmatpush1.xpose.msra.mxu0 0.0
    %4160 = vmatprep.subr.mxu0 0.0
    %4161 = vmatpush1.xpose.msra.mxu0 0.0
    %4162 = vmatprep.subr.mxu0 0.0
    %4163 = vmatpush1.xpose.msra.mxu0 0.0
    %4164 = vmatprep.subr.mxu0 0.0
    %4165 = vmatpush1.xpose.msra.mxu0 0.0
    %4166 = vmatprep.subr.mxu0 0.0
    %4167 = vmatpush1.xpose.msra.mxu0 0.0
    %4168 = vmatprep.subr.mxu0 0.0
    %4169 = vmatpush1.xpose.msra.mxu0 0.0
    %4170 = vmatprep.subr.mxu0 0.0
    %4171 = vmatpush1.xpose.msra.mxu0 0.0
    %4172 = vmatprep.mubr.f32.mxu0 0.0
    %4173 = vmatmul.mubr.f32.gmra.mrb[0].mxu0 %v4103
    %v4174 = vpop.f32.mrb[0].mxu0
    %v4175 = vadd.f32 0.0, %v4174
    %v4176 = vpop.f32.mrb[0].mxu0
    %4177 = vdwg.mxu0
    %v4179 = vsel %vm1188, %v3241, 0
    %v4182 = vsel %vm1188, %v3553, 0
    %4184 = vmatprep.subr.mxu0 0.0
    %4185 = vmatpush1.xpose.msra.mxu0 %v4182
    %4186 = vmatprep.subr.mxu0 0.0
    %4187 = vmatpush1.xpose.msra.mxu0 0.0
    %4188 = vmatprep.subr.mxu0 0.0
    %4189 = vmatpush1.xpose.msra.mxu0 0.0
    %4190 = vmatprep.subr.mxu0 0.0
    %4191 = vmatpush1.xpose.msra.mxu0 0.0
    %4192 = vmatprep.subr.mxu0 0.0
    %4193 = vmatpush1.xpose.msra.mxu0 0.0
    %4194 = vmatprep.subr.mxu0 0.0
    %4195 = vmatpush1.xpose.msra.mxu0 0.0
    %4196 = vmatprep.subr.mxu0 0.0
    %4197 = vmatpush1.xpose.msra.mxu0 0.0
    %4198 = vmatprep.subr.mxu0 0.0
    %4199 = vmatpush1.xpose.msra.mxu0 0.0
    %4200 = vmatprep.subr.mxu0 0.0
    %4201 = vmatpush1.xpose.msra.mxu0 0.0
    %4202 = vmatprep.subr.mxu0 0.0
    %4203 = vmatpush1.xpose.msra.mxu0 0.0
    %4204 = vmatprep.subr.mxu0 0.0
    %4205 = vmatpush1.xpose.msra.mxu0 0.0
    %4206 = vmatprep.subr.mxu0 0.0
    %4207 = vmatpush1.xpose.msra.mxu0 0.0
    %4208 = vmatprep.subr.mxu0 0.0
    %4209 = vmatpush1.xpose.msra.mxu0 0.0
    %4210 = vmatprep.subr.mxu0 0.0
    %4211 = vmatpush1.xpose.msra.mxu0 0.0
    %4212 = vmatprep.subr.mxu0 0.0
    %4213 = vmatpush1.xpose.msra.mxu0 0.0
    %4214 = vmatprep.subr.mxu0 0.0
    %4215 = vmatpush1.xpose.msra.mxu0 0.0
    %4216 = vmatprep.subr.mxu0 0.0
    %4217 = vmatpush1.xpose.msra.mxu0 0.0
    %4218 = vmatprep.subr.mxu0 0.0
    %4219 = vmatpush1.xpose.msra.mxu0 0.0
    %4220 = vmatprep.subr.mxu0 0.0
    %4221 = vmatpush1.xpose.msra.mxu0 0.0
    %4222 = vmatprep.subr.mxu0 0.0
    %4223 = vmatpush1.xpose.msra.mxu0 0.0
    %4224 = vmatprep.subr.mxu0 0.0
    %4225 = vmatpush1.xpose.msra.mxu0 0.0
    %4226 = vmatprep.subr.mxu0 0.0
    %4227 = vmatpush1.xpose.msra.mxu0 0.0
    %4228 = vmatprep.subr.mxu0 0.0
    %4229 = vmatpush1.xpose.msra.mxu0 0.0
    %4230 = vmatprep.subr.mxu0 0.0
    %4231 = vmatpush1.xpose.msra.mxu0 0.0
    %4232 = vmatprep.subr.mxu0 0.0
    %4233 = vmatpush1.xpose.msra.mxu0 0.0
    %4234 = vmatprep.subr.mxu0 0.0
    %4235 = vmatpush1.xpose.msra.mxu0 0.0
    %4236 = vmatprep.subr.mxu0 0.0
    %4237 = vmatpush1.xpose.msra.mxu0 0.0
    %4238 = vmatprep.subr.mxu0 0.0
    %4239 = vmatpush1.xpose.msra.mxu0 0.0
    %4240 = vmatprep.subr.mxu0 0.0
    %4241 = vmatpush1.xpose.msra.mxu0 0.0
    %4242 = vmatprep.subr.mxu0 0.0
    %4243 = vmatpush1.xpose.msra.mxu0 0.0
    %4244 = vmatprep.subr.mxu0 0.0
    %4245 = vmatpush1.xpose.msra.mxu0 0.0
    %4246 = vmatprep.subr.mxu0 0.0
    %4247 = vmatpush1.xpose.msra.mxu0 0.0
    %4248 = vmatprep.mubr.f32.mxu0 0.0
    %4249 = vmatmul.mubr.f32.gmra.mrb[0].mxu0 %v4179
    %v4250 = vpop.f32.mrb[0].mxu0
    %v4251 = vadd.f32 0.0, %v4250
    %v4252 = vpop.f32.mrb[0].mxu0
    %4253 = vdwg.mxu0
    %v4255 = vsel %vm1188, %v3314, 0
    %v4258 = vsel %vm1188, %v3626, 0
    %4260 = vmatprep.subr.mxu0 0.0
    %4261 = vmatpush1.xpose.msra.mxu0 %v4258
    %4262 = vmatprep.subr.mxu0 0.0
    %4263 = vmatpush1.xpose.msra.mxu0 0.0
    %4264 = vmatprep.subr.mxu0 0.0
    %4265 = vmatpush1.xpose.msra.mxu0 0.0
    %4266 = vmatprep.subr.mxu0 0.0
    %4267 = vmatpush1.xpose.msra.mxu0 0.0
    %4268 = vmatprep.subr.mxu0 0.0
    %4269 = vmatpush1.xpose.msra.mxu0 0.0
    %4270 = vmatprep.subr.mxu0 0.0
    %4271 = vmatpush1.xpose.msra.mxu0 0.0
    %4272 = vmatprep.subr.mxu0 0.0
    %4273 = vmatpush1.xpose.msra.mxu0 0.0
    %4274 = vmatprep.subr.mxu0 0.0
    %4275 = vmatpush1.xpose.msra.mxu0 0.0
    %4276 = vmatprep.subr.mxu0 0.0
    %4277 = vmatpush1.xpose.msra.mxu0 0.0
    %4278 = vmatprep.subr.mxu0 0.0
    %4279 = vmatpush1.xpose.msra.mxu0 0.0
    %4280 = vmatprep.subr.mxu0 0.0
    %4281 = vmatpush1.xpose.msra.mxu0 0.0
    %4282 = vmatprep.subr.mxu0 0.0
    %4283 = vmatpush1.xpose.msra.mxu0 0.0
    %4284 = vmatprep.subr.mxu0 0.0
    %4285 = vmatpush1.xpose.msra.mxu0 0.0
    %4286 = vmatprep.subr.mxu0 0.0
    %4287 = vmatpush1.xpose.msra.mxu0 0.0
    %4288 = vmatprep.subr.mxu0 0.0
    %4289 = vmatpush1.xpose.msra.mxu0 0.0
    %4290 = vmatprep.subr.mxu0 0.0
    %4291 = vmatpush1.xpose.msra.mxu0 0.0
    %4292 = vmatprep.subr.mxu0 0.0
    %4293 = vmatpush1.xpose.msra.mxu0 0.0
    %4294 = vmatprep.subr.mxu0 0.0
    %4295 = vmatpush1.xpose.msra.mxu0 0.0
    %4296 = vmatprep.subr.mxu0 0.0
    %4297 = vmatpush1.xpose.msra.mxu0 0.0
    %4298 = vmatprep.subr.mxu0 0.0
    %4299 = vmatpush1.xpose.msra.mxu0 0.0
    %4300 = vmatprep.subr.mxu0 0.0
    %4301 = vmatpush1.xpose.msra.mxu0 0.0
    %4302 = vmatprep.subr.mxu0 0.0
    %4303 = vmatpush1.xpose.msra.mxu0 0.0
    %4304 = vmatprep.subr.mxu0 0.0
    %4305 = vmatpush1.xpose.msra.mxu0 0.0
    %4306 = vmatprep.subr.mxu0 0.0
    %4307 = vmatpush1.xpose.msra.mxu0 0.0
    %4308 = vmatprep.subr.mxu0 0.0
    %4309 = vmatpush1.xpose.msra.mxu0 0.0
    %4310 = vmatprep.subr.mxu0 0.0
    %4311 = vmatpush1.xpose.msra.mxu0 0.0
    %4312 = vmatprep.subr.mxu0 0.0
    %4313 = vmatpush1.xpose.msra.mxu0 0.0
    %4314 = vmatprep.subr.mxu0 0.0
    %4315 = vmatpush1.xpose.msra.mxu0 0.0
    %4316 = vmatprep.subr.mxu0 0.0
    %4317 = vmatpush1.xpose.msra.mxu0 0.0
    %4318 = vmatprep.subr.mxu0 0.0
    %4319 = vmatpush1.xpose.msra.mxu0 0.0
    %4320 = vmatprep.subr.mxu0 0.0
    %4321 = vmatpush1.xpose.msra.mxu0 0.0
    %4322 = vmatprep.subr.mxu0 0.0
    %4323 = vmatpush1.xpose.msra.mxu0 0.0
    %4324 = vmatprep.mubr.f32.mxu0 0.0
    %4325 = vmatmul.mubr.f32.gmra.mrb[0].mxu0 %v4255
    %v4326 = vpop.f32.mrb[0].mxu0
    %v4327 = vadd.f32 0.0, %v4326
    %v4328 = vpop.f32.mrb[0].mxu0
    %4329 = vdwg.mxu0
    %v4331 = vsel %vm1188, %v3319, 0
    %v4334 = vsel %vm1188, %v3631, 0
    %4336 = vmatprep.subr.mxu0 0.0
    %4337 = vmatpush1.xpose.msra.mxu0 %v4334
    %4338 = vmatprep.subr.mxu0 0.0
    %4339 = vmatpush1.xpose.msra.mxu0 0.0
    %4340 = vmatprep.subr.mxu0 0.0
    %4341 = vmatpush1.xpose.msra.mxu0 0.0
    %4342 = vmatprep.subr.mxu0 0.0
    %4343 = vmatpush1.xpose.msra.mxu0 0.0
    %4344 = vmatprep.subr.mxu0 0.0
    %4345 = vmatpush1.xpose.msra.mxu0 0.0
    %4346 = vmatprep.subr.mxu0 0.0
    %4347 = vmatpush1.xpose.msra.mxu0 0.0
    %4348 = vmatprep.subr.mxu0 0.0
    %4349 = vmatpush1.xpose.msra.mxu0 0.0
    %4350 = vmatprep.subr.mxu0 0.0
    %4351 = vmatpush1.xpose.msra.mxu0 0.0
    %4352 = vmatprep.subr.mxu0 0.0
    %4353 = vmatpush1.xpose.msra.mxu0 0.0
    %4354 = vmatprep.subr.mxu0 0.0
    %4355 = vmatpush1.xpose.msra.mxu0 0.0
    %4356 = vmatprep.subr.mxu0 0.0
    %4357 = vmatpush1.xpose.msra.mxu0 0.0
    %4358 = vmatprep.subr.mxu0 0.0
    %4359 = vmatpush1.xpose.msra.mxu0 0.0
    %4360 = vmatprep.subr.mxu0 0.0
    %4361 = vmatpush1.xpose.msra.mxu0 0.0
    %4362 = vmatprep.subr.mxu0 0.0
    %4363 = vmatpush1.xpose.msra.mxu0 0.0
    %4364 = vmatprep.subr.mxu0 0.0
    %4365 = vmatpush1.xpose.msra.mxu0 0.0
    %4366 = vmatprep.subr.mxu0 0.0
    %4367 = vmatpush1.xpose.msra.mxu0 0.0
    %4368 = vmatprep.subr.mxu0 0.0
    %4369 = vmatpush1.xpose.msra.mxu0 0.0
    %4370 = vmatprep.subr.mxu0 0.0
    %4371 = vmatpush1.xpose.msra.mxu0 0.0
    %4372 = vmatprep.subr.mxu0 0.0
    %4373 = vmatpush1.xpose.msra.mxu0 0.0
    %4374 = vmatprep.subr.mxu0 0.0
    %4375 = vmatpush1.xpose.msra.mxu0 0.0
    %4376 = vmatprep.subr.mxu0 0.0
    %4377 = vmatpush1.xpose.msra.mxu0 0.0
    %4378 = vmatprep.subr.mxu0 0.0
    %4379 = vmatpush1.xpose.msra.mxu0 0.0
    %4380 = vmatprep.subr.mxu0 0.0
    %4381 = vmatpush1.xpose.msra.mxu0 0.0
    %4382 = vmatprep.subr.mxu0 0.0
    %4383 = vmatpush1.xpose.msra.mxu0 0.0
    %4384 = vmatprep.subr.mxu0 0.0
    %4385 = vmatpush1.xpose.msra.mxu0 0.0
    %4386 = vmatprep.subr.mxu0 0.0
    %4387 = vmatpush1.xpose.msra.mxu0 0.0
    %4388 = vmatprep.subr.mxu0 0.0
    %4389 = vmatpush1.xpose.msra.mxu0 0.0
    %4390 = vmatprep.subr.mxu0 0.0
    %4391 = vmatpush1.xpose.msra.mxu0 0.0
    %4392 = vmatprep.subr.mxu0 0.0
    %4393 = vmatpush1.xpose.msra.mxu0 0.0
    %4394 = vmatprep.subr.mxu0 0.0
    %4395 = vmatpush1.xpose.msra.mxu0 0.0
    %4396 = vmatprep.subr.mxu0 0.0
    %4397 = vmatpush1.xpose.msra.mxu0 0.0
    %4398 = vmatprep.subr.mxu0 0.0
    %4399 = vmatpush1.xpose.msra.mxu0 0.0
    %4400 = vmatprep.mubr.f32.mxu0 0.0
    %4401 = vmatmul.mubr.f32.gmra.mrb[0].mxu0 %v4331
    %v4402 = vpop.f32.mrb[0].mxu0
    %v4403 = vadd.f32 0.0, %v4402
    %v4404 = vpop.f32.mrb[0].mxu0
    %4405 = vdwg.mxu0
    %v4407 = vsel %vm1188, %v3392, 0
    %v4410 = vsel %vm1188, %v3704, 0
    %4412 = vmatprep.subr.mxu0 0.0
    %4413 = vmatpush1.xpose.msra.mxu0 %v4410
    %4414 = vmatprep.subr.mxu0 0.0
    %4415 = vmatpush1.xpose.msra.mxu0 0.0
    %4416 = vmatprep.subr.mxu0 0.0
    %4417 = vmatpush1.xpose.msra.mxu0 0.0
    %4418 = vmatprep.subr.mxu0 0.0
    %4419 = vmatpush1.xpose.msra.mxu0 0.0
    %4420 = vmatprep.subr.mxu0 0.0
    %4421 = vmatpush1.xpose.msra.mxu0 0.0
    %4422 = vmatprep.subr.mxu0 0.0
    %4423 = vmatpush1.xpose.msra.mxu0 0.0
    %4424 = vmatprep.subr.mxu0 0.0
    %4425 = vmatpush1.xpose.msra.mxu0 0.0
    %4426 = vmatprep.subr.mxu0 0.0
    %4427 = vmatpush1.xpose.msra.mxu0 0.0
    %4428 = vmatprep.subr.mxu0 0.0
    %4429 = vmatpush1.xpose.msra.mxu0 0.0
    %4430 = vmatprep.subr.mxu0 0.0
    %4431 = vmatpush1.xpose.msra.mxu0 0.0
    %4432 = vmatprep.subr.mxu0 0.0
    %4433 = vmatpush1.xpose.msra.mxu0 0.0
    %4434 = vmatprep.subr.mxu0 0.0
    %4435 = vmatpush1.xpose.msra.mxu0 0.0
    %4436 = vmatprep.subr.mxu0 0.0
    %4437 = vmatpush1.xpose.msra.mxu0 0.0
    %4438 = vmatprep.subr.mxu0 0.0
    %4439 = vmatpush1.xpose.msra.mxu0 0.0
    %4440 = vmatprep.subr.mxu0 0.0
    %4441 = vmatpush1.xpose.msra.mxu0 0.0
    %4442 = vmatprep.subr.mxu0 0.0
    %4443 = vmatpush1.xpose.msra.mxu0 0.0
    %4444 = vmatprep.subr.mxu0 0.0
    %4445 = vmatpush1.xpose.msra.mxu0 0.0
    %4446 = vmatprep.subr.mxu0 0.0
    %4447 = vmatpush1.xpose.msra.mxu0 0.0
    %4448 = vmatprep.subr.mxu0 0.0
    %4449 = vmatpush1.xpose.msra.mxu0 0.0
    %4450 = vmatprep.subr.mxu0 0.0
    %4451 = vmatpush1.xpose.msra.mxu0 0.0
    %4452 = vmatprep.subr.mxu0 0.0
    %4453 = vmatpush1.xpose.msra.mxu0 0.0
    %4454 = vmatprep.subr.mxu0 0.0
    %4455 = vmatpush1.xpose.msra.mxu0 0.0
    %4456 = vmatprep.subr.mxu0 0.0
    %4457 = vmatpush1.xpose.msra.mxu0 0.0
    %4458 = vmatprep.subr.mxu0 0.0
    %4459 = vmatpush1.xpose.msra.mxu0 0.0
    %4460 = vmatprep.subr.mxu0 0.0
    %4461 = vmatpush1.xpose.msra.mxu0 0.0
    %4462 = vmatprep.subr.mxu0 0.0
    %4463 = vmatpush1.xpose.msra.mxu0 0.0
    %4464 = vmatprep.subr.mxu0 0.0
    %4465 = vmatpush1.xpose.msra.mxu0 0.0
    %4466 = vmatprep.subr.mxu0 0.0
    %4467 = vmatpush1.xpose.msra.mxu0 0.0
    %4468 = vmatprep.subr.mxu0 0.0
    %4469 = vmatpush1.xpose.msra.mxu0 0.0
    %4470 = vmatprep.subr.mxu0 0.0
    %4471 = vmatpush1.xpose.msra.mxu0 0.0
    %4472 = vmatprep.subr.mxu0 0.0
    %4473 = vmatpush1.xpose.msra.mxu0 0.0
    %4474 = vmatprep.subr.mxu0 0.0
    %4475 = vmatpush1.xpose.msra.mxu0 0.0
    %4476 = vmatprep.mubr.f32.mxu0 0.0
    %4477 = vmatmul.mubr.f32.gmra.mrb[0].mxu0 %v4407
    %v4478 = vpop.f32.mrb[0].mxu0
    %v4479 = vadd.f32 0.0, %v4478
    %v4480 = vpop.f32.mrb[0].mxu0
    %4481 = vdwg.mxu0
    %v4483 = vsel %vm1188, %v3397, 0
    %v4486 = vsel %vm1188, %v3709, 0
    %4488 = vmatprep.subr.mxu0 0.0
    %4489 = vmatpush1.xpose.msra.mxu0 %v4486
    %4490 = vmatprep.subr.mxu0 0.0
    %4491 = vmatpush1.xpose.msra.mxu0 0.0
    %4492 = vmatprep.subr.mxu0 0.0
    %4493 = vmatpush1.xpose.msra.mxu0 0.0
    %4494 = vmatprep.subr.mxu0 0.0
    %4495 = vmatpush1.xpose.msra.mxu0 0.0
    %4496 = vmatprep.subr.mxu0 0.0
    %4497 = vmatpush1.xpose.msra.mxu0 0.0
    %4498 = vmatprep.subr.mxu0 0.0
    %4499 = vmatpush1.xpose.msra.mxu0 0.0
    %4500 = vmatprep.subr.mxu0 0.0
    %4501 = vmatpush1.xpose.msra.mxu0 0.0
    %4502 = vmatprep.subr.mxu0 0.0
    %4503 = vmatpush1.xpose.msra.mxu0 0.0
    %4504 = vmatprep.subr.mxu0 0.0
    %4505 = vmatpush1.xpose.msra.mxu0 0.0
    %4506 = vmatprep.subr.mxu0 0.0
    %4507 = vmatpush1.xpose.msra.mxu0 0.0
    %4508 = vmatprep.subr.mxu0 0.0
    %4509 = vmatpush1.xpose.msra.mxu0 0.0
    %4510 = vmatprep.subr.mxu0 0.0
    %4511 = vmatpush1.xpose.msra.mxu0 0.0
    %4512 = vmatprep.subr.mxu0 0.0
    %4513 = vmatpush1.xpose.msra.mxu0 0.0
    %4514 = vmatprep.subr.mxu0 0.0
    %4515 = vmatpush1.xpose.msra.mxu0 0.0
    %4516 = vmatprep.subr.mxu0 0.0
    %4517 = vmatpush1.xpose.msra.mxu0 0.0
    %4518 = vmatprep.subr.mxu0 0.0
    %4519 = vmatpush1.xpose.msra.mxu0 0.0
    %4520 = vmatprep.subr.mxu0 0.0
    %4521 = vmatpush1.xpose.msra.mxu0 0.0
    %4522 = vmatprep.subr.mxu0 0.0
    %4523 = vmatpush1.xpose.msra.mxu0 0.0
    %4524 = vmatprep.subr.mxu0 0.0
    %4525 = vmatpush1.xpose.msra.mxu0 0.0
    %4526 = vmatprep.subr.mxu0 0.0
    %4527 = vmatpush1.xpose.msra.mxu0 0.0
    %4528 = vmatprep.subr.mxu0 0.0
    %4529 = vmatpush1.xpose.msra.mxu0 0.0
    %4530 = vmatprep.subr.mxu0 0.0
    %4531 = vmatpush1.xpose.msra.mxu0 0.0
    %4532 = vmatprep.subr.mxu0 0.0
    %4533 = vmatpush1.xpose.msra.mxu0 0.0
    %4534 = vmatprep.subr.mxu0 0.0
    %4535 = vmatpush1.xpose.msra.mxu0 0.0
    %4536 = vmatprep.subr.mxu0 0.0
    %4537 = vmatpush1.xpose.msra.mxu0 0.0
    %4538 = vmatprep.subr.mxu0 0.0
    %4539 = vmatpush1.xpose.msra.mxu0 0.0
    %4540 = vmatprep.subr.mxu0 0.0
    %4541 = vmatpush1.xpose.msra.mxu0 0.0
    %4542 = vmatprep.subr.mxu0 0.0
    %4543 = vmatpush1.xpose.msra.mxu0 0.0
    %4544 = vmatprep.subr.mxu0 0.0
    %4545 = vmatpush1.xpose.msra.mxu0 0.0
    %4546 = vmatprep.subr.mxu0 0.0
    %4547 = vmatpush1.xpose.msra.mxu0 0.0
    %4548 = vmatprep.subr.mxu0 0.0
    %4549 = vmatpush1.xpose.msra.mxu0 0.0
    %4550 = vmatprep.subr.mxu0 0.0
    %4551 = vmatpush1.xpose.msra.mxu0 0.0
    %4552 = vmatprep.mubr.f32.mxu0 0.0
    %4553 = vmatmul.mubr.f32.gmra.mrb[0].mxu0 %v4483
    %v4554 = vpop.f32.mrb[0].mxu0
    %v4555 = vadd.f32 0.0, %v4554
    %v4556 = vpop.f32.mrb[0].mxu0
    %4557 = vdwg.mxu0
    %v4559 = vsel %vm1188, %v3470, 0
    %v4562 = vsel %vm1188, %v3782, 0
    %4564 = vmatprep.subr.mxu0 0.0
    %4565 = vmatpush1.xpose.msra.mxu0 %v4562
    %4566 = vmatprep.subr.mxu0 0.0
    %4567 = vmatpush1.xpose.msra.mxu0 0.0
    %4568 = vmatprep.subr.mxu0 0.0
    %4569 = vmatpush1.xpose.msra.mxu0 0.0
    %4570 = vmatprep.subr.mxu0 0.0
    %4571 = vmatpush1.xpose.msra.mxu0 0.0
    %4572 = vmatprep.subr.mxu0 0.0
    %4573 = vmatpush1.xpose.msra.mxu0 0.0
    %4574 = vmatprep.subr.mxu0 0.0
    %4575 = vmatpush1.xpose.msra.mxu0 0.0
    %4576 = vmatprep.subr.mxu0 0.0
    %4577 = vmatpush1.xpose.msra.mxu0 0.0
    %4578 = vmatprep.subr.mxu0 0.0
    %4579 = vmatpush1.xpose.msra.mxu0 0.0
    %4580 = vmatprep.subr.mxu0 0.0
    %4581 = vmatpush1.xpose.msra.mxu0 0.0
    %4582 = vmatprep.subr.mxu0 0.0
    %4583 = vmatpush1.xpose.msra.mxu0 0.0
    %4584 = vmatprep.subr.mxu0 0.0
    %4585 = vmatpush1.xpose.msra.mxu0 0.0
    %4586 = vmatprep.subr.mxu0 0.0
    %4587 = vmatpush1.xpose.msra.mxu0 0.0
    %4588 = vmatprep.subr.mxu0 0.0
    %4589 = vmatpush1.xpose.msra.mxu0 0.0
    %4590 = vmatprep.subr.mxu0 0.0
    %4591 = vmatpush1.xpose.msra.mxu0 0.0
    %4592 = vmatprep.subr.mxu0 0.0
    %4593 = vmatpush1.xpose.msra.mxu0 0.0
    %4594 = vmatprep.subr.mxu0 0.0
    %4595 = vmatpush1.xpose.msra.mxu0 0.0
    %4596 = vmatprep.subr.mxu0 0.0
    %4597 = vmatpush1.xpose.msra.mxu0 0.0
    %4598 = vmatprep.subr.mxu0 0.0
    %4599 = vmatpush1.xpose.msra.mxu0 0.0
    %4600 = vmatprep.subr.mxu0 0.0
    %4601 = vmatpush1.xpose.msra.mxu0 0.0
    %4602 = vmatprep.subr.mxu0 0.0
    %4603 = vmatpush1.xpose.msra.mxu0 0.0
    %4604 = vmatprep.subr.mxu0 0.0
    %4605 = vmatpush1.xpose.msra.mxu0 0.0
    %4606 = vmatprep.subr.mxu0 0.0
    %4607 = vmatpush1.xpose.msra.mxu0 0.0
    %4608 = vmatprep.subr.mxu0 0.0
    %4609 = vmatpush1.xpose.msra.mxu0 0.0
    %4610 = vmatprep.subr.mxu0 0.0
    %4611 = vmatpush1.xpose.msra.mxu0 0.0
    %4612 = vmatprep.subr.mxu0 0.0
    %4613 = vmatpush1.xpose.msra.mxu0 0.0
    %4614 = vmatprep.subr.mxu0 0.0
    %4615 = vmatpush1.xpose.msra.mxu0 0.0
    %4616 = vmatprep.subr.mxu0 0.0
    %4617 = vmatpush1.xpose.msra.mxu0 0.0
    %4618 = vmatprep.subr.mxu0 0.0
    %4619 = vmatpush1.xpose.msra.mxu0 0.0
    %4620 = vmatprep.subr.mxu0 0.0
    %4621 = vmatpush1.xpose.msra.mxu0 0.0
    %4622 = vmatprep.subr.mxu0 0.0
    %4623 = vmatpush1.xpose.msra.mxu0 0.0
    %4624 = vmatprep.subr.mxu0 0.0
    %4625 = vmatpush1.xpose.msra.mxu0 0.0
    %4626 = vmatprep.subr.mxu0 0.0
    %4627 = vmatpush1.xpose.msra.mxu0 0.0
    %4628 = vmatprep.mubr.f32.mxu0 0.0
    %4629 = vmatmul.mubr.f32.gmra.mrb[0].mxu0 %v4559
    %v4630 = vpop.f32.mrb[0].mxu0
    %v4631 = vadd.f32 0.0, %v4630
    %v4632 = vpop.f32.mrb[0].mxu0
    %4633 = vdwg.mxu0
    %v4635 = vsel %vm1188, %v3475, 0
    %v4638 = vsel %vm1188, %v3787, 0
    %4640 = vmatprep.subr.mxu0 0.0
    %4641 = vmatpush1.xpose.msra.mxu0 %v4638
    %4642 = vmatprep.subr.mxu0 0.0
    %4643 = vmatpush1.xpose.msra.mxu0 0.0
    %4644 = vmatprep.subr.mxu0 0.0
    %4645 = vmatpush1.xpose.msra.mxu0 0.0
    %4646 = vmatprep.subr.mxu0 0.0
    %4647 = vmatpush1.xpose.msra.mxu0 0.0
    %4648 = vmatprep.subr.mxu0 0.0
    %4649 = vmatpush1.xpose.msra.mxu0 0.0
    %4650 = vmatprep.subr.mxu0 0.0
    %4651 = vmatpush1.xpose.msra.mxu0 0.0
    %4652 = vmatprep.subr.mxu0 0.0
    %4653 = vmatpush1.xpose.msra.mxu0 0.0
    %4654 = vmatprep.subr.mxu0 0.0
    %4655 = vmatpush1.xpose.msra.mxu0 0.0
    %4656 = vmatprep.subr.mxu0 0.0
    %4657 = vmatpush1.xpose.msra.mxu0 0.0
    %4658 = vmatprep.subr.mxu0 0.0
    %4659 = vmatpush1.xpose.msra.mxu0 0.0
    %4660 = vmatprep.subr.mxu0 0.0
    %4661 = vmatpush1.xpose.msra.mxu0 0.0
    %4662 = vmatprep.subr.mxu0 0.0
    %4663 = vmatpush1.xpose.msra.mxu0 0.0
    %4664 = vmatprep.subr.mxu0 0.0
    %4665 = vmatpush1.xpose.msra.mxu0 0.0
    %4666 = vmatprep.subr.mxu0 0.0
    %4667 = vmatpush1.xpose.msra.mxu0 0.0
    %4668 = vmatprep.subr.mxu0 0.0
    %4669 = vmatpush1.xpose.msra.mxu0 0.0
    %4670 = vmatprep.subr.mxu0 0.0
    %4671 = vmatpush1.xpose.msra.mxu0 0.0
    %4672 = vmatprep.subr.mxu0 0.0
    %4673 = vmatpush1.xpose.msra.mxu0 0.0
    %4674 = vmatprep.subr.mxu0 0.0
    %4675 = vmatpush1.xpose.msra.mxu0 0.0
    %4676 = vmatprep.subr.mxu0 0.0
    %4677 = vmatpush1.xpose.msra.mxu0 0.0
    %4678 = vmatprep.subr.mxu0 0.0
    %4679 = vmatpush1.xpose.msra.mxu0 0.0
    %4680 = vmatprep.subr.mxu0 0.0
    %4681 = vmatpush1.xpose.msra.mxu0 0.0
    %4682 = vmatprep.subr.mxu0 0.0
    %4683 = vmatpush1.xpose.msra.mxu0 0.0
    %4684 = vmatprep.subr.mxu0 0.0
    %4685 = vmatpush1.xpose.msra.mxu0 0.0
    %4686 = vmatprep.subr.mxu0 0.0
    %4687 = vmatpush1.xpose.msra.mxu0 0.0
    %4688 = vmatprep.subr.mxu0 0.0
    %4689 = vmatpush1.xpose.msra.mxu0 0.0
    %4690 = vmatprep.subr.mxu0 0.0
    %4691 = vmatpush1.xpose.msra.mxu0 0.0
    %4692 = vmatprep.subr.mxu0 0.0
    %4693 = vmatpush1.xpose.msra.mxu0 0.0
    %4694 = vmatprep.subr.mxu0 0.0
    %4695 = vmatpush1.xpose.msra.mxu0 0.0
    %4696 = vmatprep.subr.mxu0 0.0
    %4697 = vmatpush1.xpose.msra.mxu0 0.0
    %4698 = vmatprep.subr.mxu0 0.0
    %4699 = vmatpush1.xpose.msra.mxu0 0.0
    %4700 = vmatprep.subr.mxu0 0.0
    %4701 = vmatpush1.xpose.msra.mxu0 0.0
    %4702 = vmatprep.subr.mxu0 0.0
    %4703 = vmatpush1.xpose.msra.mxu0 0.0
    %4704 = vmatprep.mubr.f32.mxu0 0.0
    %4705 = vmatmul.mubr.f32.gmra.mrb[0].mxu0 %v4635
    %v4706 = vpop.f32.mrb[0].mxu0
    %v4707 = vadd.f32 0.0, %v4706
    %v4708 = vpop.f32.mrb[0].mxu0
    %4709 = vdwg.mxu0
    %v4710 = vsel %vm1188, %v4175, -inf
    %4711 = vmax.xlane.f32.xlu0 %v4710
    %v4712 = vpop.xlane.xlu0 %4711
    %v4713 = vsel %vm1188, %v4251, -inf
    %4714 = vmax.xlane.f32.xlu0 %v4713
    %v4715 = vpop.xlane.xlu0 %4714
    %v4716 = vsel %vm1188, %v4327, -inf
    %4717 = vmax.xlane.f32.xlu0 %v4716
    %v4718 = vpop.xlane.xlu0 %4717
    %v4719 = vsel %vm1188, %v4403, -inf
    %4720 = vmax.xlane.f32.xlu0 %v4719
    %v4721 = vpop.xlane.xlu0 %4720
    %v4722 = vsel %vm1188, %v4479, -inf
    %4723 = vmax.xlane.f32.xlu0 %v4722
    %v4724 = vpop.xlane.xlu0 %4723
    %v4725 = vsel %vm1188, %v4555, -inf
    %4726 = vmax.xlane.f32.xlu0 %v4725
    %v4727 = vpop.xlane.xlu0 %4726
    %v4728 = vsel %vm1188, %v4631, -inf
    %4729 = vmax.xlane.f32.xlu0 %v4728
    %v4730 = vpop.xlane.xlu0 %4729
    %v4731 = vsel %vm1188, %v4707, -inf
    %4732 = vmax.xlane.f32.xlu0 %v4731
    %v4733 = vpop.xlane.xlu0 %4732
    %v4734 = vsub.f32 %v4175, %v4712
    %v4735 = vsub.f32 %v4251, %v4715
    %v4736 = vsub.f32 %v4327, %v4718
    %v4737 = vsub.f32 %v4403, %v4721
    %v4738 = vsub.f32 %v4479, %v4724
    %v4739 = vsub.f32 %v4555, %v4727
    %v4740 = vsub.f32 %v4631, %v4730
    %v4741 = vsub.f32 %v4707, %v4733
    %v4742 = vmul.f32 %v4734, 1.442695
    %v4743 = vpow.pop %v4742
    %v4744 = vmul.f32 %v4735, 1.442695
    %v4745 = vpow.pop %v4744
    %v4746 = vmul.f32 %v4736, 1.442695
    %v4747 = vpow.pop %v4746
    %v4748 = vmul.f32 %v4737, 1.442695
    %v4749 = vpow.pop %v4748
    %v4750 = vmul.f32 %v4738, 1.442695
    %v4751 = vpow.pop %v4750
    %v4752 = vmul.f32 %v4739, 1.442695
    %v4753 = vpow.pop %v4752
    %v4754 = vmul.f32 %v4740, 1.442695
    %v4755 = vpow.pop %v4754
    %v4756 = vmul.f32 %v4741, 1.442695
    %v4757 = vpow.pop %v4756
    %v4758 = vsel %vm1188, %v4743, 0.0
    %4759 = vadd.xlane.f32.xlu0 %v4758
    %v4760 = vpop.xlane.xlu0 %4759
    %v4761 = vsel %vm1188, %v4745, 0.0
    %4762 = vadd.xlane.f32.xlu0 %v4761
    %v4763 = vpop.xlane.xlu0 %4762
    %v4764 = vsel %vm1188, %v4747, 0.0
    %4765 = vadd.xlane.f32.xlu0 %v4764
    %v4766 = vpop.xlane.xlu0 %4765
    %v4767 = vsel %vm1188, %v4749, 0.0
    %4768 = vadd.xlane.f32.xlu0 %v4767
    %v4769 = vpop.xlane.xlu0 %4768
    %v4770 = vsel %vm1188, %v4751, 0.0
    %4771 = vadd.xlane.f32.xlu0 %v4770
    %v4772 = vpop.xlane.xlu0 %4771
    %v4773 = vsel %vm1188, %v4753, 0.0
    %4774 = vadd.xlane.f32.xlu0 %v4773
    %v4775 = vpop.xlane.xlu0 %4774
    %v4776 = vsel %vm1188, %v4755, 0.0
    %4777 = vadd.xlane.f32.xlu0 %v4776
    %v4778 = vpop.xlane.xlu0 %4777
    %v4779 = vsel %vm1188, %v4757, 0.0
    %4780 = vadd.xlane.f32.xlu0 %v4779
    %v4781 = vpop.xlane.xlu0 %4780
    %v4782 = vrcp.pop %v4760
    %v4783 = vmul.f32 %v4743, %v4782
    %v4784 = vrcp.pop %v4763
    %v4785 = vmul.f32 %v4745, %v4784
    %v4786 = vrcp.pop %v4766
    %v4787 = vmul.f32 %v4747, %v4786
    %v4788 = vrcp.pop %v4769
    %v4789 = vmul.f32 %v4749, %v4788
    %v4790 = vrcp.pop %v4772
    %v4791 = vmul.f32 %v4751, %v4790
    %v4792 = vrcp.pop %v4775
    %v4793 = vmul.f32 %v4753, %v4792
    %v4794 = vrcp.pop %v4778
    %v4795 = vmul.f32 %v4755, %v4794
    %v4796 = vrcp.pop %v4781
    %v4797 = vmul.f32 %v4757, %v4796
    %v4799 = vsel %vm1188, %v4783, 0
    %4801 = vmatprep.subr.mxu0 0.0
    %4802 = vmatpush1.msra.mxu0 %v3860
    %4803 = vmatprep.subr.mxu0 0.0
    %4804 = vmatpush1.msra.mxu0 0.0
    %4805 = vmatprep.subr.mxu0 0.0
    %4806 = vmatpush1.msra.mxu0 0.0
    %4807 = vmatprep.subr.mxu0 0.0
    %4808 = vmatpush1.msra.mxu0 0.0
    %4809 = vmatprep.subr.mxu0 0.0
    %4810 = vmatpush1.msra.mxu0 0.0
    %4811 = vmatprep.subr.mxu0 0.0
    %4812 = vmatpush1.msra.mxu0 0.0
    %4813 = vmatprep.subr.mxu0 0.0
    %4814 = vmatpush1.msra.mxu0 0.0
    %4815 = vmatprep.subr.mxu0 0.0
    %4816 = vmatpush1.msra.mxu0 0.0
    %4817 = vmatprep.subr.mxu0 0.0
    %4818 = vmatpush1.msra.mxu0 0.0
    %4819 = vmatprep.subr.mxu0 0.0
    %4820 = vmatpush1.msra.mxu0 0.0
    %4821 = vmatprep.subr.mxu0 0.0
    %4822 = vmatpush1.msra.mxu0 0.0
    %4823 = vmatprep.subr.mxu0 0.0
    %4824 = vmatpush1.msra.mxu0 0.0
    %4825 = vmatprep.subr.mxu0 0.0
    %4826 = vmatpush1.msra.mxu0 0.0
    %4827 = vmatprep.subr.mxu0 0.0
    %4828 = vmatpush1.msra.mxu0 0.0
    %4829 = vmatprep.subr.mxu0 0.0
    %4830 = vmatpush1.msra.mxu0 0.0
    %4831 = vmatprep.subr.mxu0 0.0
    %4832 = vmatpush1.msra.mxu0 0.0
    %4833 = vmatprep.subr.mxu0 0.0
    %4834 = vmatpush1.msra.mxu0 0.0
    %4835 = vmatprep.subr.mxu0 0.0
    %4836 = vmatpush1.msra.mxu0 0.0
    %4837 = vmatprep.subr.mxu0 0.0
    %4838 = vmatpush1.msra.mxu0 0.0
    %4839 = vmatprep.subr.mxu0 0.0
    %4840 = vmatpush1.msra.mxu0 0.0
    %4841 = vmatprep.subr.mxu0 0.0
    %4842 = vmatpush1.msra.mxu0 0.0
    %4843 = vmatprep.subr.mxu0 0.0
    %4844 = vmatpush1.msra.mxu0 0.0
    %4845 = vmatprep.subr.mxu0 0.0
    %4846 = vmatpush1.msra.mxu0 0.0
    %4847 = vmatprep.subr.mxu0 0.0
    %4848 = vmatpush1.msra.mxu0 0.0
    %4849 = vmatprep.subr.mxu0 0.0
    %4850 = vmatpush1.msra.mxu0 0.0
    %4851 = vmatprep.subr.mxu0 0.0
    %4852 = vmatpush1.msra.mxu0 0.0
    %4853 = vmatprep.subr.mxu0 0.0
    %4854 = vmatpush1.msra.mxu0 0.0
    %4855 = vmatprep.subr.mxu0 0.0
    %4856 = vmatpush1.msra.mxu0 0.0
    %4857 = vmatprep.subr.mxu0 0.0
    %4858 = vmatpush1.msra.mxu0 0.0
    %4859 = vmatprep.subr.mxu0 0.0
    %4860 = vmatpush1.msra.mxu0 0.0
    %4861 = vmatprep.subr.mxu0 0.0
    %4862 = vmatpush1.msra.mxu0 0.0
    %4863 = vmatprep.subr.mxu0 0.0
    %4864 = vmatpush1.msra.mxu0 0.0
    %4865 = vmatprep.mubr.f32.mxu0 0.0
    %4866 = vmatmul.mubr.f32.gmra.mrb[0].mxu0 %v4799
    %v4867 = vpop.f32.mrb[0].mxu0
    %v4868 = vadd.f32 0.0, %v4867
    %v4869 = vpop.f32.mrb[0].mxu0
    %4870 = vdwg.mxu0
    %v4872 = vsel %vm1188, %v4785, 0
    %4874 = vmatprep.subr.mxu0 0.0
    %4875 = vmatpush1.msra.mxu0 %v3865
    %4876 = vmatprep.subr.mxu0 0.0
    %4877 = vmatpush1.msra.mxu0 0.0
    %4878 = vmatprep.subr.mxu0 0.0
    %4879 = vmatpush1.msra.mxu0 0.0
    %4880 = vmatprep.subr.mxu0 0.0
    %4881 = vmatpush1.msra.mxu0 0.0
    %4882 = vmatprep.subr.mxu0 0.0
    %4883 = vmatpush1.msra.mxu0 0.0
    %4884 = vmatprep.subr.mxu0 0.0
    %4885 = vmatpush1.msra.mxu0 0.0
    %4886 = vmatprep.subr.mxu0 0.0
    %4887 = vmatpush1.msra.mxu0 0.0
    %4888 = vmatprep.subr.mxu0 0.0
    %4889 = vmatpush1.msra.mxu0 0.0
    %4890 = vmatprep.subr.mxu0 0.0
    %4891 = vmatpush1.msra.mxu0 0.0
    %4892 = vmatprep.subr.mxu0 0.0
    %4893 = vmatpush1.msra.mxu0 0.0
    %4894 = vmatprep.subr.mxu0 0.0
    %4895 = vmatpush1.msra.mxu0 0.0
    %4896 = vmatprep.subr.mxu0 0.0
    %4897 = vmatpush1.msra.mxu0 0.0
    %4898 = vmatprep.subr.mxu0 0.0
    %4899 = vmatpush1.msra.mxu0 0.0
    %4900 = vmatprep.subr.mxu0 0.0
    %4901 = vmatpush1.msra.mxu0 0.0
    %4902 = vmatprep.subr.mxu0 0.0
    %4903 = vmatpush1.msra.mxu0 0.0
    %4904 = vmatprep.subr.mxu0 0.0
    %4905 = vmatpush1.msra.mxu0 0.0
    %4906 = vmatprep.subr.mxu0 0.0
    %4907 = vmatpush1.msra.mxu0 0.0
    %4908 = vmatprep.subr.mxu0 0.0
    %4909 = vmatpush1.msra.mxu0 0.0
    %4910 = vmatprep.subr.mxu0 0.0
    %4911 = vmatpush1.msra.mxu0 0.0
    %4912 = vmatprep.subr.mxu0 0.0
    %4913 = vmatpush1.msra.mxu0 0.0
    %4914 = vmatprep.subr.mxu0 0.0
    %4915 = vmatpush1.msra.mxu0 0.0
    %4916 = vmatprep.subr.mxu0 0.0
    %4917 = vmatpush1.msra.mxu0 0.0
    %4918 = vmatprep.subr.mxu0 0.0
    %4919 = vmatpush1.msra.mxu0 0.0
    %4920 = vmatprep.subr.mxu0 0.0
    %4921 = vmatpush1.msra.mxu0 0.0
    %4922 = vmatprep.subr.mxu0 0.0
    %4923 = vmatpush1.msra.mxu0 0.0
    %4924 = vmatprep.subr.mxu0 0.0
    %4925 = vmatpush1.msra.mxu0 0.0
    %4926 = vmatprep.subr.mxu0 0.0
    %4927 = vmatpush1.msra.mxu0 0.0
    %4928 = vmatprep.subr.mxu0 0.0
    %4929 = vmatpush1.msra.mxu0 0.0
    %4930 = vmatprep.subr.mxu0 0.0
    %4931 = vmatpush1.msra.mxu0 0.0
    %4932 = vmatprep.subr.mxu0 0.0
    %4933 = vmatpush1.msra.mxu0 0.0
    %4934 = vmatprep.subr.mxu0 0.0
    %4935 = vmatpush1.msra.mxu0 0.0
    %4936 = vmatprep.subr.mxu0 0.0
    %4937 = vmatpush1.msra.mxu0 0.0
    %4938 = vmatprep.mubr.f32.mxu0 0.0
    %4939 = vmatmul.mubr.f32.gmra.mrb[0].mxu0 %v4872
    %v4940 = vpop.f32.mrb[0].mxu0
    %v4941 = vadd.f32 0.0, %v4940
    %v4942 = vpop.f32.mrb[0].mxu0
    %4943 = vdwg.mxu0
    %v4945 = vsel %vm1188, %v4787, 0
    %4947 = vmatprep.subr.mxu0 0.0
    %4948 = vmatpush1.msra.mxu0 %v3938
    %4949 = vmatprep.subr.mxu0 0.0
    %4950 = vmatpush1.msra.mxu0 0.0
    %4951 = vmatprep.subr.mxu0 0.0
    %4952 = vmatpush1.msra.mxu0 0.0
    %4953 = vmatprep.subr.mxu0 0.0
    %4954 = vmatpush1.msra.mxu0 0.0
    %4955 = vmatprep.subr.mxu0 0.0
    %4956 = vmatpush1.msra.mxu0 0.0
    %4957 = vmatprep.subr.mxu0 0.0
    %4958 = vmatpush1.msra.mxu0 0.0
    %4959 = vmatprep.subr.mxu0 0.0
    %4960 = vmatpush1.msra.mxu0 0.0
    %4961 = vmatprep.subr.mxu0 0.0
    %4962 = vmatpush1.msra.mxu0 0.0
    %4963 = vmatprep.subr.mxu0 0.0
    %4964 = vmatpush1.msra.mxu0 0.0
    %4965 = vmatprep.subr.mxu0 0.0
    %4966 = vmatpush1.msra.mxu0 0.0
    %4967 = vmatprep.subr.mxu0 0.0
    %4968 = vmatpush1.msra.mxu0 0.0
    %4969 = vmatprep.subr.mxu0 0.0
    %4970 = vmatpush1.msra.mxu0 0.0
    %4971 = vmatprep.subr.mxu0 0.0
    %4972 = vmatpush1.msra.mxu0 0.0
    %4973 = vmatprep.subr.mxu0 0.0
    %4974 = vmatpush1.msra.mxu0 0.0
    %4975 = vmatprep.subr.mxu0 0.0
    %4976 = vmatpush1.msra.mxu0 0.0
    %4977 = vmatprep.subr.mxu0 0.0
    %4978 = vmatpush1.msra.mxu0 0.0
    %4979 = vmatprep.subr.mxu0 0.0
    %4980 = vmatpush1.msra.mxu0 0.0
    %4981 = vmatprep.subr.mxu0 0.0
    %4982 = vmatpush1.msra.mxu0 0.0
    %4983 = vmatprep.subr.mxu0 0.0
    %4984 = vmatpush1.msra.mxu0 0.0
    %4985 = vmatprep.subr.mxu0 0.0
    %4986 = vmatpush1.msra.mxu0 0.0
    %4987 = vmatprep.subr.mxu0 0.0
    %4988 = vmatpush1.msra.mxu0 0.0
    %4989 = vmatprep.subr.mxu0 0.0
    %4990 = vmatpush1.msra.mxu0 0.0
    %4991 = vmatprep.subr.mxu0 0.0
    %4992 = vmatpush1.msra.mxu0 0.0
    %4993 = vmatprep.subr.mxu0 0.0
    %4994 = vmatpush1.msra.mxu0 0.0
    %4995 = vmatprep.subr.mxu0 0.0
    %4996 = vmatpush1.msra.mxu0 0.0
    %4997 = vmatprep.subr.mxu0 0.0
    %4998 = vmatpush1.msra.mxu0 0.0
    %4999 = vmatprep.subr.mxu0 0.0
    %5000 = vmatpush1.msra.mxu0 0.0
    %5001 = vmatprep.subr.mxu0 0.0
    %5002 = vmatpush1.msra.mxu0 0.0
    %5003 = vmatprep.subr.mxu0 0.0
    %5004 = vmatpush1.msra.mxu0 0.0
    %5005 = vmatprep.subr.mxu0 0.0
    %5006 = vmatpush1.msra.mxu0 0.0
    %5007 = vmatprep.subr.mxu0 0.0
    %5008 = vmatpush1.msra.mxu0 0.0
    %5009 = vmatprep.subr.mxu0 0.0
    %5010 = vmatpush1.msra.mxu0 0.0
    %5011 = vmatprep.mubr.f32.mxu0 0.0
    %5012 = vmatmul.mubr.f32.gmra.mrb[0].mxu0 %v4945
    %v5013 = vpop.f32.mrb[0].mxu0
    %v5014 = vadd.f32 0.0, %v5013
    %v5015 = vpop.f32.mrb[0].mxu0
    %5016 = vdwg.mxu0
    %v5018 = vsel %vm1188, %v4789, 0
    %5020 = vmatprep.subr.mxu0 0.0
    %5021 = vmatpush1.msra.mxu0 %v3943
    %5022 = vmatprep.subr.mxu0 0.0
    %5023 = vmatpush1.msra.mxu0 0.0
    %5024 = vmatprep.subr.mxu0 0.0
    %5025 = vmatpush1.msra.mxu0 0.0
    %5026 = vmatprep.subr.mxu0 0.0
    %5027 = vmatpush1.msra.mxu0 0.0
    %5028 = vmatprep.subr.mxu0 0.0
    %5029 = vmatpush1.msra.mxu0 0.0
    %5030 = vmatprep.subr.mxu0 0.0
    %5031 = vmatpush1.msra.mxu0 0.0
    %5032 = vmatprep.subr.mxu0 0.0
    %5033 = vmatpush1.msra.mxu0 0.0
    %5034 = vmatprep.subr.mxu0 0.0
    %5035 = vmatpush1.msra.mxu0 0.0
    %5036 = vmatprep.subr.mxu0 0.0
    %5037 = vmatpush1.msra.mxu0 0.0
    %5038 = vmatprep.subr.mxu0 0.0
    %5039 = vmatpush1.msra.mxu0 0.0
    %5040 = vmatprep.subr.mxu0 0.0
    %5041 = vmatpush1.msra.mxu0 0.0
    %5042 = vmatprep.subr.mxu0 0.0
    %5043 = vmatpush1.msra.mxu0 0.0
    %5044 = vmatprep.subr.mxu0 0.0
    %5045 = vmatpush1.msra.mxu0 0.0
    %5046 = vmatprep.subr.mxu0 0.0
    %5047 = vmatpush1.msra.mxu0 0.0
    %5048 = vmatprep.subr.mxu0 0.0
    %5049 = vmatpush1.msra.mxu0 0.0
    %5050 = vmatprep.subr.mxu0 0.0
    %5051 = vmatpush1.msra.mxu0 0.0
    %5052 = vmatprep.subr.mxu0 0.0
    %5053 = vmatpush1.msra.mxu0 0.0
    %5054 = vmatprep.subr.mxu0 0.0
    %5055 = vmatpush1.msra.mxu0 0.0
    %5056 = vmatprep.subr.mxu0 0.0
    %5057 = vmatpush1.msra.mxu0 0.0
    %5058 = vmatprep.subr.mxu0 0.0
    %5059 = vmatpush1.msra.mxu0 0.0
    %5060 = vmatprep.subr.mxu0 0.0
    %5061 = vmatpush1.msra.mxu0 0.0
    %5062 = vmatprep.subr.mxu0 0.0
    %5063 = vmatpush1.msra.mxu0 0.0
    %5064 = vmatprep.subr.mxu0 0.0
    %5065 = vmatpush1.msra.mxu0 0.0
    %5066 = vmatprep.subr.mxu0 0.0
    %5067 = vmatpush1.msra.mxu0 0.0
    %5068 = vmatprep.subr.mxu0 0.0
    %5069 = vmatpush1.msra.mxu0 0.0
    %5070 = vmatprep.subr.mxu0 0.0
    %5071 = vmatpush1.msra.mxu0 0.0
    %5072 = vmatprep.subr.mxu0 0.0
    %5073 = vmatpush1.msra.mxu0 0.0
    %5074 = vmatprep.subr.mxu0 0.0
    %5075 = vmatpush1.msra.mxu0 0.0
    %5076 = vmatprep.subr.mxu0 0.0
    %5077 = vmatpush1.msra.mxu0 0.0
    %5078 = vmatprep.subr.mxu0 0.0
    %5079 = vmatpush1.msra.mxu0 0.0
    %5080 = vmatprep.subr.mxu0 0.0
    %5081 = vmatpush1.msra.mxu0 0.0
    %5082 = vmatprep.subr.mxu0 0.0
    %5083 = vmatpush1.msra.mxu0 0.0
    %5084 = vmatprep.mubr.f32.mxu0 0.0
    %5085 = vmatmul.mubr.f32.gmra.mrb[0].mxu0 %v5018
    %v5086 = vpop.f32.mrb[0].mxu0
    %v5087 = vadd.f32 0.0, %v5086
    %v5088 = vpop.f32.mrb[0].mxu0
    %5089 = vdwg.mxu0
    %v5091 = vsel %vm1188, %v4791, 0
    %5093 = vmatprep.subr.mxu0 0.0
    %5094 = vmatpush1.msra.mxu0 %v4016
    %5095 = vmatprep.subr.mxu0 0.0
    %5096 = vmatpush1.msra.mxu0 0.0
    %5097 = vmatprep.subr.mxu0 0.0
    %5098 = vmatpush1.msra.mxu0 0.0
    %5099 = vmatprep.subr.mxu0 0.0
    %5100 = vmatpush1.msra.mxu0 0.0
    %5101 = vmatprep.subr.mxu0 0.0
    %5102 = vmatpush1.msra.mxu0 0.0
    %5103 = vmatprep.subr.mxu0 0.0
    %5104 = vmatpush1.msra.mxu0 0.0
    %5105 = vmatprep.subr.mxu0 0.0
    %5106 = vmatpush1.msra.mxu0 0.0
    %5107 = vmatprep.subr.mxu0 0.0
    %5108 = vmatpush1.msra.mxu0 0.0
    %5109 = vmatprep.subr.mxu0 0.0
    %5110 = vmatpush1.msra.mxu0 0.0
    %5111 = vmatprep.subr.mxu0 0.0
    %5112 = vmatpush1.msra.mxu0 0.0
    %5113 = vmatprep.subr.mxu0 0.0
    %5114 = vmatpush1.msra.mxu0 0.0
    %5115 = vmatprep.subr.mxu0 0.0
    %5116 = vmatpush1.msra.mxu0 0.0
    %5117 = vmatprep.subr.mxu0 0.0
    %5118 = vmatpush1.msra.mxu0 0.0
    %5119 = vmatprep.subr.mxu0 0.0
    %5120 = vmatpush1.msra.mxu0 0.0
    %5121 = vmatprep.subr.mxu0 0.0
    %5122 = vmatpush1.msra.mxu0 0.0
    %5123 = vmatprep.subr.mxu0 0.0
    %5124 = vmatpush1.msra.mxu0 0.0
    %5125 = vmatprep.subr.mxu0 0.0
    %5126 = vmatpush1.msra.mxu0 0.0
    %5127 = vmatprep.subr.mxu0 0.0
    %5128 = vmatpush1.msra.mxu0 0.0
    %5129 = vmatprep.subr.mxu0 0.0
    %5130 = vmatpush1.msra.mxu0 0.0
    %5131 = vmatprep.subr.mxu0 0.0
    %5132 = vmatpush1.msra.mxu0 0.0
    %5133 = vmatprep.subr.mxu0 0.0
    %5134 = vmatpush1.msra.mxu0 0.0
    %5135 = vmatprep.subr.mxu0 0.0
    %5136 = vmatpush1.msra.mxu0 0.0
    %5137 = vmatprep.subr.mxu0 0.0
    %5138 = vmatpush1.msra.mxu0 0.0
    %5139 = vmatprep.subr.mxu0 0.0
    %5140 = vmatpush1.msra.mxu0 0.0
    %5141 = vmatprep.subr.mxu0 0.0
    %5142 = vmatpush1.msra.mxu0 0.0
    %5143 = vmatprep.subr.mxu0 0.0
    %5144 = vmatpush1.msra.mxu0 0.0
    %5145 = vmatprep.subr.mxu0 0.0
    %5146 = vmatpush1.msra.mxu0 0.0
    %5147 = vmatprep.subr.mxu0 0.0
    %5148 = vmatpush1.msra.mxu0 0.0
    %5149 = vmatprep.subr.mxu0 0.0
    %5150 = vmatpush1.msra.mxu0 0.0
    %5151 = vmatprep.subr.mxu0 0.0
    %5152 = vmatpush1.msra.mxu0 0.0
    %5153 = vmatprep.subr.mxu0 0.0
    %5154 = vmatpush1.msra.mxu0 0.0
    %5155 = vmatprep.subr.mxu0 0.0
    %5156 = vmatpush1.msra.mxu0 0.0
    %5157 = vmatprep.mubr.f32.mxu0 0.0
    %5158 = vmatmul.mubr.f32.gmra.mrb[0].mxu0 %v5091
    %v5159 = vpop.f32.mrb[0].mxu0
    %v5160 = vadd.f32 0.0, %v5159
    %v5161 = vpop.f32.mrb[0].mxu0
    %5162 = vdwg.mxu0
    %v5164 = vsel %vm1188, %v4793, 0
    %5166 = vmatprep.subr.mxu0 0.0
    %5167 = vmatpush1.msra.mxu0 %v4021
    %5168 = vmatprep.subr.mxu0 0.0
    %5169 = vmatpush1.msra.mxu0 0.0
    %5170 = vmatprep.subr.mxu0 0.0
    %5171 = vmatpush1.msra.mxu0 0.0
    %5172 = vmatprep.subr.mxu0 0.0
    %5173 = vmatpush1.msra.mxu0 0.0
    %5174 = vmatprep.subr.mxu0 0.0
    %5175 = vmatpush1.msra.mxu0 0.0
    %5176 = vmatprep.subr.mxu0 0.0
    %5177 = vmatpush1.msra.mxu0 0.0
    %5178 = vmatprep.subr.mxu0 0.0
    %5179 = vmatpush1.msra.mxu0 0.0
    %5180 = vmatprep.subr.mxu0 0.0
    %5181 = vmatpush1.msra.mxu0 0.0
    %5182 = vmatprep.subr.mxu0 0.0
    %5183 = vmatpush1.msra.mxu0 0.0
    %5184 = vmatprep.subr.mxu0 0.0
    %5185 = vmatpush1.msra.mxu0 0.0
    %5186 = vmatprep.subr.mxu0 0.0
    %5187 = vmatpush1.msra.mxu0 0.0
    %5188 = vmatprep.subr.mxu0 0.0
    %5189 = vmatpush1.msra.mxu0 0.0
    %5190 = vmatprep.subr.mxu0 0.0
    %5191 = vmatpush1.msra.mxu0 0.0
    %5192 = vmatprep.subr.mxu0 0.0
    %5193 = vmatpush1.msra.mxu0 0.0
    %5194 = vmatprep.subr.mxu0 0.0
    %5195 = vmatpush1.msra.mxu0 0.0
    %5196 = vmatprep.subr.mxu0 0.0
    %5197 = vmatpush1.msra.mxu0 0.0
    %5198 = vmatprep.subr.mxu0 0.0
    %5199 = vmatpush1.msra.mxu0 0.0
    %5200 = vmatprep.subr.mxu0 0.0
    %5201 = vmatpush1.msra.mxu0 0.0
    %5202 = vmatprep.subr.mxu0 0.0
    %5203 = vmatpush1.msra.mxu0 0.0
    %5204 = vmatprep.subr.mxu0 0.0
    %5205 = vmatpush1.msra.mxu0 0.0
    %5206 = vmatprep.subr.mxu0 0.0
    %5207 = vmatpush1.msra.mxu0 0.0
    %5208 = vmatprep.subr.mxu0 0.0
    %5209 = vmatpush1.msra.mxu0 0.0
    %5210 = vmatprep.subr.mxu0 0.0
    %5211 = vmatpush1.msra.mxu0 0.0
    %5212 = vmatprep.subr.mxu0 0.0
    %5213 = vmatpush1.msra.mxu0 0.0
    %5214 = vmatprep.subr.mxu0 0.0
    %5215 = vmatpush1.msra.mxu0 0.0
    %5216 = vmatprep.subr.mxu0 0.0
    %5217 = vmatpush1.msra.mxu0 0.0
    %5218 = vmatprep.subr.mxu0 0.0
    %5219 = vmatpush1.msra.mxu0 0.0
    %5220 = vmatprep.subr.mxu0 0.0
    %5221 = vmatpush1.msra.mxu0 0.0
    %5222 = vmatprep.subr.mxu0 0.0
    %5223 = vmatpush1.msra.mxu0 0.0
    %5224 = vmatprep.subr.mxu0 0.0
    %5225 = vmatpush1.msra.mxu0 0.0
    %5226 = vmatprep.subr.mxu0 0.0
    %5227 = vmatpush1.msra.mxu0 0.0
    %5228 = vmatprep.subr.mxu0 0.0
    %5229 = vmatpush1.msra.mxu0 0.0
    %5230 = vmatprep.mubr.f32.mxu0 0.0
    %5231 = vmatmul.mubr.f32.gmra.mrb[0].mxu0 %v5164
    %v5232 = vpop.f32.mrb[0].mxu0
    %v5233 = vadd.f32 0.0, %v5232
    %v5234 = vpop.f32.mrb[0].mxu0
    %5235 = vdwg.mxu0
    %v5237 = vsel %vm1188, %v4795, 0
    %5239 = vmatprep.subr.mxu0 0.0
    %5240 = vmatpush1.msra.mxu0 %v4094
    %5241 = vmatprep.subr.mxu0 0.0
    %5242 = vmatpush1.msra.mxu0 0.0
    %5243 = vmatprep.subr.mxu0 0.0
    %5244 = vmatpush1.msra.mxu0 0.0
    %5245 = vmatprep.subr.mxu0 0.0
    %5246 = vmatpush1.msra.mxu0 0.0
    %5247 = vmatprep.subr.mxu0 0.0
    %5248 = vmatpush1.msra.mxu0 0.0
    %5249 = vmatprep.subr.mxu0 0.0
    %5250 = vmatpush1.msra.mxu0 0.0
    %5251 = vmatprep.subr.mxu0 0.0
    %5252 = vmatpush1.msra.mxu0 0.0
    %5253 = vmatprep.subr.mxu0 0.0
    %5254 = vmatpush1.msra.mxu0 0.0
    %5255 = vmatprep.subr.mxu0 0.0
    %5256 = vmatpush1.msra.mxu0 0.0
    %5257 = vmatprep.subr.mxu0 0.0
    %5258 = vmatpush1.msra.mxu0 0.0
    %5259 = vmatprep.subr.mxu0 0.0
    %5260 = vmatpush1.msra.mxu0 0.0
    %5261 = vmatprep.subr.mxu0 0.0
    %5262 = vmatpush1.msra.mxu0 0.0
    %5263 = vmatprep.subr.mxu0 0.0
    %5264 = vmatpush1.msra.mxu0 0.0
    %5265 = vmatprep.subr.mxu0 0.0
    %5266 = vmatpush1.msra.mxu0 0.0
    %5267 = vmatprep.subr.mxu0 0.0
    %5268 = vmatpush1.msra.mxu0 0.0
    %5269 = vmatprep.subr.mxu0 0.0
    %5270 = vmatpush1.msra.mxu0 0.0
    %5271 = vmatprep.subr.mxu0 0.0
    %5272 = vmatpush1.msra.mxu0 0.0
    %5273 = vmatprep.subr.mxu0 0.0
    %5274 = vmatpush1.msra.mxu0 0.0
    %5275 = vmatprep.subr.mxu0 0.0
    %5276 = vmatpush1.msra.mxu0 0.0
    %5277 = vmatprep.subr.mxu0 0.0
    %5278 = vmatpush1.msra.mxu0 0.0
    %5279 = vmatprep.subr.mxu0 0.0
    %5280 = vmatpush1.msra.mxu0 0.0
    %5281 = vmatprep.subr.mxu0 0.0
    %5282 = vmatpush1.msra.mxu0 0.0
    %5283 = vmatprep.subr.mxu0 0.0
    %5284 = vmatpush1.msra.mxu0 0.0
    %5285 = vmatprep.subr.mxu0 0.0
    %5286 = vmatpush1.msra.mxu0 0.0
    %5287 = vmatprep.subr.mxu0 0.0
    %5288 = vmatpush1.msra.mxu0 0.0
    %5289 = vmatprep.subr.mxu0 0.0
    %5290 = vmatpush1.msra.mxu0 0.0
    %5291 = vmatprep.subr.mxu0 0.0
    %5292 = vmatpush1.msra.mxu0 0.0
    %5293 = vmatprep.subr.mxu0 0.0
    %5294 = vmatpush1.msra.mxu0 0.0
    %5295 = vmatprep.subr.mxu0 0.0
    %5296 = vmatpush1.msra.mxu0 0.0
    %5297 = vmatprep.subr.mxu0 0.0
    %5298 = vmatpush1.msra.mxu0 0.0
    %5299 = vmatprep.subr.mxu0 0.0
    %5300 = vmatpush1.msra.mxu0 0.0
    %5301 = vmatprep.subr.mxu0 0.0
    %5302 = vmatpush1.msra.mxu0 0.0
    %5303 = vmatprep.mubr.f32.mxu0 0.0
    %5304 = vmatmul.mubr.f32.gmra.mrb[0].mxu0 %v5237
    %v5305 = vpop.f32.mrb[0].mxu0
    %v5306 = vadd.f32 0.0, %v5305
    %v5307 = vpop.f32.mrb[0].mxu0
    %5308 = vdwg.mxu0
    %v5310 = vsel %vm1188, %v4797, 0
    %5312 = vmatprep.subr.mxu0 0.0
    %5313 = vmatpush1.msra.mxu0 %v4099
    %5314 = vmatprep.subr.mxu0 0.0
    %5315 = vmatpush1.msra.mxu0 0.0
    %5316 = vmatprep.subr.mxu0 0.0
    %5317 = vmatpush1.msra.mxu0 0.0
    %5318 = vmatprep.subr.mxu0 0.0
    %5319 = vmatpush1.msra.mxu0 0.0
    %5320 = vmatprep.subr.mxu0 0.0
    %5321 = vmatpush1.msra.mxu0 0.0
    %5322 = vmatprep.subr.mxu0 0.0
    %5323 = vmatpush1.msra.mxu0 0.0
    %5324 = vmatprep.subr.mxu0 0.0
    %5325 = vmatpush1.msra.mxu0 0.0
    %5326 = vmatprep.subr.mxu0 0.0
    %5327 = vmatpush1.msra.mxu0 0.0
    %5328 = vmatprep.subr.mxu0 0.0
    %5329 = vmatpush1.msra.mxu0 0.0
    %5330 = vmatprep.subr.mxu0 0.0
    %5331 = vmatpush1.msra.mxu0 0.0
    %5332 = vmatprep.subr.mxu0 0.0
    %5333 = vmatpush1.msra.mxu0 0.0
    %5334 = vmatprep.subr.mxu0 0.0
    %5335 = vmatpush1.msra.mxu0 0.0
    %5336 = vmatprep.subr.mxu0 0.0
    %5337 = vmatpush1.msra.mxu0 0.0
    %5338 = vmatprep.subr.mxu0 0.0
    %5339 = vmatpush1.msra.mxu0 0.0
    %5340 = vmatprep.subr.mxu0 0.0
    %5341 = vmatpush1.msra.mxu0 0.0
    %5342 = vmatprep.subr.mxu0 0.0
    %5343 = vmatpush1.msra.mxu0 0.0
    %5344 = vmatprep.subr.mxu0 0.0
    %5345 = vmatpush1.msra.mxu0 0.0
    %5346 = vmatprep.subr.mxu0 0.0
    %5347 = vmatpush1.msra.mxu0 0.0
    %5348 = vmatprep.subr.mxu0 0.0
    %5349 = vmatpush1.msra.mxu0 0.0
    %5350 = vmatprep.subr.mxu0 0.0
    %5351 = vmatpush1.msra.mxu0 0.0
    %5352 = vmatprep.subr.mxu0 0.0
    %5353 = vmatpush1.msra.mxu0 0.0
    %5354 = vmatprep.subr.mxu0 0.0
    %5355 = vmatpush1.msra.mxu0 0.0
    %5356 = vmatprep.subr.mxu0 0.0
    %5357 = vmatpush1.msra.mxu0 0.0
    %5358 = vmatprep.subr.mxu0 0.0
    %5359 = vmatpush1.msra.mxu0 0.0
    %5360 = vmatprep.subr.mxu0 0.0
    %5361 = vmatpush1.msra.mxu0 0.0
    %5362 = vmatprep.subr.mxu0 0.0
    %5363 = vmatpush1.msra.mxu0 0.0
    %5364 = vmatprep.subr.mxu0 0.0
    %5365 = vmatpush1.msra.mxu0 0.0
    %5366 = vmatprep.subr.mxu0 0.0
    %5367 = vmatpush1.msra.mxu0 0.0
    %5368 = vmatprep.subr.mxu0 0.0
    %5369 = vmatpush1.msra.mxu0 0.0
    %5370 = vmatprep.subr.mxu0 0.0
    %5371 = vmatpush1.msra.mxu0 0.0
    %5372 = vmatprep.subr.mxu0 0.0
    %5373 = vmatpush1.msra.mxu0 0.0
    %5374 = vmatprep.subr.mxu0 0.0
    %5375 = vmatpush1.msra.mxu0 0.0
    %5376 = vmatprep.mubr.f32.mxu0 0.0
    %5377 = vmatmul.mubr.f32.gmra.mrb[0].mxu0 %v5310
    %v5378 = vpop.f32.mrb[0].mxu0
    %v5379 = vadd.f32 0.0, %v5378
    %v5380 = vpop.f32.mrb[0].mxu0
    %5381 = vdwg.mxu0
    %s5382 = scalar_lea.vmem %s3, 32
    %v5383 = vld [vmem:[%s5382] sm:$0xff]
    %v5384 = vld [vmem:[%s5382 + $0x8] sm:$0xff]
    %v5385 = vld [vmem:[%s5382 + $0x10] sm:$0xff]
    %v5386 = vld [vmem:[%s5382 + $0x18] sm:$0xff]
    %v5388 = vsel %vm1188, %v4868, 0
    %v5391 = vsel %vm1188, %v4941, 0
    %5393 = vmatprep.subr.mxu0 0.0
    %5394 = vmatpush1.msra.mxu0 %v5383
    %5395 = vmatprep.subr.mxu0 0.0
    %5396 = vmatpush1.msra.mxu0 0.0
    %5397 = vmatprep.subr.mxu0 0.0
    %5398 = vmatpush1.msra.mxu0 0.0
    %5399 = vmatprep.subr.mxu0 0.0
    %5400 = vmatpush1.msra.mxu0 0.0
    %5401 = vmatprep.subr.mxu0 0.0
    %5402 = vmatpush1.msra.mxu0 0.0
    %5403 = vmatprep.subr.mxu0 0.0
    %5404 = vmatpush1.msra.mxu0 0.0
    %5405 = vmatprep.subr.mxu0 0.0
    %5406 = vmatpush1.msra.mxu0 0.0
    %5407 = vmatprep.subr.mxu0 0.0
    %5408 = vmatpush1.msra.mxu0 0.0
    %5409 = vmatprep.subr.mxu0 0.0
    %5410 = vmatpush1.msra.mxu0 0.0
    %5411 = vmatprep.subr.mxu0 0.0
    %5412 = vmatpush1.msra.mxu0 0.0
    %5413 = vmatprep.subr.mxu0 0.0
    %5414 = vmatpush1.msra.mxu0 0.0
    %5415 = vmatprep.subr.mxu0 0.0
    %5416 = vmatpush1.msra.mxu0 0.0
    %5417 = vmatprep.subr.mxu0 0.0
    %5418 = vmatpush1.msra.mxu0 0.0
    %5419 = vmatprep.subr.mxu0 0.0
    %5420 = vmatpush1.msra.mxu0 0.0
    %5421 = vmatprep.subr.mxu0 0.0
    %5422 = vmatpush1.msra.mxu0 0.0
    %5423 = vmatprep.subr.mxu0 0.0
    %5424 = vmatpush1.msra.mxu0 0.0
    %5425 = vmatprep.subr.mxu0 0.0
    %5426 = vmatpush1.msra.mxu0 0.0
    %5427 = vmatprep.subr.mxu0 0.0
    %5428 = vmatpush1.msra.mxu0 0.0
    %5429 = vmatprep.subr.mxu0 0.0
    %5430 = vmatpush1.msra.mxu0 0.0
    %5431 = vmatprep.subr.mxu0 0.0
    %5432 = vmatpush1.msra.mxu0 0.0
    %5433 = vmatprep.subr.mxu0 0.0
    %5434 = vmatpush1.msra.mxu0 0.0
    %5435 = vmatprep.subr.mxu0 0.0
    %5436 = vmatpush1.msra.mxu0 0.0
    %5437 = vmatprep.subr.mxu0 0.0
    %5438 = vmatpush1.msra.mxu0 0.0
    %5439 = vmatprep.subr.mxu0 0.0
    %5440 = vmatpush1.msra.mxu0 0.0
    %5441 = vmatprep.subr.mxu0 0.0
    %5442 = vmatpush1.msra.mxu0 0.0
    %5443 = vmatprep.subr.mxu0 0.0
    %5444 = vmatpush1.msra.mxu0 0.0
    %5445 = vmatprep.subr.mxu0 0.0
    %5446 = vmatpush1.msra.mxu0 0.0
    %5447 = vmatprep.subr.mxu0 0.0
    %5448 = vmatpush1.msra.mxu0 0.0
    %5449 = vmatprep.subr.mxu0 0.0
    %5450 = vmatpush1.msra.mxu0 0.0
    %5451 = vmatprep.subr.mxu0 0.0
    %5452 = vmatpush1.msra.mxu0 0.0
    %5453 = vmatprep.subr.mxu0 0.0
    %5454 = vmatpush1.msra.mxu0 0.0
    %5455 = vmatprep.subr.mxu0 0.0
    %5456 = vmatpush1.msra.mxu0 0.0
    %5457 = vmatprep.mubr.f32.mxu0 0.0
    %5458 = vmatmul.mubr.f32.gmra.mrb[0].mxu0 %v5388
    %v5459 = vpop.f32.mrb[0].mxu0
    %v5460 = vadd.f32 0.0, %v5459
    %v5461 = vpop.f32.mrb[0].mxu0
    %5462 = vmatprep.mubr.f32.mxu0 0.0
    %5463 = vmatmul.mubr.f32.gmra.mrb[0].mxu0 %v5391
    %v5464 = vpop.f32.mrb[0].mxu0
    %v5465 = vadd.f32 0.0, %v5464
    %v5466 = vpop.f32.mrb[0].mxu0
    %5467 = vdwg.mxu0
    %v5469 = vsel %vm1188, %v5014, 0
    %v5472 = vsel %vm1188, %v5087, 0
    %5474 = vmatprep.subr.mxu0 0.0
    %5475 = vmatpush1.msra.mxu0 %v5384
    %5476 = vmatprep.subr.mxu0 0.0
    %5477 = vmatpush1.msra.mxu0 0.0
    %5478 = vmatprep.subr.mxu0 0.0
    %5479 = vmatpush1.msra.mxu0 0.0
    %5480 = vmatprep.subr.mxu0 0.0
    %5481 = vmatpush1.msra.mxu0 0.0
    %5482 = vmatprep.subr.mxu0 0.0
    %5483 = vmatpush1.msra.mxu0 0.0
    %5484 = vmatprep.subr.mxu0 0.0
    %5485 = vmatpush1.msra.mxu0 0.0
    %5486 = vmatprep.subr.mxu0 0.0
    %5487 = vmatpush1.msra.mxu0 0.0
    %5488 = vmatprep.subr.mxu0 0.0
    %5489 = vmatpush1.msra.mxu0 0.0
    %5490 = vmatprep.subr.mxu0 0.0
    %5491 = vmatpush1.msra.mxu0 0.0
    %5492 = vmatprep.subr.mxu0 0.0
    %5493 = vmatpush1.msra.mxu0 0.0
    %5494 = vmatprep.subr.mxu0 0.0
    %5495 = vmatpush1.msra.mxu0 0.0
    %5496 = vmatprep.subr.mxu0 0.0
    %5497 = vmatpush1.msra.mxu0 0.0
    %5498 = vmatprep.subr.mxu0 0.0
    %5499 = vmatpush1.msra.mxu0 0.0
    %5500 = vmatprep.subr.mxu0 0.0
    %5501 = vmatpush1.msra.mxu0 0.0
    %5502 = vmatprep.subr.mxu0 0.0
    %5503 = vmatpush1.msra.mxu0 0.0
    %5504 = vmatprep.subr.mxu0 0.0
    %5505 = vmatpush1.msra.mxu0 0.0
    %5506 = vmatprep.subr.mxu0 0.0
    %5507 = vmatpush1.msra.mxu0 0.0
    %5508 = vmatprep.subr.mxu0 0.0
    %5509 = vmatpush1.msra.mxu0 0.0
    %5510 = vmatprep.subr.mxu0 0.0
    %5511 = vmatpush1.msra.mxu0 0.0
    %5512 = vmatprep.subr.mxu0 0.0
    %5513 = vmatpush1.msra.mxu0 0.0
    %5514 = vmatprep.subr.mxu0 0.0
    %5515 = vmatpush1.msra.mxu0 0.0
    %5516 = vmatprep.subr.mxu0 0.0
    %5517 = vmatpush1.msra.mxu0 0.0
    %5518 = vmatprep.subr.mxu0 0.0
    %5519 = vmatpush1.msra.mxu0 0.0
    %5520 = vmatprep.subr.mxu0 0.0
    %5521 = vmatpush1.msra.mxu0 0.0
    %5522 = vmatprep.subr.mxu0 0.0
    %5523 = vmatpush1.msra.mxu0 0.0
    %5524 = vmatprep.subr.mxu0 0.0
    %5525 = vmatpush1.msra.mxu0 0.0
    %5526 = vmatprep.subr.mxu0 0.0
    %5527 = vmatpush1.msra.mxu0 0.0
    %5528 = vmatprep.subr.mxu0 0.0
    %5529 = vmatpush1.msra.mxu0 0.0
    %5530 = vmatprep.subr.mxu0 0.0
    %5531 = vmatpush1.msra.mxu0 0.0
    %5532 = vmatprep.subr.mxu0 0.0
    %5533 = vmatpush1.msra.mxu0 0.0
    %5534 = vmatprep.subr.mxu0 0.0
    %5535 = vmatpush1.msra.mxu0 0.0
    %5536 = vmatprep.subr.mxu0 0.0
    %5537 = vmatpush1.msra.mxu0 0.0
    %5538 = vmatprep.mubr.f32.mxu0 0.0
    %5539 = vmatmul.mubr.f32.gmra.mrb[0].mxu0 %v5469
    %v5540 = vpop.f32.mrb[0].mxu0
    %v5541 = vadd.f32 0.0, %v5540
    %v5542 = vpop.f32.mrb[0].mxu0
    %5543 = vmatprep.mubr.f32.mxu0 0.0
    %5544 = vmatmul.mubr.f32.gmra.mrb[0].mxu0 %v5472
    %v5545 = vpop.f32.mrb[0].mxu0
    %v5546 = vadd.f32 0.0, %v5545
    %v5547 = vpop.f32.mrb[0].mxu0
    %5548 = vdwg.mxu0
    %v5550 = vsel %vm1188, %v5160, 0
    %v5553 = vsel %vm1188, %v5233, 0
    %5555 = vmatprep.subr.mxu0 0.0
    %5556 = vmatpush1.msra.mxu0 %v5385
    %5557 = vmatprep.subr.mxu0 0.0
    %5558 = vmatpush1.msra.mxu0 0.0
    %5559 = vmatprep.subr.mxu0 0.0
    %5560 = vmatpush1.msra.mxu0 0.0
    %5561 = vmatprep.subr.mxu0 0.0
    %5562 = vmatpush1.msra.mxu0 0.0
    %5563 = vmatprep.subr.mxu0 0.0
    %5564 = vmatpush1.msra.mxu0 0.0
    %5565 = vmatprep.subr.mxu0 0.0
    %5566 = vmatpush1.msra.mxu0 0.0
    %5567 = vmatprep.subr.mxu0 0.0
    %5568 = vmatpush1.msra.mxu0 0.0
    %5569 = vmatprep.subr.mxu0 0.0
    %5570 = vmatpush1.msra.mxu0 0.0
    %5571 = vmatprep.subr.mxu0 0.0
    %5572 = vmatpush1.msra.mxu0 0.0
    %5573 = vmatprep.subr.mxu0 0.0
    %5574 = vmatpush1.msra.mxu0 0.0
    %5575 = vmatprep.subr.mxu0 0.0
    %5576 = vmatpush1.msra.mxu0 0.0
    %5577 = vmatprep.subr.mxu0 0.0
    %5578 = vmatpush1.msra.mxu0 0.0
    %5579 = vmatprep.subr.mxu0 0.0
    %5580 = vmatpush1.msra.mxu0 0.0
    %5581 = vmatprep.subr.mxu0 0.0
    %5582 = vmatpush1.msra.mxu0 0.0
    %5583 = vmatprep.subr.mxu0 0.0
    %5584 = vmatpush1.msra.mxu0 0.0
    %5585 = vmatprep.subr.mxu0 0.0
    %5586 = vmatpush1.msra.mxu0 0.0
    %5587 = vmatprep.subr.mxu0 0.0
    %5588 = vmatpush1.msra.mxu0 0.0
    %5589 = vmatprep.subr.mxu0 0.0
    %5590 = vmatpush1.msra.mxu0 0.0
    %5591 = vmatprep.subr.mxu0 0.0
    %5592 = vmatpush1.msra.mxu0 0.0
    %5593 = vmatprep.subr.mxu0 0.0
    %5594 = vmatpush1.msra.mxu0 0.0
    %5595 = vmatprep.subr.mxu0 0.0
    %5596 = vmatpush1.msra.mxu0 0.0
    %5597 = vmatprep.subr.mxu0 0.0
    %5598 = vmatpush1.msra.mxu0 0.0
    %5599 = vmatprep.subr.mxu0 0.0
    %5600 = vmatpush1.msra.mxu0 0.0
    %5601 = vmatprep.subr.mxu0 0.0
    %5602 = vmatpush1.msra.mxu0 0.0
    %5603 = vmatprep.subr.mxu0 0.0
    %5604 = vmatpush1.msra.mxu0 0.0
    %5605 = vmatprep.subr.mxu0 0.0
    %5606 = vmatpush1.msra.mxu0 0.0
    %5607 = vmatprep.subr.mxu0 0.0
    %5608 = vmatpush1.msra.mxu0 0.0
    %5609 = vmatprep.subr.mxu0 0.0
    %5610 = vmatpush1.msra.mxu0 0.0
    %5611 = vmatprep.subr.mxu0 0.0
    %5612 = vmatpush1.msra.mxu0 0.0
    %5613 = vmatprep.subr.mxu0 0.0
    %5614 = vmatpush1.msra.mxu0 0.0
    %5615 = vmatprep.subr.mxu0 0.0
    %5616 = vmatpush1.msra.mxu0 0.0
    %5617 = vmatprep.subr.mxu0 0.0
    %5618 = vmatpush1.msra.mxu0 0.0
    %5619 = vmatprep.mubr.f32.mxu0 0.0
    %5620 = vmatmul.mubr.f32.gmra.mrb[0].mxu0 %v5550
    %v5621 = vpop.f32.mrb[0].mxu0
    %v5622 = vadd.f32 0.0, %v5621
    %v5623 = vpop.f32.mrb[0].mxu0
    %5624 = vmatprep.mubr.f32.mxu0 0.0
    %5625 = vmatmul.mubr.f32.gmra.mrb[0].mxu0 %v5553
    %v5626 = vpop.f32.mrb[0].mxu0
    %v5627 = vadd.f32 0.0, %v5626
    %v5628 = vpop.f32.mrb[0].mxu0
    %5629 = vdwg.mxu0
    %v5631 = vsel %vm1188, %v5306, 0
    %v5634 = vsel %vm1188, %v5379, 0
    %5636 = vmatprep.subr.mxu0 0.0
    %5637 = vmatpush1.msra.mxu0 %v5386
    %5638 = vmatprep.subr.mxu0 0.0
    %5639 = vmatpush1.msra.mxu0 0.0
    %5640 = vmatprep.subr.mxu0 0.0
    %5641 = vmatpush1.msra.mxu0 0.0
    %5642 = vmatprep.subr.mxu0 0.0
    %5643 = vmatpush1.msra.mxu0 0.0
    %5644 = vmatprep.subr.mxu0 0.0
    %5645 = vmatpush1.msra.mxu0 0.0
    %5646 = vmatprep.subr.mxu0 0.0
    %5647 = vmatpush1.msra.mxu0 0.0
    %5648 = vmatprep.subr.mxu0 0.0
    %5649 = vmatpush1.msra.mxu0 0.0
    %5650 = vmatprep.subr.mxu0 0.0
    %5651 = vmatpush1.msra.mxu0 0.0
    %5652 = vmatprep.subr.mxu0 0.0
    %5653 = vmatpush1.msra.mxu0 0.0
    %5654 = vmatprep.subr.mxu0 0.0
    %5655 = vmatpush1.msra.mxu0 0.0
    %5656 = vmatprep.subr.mxu0 0.0
    %5657 = vmatpush1.msra.mxu0 0.0
    %5658 = vmatprep.subr.mxu0 0.0
    %5659 = vmatpush1.msra.mxu0 0.0
    %5660 = vmatprep.subr.mxu0 0.0
    %5661 = vmatpush1.msra.mxu0 0.0
    %5662 = vmatprep.subr.mxu0 0.0
    %5663 = vmatpush1.msra.mxu0 0.0
    %5664 = vmatprep.subr.mxu0 0.0
    %5665 = vmatpush1.msra.mxu0 0.0
    %5666 = vmatprep.subr.mxu0 0.0
    %5667 = vmatpush1.msra.mxu0 0.0
    %5668 = vmatprep.subr.mxu0 0.0
    %5669 = vmatpush1.msra.mxu0 0.0
    %5670 = vmatprep.subr.mxu0 0.0
    %5671 = vmatpush1.msra.mxu0 0.0
    %5672 = vmatprep.subr.mxu0 0.0
    %5673 = vmatpush1.msra.mxu0 0.0
    %5674 = vmatprep.subr.mxu0 0.0
    %5675 = vmatpush1.msra.mxu0 0.0
    %5676 = vmatprep.subr.mxu0 0.0
    %5677 = vmatpush1.msra.mxu0 0.0
    %5678 = vmatprep.subr.mxu0 0.0
    %5679 = vmatpush1.msra.mxu0 0.0
    %5680 = vmatprep.subr.mxu0 0.0
    %5681 = vmatpush1.msra.mxu0 0.0
    %5682 = vmatprep.subr.mxu0 0.0
    %5683 = vmatpush1.msra.mxu0 0.0
    %5684 = vmatprep.subr.mxu0 0.0
    %5685 = vmatpush1.msra.mxu0 0.0
    %5686 = vmatprep.subr.mxu0 0.0
    %5687 = vmatpush1.msra.mxu0 0.0
    %5688 = vmatprep.subr.mxu0 0.0
    %5689 = vmatpush1.msra.mxu0 0.0
    %5690 = vmatprep.subr.mxu0 0.0
    %5691 = vmatpush1.msra.mxu0 0.0
    %5692 = vmatprep.subr.mxu0 0.0
    %5693 = vmatpush1.msra.mxu0 0.0
    %5694 = vmatprep.subr.mxu0 0.0
    %5695 = vmatpush1.msra.mxu0 0.0
    %5696 = vmatprep.subr.mxu0 0.0
    %5697 = vmatpush1.msra.mxu0 0.0
    %5698 = vmatprep.subr.mxu0 0.0
    %5699 = vmatpush1.msra.mxu0 0.0
    %5700 = vmatprep.mubr.f32.mxu0 0.0
    %5701 = vmatmul.mubr.f32.gmra.mrb[0].mxu0 %v5631
    %v5702 = vpop.f32.mrb[0].mxu0
    %v5703 = vadd.f32 0.0, %v5702
    %v5704 = vpop.f32.mrb[0].mxu0
    %5705 = vmatprep.mubr.f32.mxu0 0.0
    %5706 = vmatmul.mubr.f32.gmra.mrb[0].mxu0 %v5634
    %v5707 = vpop.f32.mrb[0].mxu0
    %v5708 = vadd.f32 0.0, %v5707
    %v5709 = vpop.f32.mrb[0].mxu0
    %5710 = vdwg.mxu0
    %v5711 = vadd.f32 %v5460, %v5541
    %v5712 = vadd.f32 %v5465, %v5546
    %v5713 = vadd.f32 %v5711, %v5622
    %v5714 = vadd.f32 %v5712, %v5627
    %v5715 = vadd.f32 %v5713, %v5703
    %v5716 = vadd.f32 %v5714, %v5708
    %s5717 = scalar_lea.vmem %s6, 8
    %v5718 = vld [vmem:[%s5717] sm:$0x1]
    %v5719 = vlaneseq
    %v5720 = vshrl.u32 %v5719, 7
    %v5721 = vsub.s32 0, %v5720
    %v5722 = vrot.slane %v5718, %v5721
    %v5723 = vadd.f32 %v5715, %v5722
    %v5724 = vadd.f32 %v5716, %v5722
    %v5725 = vadd.f32 %v3095, %v5723
    %v5726 = vadd.f32 %v3096, %v5724
    %v5727 = vld [vmem:[%s5717 + $0x3] sm:$0x1]
    %v5728 = vld [vmem:[%s5717 + $0x4] sm:$0x1]
    %v5729 = vsel %vm142, %v5725, 0.0
    %5730 = vadd.xlane.f32.xlu0 %v5729
    %v5731 = vpop.xlane.xlu0 %5730
    %v5732 = vsel %vm142, %v5726, 0.0
    %5733 = vadd.xlane.f32.xlu0 %v5732
    %v5734 = vpop.xlane.xlu0 %5733
    %v5735 = vmul.f32 %v5731, %v149
    %v5736 = vmul.f32 %v5734, %v149
    %v5737 = vsub.f32 %v5725, %v5735
    %v5738 = vsub.f32 %v5726, %v5736
    %v5739 = vmul.f32 %v5737, %v5737
    %v5740 = vmul.f32 %v5738, %v5738
    %v5741 = vsel %vm142, %v5739, 0.0
    %5742 = vadd.xlane.f32.xlu0 %v5741
    %v5743 = vpop.xlane.xlu0 %5742
    %v5744 = vsel %vm142, %v5740, 0.0
    %5745 = vadd.xlane.f32.xlu0 %v5744
    %v5746 = vpop.xlane.xlu0 %5745
    %v5747 = vmul.f32 %v5743, %v149
    %v5748 = vmul.f32 %v5746, %v149
    %v5749 = vadd.f32 %v5747, 1e-12
    %v5750 = vadd.f32 %v5748, 1e-12
    %v5751 = vrsqrt.pop %v5749
    %v5752 = vrsqrt.pop %v5750
    %v5753 = vmul.f32 %v5737, %v5751
    %v5754 = vmul.f32 %v5738, %v5752
    %v5755 = vlaneseq
    %v5756 = vshrl.u32 %v5755, 7
    %v5757 = vsub.s32 0, %v5756
    %v5758 = vrot.slane %v5727, %v5757
    %v5759 = vmul.f32 %v5753, %v5758
    %v5760 = vmul.f32 %v5754, %v5758
    %v5761 = vlaneseq
    %v5762 = vshrl.u32 %v5761, 7
    %v5763 = vsub.s32 0, %v5762
    %v5764 = vrot.slane %v5728, %v5763
    %v5765 = vadd.f32 %v5759, %v5764
    %v5766 = vadd.f32 %v5760, %v5764
    %s5767 = scalar_lea.vmem %s4, 32
    %v5768 = vld [vmem:[%s5767] sm:$0xff]
    %v5769 = vld [vmem:[%s5767 + $0x8] sm:$0xff]
    %v5770 = vld [vmem:[%s5767 + $0x10] sm:$0xff]
    %v5771 = vld [vmem:[%s5767 + $0x18] sm:$0xff]
    %v5772 = vld [vmem:[%s5717 + $0x1] sm:$0x1]
    %v5773 = vlaneseq
    %v5774 = vshrl.u32 %v5773, 7
    %v5775 = vsub.s32 0, %v5774
    %v5776 = vrot.slane %v5772, %v5775
    %v5778 = vsel %vm142, %v5765, 0
    %v5781 = vsel %vm142, %v5766, 0
    %5783 = vmatprep.subr.mxu0 0.0
    %5784 = vmatpush1.msra.mxu0 %v5768
    %5785 = vmatprep.subr.mxu0 0.0
    %5786 = vmatpush1.msra.mxu0 %v5769
    %5787 = vmatprep.subr.mxu0 0.0
    %5788 = vmatpush1.msra.mxu0 %v5770
    %5789 = vmatprep.subr.mxu0 0.0
    %5790 = vmatpush1.msra.mxu0 %v5771
    %5791 = vmatprep.subr.mxu0 0.0
    %5792 = vmatpush1.msra.mxu0 0.0
    %5793 = vmatprep.subr.mxu0 0.0
    %5794 = vmatpush1.msra.mxu0 0.0
    %5795 = vmatprep.subr.mxu0 0.0
    %5796 = vmatpush1.msra.mxu0 0.0
    %5797 = vmatprep.subr.mxu0 0.0
    %5798 = vmatpush1.msra.mxu0 0.0
    %5799 = vmatprep.subr.mxu0 0.0
    %5800 = vmatpush1.msra.mxu0 0.0
    %5801 = vmatprep.subr.mxu0 0.0
    %5802 = vmatpush1.msra.mxu0 0.0
    %5803 = vmatprep.subr.mxu0 0.0
    %5804 = vmatpush1.msra.mxu0 0.0
    %5805 = vmatprep.subr.mxu0 0.0
    %5806 = vmatpush1.msra.mxu0 0.0
    %5807 = vmatprep.subr.mxu0 0.0
    %5808 = vmatpush1.msra.mxu0 0.0
    %5809 = vmatprep.subr.mxu0 0.0
    %5810 = vmatpush1.msra.mxu0 0.0
    %5811 = vmatprep.subr.mxu0 0.0
    %5812 = vmatpush1.msra.mxu0 0.0
    %5813 = vmatprep.subr.mxu0 0.0
    %5814 = vmatpush1.msra.mxu0 0.0
    %5815 = vmatprep.subr.mxu0 0.0
    %5816 = vmatpush1.msra.mxu0 0.0
    %5817 = vmatprep.subr.mxu0 0.0
    %5818 = vmatpush1.msra.mxu0 0.0
    %5819 = vmatprep.subr.mxu0 0.0
    %5820 = vmatpush1.msra.mxu0 0.0
    %5821 = vmatprep.subr.mxu0 0.0
    %5822 = vmatpush1.msra.mxu0 0.0
    %5823 = vmatprep.subr.mxu0 0.0
    %5824 = vmatpush1.msra.mxu0 0.0
    %5825 = vmatprep.subr.mxu0 0.0
    %5826 = vmatpush1.msra.mxu0 0.0
    %5827 = vmatprep.subr.mxu0 0.0
    %5828 = vmatpush1.msra.mxu0 0.0
    %5829 = vmatprep.subr.mxu0 0.0
    %5830 = vmatpush1.msra.mxu0 0.0
    %5831 = vmatprep.subr.mxu0 0.0
    %5832 = vmatpush1.msra.mxu0 0.0
    %5833 = vmatprep.subr.mxu0 0.0
    %5834 = vmatpush1.msra.mxu0 0.0
    %5835 = vmatprep.subr.mxu0 0.0
    %5836 = vmatpush1.msra.mxu0 0.0
    %5837 = vmatprep.subr.mxu0 0.0
    %5838 = vmatpush1.msra.mxu0 0.0
    %5839 = vmatprep.subr.mxu0 0.0
    %5840 = vmatpush1.msra.mxu0 0.0
    %5841 = vmatprep.subr.mxu0 0.0
    %5842 = vmatpush1.msra.mxu0 0.0
    %5843 = vmatprep.subr.mxu0 0.0
    %5844 = vmatpush1.msra.mxu0 0.0
    %5845 = vmatprep.subr.mxu0 0.0
    %5846 = vmatpush1.msra.mxu0 0.0
    %5847 = vmatprep.mubr.f32.mxu0 0.0
    %5848 = vmatmul.mubr.f32.gmra.mrb[0].mxu0 %v5778
    %v5849 = vpop.f32.mrb[0].mxu0
    %v5850 = vadd.f32 %v5776, %v5849
    %v5851 = vpop.f32.mrb[0].mxu0
    %5852 = vmatprep.mubr.f32.mxu0 0.0
    %5853 = vmatmul.mubr.f32.gmra.mrb[0].mxu0 %v5781
    %v5854 = vpop.f32.mrb[0].mxu0
    %v5855 = vadd.f32 %v5776, %v5854
    %v5856 = vpop.f32.mrb[0].mxu0
    %5857 = vdwg.mxu0
    %v5858 = vmul.f32 %v5850, 0.5
    %v5859 = vmul.f32 %v5855, 0.5
    %v5860 = vmul.f32 %v5850, 0.044715
    %v5861 = vmul.f32 %v5855, 0.044715
    %v5862 = vmul.f32 %v5860, %v5850
    %v5863 = vmul.f32 %v5861, %v5855
    %v5864 = vmul.f32 %v5862, %v5850
    %v5865 = vmul.f32 %v5863, %v5855
    %v5866 = vadd.f32 %v5850, %v5864
    %v5867 = vadd.f32 %v5855, %v5865
    %v5868 = vmul.f32 %v5866, 0.7978846
    %v5869 = vmul.f32 %v5867, 0.7978846
    %v5870 = vtanh.pop %v5868
    %v5871 = vtanh.pop %v5869
    %v5872 = vadd.f32 %v5870, 1.0
    %v5873 = vadd.f32 %v5871, 1.0
    %v5874 = vmul.f32 %v5858, %v5872
    %v5875 = vmul.f32 %v5859, %v5873
    %s5876 = scalar_lea.vmem %s5, 64
    %v5877 = vld [vmem:[%s5876] sm:$0xff]
    %v5878 = vld [vmem:[%s5876 + $0x8] sm:$0xff]
    %v5879 = vld [vmem:[%s5876 + $0x10] sm:$0xff]
    %v5880 = vld [vmem:[%s5876 + $0x18] sm:$0xff]
    %v5881 = vld [vmem:[%s5876 + $0x20] sm:$0xff]
    %v5882 = vld [vmem:[%s5876 + $0x28] sm:$0xff]
    %v5883 = vld [vmem:[%s5876 + $0x30] sm:$0xff]
    %v5884 = vld [vmem:[%s5876 + $0x38] sm:$0xff]
    %v5885 = vld [vmem:[%s5717 + $0x2] sm:$0x1]
    %v5886 = vlaneseq
    %v5887 = vshrl.u32 %v5886, 7
    %v5888 = vsub.s32 0, %v5887
    %v5889 = vrot.slane %v5885, %v5888
    %v5891 = vsel %vm2973, %v5874, 0
    %v5894 = vsel %vm2973, %v5875, 0
    %5896 = vmatprep.subr.mxu0 0.0
    %5897 = vmatpush1.msra.mxu0 %v5877
    %5898 = vmatprep.subr.mxu0 0.0
    %5899 = vmatpush1.msra.mxu0 %v5878
    %5900 = vmatprep.subr.mxu0 0.0
    %5901 = vmatpush1.msra.mxu0 %v5879
    %5902 = vmatprep.subr.mxu0 0.0
    %5903 = vmatpush1.msra.mxu0 %v5880
    %5904 = vmatprep.subr.mxu0 0.0
    %5905 = vmatpush1.msra.mxu0 %v5881
    %5906 = vmatprep.subr.mxu0 0.0
    %5907 = vmatpush1.msra.mxu0 %v5882
    %5908 = vmatprep.subr.mxu0 0.0
    %5909 = vmatpush1.msra.mxu0 %v5883
    %5910 = vmatprep.subr.mxu0 0.0
    %5911 = vmatpush1.msra.mxu0 %v5884
    %5912 = vmatprep.subr.mxu0 0.0
    %5913 = vmatpush1.msra.mxu0 0.0
    %5914 = vmatprep.subr.mxu0 0.0
    %5915 = vmatpush1.msra.mxu0 0.0
    %5916 = vmatprep.subr.mxu0 0.0
    %5917 = vmatpush1.msra.mxu0 0.0
    %5918 = vmatprep.subr.mxu0 0.0
    %5919 = vmatpush1.msra.mxu0 0.0
    %5920 = vmatprep.subr.mxu0 0.0
    %5921 = vmatpush1.msra.mxu0 0.0
    %5922 = vmatprep.subr.mxu0 0.0
    %5923 = vmatpush1.msra.mxu0 0.0
    %5924 = vmatprep.subr.mxu0 0.0
    %5925 = vmatpush1.msra.mxu0 0.0
    %5926 = vmatprep.subr.mxu0 0.0
    %5927 = vmatpush1.msra.mxu0 0.0
    %5928 = vmatprep.subr.mxu0 0.0
    %5929 = vmatpush1.msra.mxu0 0.0
    %5930 = vmatprep.subr.mxu0 0.0
    %5931 = vmatpush1.msra.mxu0 0.0
    %5932 = vmatprep.subr.mxu0 0.0
    %5933 = vmatpush1.msra.mxu0 0.0
    %5934 = vmatprep.subr.mxu0 0.0
    %5935 = vmatpush1.msra.mxu0 0.0
    %5936 = vmatprep.subr.mxu0 0.0
    %5937 = vmatpush1.msra.mxu0 0.0
    %5938 = vmatprep.subr.mxu0 0.0
    %5939 = vmatpush1.msra.mxu0 0.0
    %5940 = vmatprep.subr.mxu0 0.0
    %5941 = vmatpush1.msra.mxu0 0.0
    %5942 = vmatprep.subr.mxu0 0.0
    %5943 = vmatpush1.msra.mxu0 0.0
    %5944 = vmatprep.subr.mxu0 0.0
    %5945 = vmatpush1.msra.mxu0 0.0
    %5946 = vmatprep.subr.mxu0 0.0
    %5947 = vmatpush1.msra.mxu0 0.0
    %5948 = vmatprep.subr.mxu0 0.0
    %5949 = vmatpush1.msra.mxu0 0.0
    %5950 = vmatprep.subr.mxu0 0.0
    %5951 = vmatpush1.msra.mxu0 0.0
    %5952 = vmatprep.subr.mxu0 0.0
    %5953 = vmatpush1.msra.mxu0 0.0
    %5954 = vmatprep.subr.mxu0 0.0
    %5955 = vmatpush1.msra.mxu0 0.0
    %5956 = vmatprep.subr.mxu0 0.0
    %5957 = vmatpush1.msra.mxu0 0.0
    %5958 = vmatprep.subr.mxu0 0.0
    %5959 = vmatpush1.msra.mxu0 0.0
    %5960 = vmatprep.mubr.f32.mxu0 0.0
    %5961 = vmatmul.mubr.f32.gmra.mrb[0].mxu0 %v5891
    %v5962 = vpop.f32.mrb[0].mxu0
    %v5963 = vadd.f32 %v5889, %v5962
    %v5964 = vpop.f32.mrb[0].mxu0
    %5965 = vmatprep.mubr.f32.mxu0 0.0
    %5966 = vmatmul.mubr.f32.gmra.mrb[0].mxu0 %v5894
    %v5967 = vpop.f32.mrb[0].mxu0
    %v5968 = vadd.f32 %v5889, %v5967
    %v5969 = vpop.f32.mrb[0].mxu0
    %5970 = vdwg.mxu0
    %v5971 = vadd.f32 %v5765, %v5963
    %v5972 = vadd.f32 %v5766, %v5968
    %v5973 = vld [vmem:[%s5717 + $0x5] sm:$0x1]
    %v5974 = vld [vmem:[%s5717 + $0x6] sm:$0x1]
    %v5975 = vsel %vm142, %v5971, 0.0
    %5976 = vadd.xlane.f32.xlu0 %v5975
    %v5977 = vpop.xlane.xlu0 %5976
    %v5978 = vsel %vm142, %v5972, 0.0
    %5979 = vadd.xlane.f32.xlu0 %v5978
    %v5980 = vpop.xlane.xlu0 %5979
    %v5981 = vmul.f32 %v5977, %v149
    %v5982 = vmul.f32 %v5980, %v149
    %v5983 = vsub.f32 %v5971, %v5981
    %v5984 = vsub.f32 %v5972, %v5982
    %v5985 = vmul.f32 %v5983, %v5983
    %v5986 = vmul.f32 %v5984, %v5984
    %v5987 = vsel %vm142, %v5985, 0.0
    %5988 = vadd.xlane.f32.xlu0 %v5987
    %v5989 = vpop.xlane.xlu0 %5988
    %v5990 = vsel %vm142, %v5986, 0.0
    %5991 = vadd.xlane.f32.xlu0 %v5990
    %v5992 = vpop.xlane.xlu0 %5991
    %v5993 = vmul.f32 %v5989, %v149
    %v5994 = vmul.f32 %v5992, %v149
    %v5995 = vadd.f32 %v5993, 1e-12
    %v5996 = vadd.f32 %v5994, 1e-12
    %v5997 = vrsqrt.pop %v5995
    %v5998 = vrsqrt.pop %v5996
    %v5999 = vmul.f32 %v5983, %v5997
    %v6000 = vmul.f32 %v5984, %v5998
    %v6001 = vlaneseq
    %v6002 = vshrl.u32 %v6001, 7
    %v6003 = vsub.s32 0, %v6002
    %v6004 = vrot.slane %v5973, %v6003
    %v6005 = vmul.f32 %v5999, %v6004
    %v6006 = vmul.f32 %v6000, %v6004
    %v6007 = vlaneseq
    %v6008 = vshrl.u32 %v6007, 7
    %v6009 = vsub.s32 0, %v6008
    %v6010 = vrot.slane %v5974, %v6009
    %v6011 = vadd.f32 %v6005, %v6010
    %v6012 = vadd.f32 %v6006, %v6010
    %v6013 = vlaneseq
    %v6014 = vshrl.u32 %v6013, 7
    %v6015 = vmul.u32 %v6014, 8
    %vm6016 = vcmp.eq.s32.totalorder %v33, %v6015
    %v6017 = vsel %vm6016, 1, 0
    %v6018 = vcvt.s32.f32 %v6017
    %vm6019 = vcmask 130048
    %v6021 = vsel %vm6019, %v6018, 0
    %6023 = vmatprep.subr.mxu0 0.0
    %6024 = vmatpush1.msra.mxu0 %v6011
    %6025 = vmatprep.subr.mxu0 0.0
    %6026 = vmatpush1.msra.mxu0 %v6012
    %6027 = vmatprep.subr.mxu0 0.0
    %6028 = vmatpush1.msra.mxu0 0.0
    %6029 = vmatprep.subr.mxu0 0.0
    %6030 = vmatpush1.msra.mxu0 0.0
    %6031 = vmatprep.subr.mxu0 0.0
    %6032 = vmatpush1.msra.mxu0 0.0
    %6033 = vmatprep.subr.mxu0 0.0
    %6034 = vmatpush1.msra.mxu0 0.0
    %6035 = vmatprep.subr.mxu0 0.0
    %6036 = vmatpush1.msra.mxu0 0.0
    %6037 = vmatprep.subr.mxu0 0.0
    %6038 = vmatpush1.msra.mxu0 0.0
    %6039 = vmatprep.subr.mxu0 0.0
    %6040 = vmatpush1.msra.mxu0 0.0
    %6041 = vmatprep.subr.mxu0 0.0
    %6042 = vmatpush1.msra.mxu0 0.0
    %6043 = vmatprep.subr.mxu0 0.0
    %6044 = vmatpush1.msra.mxu0 0.0
    %6045 = vmatprep.subr.mxu0 0.0
    %6046 = vmatpush1.msra.mxu0 0.0
    %6047 = vmatprep.subr.mxu0 0.0
    %6048 = vmatpush1.msra.mxu0 0.0
    %6049 = vmatprep.subr.mxu0 0.0
    %6050 = vmatpush1.msra.mxu0 0.0
    %6051 = vmatprep.subr.mxu0 0.0
    %6052 = vmatpush1.msra.mxu0 0.0
    %6053 = vmatprep.subr.mxu0 0.0
    %6054 = vmatpush1.msra.mxu0 0.0
    %6055 = vmatprep.subr.mxu0 0.0
    %6056 = vmatpush1.msra.mxu0 0.0
    %6057 = vmatprep.subr.mxu0 0.0
    %6058 = vmatpush1.msra.mxu0 0.0
    %6059 = vmatprep.subr.mxu0 0.0
    %6060 = vmatpush1.msra.mxu0 0.0
    %6061 = vmatprep.subr.mxu0 0.0
    %6062 = vmatpush1.msra.mxu0 0.0
    %6063 = vmatprep.subr.mxu0 0.0
    %6064 = vmatpush1.msra.mxu0 0.0
    %6065 = vmatprep.subr.mxu0 0.0
    %6066 = vmatpush1.msra.mxu0 0.0
    %6067 = vmatprep.subr.mxu0 0.0
    %6068 = vmatpush1.msra.mxu0 0.0
    %6069 = vmatprep.subr.mxu0 0.0
    %6070 = vmatpush1.msra.mxu0 0.0
    %6071 = vmatprep.subr.mxu0 0.0
    %6072 = vmatpush1.msra.mxu0 0.0
    %6073 = vmatprep.subr.mxu0 0.0
    %6074 = vmatpush1.msra.mxu0 0.0
    %6075 = vmatprep.subr.mxu0 0.0
    %6076 = vmatpush1.msra.mxu0 0.0
    %6077 = vmatprep.subr.mxu0 0.0
    %6078 = vmatpush1.msra.mxu0 0.0
    %6079 = vmatprep.subr.mxu0 0.0
    %6080 = vmatpush1.msra.mxu0 0.0
    %6081 = vmatprep.subr.mxu0 0.0
    %6082 = vmatpush1.msra.mxu0 0.0
    %6083 = vmatprep.subr.mxu0 0.0
    %6084 = vmatpush1.msra.mxu0 0.0
    %6085 = vmatprep.subr.mxu0 0.0
    %6086 = vmatpush1.msra.mxu0 0.0
    %6087 = vmatprep.mubr.f32.mxu0 0.0
    %6088 = vmatmul.mubr.f32.gmra.mrb[0].mxu0 %v6021
    %v6089 = vpop.f32.mrb[0].mxu0
    %v6090 = vadd.f32 0.0, %v6089
    %v6091 = vpop.f32.mrb[0].mxu0
    %6092 = vdwg.mxu0
    %v6093 = vld [vmem:[%s7] sm:$0xff]
    %v6094 = vld [vmem:[%s7 + $0x8] sm:$0xff]
    %v6095 = vld [vmem:[%s7 + $0x10] sm:$0xff]
    %v6096 = vld [vmem:[%s7 + $0x18] sm:$0xff]
    %v6097 = vld [vmem:[%s7 + $0x20] sm:$0x1]
    %v6098 = vlaneseq
    %v6099 = vshrl.u32 %v6098, 7
    %v6100 = vsub.s32 0, %v6099
    %v6101 = vrot.slane %v6097, %v6100
    %v6103 = vsel %vm142, %v6090, 0
    %6105 = vmatprep.subr.mxu0 0.0
    %6106 = vmatpush1.msra.mxu0 %v6093
    %6107 = vmatprep.subr.mxu0 0.0
    %6108 = vmatpush1.msra.mxu0 %v6094
    %6109 = vmatprep.subr.mxu0 0.0
    %6110 = vmatpush1.msra.mxu0 %v6095
    %6111 = vmatprep.subr.mxu0 0.0
    %6112 = vmatpush1.msra.mxu0 %v6096
    %6113 = vmatprep.subr.mxu0 0.0
    %6114 = vmatpush1.msra.mxu0 0.0
    %6115 = vmatprep.subr.mxu0 0.0
    %6116 = vmatpush1.msra.mxu0 0.0
    %6117 = vmatprep.subr.mxu0 0.0
    %6118 = vmatpush1.msra.mxu0 0.0
    %6119 = vmatprep.subr.mxu0 0.0
    %6120 = vmatpush1.msra.mxu0 0.0
    %6121 = vmatprep.subr.mxu0 0.0
    %6122 = vmatpush1.msra.mxu0 0.0
    %6123 = vmatprep.subr.mxu0 0.0
    %6124 = vmatpush1.msra.mxu0 0.0
    %6125 = vmatprep.subr.mxu0 0.0
    %6126 = vmatpush1.msra.mxu0 0.0
    %6127 = vmatprep.subr.mxu0 0.0
    %6128 = vmatpush1.msra.mxu0 0.0
    %6129 = vmatprep.subr.mxu0 0.0
    %6130 = vmatpush1.msra.mxu0 0.0
    %6131 = vmatprep.subr.mxu0 0.0
    %6132 = vmatpush1.msra.mxu0 0.0
    %6133 = vmatprep.subr.mxu0 0.0
    %6134 = vmatpush1.msra.mxu0 0.0
    %6135 = vmatprep.subr.mxu0 0.0
    %6136 = vmatpush1.msra.mxu0 0.0
    %6137 = vmatprep.subr.mxu0 0.0
    %6138 = vmatpush1.msra.mxu0 0.0
    %6139 = vmatprep.subr.mxu0 0.0
    %6140 = vmatpush1.msra.mxu0 0.0
    %6141 = vmatprep.subr.mxu0 0.0
    %6142 = vmatpush1.msra.mxu0 0.0
    %6143 = vmatprep.subr.mxu0 0.0
    %6144 = vmatpush1.msra.mxu0 0.0
    %6145 = vmatprep.subr.mxu0 0.0
    %6146 = vmatpush1.msra.mxu0 0.0
    %6147 = vmatprep.subr.mxu0 0.0
    %6148 = vmatpush1.msra.mxu0 0.0
    %6149 = vmatprep.subr.mxu0 0.0
    %6150 = vmatpush1.msra.mxu0 0.0
    %6151 = vmatprep.subr.mxu0 0.0
    %6152 = vmatpush1.msra.mxu0 0.0
    %6153 = vmatprep.subr.mxu0 0.0
    %6154 = vmatpush1.msra.mxu0 0.0
    %6155 = vmatprep.subr.mxu0 0.0
    %6156 = vmatpush1.msra.mxu0 0.0
    %6157 = vmatprep.subr.mxu0 0.0
    %6158 = vmatpush1.msra.mxu0 0.0
    %6159 = vmatprep.subr.mxu0 0.0
    %6160 = vmatpush1.msra.mxu0 0.0
    %6161 = vmatprep.subr.mxu0 0.0
    %6162 = vmatpush1.msra.mxu0 0.0
    %6163 = vmatprep.subr.mxu0 0.0
    %6164 = vmatpush1.msra.mxu0 0.0
    %6165 = vmatprep.subr.mxu0 0.0
    %6166 = vmatpush1.msra.mxu0 0.0
    %6167 = vmatprep.subr.mxu0 0.0
    %6168 = vmatpush1.msra.mxu0 0.0
    %6169 = vmatprep.mubr.f32.mxu0 0.0
    %6170 = vmatmul.mubr.f32.gmra.mrb[0].mxu0 %v6103
    %v6171 = vpop.f32.mrb[0].mxu0
    %v6172 = vadd.f32 %v6101, %v6171
    %v6173 = vpop.f32.mrb[0].mxu0
    %6174 = vdwg.mxu0
    %6175 = vst [vmem:[#allocation2] sm:$0x3] %v6172
    // Predicated region
    $region34: #{tpu_custom_call.1} parent=1 // pred_check
      _
    $region35: #{tpu_custom_call.1} parent=1 // pred_check_branch
      %6177 = sbr.rel (0) target = $region37
    $region36: #{tpu_custom_call.1} parent=1 // pred_region
      %s6179 = ssub.s32 32, 32
      %6180 = vsyncadd [#allocation3], %s6179
      %s6182 = sshll.u32 [#allocation2], 4
      %s6183 = int_to_ptr.vmem [resolvable:$true] %s6182
      %6185 = dma.vmem_to_hbm [thread:$0]  %s6183, 32, %s8, [#allocation3]
    $region37: #{tpu_custom_call.1} parent=1 // pred_fallthru
      _
    // Predicated region
    $region38: #{tpu_custom_call.1} parent=1 // pred_check
      _
    $region39: #{tpu_custom_call.1} parent=1 // pred_check_branch
      %6187 = sbr.rel (0) target = $region41
    $region40: #{tpu_custom_call.1} parent=1 // pred_region
      %6188 = dma.done [#allocation3], 32
    $region41: #{tpu_custom_call.1} parent=1 // pred_fallthru
      _
    %6189 = vsyncpa [#allocation3], 1

</llo_original>
